<compile_context>
chip_gen: v7x
topology: tpu7x:2x2x1
jax: 0.10.0
libtpu: 0.0.40
codegen_flags: <defaults>
</compile_context>

<pallas_src>
import functools

import jax
import jax.numpy as jnp
from jax import lax
from jax.experimental import pallas as pl
from jax.experimental.pallas import tpu as pltpu


# Which conv blocks are followed by MaxPool1d in the PyTorch module.
_POOLED = (True, True, False, False, False, True)


# ----------------------------------------------------------------------------
# Fused forward kernel: one grid step = Bt batch samples, everything in VMEM.
# ----------------------------------------------------------------------------
def _charcnn_fused_kernel(x_ref, *refs, kernel_sizes, pooled, pool_size,
                          batch_tile, l_last, n_fc, n_classes, mm_dtype):
    n_conv = len(kernel_sizes)
    conv_w_refs = refs[:n_conv]
    conv_b_ref = refs[n_conv]                       # (>=8, filters), packed
    fc1w_ref, fc2w_ref, fc3w_ref, fcb_ref = refs[n_conv + 1:n_conv + 5]
    o_ref = refs[n_conv + 5]                        # (Bt, n_classes)
    pool_scr = refs[n_conv + 6]                     # (pool_rows, filters)

    Bt = batch_tile
    L = x_ref.shape[1]

    def matmul(a, w_ref):
        # Operands already in mm_dtype; f32 accumulation on the MXU.
        return jnp.dot(a, w_ref[...], preferred_element_type=jnp.float32)

    # Stack the Bt samples along rows (sample s occupies rows [s*L, (s+1)*L)).
    h = jnp.concatenate([x_ref[s].astype(jnp.float32) for s in range(Bt)],
                        axis=0)                               # (Bt*L, C_in) f32

    for i in range(n_conv):
        k = kernel_sizes[i]
        l_conv = L - k + 1
        # Cast once per layer, BEFORE the k-fold im2col blow-up.
        hm = h.astype(mm_dtype)
        # Batched im2col: lane-concat the k shifted windows per sample, stack
        # the Bt samples along rows -> ONE (Bt*l_conv, k*C_in) MXU matmul.
        # TODO(synk): if a bundle dump shows vld/XLU (relayout) saturation,
        # fall back to k accumulated tap matmuls instead of im2col.
        xm = jnp.concatenate(
            [jnp.concatenate(
                [hm[s * L + t:s * L + t + l_conv, :] for t in range(k)],
                axis=1)
             for s in range(Bt)], axis=0)
        y = matmul(xm, conv_w_refs[i])                 # (Bt*l_conv, C_out) f32
        y = jnp.maximum(y + conv_b_ref[i:i + 1, :], 0.0)      # bias + ReLU, f32
        if pooled[i]:
            l_out = l_conv // pool_size
            # In-window max via pool_size shifted value slices (no per-tap
            # scratch round-trip), then ONE stride-pool_size sublane read
            # selects the surviving rows of all Bt samples at once
            # (l_conv % pool_size == 0, asserted in the wrapper, so the picked
            # rows form a single arithmetic stride across sample boundaries).
            span = Bt * l_conv - (pool_size - 1)
            m = y[0:span, :]
            for p in range(1, pool_size):
                m = jnp.maximum(m, y[p:p + span, :])
            pool_scr[0:span, :] = m
            h = pool_scr[pl.ds(0, Bt * l_out, stride=pool_size), :]
            L = l_out
        else:
            h = y
            L = l_conv

    # Per-sample row-major (l, c) flatten along lanes; PyTorch's channel-major
    # view(B, -1) ordering is folded into the fc1 weight permutation done in
    # the wrapper.  M = Bt for all three FC matmuls.
    hm = h.astype(mm_dtype)
    flat = jnp.concatenate(
        [jnp.concatenate(
            [hm[s * l_last + t:s * l_last + t + 1, :] for t in range(l_last)],
            axis=1)
         for s in range(Bt)], axis=0)                  # (Bt, l_last*filters)

    z = jnp.maximum(matmul(flat, fc1w_ref) + fcb_ref[0:1, :n_fc], 0.0)
    # TODO(synk): nn.Dropout(p=0.5) is identity in eval mode; training-mode
    # stochastic dropout is not implemented here.
    z = jnp.maximum(matmul(z.astype(mm_dtype), fc2w_ref) + fcb_ref[1:2, :n_fc],
                    0.0)
    z = matmul(z.astype(mm_dtype), fc3w_ref) + fcb_ref[2:3, :n_classes]
    # Exact sigmoid (strict f32 path); tiny (Bt, n_classes) tile -> negligible.
    o_ref[...] = (1.0 / (1.0 + jnp.exp(-z))).astype(o_ref.dtype)


def charcnn_forward(params, x, *, pool_size=3, kernel_sizes=(7, 7, 3, 3, 3, 3),
                    mm_dtype=jnp.bfloat16, batch_tile=None):
    """Fused CharCNN forward.  x: (B, seq_len, input_dim) — PyTorch input layout."""
    B, L0, C_in = x.shape
    n_conv = len(kernel_sizes)
    pooled = _POOLED[:n_conv]
    filters = params["conv1_w"].shape[0]
    n_fc = params["fc1_w"].shape[0]
    n_classes = params["fc3_w"].shape[0]
    mm_isz = jnp.dtype(mm_dtype).itemsize

    # ---- static length arithmetic, VMEM estimate, pool-scratch sizing ----
    L, c_prev = L0, C_in
    per_sample_bytes = 2 * 4 * L0 * C_in           # double-buffered input block
    max_pool_rows = 0
    for k, do_pool in zip(kernel_sizes, pooled):
        l_conv = L - k + 1
        assert l_conv >= 1, "sequence too short for the conv stack"
        per_sample_bytes = max(
            per_sample_bytes,
            2 * 4 * L0 * C_in + l_conv * k * c_prev * mm_isz
            + 3 * l_conv * filters * 4)
        if do_pool:
            assert l_conv % pool_size == 0, (
                "CharCNN length arithmetic requires pooled conv lengths to be "
                "multiples of pool_size")
            max_pool_rows = max(max_pool_rows, l_conv)
            L = l_conv // pool_size
        else:
            L = l_conv
        c_prev = filters
    l_last = L
    assert params["fc1_w"].shape[1] == l_last * filters, (
        params["fc1_w"].shape, l_last, filters)

    # ---- pick the per-grid-step batch tile Bt (fold Bt samples into M) ----
    if batch_tile is None:
        vmem_budget = 20 << 20   # headroom under v7x's 32 MiB scoped default
        cap = max(1, vmem_budget // max(per_sample_bytes, 1))
        batch_tile = 1
        for bt in range(1, B + 1):
            # keep >= 2 grid blocks so both v7x TensorCores get work
            if B % bt == 0 and bt <= cap and (B // bt >= 2 or B == 1):
                batch_tile = bt
    assert B % batch_tile == 0, (B, batch_tile)
    Bt = batch_tile
    num_blocks = B // Bt

    # ---- parameter repacking (plain JAX glue, tiny, done once per call) ----
    conv_ws = []
    c_prev = C_in
    for i, k in enumerate(kernel_sizes):
        w = params[f"conv{i + 1}_w"]                 # (C_out, C_in, K)
        c_out = w.shape[0]
        conv_ws.append(jnp.transpose(w, (2, 1, 0))   # (K, C_in, C_out)
                       .reshape(k * c_prev, c_out).astype(mm_dtype))
        c_prev = c_out
    bias_rows = max(8, ((n_conv + 7) // 8) * 8)
    conv_b = jnp.zeros((bias_rows, filters), jnp.float32)
    for i in range(n_conv):
        conv_b = conv_b.at[i, :].set(params[f"conv{i + 1}_b"].astype(jnp.float32))

    # fc1 weight permuted so the kernel's row-major (l, c) flatten matches the
    # PyTorch channel-major flatten (index c*l_last + l).
    fc1w = (params["fc1_w"].reshape(n_fc, filters, l_last)
            .transpose(2, 1, 0).reshape(l_last * filters, n_fc).astype(mm_dtype))
    fc2w = params["fc2_w"].T.astype(mm_dtype)
    fc3w = params["fc3_w"].T.astype(mm_dtype)
    fc_width = max(n_fc, n_classes)
    fcb = jnp.zeros((8, fc_width), jnp.float32)
    fcb = fcb.at[0, :n_fc].set(params["fc1_b"].astype(jnp.float32))
    fcb = fcb.at[1, :n_fc].set(params["fc2_b"].astype(jnp.float32))
    fcb = fcb.at[2, :n_classes].set(params["fc3_b"].astype(jnp.float32))

    ops = conv_ws + [conv_b, fc1w, fc2w, fc3w, fcb]

    def const_spec(shape):
        n = len(shape)
        return pl.BlockSpec(shape, lambda b, _n=n: (0,) * _n)

    in_specs = [pl.BlockSpec((Bt, L0, C_in), lambda b: (b, 0, 0))]
    in_specs += [const_spec(op.shape) for op in ops]

    pool_scr_rows = max(8, ((Bt * max_pool_rows + 7) // 8) * 8)

    kernel = functools.partial(
        _charcnn_fused_kernel, kernel_sizes=tuple(kernel_sizes),
        pooled=tuple(pooled), pool_size=pool_size, batch_tile=Bt,
        l_last=l_last, n_fc=n_fc, n_classes=n_classes, mm_dtype=mm_dtype)

    out = pl.pallas_call(
        kernel,
        out_shape=jax.ShapeDtypeStruct((num_blocks, Bt, n_classes), jnp.float32),
        grid=(num_blocks,),
        in_specs=in_specs,
        out_specs=pl.BlockSpec((None, Bt, n_classes), lambda b: (b, 0, 0)),
        scratch_shapes=[pltpu.VMEM((pool_scr_rows, filters), jnp.float32)],
        compiler_params=pltpu.CompilerParams(
            dimension_semantics=("parallel",),
            vmem_limit_bytes=32 * 1024 * 1024),
    )(x, *ops)
    return out.reshape(B, n_classes)


# ----------------------------------------------------------------------------
# Parameter init (deterministic, synthetic — mirrors module shapes).
# ----------------------------------------------------------------------------
def init_params(key, *, n_classes, input_dim, max_seq_length, filters,
                kernel_sizes, n_fc_neurons):
    keys = jax.random.split(key, 18)
    std = 0.05  # matches CharCNN._create_weights default
    params = {}
    c_in = input_dim
    for i, k in enumerate(kernel_sizes):
        params[f"conv{i + 1}_w"] = std * jax.random.normal(
            keys[2 * i], (filters, c_in, k), jnp.float32)
        params[f"conv{i + 1}_b"] = 0.01 * jax.random.normal(
            keys[2 * i + 1], (filters,), jnp.float32)
        c_in = filters
    dimension = int((max_seq_length - 96) / 27 * filters)
    fc_shapes = [(n_fc_neurons, dimension),
                 (n_fc_neurons, n_fc_neurons),
                 (n_classes, n_fc_neurons)]
    for i, (o, inp) in enumerate(fc_shapes):
        params[f"fc{i + 1}_w"] = std * jax.random.normal(
            keys[12 + 2 * i], (o, inp), jnp.float32)
        params[f"fc{i + 1}_b"] = 0.01 * jax.random.normal(
            keys[12 + 2 * i + 1], (o,), jnp.float32)
    return params


# ----------------------------------------------------------------------------
# Pure-JAX reference (PyTorch-equivalent).  mm_dtype lets us mirror the
# kernel's bf16-operand / f32-accumulate matmul policy for a matched check.
# ----------------------------------------------------------------------------
def charcnn_reference(params, x, *, pool_size=3, mm_dtype=jnp.float32):
    h = jnp.transpose(x, (0, 2, 1))        # (B, C_in, L) — input.transpose(1,2)

    def conv_block(h, w, b, do_pool):
        y = lax.conv_general_dilated(
            h.astype(mm_dtype), w.astype(mm_dtype), (1,), "VALID",
            dimension_numbers=("NCH", "OIH", "NCH"),
            preferred_element_type=jnp.float32)
        y = jnp.maximum(y + b[None, :, None].astype(jnp.float32), 0.0)
        if do_pool:
            B, C, L = y.shape
            lp = L // pool_size
            y = y[:, :, :lp * pool_size].reshape(B, C, lp, pool_size).max(-1)
        return y

    for i, do_pool in enumerate(_POOLED):
        h = conv_block(h, params[f"conv{i + 1}_w"], params[f"conv{i + 1}_b"],
                       do_pool)
    h = h.reshape(h.shape[0], -1)          # channel-major flatten (NCL)

    def dense(h, w, b):
        return jnp.dot(h.astype(mm_dtype), w.T.astype(mm_dtype),
                       preferred_element_type=jnp.float32) + b.astype(jnp.float32)

    h = jnp.maximum(dense(h, params["fc1_w"], params["fc1_b"]), 0.0)
    h = jnp.maximum(dense(h, params["fc2_w"], params["fc2_b"]), 0.0)
    h = jax.nn.sigmoid(dense(h, params["fc3_w"], params["fc3_b"]))
    return h


if __name__ == "__main__":
    # Small shapes consistent with the module's length arithmetic:
    # seq len L must satisfy (L - 96) % 27 == 0;  L = 150 -> 2 surviving
    # positions after the conv/pool stack, so flatten dim = 2 * filters.
    # B = 8 exercises the batched-M path: Bt = 4 samples per grid step,
    # grid = (2,) so both v7x TensorCores get one block each.
    B = 8
    n_classes = 4
    input_dim = 16
    max_seq_length = 150
    filters = 32
    kernel_sizes = (7, 7, 3, 3, 3, 3)
    pool_size = 3
    n_fc_neurons = 64

    key = jax.random.PRNGKey(0)
    kp, kx = jax.random.split(key)
    params = init_params(kp, n_classes=n_classes, input_dim=input_dim,
                         max_seq_length=max_seq_length, filters=filters,
                         kernel_sizes=kernel_sizes, n_fc_neurons=n_fc_neurons)
    x = jax.random.normal(kx, (B, max_seq_length, input_dim), jnp.float32)

    # --- f32-MXU variant: strict check against the pure-f32 reference. ---
    out_f32 = jax.block_until_ready(
        charcnn_forward(params, x, pool_size=pool_size,
                        kernel_sizes=kernel_sizes, mm_dtype=jnp.float32))
    ref_f32 = charcnn_reference(params, x, pool_size=pool_size,
                                mm_dtype=jnp.float32)
    assert out_f32.shape == (B, n_classes), out_f32.shape
    assert bool(jnp.allclose(out_f32, ref_f32, atol=2e-3, rtol=2e-3)), (
        "f32 kernel mismatch vs pure-JAX reference")

    # --- bf16-MXU-operand variant (default perf config for v5e/v6e/v7x). ---
    out_bf16 = jax.block_until_ready(
        charcnn_forward(params, x, pool_size=pool_size,
                        kernel_sizes=kernel_sizes, mm_dtype=jnp.bfloat16))
    ref_bf16 = charcnn_reference(params, x, pool_size=pool_size,
                                 mm_dtype=jnp.bfloat16)
    assert bool(jnp.allclose(out_bf16, ref_bf16, atol=5e-3, rtol=5e-3)), (
        "bf16 kernel mismatch vs bf16-matched reference")
    assert bool(jnp.allclose(out_bf16, ref_f32, atol=5e-2, rtol=5e-2)), (
        "bf16 kernel too far from f32 reference")

    print("KERNEL_OK")
</pallas_src>

<mosaic_0001>
module attributes {stable_mosaic.version = 11 : i64} {
  func.func @_charcnn_fused_kernel(%arg0: i32, %arg1: memref<4x150x16xf32, #tpu.memory_space<vmem>>, %arg2: memref<112x32xf32, #tpu.memory_space<vmem>>, %arg3: memref<224x32xf32, #tpu.memory_space<vmem>>, %arg4: memref<96x32xf32, #tpu.memory_space<vmem>>, %arg5: memref<96x32xf32, #tpu.memory_space<vmem>>, %arg6: memref<96x32xf32, #tpu.memory_space<vmem>>, %arg7: memref<96x32xf32, #tpu.memory_space<vmem>>, %arg8: memref<8x32xf32, #tpu.memory_space<vmem>>, %arg9: memref<64x64xf32, #tpu.memory_space<vmem>>, %arg10: memref<64x64xf32, #tpu.memory_space<vmem>>, %arg11: memref<64x4xf32, #tpu.memory_space<vmem>>, %arg12: memref<8x64xf32, #tpu.memory_space<vmem>>, %arg13: memref<1x4x4xf32, #tpu.memory_space<vmem>>, %arg14: memref<576x32xf32, #tpu.memory_space<vmem>>) attributes {dimension_semantics = [#tpu.dimension_semantics<parallel>], iteration_bounds = array<i64: 2>, scalar_prefetch = 0 : i64, scratch_operands = 1 : i64, tpu.core_type = #tpu.core_type<tc>, window_params = [{transform_indices = @transform_0, window_bounds = array<i64: 4, 150, 16>}, {pipeline_mode = #tpu.pipeline_mode<synchronous>, transform_indices = @transform_1, window_bounds = array<i64: 112, 32>}, {pipeline_mode = #tpu.pipeline_mode<synchronous>, transform_indices = @transform_2, window_bounds = array<i64: 224, 32>}, {pipeline_mode = #tpu.pipeline_mode<synchronous>, transform_indices = @transform_3, window_bounds = array<i64: 96, 32>}, {pipeline_mode = #tpu.pipeline_mode<synchronous>, transform_indices = @transform_4, window_bounds = array<i64: 96, 32>}, {pipeline_mode = #tpu.pipeline_mode<synchronous>, transform_indices = @transform_5, window_bounds = array<i64: 96, 32>}, {pipeline_mode = #tpu.pipeline_mode<synchronous>, transform_indices = @transform_6, window_bounds = array<i64: 96, 32>}, {pipeline_mode = #tpu.pipeline_mode<synchronous>, transform_indices = @transform_7, window_bounds = array<i64: 8, 32>}, {pipeline_mode = #tpu.pipeline_mode<synchronous>, transform_indices = @transform_8, window_bounds = array<i64: 64, 64>}, {pipeline_mode = #tpu.pipeline_mode<synchronous>, transform_indices = @transform_9, window_bounds = array<i64: 64, 64>}, {pipeline_mode = #tpu.pipeline_mode<synchronous>, transform_indices = @transform_10, window_bounds = array<i64: 64, 4>}, {pipeline_mode = #tpu.pipeline_mode<synchronous>, transform_indices = @transform_11, window_bounds = array<i64: 8, 64>}, {transform_indices = @transform_12, window_bounds = array<i64: 1, 4, 4>}]} {
    %c0 = arith.constant 0 : index
    %c0_0 = arith.constant 0 : index
    %c0_1 = arith.constant 0 : index
    %0 = vector.load %arg1[%c0, %c0_0, %c0_1] : memref<4x150x16xf32, #tpu.memory_space<vmem>>, vector<1x150x16xf32>
    %1 = vector.shape_cast %0 : vector<1x150x16xf32> to vector<150x16xf32>
    %c1 = arith.constant 1 : index
    %c0_2 = arith.constant 0 : index
    %c0_3 = arith.constant 0 : index
    %2 = vector.load %arg1[%c1, %c0_2, %c0_3] : memref<4x150x16xf32, #tpu.memory_space<vmem>>, vector<1x150x16xf32>
    %3 = vector.shape_cast %2 : vector<1x150x16xf32> to vector<150x16xf32>
    %c2 = arith.constant 2 : index
    %c0_4 = arith.constant 0 : index
    %c0_5 = arith.constant 0 : index
    %4 = vector.load %arg1[%c2, %c0_4, %c0_5] : memref<4x150x16xf32, #tpu.memory_space<vmem>>, vector<1x150x16xf32>
    %5 = vector.shape_cast %4 : vector<1x150x16xf32> to vector<150x16xf32>
    %c3 = arith.constant 3 : index
    %c0_6 = arith.constant 0 : index
    %c0_7 = arith.constant 0 : index
    %6 = vector.load %arg1[%c3, %c0_6, %c0_7] : memref<4x150x16xf32, #tpu.memory_space<vmem>>, vector<1x150x16xf32>
    %7 = vector.shape_cast %6 : vector<1x150x16xf32> to vector<150x16xf32>
    %8 = tpu.concatenate %1, %3, %5, %7 in 0 : vector<150x16xf32>, vector<150x16xf32>, vector<150x16xf32>, vector<150x16xf32> -> vector<600x16xf32>
    %9 = vector.extract_strided_slice %8 {offsets = [0, 0], sizes = [144, 16], strides = [1, 1]} : vector<600x16xf32> to vector<144x16xf32>
    %10 = vector.extract_strided_slice %8 {offsets = [1, 0], sizes = [144, 16], strides = [1, 1]} : vector<600x16xf32> to vector<144x16xf32>
    %11 = vector.extract_strided_slice %8 {offsets = [2, 0], sizes = [144, 16], strides = [1, 1]} : vector<600x16xf32> to vector<144x16xf32>
    %12 = vector.extract_strided_slice %8 {offsets = [3, 0], sizes = [144, 16], strides = [1, 1]} : vector<600x16xf32> to vector<144x16xf32>
    %13 = vector.extract_strided_slice %8 {offsets = [4, 0], sizes = [144, 16], strides = [1, 1]} : vector<600x16xf32> to vector<144x16xf32>
    %14 = vector.extract_strided_slice %8 {offsets = [5, 0], sizes = [144, 16], strides = [1, 1]} : vector<600x16xf32> to vector<144x16xf32>
    %15 = vector.extract_strided_slice %8 {offsets = [6, 0], sizes = [144, 16], strides = [1, 1]} : vector<600x16xf32> to vector<144x16xf32>
    %16 = tpu.concatenate %9, %10, %11, %12, %13, %14, %15 in 1 : vector<144x16xf32>, vector<144x16xf32>, vector<144x16xf32>, vector<144x16xf32>, vector<144x16xf32>, vector<144x16xf32>, vector<144x16xf32> -> vector<144x112xf32>
    %17 = vector.extract_strided_slice %8 {offsets = [150, 0], sizes = [144, 16], strides = [1, 1]} : vector<600x16xf32> to vector<144x16xf32>
    %18 = vector.extract_strided_slice %8 {offsets = [151, 0], sizes = [144, 16], strides = [1, 1]} : vector<600x16xf32> to vector<144x16xf32>
    %19 = vector.extract_strided_slice %8 {offsets = [152, 0], sizes = [144, 16], strides = [1, 1]} : vector<600x16xf32> to vector<144x16xf32>
    %20 = vector.extract_strided_slice %8 {offsets = [153, 0], sizes = [144, 16], strides = [1, 1]} : vector<600x16xf32> to vector<144x16xf32>
    %21 = vector.extract_strided_slice %8 {offsets = [154, 0], sizes = [144, 16], strides = [1, 1]} : vector<600x16xf32> to vector<144x16xf32>
    %22 = vector.extract_strided_slice %8 {offsets = [155, 0], sizes = [144, 16], strides = [1, 1]} : vector<600x16xf32> to vector<144x16xf32>
    %23 = vector.extract_strided_slice %8 {offsets = [156, 0], sizes = [144, 16], strides = [1, 1]} : vector<600x16xf32> to vector<144x16xf32>
    %24 = tpu.concatenate %17, %18, %19, %20, %21, %22, %23 in 1 : vector<144x16xf32>, vector<144x16xf32>, vector<144x16xf32>, vector<144x16xf32>, vector<144x16xf32>, vector<144x16xf32>, vector<144x16xf32> -> vector<144x112xf32>
    %25 = vector.extract_strided_slice %8 {offsets = [300, 0], sizes = [144, 16], strides = [1, 1]} : vector<600x16xf32> to vector<144x16xf32>
    %26 = vector.extract_strided_slice %8 {offsets = [301, 0], sizes = [144, 16], strides = [1, 1]} : vector<600x16xf32> to vector<144x16xf32>
    %27 = vector.extract_strided_slice %8 {offsets = [302, 0], sizes = [144, 16], strides = [1, 1]} : vector<600x16xf32> to vector<144x16xf32>
    %28 = vector.extract_strided_slice %8 {offsets = [303, 0], sizes = [144, 16], strides = [1, 1]} : vector<600x16xf32> to vector<144x16xf32>
    %29 = vector.extract_strided_slice %8 {offsets = [304, 0], sizes = [144, 16], strides = [1, 1]} : vector<600x16xf32> to vector<144x16xf32>
    %30 = vector.extract_strided_slice %8 {offsets = [305, 0], sizes = [144, 16], strides = [1, 1]} : vector<600x16xf32> to vector<144x16xf32>
    %31 = vector.extract_strided_slice %8 {offsets = [306, 0], sizes = [144, 16], strides = [1, 1]} : vector<600x16xf32> to vector<144x16xf32>
    %32 = tpu.concatenate %25, %26, %27, %28, %29, %30, %31 in 1 : vector<144x16xf32>, vector<144x16xf32>, vector<144x16xf32>, vector<144x16xf32>, vector<144x16xf32>, vector<144x16xf32>, vector<144x16xf32> -> vector<144x112xf32>
    %33 = vector.extract_strided_slice %8 {offsets = [450, 0], sizes = [144, 16], strides = [1, 1]} : vector<600x16xf32> to vector<144x16xf32>
    %34 = vector.extract_strided_slice %8 {offsets = [451, 0], sizes = [144, 16], strides = [1, 1]} : vector<600x16xf32> to vector<144x16xf32>
    %35 = vector.extract_strided_slice %8 {offsets = [452, 0], sizes = [144, 16], strides = [1, 1]} : vector<600x16xf32> to vector<144x16xf32>
    %36 = vector.extract_strided_slice %8 {offsets = [453, 0], sizes = [144, 16], strides = [1, 1]} : vector<600x16xf32> to vector<144x16xf32>
    %37 = vector.extract_strided_slice %8 {offsets = [454, 0], sizes = [144, 16], strides = [1, 1]} : vector<600x16xf32> to vector<144x16xf32>
    %38 = vector.extract_strided_slice %8 {offsets = [455, 0], sizes = [144, 16], strides = [1, 1]} : vector<600x16xf32> to vector<144x16xf32>
    %39 = vector.extract_strided_slice %8 {offsets = [456, 0], sizes = [144, 16], strides = [1, 1]} : vector<600x16xf32> to vector<144x16xf32>
    %40 = tpu.concatenate %33, %34, %35, %36, %37, %38, %39 in 1 : vector<144x16xf32>, vector<144x16xf32>, vector<144x16xf32>, vector<144x16xf32>, vector<144x16xf32>, vector<144x16xf32>, vector<144x16xf32> -> vector<144x112xf32>
    %41 = tpu.concatenate %16, %24, %32, %40 in 0 : vector<144x112xf32>, vector<144x112xf32>, vector<144x112xf32>, vector<144x112xf32> -> vector<576x112xf32>
    %c0_8 = arith.constant 0 : index
    %c0_9 = arith.constant 0 : index
    %42 = vector.load %arg2[%c0_8, %c0_9] : memref<112x32xf32, #tpu.memory_space<vmem>>, vector<112x32xf32>
    %cst = arith.constant dense<0.000000e+00> : vector<576x32xf32>
    %43 = tpu.matmul %41, %42, %cst {dimension_numbers = #tpu.dot_dimension_numbers<[1], [0], [0], [1], [0, 0, 1, 1], [], []>} : vector<576x112xf32>, vector<112x32xf32>, vector<576x32xf32> -> vector<576x32xf32>
    %c0_10 = arith.constant 0 : index
    %c0_11 = arith.constant 0 : index
    %44 = vector.load %arg8[%c0_10, %c0_11] : memref<8x32xf32, #tpu.memory_space<vmem>>, vector<1x32xf32>
    %45 = vector.broadcast %44 : vector<1x32xf32> to vector<576x32xf32>
    %46 = arith.addf %43, %45 : vector<576x32xf32>
    %cst_12 = arith.constant 0.000000e+00 : f32
    %47 = vector.broadcast %cst_12 : f32 to vector<576x32xf32>
    %48 = arith.maximumf %46, %47 : vector<576x32xf32>
    %49 = vector.extract_strided_slice %48 {offsets = [0, 0], sizes = [574, 32], strides = [1, 1]} : vector<576x32xf32> to vector<574x32xf32>
    %50 = vector.extract_strided_slice %48 {offsets = [1, 0], sizes = [574, 32], strides = [1, 1]} : vector<576x32xf32> to vector<574x32xf32>
    %51 = arith.maximumf %49, %50 : vector<574x32xf32>
    %52 = vector.extract_strided_slice %48 {offsets = [2, 0], sizes = [574, 32], strides = [1, 1]} : vector<576x32xf32> to vector<574x32xf32>
    %53 = arith.maximumf %51, %52 : vector<574x32xf32>
    %c0_13 = arith.constant 0 : index
    %c0_14 = arith.constant 0 : index
    %54 = vector.load %arg14[%c0_13, %c0_14] : memref<576x32xf32, #tpu.memory_space<vmem>>, vector<574x32xf32>
    tpu.vector_store %arg14[%c0_13, %c0_14], %53 {strides = array<i32>} : memref<576x32xf32, #tpu.memory_space<vmem>>, vector<574x32xf32>,
    %c0_15 = arith.constant 0 : index
    %c0_16 = arith.constant 0 : index
    %55 = tpu.strided_load %arg14[%c0_15, %c0_16] {strides = array<i32: 3, 1>} : memref<576x32xf32, #tpu.memory_space<vmem>>, vector<192x32xf32>
    %56 = vector.extract_strided_slice %55 {offsets = [0, 0], sizes = [42, 32], strides = [1, 1]} : vector<192x32xf32> to vector<42x32xf32>
    %57 = vector.extract_strided_slice %55 {offsets = [1, 0], sizes = [42, 32], strides = [1, 1]} : vector<192x32xf32> to vector<42x32xf32>
    %58 = vector.extract_strided_slice %55 {offsets = [2, 0], sizes = [42, 32], strides = [1, 1]} : vector<192x32xf32> to vector<42x32xf32>
    %59 = vector.extract_strided_slice %55 {offsets = [3, 0], sizes = [42, 32], strides = [1, 1]} : vector<192x32xf32> to vector<42x32xf32>
    %60 = vector.extract_strided_slice %55 {offsets = [4, 0], sizes = [42, 32], strides = [1, 1]} : vector<192x32xf32> to vector<42x32xf32>
    %61 = vector.extract_strided_slice %55 {offsets = [5, 0], sizes = [42, 32], strides = [1, 1]} : vector<192x32xf32> to vector<42x32xf32>
    %62 = vector.extract_strided_slice %55 {offsets = [6, 0], sizes = [42, 32], strides = [1, 1]} : vector<192x32xf32> to vector<42x32xf32>
    %63 = tpu.concatenate %56, %57, %58, %59, %60, %61, %62 in 1 : vector<42x32xf32>, vector<42x32xf32>, vector<42x32xf32>, vector<42x32xf32>, vector<42x32xf32>, vector<42x32xf32>, vector<42x32xf32> -> vector<42x224xf32>
    %64 = vector.extract_strided_slice %55 {offsets = [48, 0], sizes = [42, 32], strides = [1, 1]} : vector<192x32xf32> to vector<42x32xf32>
    %65 = vector.extract_strided_slice %55 {offsets = [49, 0], sizes = [42, 32], strides = [1, 1]} : vector<192x32xf32> to vector<42x32xf32>
    %66 = vector.extract_strided_slice %55 {offsets = [50, 0], sizes = [42, 32], strides = [1, 1]} : vector<192x32xf32> to vector<42x32xf32>
    %67 = vector.extract_strided_slice %55 {offsets = [51, 0], sizes = [42, 32], strides = [1, 1]} : vector<192x32xf32> to vector<42x32xf32>
    %68 = vector.extract_strided_slice %55 {offsets = [52, 0], sizes = [42, 32], strides = [1, 1]} : vector<192x32xf32> to vector<42x32xf32>
    %69 = vector.extract_strided_slice %55 {offsets = [53, 0], sizes = [42, 32], strides = [1, 1]} : vector<192x32xf32> to vector<42x32xf32>
    %70 = vector.extract_strided_slice %55 {offsets = [54, 0], sizes = [42, 32], strides = [1, 1]} : vector<192x32xf32> to vector<42x32xf32>
    %71 = tpu.concatenate %64, %65, %66, %67, %68, %69, %70 in 1 : vector<42x32xf32>, vector<42x32xf32>, vector<42x32xf32>, vector<42x32xf32>, vector<42x32xf32>, vector<42x32xf32>, vector<42x32xf32> -> vector<42x224xf32>
    %72 = vector.extract_strided_slice %55 {offsets = [96, 0], sizes = [42, 32], strides = [1, 1]} : vector<192x32xf32> to vector<42x32xf32>
    %73 = vector.extract_strided_slice %55 {offsets = [97, 0], sizes = [42, 32], strides = [1, 1]} : vector<192x32xf32> to vector<42x32xf32>
    %74 = vector.extract_strided_slice %55 {offsets = [98, 0], sizes = [42, 32], strides = [1, 1]} : vector<192x32xf32> to vector<42x32xf32>
    %75 = vector.extract_strided_slice %55 {offsets = [99, 0], sizes = [42, 32], strides = [1, 1]} : vector<192x32xf32> to vector<42x32xf32>
    %76 = vector.extract_strided_slice %55 {offsets = [100, 0], sizes = [42, 32], strides = [1, 1]} : vector<192x32xf32> to vector<42x32xf32>
    %77 = vector.extract_strided_slice %55 {offsets = [101, 0], sizes = [42, 32], strides = [1, 1]} : vector<192x32xf32> to vector<42x32xf32>
    %78 = vector.extract_strided_slice %55 {offsets = [102, 0], sizes = [42, 32], strides = [1, 1]} : vector<192x32xf32> to vector<42x32xf32>
    %79 = tpu.concatenate %72, %73, %74, %75, %76, %77, %78 in 1 : vector<42x32xf32>, vector<42x32xf32>, vector<42x32xf32>, vector<42x32xf32>, vector<42x32xf32>, vector<42x32xf32>, vector<42x32xf32> -> vector<42x224xf32>
    %80 = vector.extract_strided_slice %55 {offsets = [144, 0], sizes = [42, 32], strides = [1, 1]} : vector<192x32xf32> to vector<42x32xf32>
    %81 = vector.extract_strided_slice %55 {offsets = [145, 0], sizes = [42, 32], strides = [1, 1]} : vector<192x32xf32> to vector<42x32xf32>
    %82 = vector.extract_strided_slice %55 {offsets = [146, 0], sizes = [42, 32], strides = [1, 1]} : vector<192x32xf32> to vector<42x32xf32>
    %83 = vector.extract_strided_slice %55 {offsets = [147, 0], sizes = [42, 32], strides = [1, 1]} : vector<192x32xf32> to vector<42x32xf32>
    %84 = vector.extract_strided_slice %55 {offsets = [148, 0], sizes = [42, 32], strides = [1, 1]} : vector<192x32xf32> to vector<42x32xf32>
    %85 = vector.extract_strided_slice %55 {offsets = [149, 0], sizes = [42, 32], strides = [1, 1]} : vector<192x32xf32> to vector<42x32xf32>
    %86 = vector.extract_strided_slice %55 {offsets = [150, 0], sizes = [42, 32], strides = [1, 1]} : vector<192x32xf32> to vector<42x32xf32>
    %87 = tpu.concatenate %80, %81, %82, %83, %84, %85, %86 in 1 : vector<42x32xf32>, vector<42x32xf32>, vector<42x32xf32>, vector<42x32xf32>, vector<42x32xf32>, vector<42x32xf32>, vector<42x32xf32> -> vector<42x224xf32>
    %88 = tpu.concatenate %63, %71, %79, %87 in 0 : vector<42x224xf32>, vector<42x224xf32>, vector<42x224xf32>, vector<42x224xf32> -> vector<168x224xf32>
    %c0_17 = arith.constant 0 : index
    %c0_18 = arith.constant 0 : index
    %89 = vector.load %arg3[%c0_17, %c0_18] : memref<224x32xf32, #tpu.memory_space<vmem>>, vector<224x32xf32>
    %cst_19 = arith.constant dense<0.000000e+00> : vector<168x32xf32>
    %90 = tpu.matmul %88, %89, %cst_19 {dimension_numbers = #tpu.dot_dimension_numbers<[1], [0], [0], [1], [0, 0, 1, 1], [], []>} : vector<168x224xf32>, vector<224x32xf32>, vector<168x32xf32> -> vector<168x32xf32>
    %c1_20 = arith.constant 1 : index
    %c0_21 = arith.constant 0 : index
    %91 = vector.load %arg8[%c1_20, %c0_21] : memref<8x32xf32, #tpu.memory_space<vmem>>, vector<1x32xf32>
    %92 = vector.broadcast %91 : vector<1x32xf32> to vector<168x32xf32>
    %93 = arith.addf %90, %92 : vector<168x32xf32>
    %cst_22 = arith.constant 0.000000e+00 : f32
    %94 = vector.broadcast %cst_22 : f32 to vector<168x32xf32>
    %95 = arith.maximumf %93, %94 : vector<168x32xf32>
    %96 = vector.extract_strided_slice %95 {offsets = [0, 0], sizes = [166, 32], strides = [1, 1]} : vector<168x32xf32> to vector<166x32xf32>
    %97 = vector.extract_strided_slice %95 {offsets = [1, 0], sizes = [166, 32], strides = [1, 1]} : vector<168x32xf32> to vector<166x32xf32>
    %98 = arith.maximumf %96, %97 : vector<166x32xf32>
    %99 = vector.extract_strided_slice %95 {offsets = [2, 0], sizes = [166, 32], strides = [1, 1]} : vector<168x32xf32> to vector<166x32xf32>
    %100 = arith.maximumf %98, %99 : vector<166x32xf32>
    %c0_23 = arith.constant 0 : index
    %c0_24 = arith.constant 0 : index
    %101 = vector.load %arg14[%c0_23, %c0_24] : memref<576x32xf32, #tpu.memory_space<vmem>>, vector<166x32xf32>
    tpu.vector_store %arg14[%c0_23, %c0_24], %100 {strides = array<i32>} : memref<576x32xf32, #tpu.memory_space<vmem>>, vector<166x32xf32>,
    %c0_25 = arith.constant 0 : index
    %c0_26 = arith.constant 0 : index
    %102 = tpu.strided_load %arg14[%c0_25, %c0_26] {strides = array<i32: 3, 1>} : memref<576x32xf32, #tpu.memory_space<vmem>>, vector<56x32xf32>
    %103 = vector.extract_strided_slice %102 {offsets = [0, 0], sizes = [12, 32], strides = [1, 1]} : vector<56x32xf32> to vector<12x32xf32>
    %104 = vector.extract_strided_slice %102 {offsets = [1, 0], sizes = [12, 32], strides = [1, 1]} : vector<56x32xf32> to vector<12x32xf32>
    %105 = vector.extract_strided_slice %102 {offsets = [2, 0], sizes = [12, 32], strides = [1, 1]} : vector<56x32xf32> to vector<12x32xf32>
    %106 = tpu.concatenate %103, %104, %105 in 1 : vector<12x32xf32>, vector<12x32xf32>, vector<12x32xf32> -> vector<12x96xf32>
    %107 = vector.extract_strided_slice %102 {offsets = [14, 0], sizes = [12, 32], strides = [1, 1]} : vector<56x32xf32> to vector<12x32xf32>
    %108 = vector.extract_strided_slice %102 {offsets = [15, 0], sizes = [12, 32], strides = [1, 1]} : vector<56x32xf32> to vector<12x32xf32>
    %109 = vector.extract_strided_slice %102 {offsets = [16, 0], sizes = [12, 32], strides = [1, 1]} : vector<56x32xf32> to vector<12x32xf32>
    %110 = tpu.concatenate %107, %108, %109 in 1 : vector<12x32xf32>, vector<12x32xf32>, vector<12x32xf32> -> vector<12x96xf32>
    %111 = vector.extract_strided_slice %102 {offsets = [28, 0], sizes = [12, 32], strides = [1, 1]} : vector<56x32xf32> to vector<12x32xf32>
    %112 = vector.extract_strided_slice %102 {offsets = [29, 0], sizes = [12, 32], strides = [1, 1]} : vector<56x32xf32> to vector<12x32xf32>
    %113 = vector.extract_strided_slice %102 {offsets = [30, 0], sizes = [12, 32], strides = [1, 1]} : vector<56x32xf32> to vector<12x32xf32>
    %114 = tpu.concatenate %111, %112, %113 in 1 : vector<12x32xf32>, vector<12x32xf32>, vector<12x32xf32> -> vector<12x96xf32>
    %115 = vector.extract_strided_slice %102 {offsets = [42, 0], sizes = [12, 32], strides = [1, 1]} : vector<56x32xf32> to vector<12x32xf32>
    %116 = vector.extract_strided_slice %102 {offsets = [43, 0], sizes = [12, 32], strides = [1, 1]} : vector<56x32xf32> to vector<12x32xf32>
    %117 = vector.extract_strided_slice %102 {offsets = [44, 0], sizes = [12, 32], strides = [1, 1]} : vector<56x32xf32> to vector<12x32xf32>
    %118 = tpu.concatenate %115, %116, %117 in 1 : vector<12x32xf32>, vector<12x32xf32>, vector<12x32xf32> -> vector<12x96xf32>
    %119 = tpu.concatenate %106, %110, %114, %118 in 0 : vector<12x96xf32>, vector<12x96xf32>, vector<12x96xf32>, vector<12x96xf32> -> vector<48x96xf32>
    %c0_27 = arith.constant 0 : index
    %c0_28 = arith.constant 0 : index
    %120 = vector.load %arg4[%c0_27, %c0_28] : memref<96x32xf32, #tpu.memory_space<vmem>>, vector<96x32xf32>
    %cst_29 = arith.constant dense<0.000000e+00> : vector<48x32xf32>
    %121 = tpu.matmul %119, %120, %cst_29 {dimension_numbers = #tpu.dot_dimension_numbers<[1], [0], [0], [1], [0, 0, 1, 1], [], []>} : vector<48x96xf32>, vector<96x32xf32>, vector<48x32xf32> -> vector<48x32xf32>
    %c2_30 = arith.constant 2 : index
    %c0_31 = arith.constant 0 : index
    %122 = vector.load %arg8[%c2_30, %c0_31] : memref<8x32xf32, #tpu.memory_space<vmem>>, vector<1x32xf32>
    %123 = vector.broadcast %122 : vector<1x32xf32> to vector<48x32xf32>
    %124 = arith.addf %121, %123 : vector<48x32xf32>
    %cst_32 = arith.constant 0.000000e+00 : f32
    %125 = vector.broadcast %cst_32 : f32 to vector<48x32xf32>
    %126 = arith.maximumf %124, %125 : vector<48x32xf32>
    %127 = vector.extract_strided_slice %126 {offsets = [0, 0], sizes = [10, 32], strides = [1, 1]} : vector<48x32xf32> to vector<10x32xf32>
    %128 = vector.extract_strided_slice %126 {offsets = [1, 0], sizes = [10, 32], strides = [1, 1]} : vector<48x32xf32> to vector<10x32xf32>
    %129 = vector.extract_strided_slice %126 {offsets = [2, 0], sizes = [10, 32], strides = [1, 1]} : vector<48x32xf32> to vector<10x32xf32>
    %130 = tpu.concatenate %127, %128, %129 in 1 : vector<10x32xf32>, vector<10x32xf32>, vector<10x32xf32> -> vector<10x96xf32>
    %131 = vector.extract_strided_slice %126 {offsets = [12, 0], sizes = [10, 32], strides = [1, 1]} : vector<48x32xf32> to vector<10x32xf32>
    %132 = vector.extract_strided_slice %126 {offsets = [13, 0], sizes = [10, 32], strides = [1, 1]} : vector<48x32xf32> to vector<10x32xf32>
    %133 = vector.extract_strided_slice %126 {offsets = [14, 0], sizes = [10, 32], strides = [1, 1]} : vector<48x32xf32> to vector<10x32xf32>
    %134 = tpu.concatenate %131, %132, %133 in 1 : vector<10x32xf32>, vector<10x32xf32>, vector<10x32xf32> -> vector<10x96xf32>
    %135 = vector.extract_strided_slice %126 {offsets = [24, 0], sizes = [10, 32], strides = [1, 1]} : vector<48x32xf32> to vector<10x32xf32>
    %136 = vector.extract_strided_slice %126 {offsets = [25, 0], sizes = [10, 32], strides = [1, 1]} : vector<48x32xf32> to vector<10x32xf32>
    %137 = vector.extract_strided_slice %126 {offsets = [26, 0], sizes = [10, 32], strides = [1, 1]} : vector<48x32xf32> to vector<10x32xf32>
    %138 = tpu.concatenate %135, %136, %137 in 1 : vector<10x32xf32>, vector<10x32xf32>, vector<10x32xf32> -> vector<10x96xf32>
    %139 = vector.extract_strided_slice %126 {offsets = [36, 0], sizes = [10, 32], strides = [1, 1]} : vector<48x32xf32> to vector<10x32xf32>
    %140 = vector.extract_strided_slice %126 {offsets = [37, 0], sizes = [10, 32], strides = [1, 1]} : vector<48x32xf32> to vector<10x32xf32>
    %141 = vector.extract_strided_slice %126 {offsets = [38, 0], sizes = [10, 32], strides = [1, 1]} : vector<48x32xf32> to vector<10x32xf32>
    %142 = tpu.concatenate %139, %140, %141 in 1 : vector<10x32xf32>, vector<10x32xf32>, vector<10x32xf32> -> vector<10x96xf32>
    %143 = tpu.concatenate %130, %134, %138, %142 in 0 : vector<10x96xf32>, vector<10x96xf32>, vector<10x96xf32>, vector<10x96xf32> -> vector<40x96xf32>
    %c0_33 = arith.constant 0 : index
    %c0_34 = arith.constant 0 : index
    %144 = vector.load %arg5[%c0_33, %c0_34] : memref<96x32xf32, #tpu.memory_space<vmem>>, vector<96x32xf32>
    %cst_35 = arith.constant dense<0.000000e+00> : vector<40x32xf32>
    %145 = tpu.matmul %143, %144, %cst_35 {dimension_numbers = #tpu.dot_dimension_numbers<[1], [0], [0], [1], [0, 0, 1, 1], [], []>} : vector<40x96xf32>, vector<96x32xf32>, vector<40x32xf32> -> vector<40x32xf32>
    %c3_36 = arith.constant 3 : index
    %c0_37 = arith.constant 0 : index
    %146 = vector.load %arg8[%c3_36, %c0_37] : memref<8x32xf32, #tpu.memory_space<vmem>>, vector<1x32xf32>
    %147 = vector.broadcast %146 : vector<1x32xf32> to vector<40x32xf32>
    %148 = arith.addf %145, %147 : vector<40x32xf32>
    %cst_38 = arith.constant 0.000000e+00 : f32
    %149 = vector.broadcast %cst_38 : f32 to vector<40x32xf32>
    %150 = arith.maximumf %148, %149 : vector<40x32xf32>
    %151 = vector.extract_strided_slice %150 {offsets = [0, 0], sizes = [8, 32], strides = [1, 1]} : vector<40x32xf32> to vector<8x32xf32>
    %152 = vector.extract_strided_slice %150 {offsets = [1, 0], sizes = [8, 32], strides = [1, 1]} : vector<40x32xf32> to vector<8x32xf32>
    %153 = vector.extract_strided_slice %150 {offsets = [2, 0], sizes = [8, 32], strides = [1, 1]} : vector<40x32xf32> to vector<8x32xf32>
    %154 = tpu.concatenate %151, %152, %153 in 1 : vector<8x32xf32>, vector<8x32xf32>, vector<8x32xf32> -> vector<8x96xf32>
    %155 = vector.extract_strided_slice %150 {offsets = [10, 0], sizes = [8, 32], strides = [1, 1]} : vector<40x32xf32> to vector<8x32xf32>
    %156 = vector.extract_strided_slice %150 {offsets = [11, 0], sizes = [8, 32], strides = [1, 1]} : vector<40x32xf32> to vector<8x32xf32>
    %157 = vector.extract_strided_slice %150 {offsets = [12, 0], sizes = [8, 32], strides = [1, 1]} : vector<40x32xf32> to vector<8x32xf32>
    %158 = tpu.concatenate %155, %156, %157 in 1 : vector<8x32xf32>, vector<8x32xf32>, vector<8x32xf32> -> vector<8x96xf32>
    %159 = vector.extract_strided_slice %150 {offsets = [20, 0], sizes = [8, 32], strides = [1, 1]} : vector<40x32xf32> to vector<8x32xf32>
    %160 = vector.extract_strided_slice %150 {offsets = [21, 0], sizes = [8, 32], strides = [1, 1]} : vector<40x32xf32> to vector<8x32xf32>
    %161 = vector.extract_strided_slice %150 {offsets = [22, 0], sizes = [8, 32], strides = [1, 1]} : vector<40x32xf32> to vector<8x32xf32>
    %162 = tpu.concatenate %159, %160, %161 in 1 : vector<8x32xf32>, vector<8x32xf32>, vector<8x32xf32> -> vector<8x96xf32>
    %163 = vector.extract_strided_slice %150 {offsets = [30, 0], sizes = [8, 32], strides = [1, 1]} : vector<40x32xf32> to vector<8x32xf32>
    %164 = vector.extract_strided_slice %150 {offsets = [31, 0], sizes = [8, 32], strides = [1, 1]} : vector<40x32xf32> to vector<8x32xf32>
    %165 = vector.extract_strided_slice %150 {offsets = [32, 0], sizes = [8, 32], strides = [1, 1]} : vector<40x32xf32> to vector<8x32xf32>
    %166 = tpu.concatenate %163, %164, %165 in 1 : vector<8x32xf32>, vector<8x32xf32>, vector<8x32xf32> -> vector<8x96xf32>
    %167 = tpu.concatenate %154, %158, %162, %166 in 0 : vector<8x96xf32>, vector<8x96xf32>, vector<8x96xf32>, vector<8x96xf32> -> vector<32x96xf32>
    %c0_39 = arith.constant 0 : index
    %c0_40 = arith.constant 0 : index
    %168 = vector.load %arg6[%c0_39, %c0_40] : memref<96x32xf32, #tpu.memory_space<vmem>>, vector<96x32xf32>
    %cst_41 = arith.constant dense<0.000000e+00> : vector<32x32xf32>
    %169 = tpu.matmul %167, %168, %cst_41 {dimension_numbers = #tpu.dot_dimension_numbers<[1], [0], [0], [1], [0, 0, 1, 1], [], []>} : vector<32x96xf32>, vector<96x32xf32>, vector<32x32xf32> -> vector<32x32xf32>
    %c4 = arith.constant 4 : index
    %c0_42 = arith.constant 0 : index
    %170 = vector.load %arg8[%c4, %c0_42] : memref<8x32xf32, #tpu.memory_space<vmem>>, vector<1x32xf32>
    %171 = vector.broadcast %170 : vector<1x32xf32> to vector<32x32xf32>
    %172 = arith.addf %169, %171 : vector<32x32xf32>
    %cst_43 = arith.constant 0.000000e+00 : f32
    %173 = vector.broadcast %cst_43 : f32 to vector<32x32xf32>
    %174 = arith.maximumf %172, %173 : vector<32x32xf32>
    %175 = vector.extract_strided_slice %174 {offsets = [0, 0], sizes = [6, 32], strides = [1, 1]} : vector<32x32xf32> to vector<6x32xf32>
    %176 = vector.extract_strided_slice %174 {offsets = [1, 0], sizes = [6, 32], strides = [1, 1]} : vector<32x32xf32> to vector<6x32xf32>
    %177 = vector.extract_strided_slice %174 {offsets = [2, 0], sizes = [6, 32], strides = [1, 1]} : vector<32x32xf32> to vector<6x32xf32>
    %178 = tpu.concatenate %175, %176, %177 in 1 : vector<6x32xf32>, vector<6x32xf32>, vector<6x32xf32> -> vector<6x96xf32>
    %179 = vector.extract_strided_slice %174 {offsets = [8, 0], sizes = [6, 32], strides = [1, 1]} : vector<32x32xf32> to vector<6x32xf32>
    %180 = vector.extract_strided_slice %174 {offsets = [9, 0], sizes = [6, 32], strides = [1, 1]} : vector<32x32xf32> to vector<6x32xf32>
    %181 = vector.extract_strided_slice %174 {offsets = [10, 0], sizes = [6, 32], strides = [1, 1]} : vector<32x32xf32> to vector<6x32xf32>
    %182 = tpu.concatenate %179, %180, %181 in 1 : vector<6x32xf32>, vector<6x32xf32>, vector<6x32xf32> -> vector<6x96xf32>
    %183 = vector.extract_strided_slice %174 {offsets = [16, 0], sizes = [6, 32], strides = [1, 1]} : vector<32x32xf32> to vector<6x32xf32>
    %184 = vector.extract_strided_slice %174 {offsets = [17, 0], sizes = [6, 32], strides = [1, 1]} : vector<32x32xf32> to vector<6x32xf32>
    %185 = vector.extract_strided_slice %174 {offsets = [18, 0], sizes = [6, 32], strides = [1, 1]} : vector<32x32xf32> to vector<6x32xf32>
    %186 = tpu.concatenate %183, %184, %185 in 1 : vector<6x32xf32>, vector<6x32xf32>, vector<6x32xf32> -> vector<6x96xf32>
    %187 = vector.extract_strided_slice %174 {offsets = [24, 0], sizes = [6, 32], strides = [1, 1]} : vector<32x32xf32> to vector<6x32xf32>
    %188 = vector.extract_strided_slice %174 {offsets = [25, 0], sizes = [6, 32], strides = [1, 1]} : vector<32x32xf32> to vector<6x32xf32>
    %189 = vector.extract_strided_slice %174 {offsets = [26, 0], sizes = [6, 32], strides = [1, 1]} : vector<32x32xf32> to vector<6x32xf32>
    %190 = tpu.concatenate %187, %188, %189 in 1 : vector<6x32xf32>, vector<6x32xf32>, vector<6x32xf32> -> vector<6x96xf32>
    %191 = tpu.concatenate %178, %182, %186, %190 in 0 : vector<6x96xf32>, vector<6x96xf32>, vector<6x96xf32>, vector<6x96xf32> -> vector<24x96xf32>
    %c0_44 = arith.constant 0 : index
    %c0_45 = arith.constant 0 : index
    %192 = vector.load %arg7[%c0_44, %c0_45] : memref<96x32xf32, #tpu.memory_space<vmem>>, vector<96x32xf32>
    %cst_46 = arith.constant dense<0.000000e+00> : vector<24x32xf32>
    %193 = tpu.matmul %191, %192, %cst_46 {dimension_numbers = #tpu.dot_dimension_numbers<[1], [0], [0], [1], [0, 0, 1, 1], [], []>} : vector<24x96xf32>, vector<96x32xf32>, vector<24x32xf32> -> vector<24x32xf32>
    %c5 = arith.constant 5 : index
    %c0_47 = arith.constant 0 : index
    %194 = vector.load %arg8[%c5, %c0_47] : memref<8x32xf32, #tpu.memory_space<vmem>>, vector<1x32xf32>
    %195 = vector.broadcast %194 : vector<1x32xf32> to vector<24x32xf32>
    %196 = arith.addf %193, %195 : vector<24x32xf32>
    %cst_48 = arith.constant 0.000000e+00 : f32
    %197 = vector.broadcast %cst_48 : f32 to vector<24x32xf32>
    %198 = arith.maximumf %196, %197 : vector<24x32xf32>
    %199 = vector.extract_strided_slice %198 {offsets = [0, 0], sizes = [22, 32], strides = [1, 1]} : vector<24x32xf32> to vector<22x32xf32>
    %200 = vector.extract_strided_slice %198 {offsets = [1, 0], sizes = [22, 32], strides = [1, 1]} : vector<24x32xf32> to vector<22x32xf32>
    %201 = arith.maximumf %199, %200 : vector<22x32xf32>
    %202 = vector.extract_strided_slice %198 {offsets = [2, 0], sizes = [22, 32], strides = [1, 1]} : vector<24x32xf32> to vector<22x32xf32>
    %203 = arith.maximumf %201, %202 : vector<22x32xf32>
    %c0_49 = arith.constant 0 : index
    %c0_50 = arith.constant 0 : index
    %204 = vector.load %arg14[%c0_49, %c0_50] : memref<576x32xf32, #tpu.memory_space<vmem>>, vector<22x32xf32>
    tpu.vector_store %arg14[%c0_49, %c0_50], %203 {strides = array<i32>} : memref<576x32xf32, #tpu.memory_space<vmem>>, vector<22x32xf32>,
    %c0_51 = arith.constant 0 : index
    %c0_52 = arith.constant 0 : index
    %205 = tpu.strided_load %arg14[%c0_51, %c0_52] {strides = array<i32: 3, 1>} : memref<576x32xf32, #tpu.memory_space<vmem>>, vector<8x32xf32>
    %206 = vector.extract_strided_slice %205 {offsets = [0, 0], sizes = [1, 32], strides = [1, 1]} : vector<8x32xf32> to vector<1x32xf32>
    %207 = vector.extract_strided_slice %205 {offsets = [1, 0], sizes = [1, 32], strides = [1, 1]} : vector<8x32xf32> to vector<1x32xf32>
    %208 = tpu.concatenate %206, %207 in 1 : vector<1x32xf32>, vector<1x32xf32> -> vector<1x64xf32>
    %209 = vector.extract_strided_slice %205 {offsets = [2, 0], sizes = [1, 32], strides = [1, 1]} : vector<8x32xf32> to vector<1x32xf32>
    %210 = vector.extract_strided_slice %205 {offsets = [3, 0], sizes = [1, 32], strides = [1, 1]} : vector<8x32xf32> to vector<1x32xf32>
    %211 = tpu.concatenate %209, %210 in 1 : vector<1x32xf32>, vector<1x32xf32> -> vector<1x64xf32>
    %212 = vector.extract_strided_slice %205 {offsets = [4, 0], sizes = [1, 32], strides = [1, 1]} : vector<8x32xf32> to vector<1x32xf32>
    %213 = vector.extract_strided_slice %205 {offsets = [5, 0], sizes = [1, 32], strides = [1, 1]} : vector<8x32xf32> to vector<1x32xf32>
    %214 = tpu.concatenate %212, %213 in 1 : vector<1x32xf32>, vector<1x32xf32> -> vector<1x64xf32>
    %215 = vector.extract_strided_slice %205 {offsets = [6, 0], sizes = [1, 32], strides = [1, 1]} : vector<8x32xf32> to vector<1x32xf32>
    %216 = vector.extract_strided_slice %205 {offsets = [7, 0], sizes = [1, 32], strides = [1, 1]} : vector<8x32xf32> to vector<1x32xf32>
    %217 = tpu.concatenate %215, %216 in 1 : vector<1x32xf32>, vector<1x32xf32> -> vector<1x64xf32>
    %218 = tpu.concatenate %208, %211, %214, %217 in 0 : vector<1x64xf32>, vector<1x64xf32>, vector<1x64xf32>, vector<1x64xf32> -> vector<4x64xf32>
    %c0_53 = arith.constant 0 : index
    %c0_54 = arith.constant 0 : index
    %219 = vector.load %arg9[%c0_53, %c0_54] : memref<64x64xf32, #tpu.memory_space<vmem>>, vector<64x64xf32>
    %cst_55 = arith.constant dense<0.000000e+00> : vector<4x64xf32>
    %220 = tpu.matmul %218, %219, %cst_55 {dimension_numbers = #tpu.dot_dimension_numbers<[1], [0], [0], [1], [0, 0, 1, 1], [], []>} : vector<4x64xf32>, vector<64x64xf32>, vector<4x64xf32> -> vector<4x64xf32>
    %c0_56 = arith.constant 0 : index
    %c0_57 = arith.constant 0 : index
    %221 = vector.load %arg12[%c0_56, %c0_57] : memref<8x64xf32, #tpu.memory_space<vmem>>, vector<1x64xf32>
    %222 = vector.broadcast %221 : vector<1x64xf32> to vector<4x64xf32>
    %223 = arith.addf %220, %222 : vector<4x64xf32>
    %cst_58 = arith.constant 0.000000e+00 : f32
    %224 = vector.broadcast %cst_58 : f32 to vector<4x64xf32>
    %225 = arith.maximumf %223, %224 : vector<4x64xf32>
    %c0_59 = arith.constant 0 : index
    %c0_60 = arith.constant 0 : index
    %226 = vector.load %arg10[%c0_59, %c0_60] : memref<64x64xf32, #tpu.memory_space<vmem>>, vector<64x64xf32>
    %cst_61 = arith.constant dense<0.000000e+00> : vector<4x64xf32>
    %227 = tpu.matmul %225, %226, %cst_61 {dimension_numbers = #tpu.dot_dimension_numbers<[1], [0], [0], [1], [0, 0, 1, 1], [], []>} : vector<4x64xf32>, vector<64x64xf32>, vector<4x64xf32> -> vector<4x64xf32>
    %c1_62 = arith.constant 1 : index
    %c0_63 = arith.constant 0 : index
    %228 = vector.load %arg12[%c1_62, %c0_63] : memref<8x64xf32, #tpu.memory_space<vmem>>, vector<1x64xf32>
    %229 = vector.broadcast %228 : vector<1x64xf32> to vector<4x64xf32>
    %230 = arith.addf %227, %229 : vector<4x64xf32>
    %cst_64 = arith.constant 0.000000e+00 : f32
    %231 = vector.broadcast %cst_64 : f32 to vector<4x64xf32>
    %232 = arith.maximumf %230, %231 : vector<4x64xf32>
    %c0_65 = arith.constant 0 : index
    %c0_66 = arith.constant 0 : index
    %233 = vector.load %arg11[%c0_65, %c0_66] : memref<64x4xf32, #tpu.memory_space<vmem>>, vector<64x4xf32>
    %cst_67 = arith.constant dense<0.000000e+00> : vector<4x4xf32>
    %234 = tpu.matmul %232, %233, %cst_67 {dimension_numbers = #tpu.dot_dimension_numbers<[1], [0], [0], [1], [0, 0, 1, 1], [], []>} : vector<4x64xf32>, vector<64x4xf32>, vector<4x4xf32> -> vector<4x4xf32>
    %c2_68 = arith.constant 2 : index
    %c0_69 = arith.constant 0 : index
    %235 = vector.load %arg12[%c2_68, %c0_69] : memref<8x64xf32, #tpu.memory_space<vmem>>, vector<1x4xf32>
    %236 = vector.broadcast %235 : vector<1x4xf32> to vector<4x4xf32>
    %237 = arith.addf %234, %236 : vector<4x4xf32>
    %cst_70 = arith.constant 0.000000e+00 : f32
    %238 = vector.broadcast %cst_70 : f32 to vector<4x4xf32>
    %239 = arith.subf %238, %237 : vector<4x4xf32>
    %240 = math.exp %239 : vector<4x4xf32>
    %cst_71 = arith.constant 1.000000e+00 : f32
    %241 = vector.broadcast %cst_71 : f32 to vector<4x4xf32>
    %242 = arith.addf %241, %240 : vector<4x4xf32>
    %cst_72 = arith.constant 1.000000e+00 : f32
    %243 = vector.broadcast %cst_72 : f32 to vector<4x4xf32>
    %244 = arith.divf %243, %242 : vector<4x4xf32>
    %c0_73 = arith.constant 0 : index
    %c0_74 = arith.constant 0 : index
    %c0_75 = arith.constant 0 : index
    %245 = vector.load %arg13[%c0_73, %c0_74, %c0_75] : memref<1x4x4xf32, #tpu.memory_space<vmem>>, vector<1x4x4xf32>
    %246 = vector.shape_cast %245 : vector<1x4x4xf32> to vector<4x4xf32>
    %247 = vector.shape_cast %244 : vector<4x4xf32> to vector<1x4x4xf32>
    tpu.vector_store %arg13[%c0_73, %c0_74, %c0_75], %247 {strides = array<i32>} : memref<1x4x4xf32, #tpu.memory_space<vmem>>, vector<1x4x4xf32>,
    return
  }
  func.func @transform_0(%arg0: i32) -> (i32, i32, i32) {
    %c0_i32 = arith.constant 0 : i32
    %c0_i32_0 = arith.constant 0 : i32
    %c0_i32_1 = arith.constant 0 : i32
    return %arg0, %c0_i32, %c0_i32_0 : i32, i32, i32
  }
  func.func @transform_1(%arg0: i32) -> (i32, i32) {
    %c0_i32 = arith.constant 0 : i32
    %c0_i32_0 = arith.constant 0 : i32
    %c0_i32_1 = arith.constant 0 : i32
    return %c0_i32, %c0_i32_0 : i32, i32
  }
  func.func @transform_2(%arg0: i32) -> (i32, i32) {
    %c0_i32 = arith.constant 0 : i32
    %c0_i32_0 = arith.constant 0 : i32
    %c0_i32_1 = arith.constant 0 : i32
    return %c0_i32, %c0_i32_0 : i32, i32
  }
  func.func @transform_3(%arg0: i32) -> (i32, i32) {
    %c0_i32 = arith.constant 0 : i32
    %c0_i32_0 = arith.constant 0 : i32
    %c0_i32_1 = arith.constant 0 : i32
    return %c0_i32, %c0_i32_0 : i32, i32
  }
  func.func @transform_4(%arg0: i32) -> (i32, i32) {
    %c0_i32 = arith.constant 0 : i32
    %c0_i32_0 = arith.constant 0 : i32
    %c0_i32_1 = arith.constant 0 : i32
    return %c0_i32, %c0_i32_0 : i32, i32
  }
  func.func @transform_5(%arg0: i32) -> (i32, i32) {
    %c0_i32 = arith.constant 0 : i32
    %c0_i32_0 = arith.constant 0 : i32
    %c0_i32_1 = arith.constant 0 : i32
    return %c0_i32, %c0_i32_0 : i32, i32
  }
  func.func @transform_6(%arg0: i32) -> (i32, i32) {
    %c0_i32 = arith.constant 0 : i32
    %c0_i32_0 = arith.constant 0 : i32
    %c0_i32_1 = arith.constant 0 : i32
    return %c0_i32, %c0_i32_0 : i32, i32
  }
  func.func @transform_7(%arg0: i32) -> (i32, i32) {
    %c0_i32 = arith.constant 0 : i32
    %c0_i32_0 = arith.constant 0 : i32
    %c0_i32_1 = arith.constant 0 : i32
    return %c0_i32, %c0_i32_0 : i32, i32
  }
  func.func @transform_8(%arg0: i32) -> (i32, i32) {
    %c0_i32 = arith.constant 0 : i32
    %c0_i32_0 = arith.constant 0 : i32
    %c0_i32_1 = arith.constant 0 : i32
    return %c0_i32, %c0_i32_0 : i32, i32
  }
  func.func @transform_9(%arg0: i32) -> (i32, i32) {
    %c0_i32 = arith.constant 0 : i32
    %c0_i32_0 = arith.constant 0 : i32
    %c0_i32_1 = arith.constant 0 : i32
    return %c0_i32, %c0_i32_0 : i32, i32
  }
  func.func @transform_10(%arg0: i32) -> (i32, i32) {
    %c0_i32 = arith.constant 0 : i32
    %c0_i32_0 = arith.constant 0 : i32
    %c0_i32_1 = arith.constant 0 : i32
    return %c0_i32, %c0_i32_0 : i32, i32
  }
  func.func @transform_11(%arg0: i32) -> (i32, i32) {
    %c0_i32 = arith.constant 0 : i32
    %c0_i32_0 = arith.constant 0 : i32
    %c0_i32_1 = arith.constant 0 : i32
    return %c0_i32, %c0_i32_0 : i32, i32
  }
  func.func @transform_12(%arg0: i32) -> (i32, i32, i32) {
    %c0_i32 = arith.constant 0 : i32
    %c0_i32_0 = arith.constant 0 : i32
    %c0_i32_1 = arith.constant 0 : i32
    return %arg0, %c0_i32, %c0_i32_0 : i32, i32, i32
  }
}

</mosaic_0001>

<llo_original>
// kernel: tpu_custom_call.1
$region0: #{tpu_custom_call.1}
  #allocation0 [shape = 'u32[]', space=smem, size = 0x4, offset = 0x4, fixed_abs, tag = 'smem constant byte address 0x4 - core index']
  #allocation1 [shape = 'u32[144,128]{1,0:T(1,128)}', space=vmem, size = 0x12000, scoped, tag = 'internal scratch']
  #allocation2 [shape = 'f32[576,32]{1,0:T(8,128)}', space=vmem, size = 0x48000, scoped, tag = 'scratch operand']
  %s0 = inlined_call_operand.vmem [shape: f32[8,150,16], index: 0, kind: input, shape index: {}]
  %s1 = inlined_call_operand.vmem [shape: f32[112,32], index: 1, kind: input, shape index: {}]
  %s2 = inlined_call_operand.vmem [shape: f32[224,32], index: 2, kind: input, shape index: {}]
  %s3 = inlined_call_operand.vmem [shape: f32[96,32], index: 3, kind: input, shape index: {}]
  %s4 = inlined_call_operand.vmem [shape: f32[96,32], index: 4, kind: input, shape index: {}]
  %s5 = inlined_call_operand.vmem [shape: f32[96,32], index: 5, kind: input, shape index: {}]
  %s6 = inlined_call_operand.vmem [shape: f32[96,32], index: 6, kind: input, shape index: {}]
  %s7 = inlined_call_operand.vmem [shape: f32[8,32], index: 7, kind: input, shape index: {}]
  %s8 = inlined_call_operand.vmem [shape: f32[64,64], index: 8, kind: input, shape index: {}]
  %s9 = inlined_call_operand.vmem [shape: f32[64,64], index: 9, kind: input, shape index: {}]
  %s10 = inlined_call_operand.vmem [shape: f32[64,4], index: 10, kind: input, shape index: {}]
  %s11 = inlined_call_operand.vmem [shape: f32[8,64], index: 11, kind: input, shape index: {}]
  %s12 = inlined_call_operand.hbm [shape: f32[2,4,4], index: 12, kind: output, shape index: {}]
  %s13 = sld [smem:[#allocation0]]
  $region81: #{tpu_custom_call.1} parent=0
    _
  %s15 = ssub.s32 1, %s13
  %s16 = scalar_select 0, %s15, %s13
  $region1: #{tpu_custom_call.1} parent=0
    #allocation3 [shape = 'u8[4096]{0}', space=vmem, size = 0x1000, scoped, tag = 'output window, operand 0']
    #allocation4 [shape = 's32[2]{0}', space=sflag, size = 0x8, scoped, tag = 'scoped memory for tpu_custom_call.1']
    %17 = vsyncpa [#allocation4], 0
    %s18 = scalar_lea.sflag [#allocation4], 1
    %19 = vsyncpa %s18, 0
    loop: start=0, step=1, limit=4
    $region2: #{tpu_custom_call.1} parent=1 // loop_pre_header
      _
    $region3: #{tpu_custom_call.1} parent=1 // loop_header
      %s21 = sphi 0, %s25
      %p22 = scmp.ge.s32.totalorder %s21, 4
      %s31 = sphi 0, %s33
      %s34 = sphi 0, %s31
      %s35 = sphi 0, %s34
      %s51 = sphi 0, %s35
      %s55 = sphi 0, %s55
      %s57 = sphi 0, %s55
      %s58 = sphi 0, %s57
      %s72 = sphi 0, %s58
      %s76 = sphi 0, %s76
      %s78 = sphi 0, %s76
      %s79 = sphi 0, %s78
      %s93 = sphi 0, %s79
      %s97 = sphi 0, %s97
      %s99 = sphi 0, %s97
      %s100 = sphi 0, %s99
      %s114 = sphi 0, %s100
      %s118 = sphi 0, %s118
      %s120 = sphi 0, %s118
      %s121 = sphi 0, %s120
      %s135 = sphi 0, %s121
      %s139 = sphi 0, %s139
      %s141 = sphi 0, %s139
      %s142 = sphi 0, %s141
      %s156 = sphi 0, %s142
      %s160 = sphi 0, %s160
      %s162 = sphi 0, %s160
      %s163 = sphi 0, %s162
      %s177 = sphi 0, %s163
      %s181 = sphi 0, %s181
      %s183 = sphi 0, %s181
      %s184 = sphi 0, %s183
      %s198 = sphi 0, %s184
      %s202 = sphi 0, %s202
      %s204 = sphi 0, %s202
      %s205 = sphi 0, %s204
      %s219 = sphi 0, %s205
      %s223 = sphi 0, %s223
      %s225 = sphi 0, %s223
      %s226 = sphi 0, %s225
      %s240 = sphi 0, %s226
      %s244 = sphi 0, %s244
      %s246 = sphi 0, %s244
      %s247 = sphi 0, %s246
      %s261 = sphi 0, %s247
      %s265 = sphi 0, %s265
      %s267 = sphi 0, %s265
      %s268 = sphi 0, %s267
      %s282 = sphi 0, %s268
      %s288 = sphi 0, %s290
      %s291 = sphi 0, %s288
      %s292 = sphi 0, %s291
      %s308 = sphi 0, %s292
    $region4: #{tpu_custom_call.1} parent=1 // loop_header_branch
      %24 = sbr.rel (%p22) target = $region8
    $region5: #{tpu_custom_call.1} parent=1 // loop_body
      %s26 = ssub.s32 %s21, 1
      %s27 = ssub.s32 %s21, 2
      %s28 = sadd.s32 %s21, 1
      %s29 = ssub.s32 %s21, %s28
      %p30 = scmp.eq.s32.totalorder %s29, 0
      %s32 = sadd.s32 %s31, 1
      %s33 = scalar_select %p30, %s31, %s32
      %p36 = pneg %p30
      %p37 = scmp.eq.s32.totalorder %s21, 1
      %p38 = por %p36, %p37
      %p39 = scmp.ne.s32.totalorder %s31, %s34
      %p40 = scmp.eq.s32.totalorder %s21, 0
      %p41 = por %p39, %p40
      %p42 = scmp.ne.s32.totalorder %s31, %s34
      %p43 = scmp.eq.s32.totalorder %s26, 1
      %p44 = por %p42, %p43
      %p45 = scmp.ne.s32.totalorder %s34, %s35
      %p46 = scmp.eq.s32.totalorder %s26, 0
      %p47 = por %p45, %p46
      %p48 = scmp.ne.s32.totalorder %s34, %s35
      %p49 = scmp.eq.s32.totalorder %s27, 1
      %p50 = por %p48, %p49
      %p52 = scmp.ne.s32.totalorder %s35, %s51
      %p53 = scmp.eq.s32.totalorder %s27, 0
      %p54 = por %p52, %p53
      %s56 = sadd.s32 %s55, 1
      %p59 = scmp.eq.s32.totalorder %s21, 1
      %p60 = scmp.ne.s32.totalorder %s55, %s57
      %p61 = scmp.eq.s32.totalorder %s21, 0
      %p62 = por %p60, %p61
      %p63 = scmp.ne.s32.totalorder %s55, %s57
      %p64 = scmp.eq.s32.totalorder %s26, 1
      %p65 = por %p63, %p64
      %p66 = scmp.ne.s32.totalorder %s57, %s58
      %p67 = scmp.eq.s32.totalorder %s26, 0
      %p68 = por %p66, %p67
      %p69 = scmp.ne.s32.totalorder %s57, %s58
      %p70 = scmp.eq.s32.totalorder %s27, 1
      %p71 = por %p69, %p70
      %p73 = scmp.ne.s32.totalorder %s58, %s72
      %p74 = scmp.eq.s32.totalorder %s27, 0
      %p75 = por %p73, %p74
      %s77 = sadd.s32 %s76, 1
      %p80 = scmp.eq.s32.totalorder %s21, 1
      %p81 = scmp.ne.s32.totalorder %s76, %s78
      %p82 = scmp.eq.s32.totalorder %s21, 0
      %p83 = por %p81, %p82
      %p84 = scmp.ne.s32.totalorder %s76, %s78
      %p85 = scmp.eq.s32.totalorder %s26, 1
      %p86 = por %p84, %p85
      %p87 = scmp.ne.s32.totalorder %s78, %s79
      %p88 = scmp.eq.s32.totalorder %s26, 0
      %p89 = por %p87, %p88
      %p90 = scmp.ne.s32.totalorder %s78, %s79
      %p91 = scmp.eq.s32.totalorder %s27, 1
      %p92 = por %p90, %p91
      %p94 = scmp.ne.s32.totalorder %s79, %s93
      %p95 = scmp.eq.s32.totalorder %s27, 0
      %p96 = por %p94, %p95
      %s98 = sadd.s32 %s97, 1
      %p101 = scmp.eq.s32.totalorder %s21, 1
      %p102 = scmp.ne.s32.totalorder %s97, %s99
      %p103 = scmp.eq.s32.totalorder %s21, 0
      %p104 = por %p102, %p103
      %p105 = scmp.ne.s32.totalorder %s97, %s99
      %p106 = scmp.eq.s32.totalorder %s26, 1
      %p107 = por %p105, %p106
      %p108 = scmp.ne.s32.totalorder %s99, %s100
      %p109 = scmp.eq.s32.totalorder %s26, 0
      %p110 = por %p108, %p109
      %p111 = scmp.ne.s32.totalorder %s99, %s100
      %p112 = scmp.eq.s32.totalorder %s27, 1
      %p113 = por %p111, %p112
      %p115 = scmp.ne.s32.totalorder %s100, %s114
      %p116 = scmp.eq.s32.totalorder %s27, 0
      %p117 = por %p115, %p116
      %s119 = sadd.s32 %s118, 1
      %p122 = scmp.eq.s32.totalorder %s21, 1
      %p123 = scmp.ne.s32.totalorder %s118, %s120
      %p124 = scmp.eq.s32.totalorder %s21, 0
      %p125 = por %p123, %p124
      %p126 = scmp.ne.s32.totalorder %s118, %s120
      %p127 = scmp.eq.s32.totalorder %s26, 1
      %p128 = por %p126, %p127
      %p129 = scmp.ne.s32.totalorder %s120, %s121
      %p130 = scmp.eq.s32.totalorder %s26, 0
      %p131 = por %p129, %p130
      %p132 = scmp.ne.s32.totalorder %s120, %s121
      %p133 = scmp.eq.s32.totalorder %s27, 1
      %p134 = por %p132, %p133
      %p136 = scmp.ne.s32.totalorder %s121, %s135
      %p137 = scmp.eq.s32.totalorder %s27, 0
      %p138 = por %p136, %p137
      %s140 = sadd.s32 %s139, 1
      %p143 = scmp.eq.s32.totalorder %s21, 1
      %p144 = scmp.ne.s32.totalorder %s139, %s141
      %p145 = scmp.eq.s32.totalorder %s21, 0
      %p146 = por %p144, %p145
      %p147 = scmp.ne.s32.totalorder %s139, %s141
      %p148 = scmp.eq.s32.totalorder %s26, 1
      %p149 = por %p147, %p148
      %p150 = scmp.ne.s32.totalorder %s141, %s142
      %p151 = scmp.eq.s32.totalorder %s26, 0
      %p152 = por %p150, %p151
      %p153 = scmp.ne.s32.totalorder %s141, %s142
      %p154 = scmp.eq.s32.totalorder %s27, 1
      %p155 = por %p153, %p154
      %p157 = scmp.ne.s32.totalorder %s142, %s156
      %p158 = scmp.eq.s32.totalorder %s27, 0
      %p159 = por %p157, %p158
      %s161 = sadd.s32 %s160, 1
      %p164 = scmp.eq.s32.totalorder %s21, 1
      %p165 = scmp.ne.s32.totalorder %s160, %s162
      %p166 = scmp.eq.s32.totalorder %s21, 0
      %p167 = por %p165, %p166
      %p168 = scmp.ne.s32.totalorder %s160, %s162
      %p169 = scmp.eq.s32.totalorder %s26, 1
      %p170 = por %p168, %p169
      %p171 = scmp.ne.s32.totalorder %s162, %s163
      %p172 = scmp.eq.s32.totalorder %s26, 0
      %p173 = por %p171, %p172
      %p174 = scmp.ne.s32.totalorder %s162, %s163
      %p175 = scmp.eq.s32.totalorder %s27, 1
      %p176 = por %p174, %p175
      %p178 = scmp.ne.s32.totalorder %s163, %s177
      %p179 = scmp.eq.s32.totalorder %s27, 0
      %p180 = por %p178, %p179
      %s182 = sadd.s32 %s181, 1
      %p185 = scmp.eq.s32.totalorder %s21, 1
      %p186 = scmp.ne.s32.totalorder %s181, %s183
      %p187 = scmp.eq.s32.totalorder %s21, 0
      %p188 = por %p186, %p187
      %p189 = scmp.ne.s32.totalorder %s181, %s183
      %p190 = scmp.eq.s32.totalorder %s26, 1
      %p191 = por %p189, %p190
      %p192 = scmp.ne.s32.totalorder %s183, %s184
      %p193 = scmp.eq.s32.totalorder %s26, 0
      %p194 = por %p192, %p193
      %p195 = scmp.ne.s32.totalorder %s183, %s184
      %p196 = scmp.eq.s32.totalorder %s27, 1
      %p197 = por %p195, %p196
      %p199 = scmp.ne.s32.totalorder %s184, %s198
      %p200 = scmp.eq.s32.totalorder %s27, 0
      %p201 = por %p199, %p200
      %s203 = sadd.s32 %s202, 1
      %p206 = scmp.eq.s32.totalorder %s21, 1
      %p207 = scmp.ne.s32.totalorder %s202, %s204
      %p208 = scmp.eq.s32.totalorder %s21, 0
      %p209 = por %p207, %p208
      %p210 = scmp.ne.s32.totalorder %s202, %s204
      %p211 = scmp.eq.s32.totalorder %s26, 1
      %p212 = por %p210, %p211
      %p213 = scmp.ne.s32.totalorder %s204, %s205
      %p214 = scmp.eq.s32.totalorder %s26, 0
      %p215 = por %p213, %p214
      %p216 = scmp.ne.s32.totalorder %s204, %s205
      %p217 = scmp.eq.s32.totalorder %s27, 1
      %p218 = por %p216, %p217
      %p220 = scmp.ne.s32.totalorder %s205, %s219
      %p221 = scmp.eq.s32.totalorder %s27, 0
      %p222 = por %p220, %p221
      %s224 = sadd.s32 %s223, 1
      %p227 = scmp.eq.s32.totalorder %s21, 1
      %p228 = scmp.ne.s32.totalorder %s223, %s225
      %p229 = scmp.eq.s32.totalorder %s21, 0
      %p230 = por %p228, %p229
      %p231 = scmp.ne.s32.totalorder %s223, %s225
      %p232 = scmp.eq.s32.totalorder %s26, 1
      %p233 = por %p231, %p232
      %p234 = scmp.ne.s32.totalorder %s225, %s226
      %p235 = scmp.eq.s32.totalorder %s26, 0
      %p236 = por %p234, %p235
      %p237 = scmp.ne.s32.totalorder %s225, %s226
      %p238 = scmp.eq.s32.totalorder %s27, 1
      %p239 = por %p237, %p238
      %p241 = scmp.ne.s32.totalorder %s226, %s240
      %p242 = scmp.eq.s32.totalorder %s27, 0
      %p243 = por %p241, %p242
      %s245 = sadd.s32 %s244, 1
      %p248 = scmp.eq.s32.totalorder %s21, 1
      %p249 = scmp.ne.s32.totalorder %s244, %s246
      %p250 = scmp.eq.s32.totalorder %s21, 0
      %p251 = por %p249, %p250
      %p252 = scmp.ne.s32.totalorder %s244, %s246
      %p253 = scmp.eq.s32.totalorder %s26, 1
      %p254 = por %p252, %p253
      %p255 = scmp.ne.s32.totalorder %s246, %s247
      %p256 = scmp.eq.s32.totalorder %s26, 0
      %p257 = por %p255, %p256
      %p258 = scmp.ne.s32.totalorder %s246, %s247
      %p259 = scmp.eq.s32.totalorder %s27, 1
      %p260 = por %p258, %p259
      %p262 = scmp.ne.s32.totalorder %s247, %s261
      %p263 = scmp.eq.s32.totalorder %s27, 0
      %p264 = por %p262, %p263
      %s266 = sadd.s32 %s265, 1
      %p269 = scmp.eq.s32.totalorder %s21, 1
      %p270 = scmp.ne.s32.totalorder %s265, %s267
      %p271 = scmp.eq.s32.totalorder %s21, 0
      %p272 = por %p270, %p271
      %p273 = scmp.ne.s32.totalorder %s265, %s267
      %p274 = scmp.eq.s32.totalorder %s26, 1
      %p275 = por %p273, %p274
      %p276 = scmp.ne.s32.totalorder %s267, %s268
      %p277 = scmp.eq.s32.totalorder %s26, 0
      %p278 = por %p276, %p277
      %p279 = scmp.ne.s32.totalorder %s267, %s268
      %p280 = scmp.eq.s32.totalorder %s27, 1
      %p281 = por %p279, %p280
      %p283 = scmp.ne.s32.totalorder %s268, %s282
      %p284 = scmp.eq.s32.totalorder %s27, 0
      %p285 = por %p283, %p284
      %s286 = ssub.s32 %s21, %s28
      %p287 = scmp.eq.s32.totalorder %s286, 0
      %s289 = sadd.s32 %s288, 1
      %s290 = scalar_select %p287, %s288, %s289
      %p293 = pneg %p287
      %p294 = scmp.eq.s32.totalorder %s21, 1
      %p295 = por %p293, %p294
      %p296 = scmp.ne.s32.totalorder %s288, %s291
      %p297 = scmp.eq.s32.totalorder %s21, 0
      %p298 = por %p296, %p297
      %p299 = scmp.ne.s32.totalorder %s288, %s291
      %p300 = scmp.eq.s32.totalorder %s26, 1
      %p301 = por %p299, %p300
      %p302 = scmp.ne.s32.totalorder %s291, %s292
      %p303 = scmp.eq.s32.totalorder %s26, 0
      %p304 = por %p302, %p303
      %p305 = scmp.ne.s32.totalorder %s291, %s292
      %p306 = scmp.eq.s32.totalorder %s27, 1
      %p307 = por %p305, %p306
      %p309 = scmp.ne.s32.totalorder %s292, %s308
      %p310 = scmp.eq.s32.totalorder %s27, 0
      %p311 = por %p309, %p310
      %p312 = scmp.le.s32.totalorder 1, %s21
      %p313 = scmp.lt.s32.totalorder %s21, 3
      %p314 = pnand %p312, %p313
      %p315 = pneg %p314
      // Predicated region
      $region9: #{tpu_custom_call.1} parent=5 // pred_check
        _
      $region10: #{tpu_custom_call.1} parent=5 // pred_check_branch
        %317 = sbr.rel (%p314) target = $region12
      $region11: #{tpu_custom_call.1} parent=5 // pred_region
        %s318 = ssub.s32 %s21, 1
        // Predicated region
        $region13: #{tpu_custom_call.1} parent=11 // pred_check
          %p319 = pneg %p68
        $region14: #{tpu_custom_call.1} parent=11 // pred_check_branch
          %321 = sbr.rel (%p319) target = $region16
        $region15: #{tpu_custom_call.1} parent=11 // pred_region
          _
        $region16: #{tpu_custom_call.1} parent=11 // pred_fallthru
          _
        // Predicated region
        $region17: #{tpu_custom_call.1} parent=11 // pred_check
          %p322 = pneg %p89
        $region18: #{tpu_custom_call.1} parent=11 // pred_check_branch
          %324 = sbr.rel (%p322) target = $region20
        $region19: #{tpu_custom_call.1} parent=11 // pred_region
          _
        $region20: #{tpu_custom_call.1} parent=11 // pred_fallthru
          _
        // Predicated region
        $region21: #{tpu_custom_call.1} parent=11 // pred_check
          %p325 = pneg %p110
        $region22: #{tpu_custom_call.1} parent=11 // pred_check_branch
          %327 = sbr.rel (%p325) target = $region24
        $region23: #{tpu_custom_call.1} parent=11 // pred_region
          _
        $region24: #{tpu_custom_call.1} parent=11 // pred_fallthru
          _
        // Predicated region
        $region25: #{tpu_custom_call.1} parent=11 // pred_check
          %p328 = pneg %p131
        $region26: #{tpu_custom_call.1} parent=11 // pred_check_branch
          %330 = sbr.rel (%p328) target = $region28
        $region27: #{tpu_custom_call.1} parent=11 // pred_region
          _
        $region28: #{tpu_custom_call.1} parent=11 // pred_fallthru
          _
        // Predicated region
        $region29: #{tpu_custom_call.1} parent=11 // pred_check
          %p331 = pneg %p152
        $region30: #{tpu_custom_call.1} parent=11 // pred_check_branch
          %333 = sbr.rel (%p331) target = $region32
        $region31: #{tpu_custom_call.1} parent=11 // pred_region
          _
        $region32: #{tpu_custom_call.1} parent=11 // pred_fallthru
          _
        // Predicated region
        $region33: #{tpu_custom_call.1} parent=11 // pred_check
          %p334 = pneg %p173
        $region34: #{tpu_custom_call.1} parent=11 // pred_check_branch
          %336 = sbr.rel (%p334) target = $region36
        $region35: #{tpu_custom_call.1} parent=11 // pred_region
          _
        $region36: #{tpu_custom_call.1} parent=11 // pred_fallthru
          _
        // Predicated region
        $region37: #{tpu_custom_call.1} parent=11 // pred_check
          %p337 = pneg %p194
        $region38: #{tpu_custom_call.1} parent=11 // pred_check_branch
          %339 = sbr.rel (%p337) target = $region40
        $region39: #{tpu_custom_call.1} parent=11 // pred_region
          _
        $region40: #{tpu_custom_call.1} parent=11 // pred_fallthru
          _
        // Predicated region
        $region41: #{tpu_custom_call.1} parent=11 // pred_check
          %p340 = pneg %p215
        $region42: #{tpu_custom_call.1} parent=11 // pred_check_branch
          %342 = sbr.rel (%p340) target = $region44
        $region43: #{tpu_custom_call.1} parent=11 // pred_region
          _
        $region44: #{tpu_custom_call.1} parent=11 // pred_fallthru
          _
        // Predicated region
        $region45: #{tpu_custom_call.1} parent=11 // pred_check
          %p343 = pneg %p236
        $region46: #{tpu_custom_call.1} parent=11 // pred_check_branch
          %345 = sbr.rel (%p343) target = $region48
        $region47: #{tpu_custom_call.1} parent=11 // pred_region
          _
        $region48: #{tpu_custom_call.1} parent=11 // pred_fallthru
          _
        // Predicated region
        $region49: #{tpu_custom_call.1} parent=11 // pred_check
          %p346 = pneg %p257
        $region50: #{tpu_custom_call.1} parent=11 // pred_check_branch
          %348 = sbr.rel (%p346) target = $region52
        $region51: #{tpu_custom_call.1} parent=11 // pred_region
          _
        $region52: #{tpu_custom_call.1} parent=11 // pred_fallthru
          _
        // Predicated region
        $region53: #{tpu_custom_call.1} parent=11 // pred_check
          %p349 = pneg %p278
        $region54: #{tpu_custom_call.1} parent=11 // pred_check_branch
          %351 = sbr.rel (%p349) target = $region56
        $region55: #{tpu_custom_call.1} parent=11 // pred_region
          _
        $region56: #{tpu_custom_call.1} parent=11 // pred_fallthru
          _
      $region12: #{tpu_custom_call.1} parent=5 // pred_fallthru
        _
      %p352 = scmp.lt.s32.totalorder %s21, 2
      // Predicated region
      $region57: #{tpu_custom_call.1} parent=5 // pred_check
        %p353 = pneg %p352
      $region58: #{tpu_custom_call.1} parent=5 // pred_check_branch
        %355 = sbr.rel (%p353) target = $region60
      $region59: #{tpu_custom_call.1} parent=5 // pred_region
        // Predicated region
        $region61: #{tpu_custom_call.1} parent=59 // pred_check
          %p356 = pneg %p41
        $region62: #{tpu_custom_call.1} parent=59 // pred_check_branch
          %358 = sbr.rel (%p356) target = $region64
        $region63: #{tpu_custom_call.1} parent=59 // pred_region
          %s359 = smul.u32 4, %s21
          %p360 = scmp.lt.s32.totalorder %s359, 7
          %s361 = scalar_select %p360, %s359, 7
          %s362 = smul.addr %s361, 19
          %s363 = smul.addr %s362, 8
          %s364 = scalar_lea.vmem %s0, %s363
          %s365 = smul.u32 4, %s21
        $region64: #{tpu_custom_call.1} parent=59 // pred_fallthru
          _
      $region60: #{tpu_custom_call.1} parent=5 // pred_fallthru
        _
      %p366 = scmp.le.s32.totalorder 1, %s21
      %p367 = scmp.lt.s32.totalorder %s21, 3
      %p368 = pnand %p366, %p367
      %p369 = pneg %p368
      // Predicated region
      $region65: #{tpu_custom_call.1} parent=5 // pred_check
        _
      $region66: #{tpu_custom_call.1} parent=5 // pred_check_branch
        %371 = sbr.rel (%p368) target = $region68
      $region67: #{tpu_custom_call.1} parent=5 // pred_region
        %s372 = ssub.s32 %s21, 1
        %s373 = smul.u32 4, %s26
        %p374 = scmp.lt.s32.totalorder %s373, 7
        %s375 = scalar_select %p374, %s373, 7
        %s376 = smul.addr %s375, 19
        %s377 = smul.addr %s376, 8
        %s378 = scalar_lea.vmem %s0, %s377
        %p379 = pneg %p47
        %p380 = pneg %p44
        %p381 = pneg %p68
        %p382 = pneg %p65
        %p383 = pneg %p89
        %p384 = pneg %p86
        %p385 = pneg %p110
        %p386 = pneg %p107
        %p387 = pneg %p131
        %p388 = pneg %p128
        %p389 = pneg %p152
        %p390 = pneg %p149
        %p391 = pneg %p173
        %p392 = pneg %p170
        %p393 = pneg %p194
        %p394 = pneg %p191
        %p395 = pneg %p215
        %p396 = pneg %p212
        %p397 = pneg %p236
        %p398 = pneg %p233
        %p399 = pneg %p257
        %p400 = pneg %p254
        %p401 = pneg %p278
        %p402 = pneg %p275
        %p403 = pneg %p304
        %p404 = pneg %p301
        %s405 = sand.u32 %s291, 1
        %s406 = scalar_lea.sflag [#allocation4], %s405
        %s407 = sand.u32 %s291, 1
        %s408 = smul.addr %s407, 4
        %s409 = scalar_lea.vmem [#allocation3], %s408
        %s410 = smul.u32 4, %s26
        %p411 = scmp.lt.s32.totalorder %s410, 7
        %s412 = scalar_select %p411, %s410, 7
        %s413 = smul.addr %s412, 19
        %s414 = smul.addr %s413, 8
        %s415 = scalar_lea.vmem %s0, %s414
        %s416 = smul.u32 4, %s26
        %v417 = vld [vmem:[%s415] sm:$0xff]
        %v418 = vld [vmem:[%s415 + $0x8] sm:$0xff]
        %v419 = vld [vmem:[%s415 + $0x10] sm:$0xff]
        %v420 = vld [vmem:[%s415 + $0x18] sm:$0xff]
        %v421 = vld [vmem:[%s415 + $0x20] sm:$0xff]
        %v422 = vld [vmem:[%s415 + $0x28] sm:$0xff]
        %v423 = vld [vmem:[%s415 + $0x30] sm:$0xff]
        %v424 = vld [vmem:[%s415 + $0x38] sm:$0xff]
        %v425 = vld [vmem:[%s415 + $0x40] sm:$0xff]
        %v426 = vld [vmem:[%s415 + $0x48] sm:$0xff]
        %v427 = vld [vmem:[%s415 + $0x50] sm:$0xff]
        %v428 = vld [vmem:[%s415 + $0x58] sm:$0xff]
        %v429 = vld [vmem:[%s415 + $0x60] sm:$0xff]
        %v430 = vld [vmem:[%s415 + $0x68] sm:$0xff]
        %v431 = vld [vmem:[%s415 + $0x70] sm:$0xff]
        %v432 = vld [vmem:[%s415 + $0x78] sm:$0xff]
        %v433 = vld [vmem:[%s415 + $0x80] sm:$0xff]
        %v434 = vld [vmem:[%s415 + $0x88] sm:$0xff]
        %v435 = vld [vmem:[%s415 + $0x90] sm:$0x3f]
        %s436 = scalar_lea.vmem %s415, 152
        %v437 = vld [vmem:[%s436] sm:$0xff]
        %v438 = vld [vmem:[%s436 + $0x8] sm:$0xff]
        %v439 = vld [vmem:[%s436 + $0x10] sm:$0xff]
        %v440 = vld [vmem:[%s436 + $0x18] sm:$0xff]
        %v441 = vld [vmem:[%s436 + $0x20] sm:$0xff]
        %v442 = vld [vmem:[%s436 + $0x28] sm:$0xff]
        %v443 = vld [vmem:[%s436 + $0x30] sm:$0xff]
        %v444 = vld [vmem:[%s436 + $0x38] sm:$0xff]
        %v445 = vld [vmem:[%s436 + $0x40] sm:$0xff]
        %v446 = vld [vmem:[%s436 + $0x48] sm:$0xff]
        %v447 = vld [vmem:[%s436 + $0x50] sm:$0xff]
        %v448 = vld [vmem:[%s436 + $0x58] sm:$0xff]
        %v449 = vld [vmem:[%s436 + $0x60] sm:$0xff]
        %v450 = vld [vmem:[%s436 + $0x68] sm:$0xff]
        %v451 = vld [vmem:[%s436 + $0x70] sm:$0xff]
        %v452 = vld [vmem:[%s436 + $0x78] sm:$0xff]
        %v453 = vld [vmem:[%s436 + $0x80] sm:$0xff]
        %v454 = vld [vmem:[%s436 + $0x88] sm:$0xff]
        %v455 = vld [vmem:[%s436 + $0x90] sm:$0x3f]
        %s456 = scalar_lea.vmem %s415, 304
        %v457 = vld [vmem:[%s456] sm:$0xff]
        %v458 = vld [vmem:[%s456 + $0x8] sm:$0xff]
        %v459 = vld [vmem:[%s456 + $0x10] sm:$0xff]
        %v460 = vld [vmem:[%s456 + $0x18] sm:$0xff]
        %v461 = vld [vmem:[%s456 + $0x20] sm:$0xff]
        %v462 = vld [vmem:[%s456 + $0x28] sm:$0xff]
        %v463 = vld [vmem:[%s456 + $0x30] sm:$0xff]
        %v464 = vld [vmem:[%s456 + $0x38] sm:$0xff]
        %v465 = vld [vmem:[%s456 + $0x40] sm:$0xff]
        %v466 = vld [vmem:[%s456 + $0x48] sm:$0xff]
        %v467 = vld [vmem:[%s456 + $0x50] sm:$0xff]
        %v468 = vld [vmem:[%s456 + $0x58] sm:$0xff]
        %v469 = vld [vmem:[%s456 + $0x60] sm:$0xff]
        %v470 = vld [vmem:[%s456 + $0x68] sm:$0xff]
        %v471 = vld [vmem:[%s456 + $0x70] sm:$0xff]
        %v472 = vld [vmem:[%s456 + $0x78] sm:$0xff]
        %v473 = vld [vmem:[%s456 + $0x80] sm:$0xff]
        %v474 = vld [vmem:[%s456 + $0x88] sm:$0xff]
        %v475 = vld [vmem:[%s456 + $0x90] sm:$0x3f]
        %s476 = scalar_lea.vmem %s415, 456
        %v477 = vld [vmem:[%s476] sm:$0xff]
        %v478 = vld [vmem:[%s476 + $0x8] sm:$0xff]
        %v479 = vld [vmem:[%s476 + $0x10] sm:$0xff]
        %v480 = vld [vmem:[%s476 + $0x18] sm:$0xff]
        %v481 = vld [vmem:[%s476 + $0x20] sm:$0xff]
        %v482 = vld [vmem:[%s476 + $0x28] sm:$0xff]
        %v483 = vld [vmem:[%s476 + $0x30] sm:$0xff]
        %v484 = vld [vmem:[%s476 + $0x38] sm:$0xff]
        %v485 = vld [vmem:[%s476 + $0x40] sm:$0xff]
        %v486 = vld [vmem:[%s476 + $0x48] sm:$0xff]
        %v487 = vld [vmem:[%s476 + $0x50] sm:$0xff]
        %v488 = vld [vmem:[%s476 + $0x58] sm:$0xff]
        %v489 = vld [vmem:[%s476 + $0x60] sm:$0xff]
        %v490 = vld [vmem:[%s476 + $0x68] sm:$0xff]
        %v491 = vld [vmem:[%s476 + $0x70] sm:$0xff]
        %v492 = vld [vmem:[%s476 + $0x78] sm:$0xff]
        %v493 = vld [vmem:[%s476 + $0x80] sm:$0xff]
        %v494 = vld [vmem:[%s476 + $0x88] sm:$0xff]
        %v495 = vld [vmem:[%s476 + $0x90] sm:$0x3f]
        %vm515 = vcmask 1045504
        %v516 = vrot.slane %v437, 2
        %v517 = vrot.slane %v438, 2
        %v518 = vsel %vm515, %v516, %v517
        %v519 = vrot.slane %v439, 2
        %v520 = vsel %vm515, %v517, %v519
        %v521 = vrot.slane %v440, 2
        %v522 = vsel %vm515, %v519, %v521
        %v523 = vrot.slane %v441, 2
        %v524 = vsel %vm515, %v521, %v523
        %v525 = vrot.slane %v442, 2
        %v526 = vsel %vm515, %v523, %v525
        %v527 = vrot.slane %v443, 2
        %v528 = vsel %vm515, %v525, %v527
        %v529 = vrot.slane %v444, 2
        %v530 = vsel %vm515, %v527, %v529
        %v531 = vrot.slane %v445, 2
        %v532 = vsel %vm515, %v529, %v531
        %v533 = vrot.slane %v446, 2
        %v534 = vsel %vm515, %v531, %v533
        %v535 = vrot.slane %v447, 2
        %v536 = vsel %vm515, %v533, %v535
        %v537 = vrot.slane %v448, 2
        %v538 = vsel %vm515, %v535, %v537
        %v539 = vrot.slane %v449, 2
        %v540 = vsel %vm515, %v537, %v539
        %v541 = vrot.slane %v450, 2
        %v542 = vsel %vm515, %v539, %v541
        %v543 = vrot.slane %v451, 2
        %v544 = vsel %vm515, %v541, %v543
        %v545 = vrot.slane %v452, 2
        %v546 = vsel %vm515, %v543, %v545
        %v547 = vrot.slane %v453, 2
        %v548 = vsel %vm515, %v545, %v547
        %v549 = vrot.slane %v454, 2
        %v550 = vsel %vm515, %v547, %v549
        %v551 = vrot.slane %v455, 2
        %v552 = vsel %vm515, %v549, %v551
        %vm592 = vcmask 1043456
        %v593 = vrot.slane %v457, 4
        %v594 = vrot.slane %v458, 4
        %v595 = vsel %vm592, %v593, %v594
        %v596 = vrot.slane %v459, 4
        %v597 = vsel %vm592, %v594, %v596
        %v598 = vrot.slane %v460, 4
        %v599 = vsel %vm592, %v596, %v598
        %v600 = vrot.slane %v461, 4
        %v601 = vsel %vm592, %v598, %v600
        %v602 = vrot.slane %v462, 4
        %v603 = vsel %vm592, %v600, %v602
        %v604 = vrot.slane %v463, 4
        %v605 = vsel %vm592, %v602, %v604
        %v606 = vrot.slane %v464, 4
        %v607 = vsel %vm592, %v604, %v606
        %v608 = vrot.slane %v465, 4
        %v609 = vsel %vm592, %v606, %v608
        %v610 = vrot.slane %v466, 4
        %v611 = vsel %vm592, %v608, %v610
        %v612 = vrot.slane %v467, 4
        %v613 = vsel %vm592, %v610, %v612
        %v614 = vrot.slane %v468, 4
        %v615 = vsel %vm592, %v612, %v614
        %v616 = vrot.slane %v469, 4
        %v617 = vsel %vm592, %v614, %v616
        %v618 = vrot.slane %v470, 4
        %v619 = vsel %vm592, %v616, %v618
        %v620 = vrot.slane %v471, 4
        %v621 = vsel %vm592, %v618, %v620
        %v622 = vrot.slane %v472, 4
        %v623 = vsel %vm592, %v620, %v622
        %v624 = vrot.slane %v473, 4
        %v625 = vsel %vm592, %v622, %v624
        %v626 = vrot.slane %v474, 4
        %v627 = vsel %vm592, %v624, %v626
        %v628 = vrot.slane %v475, 4
        %v629 = vsel %vm592, %v626, %v628
        %vm669 = vcmask 1041408
        %v670 = vrot.slane %v477, 6
        %v671 = vrot.slane %v478, 6
        %v672 = vsel %vm669, %v670, %v671
        %v673 = vrot.slane %v479, 6
        %v674 = vsel %vm669, %v671, %v673
        %v675 = vrot.slane %v480, 6
        %v676 = vsel %vm669, %v673, %v675
        %v677 = vrot.slane %v481, 6
        %v678 = vsel %vm669, %v675, %v677
        %v679 = vrot.slane %v482, 6
        %v680 = vsel %vm669, %v677, %v679
        %v681 = vrot.slane %v483, 6
        %v682 = vsel %vm669, %v679, %v681
        %v683 = vrot.slane %v484, 6
        %v684 = vsel %vm669, %v681, %v683
        %v685 = vrot.slane %v485, 6
        %v686 = vsel %vm669, %v683, %v685
        %v687 = vrot.slane %v486, 6
        %v688 = vsel %vm669, %v685, %v687
        %v689 = vrot.slane %v487, 6
        %v690 = vsel %vm669, %v687, %v689
        %v691 = vrot.slane %v488, 6
        %v692 = vsel %vm669, %v689, %v691
        %v693 = vrot.slane %v489, 6
        %v694 = vsel %vm669, %v691, %v693
        %v695 = vrot.slane %v490, 6
        %v696 = vsel %vm669, %v693, %v695
        %v697 = vrot.slane %v491, 6
        %v698 = vsel %vm669, %v695, %v697
        %v699 = vrot.slane %v492, 6
        %v700 = vsel %vm669, %v697, %v699
        %v701 = vrot.slane %v493, 6
        %v702 = vsel %vm669, %v699, %v701
        %v703 = vrot.slane %v494, 6
        %v704 = vsel %vm669, %v701, %v703
        %v705 = vrot.slane %v495, 6
        %v706 = vsel %vm669, %v703, %v705
        %v726 = vsel %vm515, %v435, %v516
        %v727 = vsel %vm592, %v551, %v593
        %v728 = vsel %vm669, %v628, %v670
        %vm748 = vcmask 1046528
        %v749 = vrot.slane %v417, 1
        %v750 = vrot.slane %v418, 1
        %v751 = vsel %vm748, %v749, %v750
        %v752 = vrot.slane %v419, 1
        %v753 = vsel %vm748, %v750, %v752
        %v754 = vrot.slane %v420, 1
        %v755 = vsel %vm748, %v752, %v754
        %v756 = vrot.slane %v421, 1
        %v757 = vsel %vm748, %v754, %v756
        %v758 = vrot.slane %v422, 1
        %v759 = vsel %vm748, %v756, %v758
        %v760 = vrot.slane %v423, 1
        %v761 = vsel %vm748, %v758, %v760
        %v762 = vrot.slane %v424, 1
        %v763 = vsel %vm748, %v760, %v762
        %v764 = vrot.slane %v425, 1
        %v765 = vsel %vm748, %v762, %v764
        %v766 = vrot.slane %v426, 1
        %v767 = vsel %vm748, %v764, %v766
        %v768 = vrot.slane %v427, 1
        %v769 = vsel %vm748, %v766, %v768
        %v770 = vrot.slane %v428, 1
        %v771 = vsel %vm748, %v768, %v770
        %v772 = vrot.slane %v429, 1
        %v773 = vsel %vm748, %v770, %v772
        %v774 = vrot.slane %v430, 1
        %v775 = vsel %vm748, %v772, %v774
        %v776 = vrot.slane %v431, 1
        %v777 = vsel %vm748, %v774, %v776
        %v778 = vrot.slane %v432, 1
        %v779 = vsel %vm748, %v776, %v778
        %v780 = vrot.slane %v433, 1
        %v781 = vsel %vm748, %v778, %v780
        %v782 = vrot.slane %v434, 1
        %v783 = vsel %vm748, %v780, %v782
        %v784 = vrot.slane %v726, 1
        %v785 = vsel %vm748, %v782, %v784
        %786 = vrot.lane.b32.xlu0 %v751, 16
        %v787 = vpop.permute.xlu0 %786
        %788 = vrot.lane.b32.xlu0 %v753, 16
        %v789 = vpop.permute.xlu0 %788
        %790 = vrot.lane.b32.xlu0 %v755, 16
        %v791 = vpop.permute.xlu0 %790
        %792 = vrot.lane.b32.xlu0 %v757, 16
        %v793 = vpop.permute.xlu0 %792
        %794 = vrot.lane.b32.xlu0 %v759, 16
        %v795 = vpop.permute.xlu0 %794
        %796 = vrot.lane.b32.xlu0 %v761, 16
        %v797 = vpop.permute.xlu0 %796
        %798 = vrot.lane.b32.xlu0 %v763, 16
        %v799 = vpop.permute.xlu0 %798
        %800 = vrot.lane.b32.xlu0 %v765, 16
        %v801 = vpop.permute.xlu0 %800
        %802 = vrot.lane.b32.xlu0 %v767, 16
        %v803 = vpop.permute.xlu0 %802
        %804 = vrot.lane.b32.xlu0 %v769, 16
        %v805 = vpop.permute.xlu0 %804
        %806 = vrot.lane.b32.xlu0 %v771, 16
        %v807 = vpop.permute.xlu0 %806
        %808 = vrot.lane.b32.xlu0 %v773, 16
        %v809 = vpop.permute.xlu0 %808
        %810 = vrot.lane.b32.xlu0 %v775, 16
        %v811 = vpop.permute.xlu0 %810
        %812 = vrot.lane.b32.xlu0 %v777, 16
        %v813 = vpop.permute.xlu0 %812
        %814 = vrot.lane.b32.xlu0 %v779, 16
        %v815 = vpop.permute.xlu0 %814
        %816 = vrot.lane.b32.xlu0 %v781, 16
        %v817 = vpop.permute.xlu0 %816
        %818 = vrot.lane.b32.xlu0 %v783, 16
        %v819 = vpop.permute.xlu0 %818
        %820 = vrot.lane.b32.xlu0 %v785, 16
        %v821 = vpop.permute.xlu0 %820
        %v840 = vrot.slane %v417, 2
        %v841 = vrot.slane %v418, 2
        %v842 = vsel %vm515, %v840, %v841
        %v843 = vrot.slane %v419, 2
        %v844 = vsel %vm515, %v841, %v843
        %v845 = vrot.slane %v420, 2
        %v846 = vsel %vm515, %v843, %v845
        %v847 = vrot.slane %v421, 2
        %v848 = vsel %vm515, %v845, %v847
        %v849 = vrot.slane %v422, 2
        %v850 = vsel %vm515, %v847, %v849
        %v851 = vrot.slane %v423, 2
        %v852 = vsel %vm515, %v849, %v851
        %v853 = vrot.slane %v424, 2
        %v854 = vsel %vm515, %v851, %v853
        %v855 = vrot.slane %v425, 2
        %v856 = vsel %vm515, %v853, %v855
        %v857 = vrot.slane %v426, 2
        %v858 = vsel %vm515, %v855, %v857
        %v859 = vrot.slane %v427, 2
        %v860 = vsel %vm515, %v857, %v859
        %v861 = vrot.slane %v428, 2
        %v862 = vsel %vm515, %v859, %v861
        %v863 = vrot.slane %v429, 2
        %v864 = vsel %vm515, %v861, %v863
        %v865 = vrot.slane %v430, 2
        %v866 = vsel %vm515, %v863, %v865
        %v867 = vrot.slane %v431, 2
        %v868 = vsel %vm515, %v865, %v867
        %v869 = vrot.slane %v432, 2
        %v870 = vsel %vm515, %v867, %v869
        %v871 = vrot.slane %v433, 2
        %v872 = vsel %vm515, %v869, %v871
        %v873 = vrot.slane %v434, 2
        %v874 = vsel %vm515, %v871, %v873
        %v875 = vrot.slane %v726, 2
        %v876 = vsel %vm515, %v873, %v875
        %877 = vrot.lane.b32.xlu0 %v842, 32
        %v878 = vpop.permute.xlu0 %877
        %879 = vrot.lane.b32.xlu0 %v844, 32
        %v880 = vpop.permute.xlu0 %879
        %881 = vrot.lane.b32.xlu0 %v846, 32
        %v882 = vpop.permute.xlu0 %881
        %883 = vrot.lane.b32.xlu0 %v848, 32
        %v884 = vpop.permute.xlu0 %883
        %885 = vrot.lane.b32.xlu0 %v850, 32
        %v886 = vpop.permute.xlu0 %885
        %887 = vrot.lane.b32.xlu0 %v852, 32
        %v888 = vpop.permute.xlu0 %887
        %889 = vrot.lane.b32.xlu0 %v854, 32
        %v890 = vpop.permute.xlu0 %889
        %891 = vrot.lane.b32.xlu0 %v856, 32
        %v892 = vpop.permute.xlu0 %891
        %893 = vrot.lane.b32.xlu0 %v858, 32
        %v894 = vpop.permute.xlu0 %893
        %895 = vrot.lane.b32.xlu0 %v860, 32
        %v896 = vpop.permute.xlu0 %895
        %897 = vrot.lane.b32.xlu0 %v862, 32
        %v898 = vpop.permute.xlu0 %897
        %899 = vrot.lane.b32.xlu0 %v864, 32
        %v900 = vpop.permute.xlu0 %899
        %901 = vrot.lane.b32.xlu0 %v866, 32
        %v902 = vpop.permute.xlu0 %901
        %903 = vrot.lane.b32.xlu0 %v868, 32
        %v904 = vpop.permute.xlu0 %903
        %905 = vrot.lane.b32.xlu0 %v870, 32
        %v906 = vpop.permute.xlu0 %905
        %907 = vrot.lane.b32.xlu0 %v872, 32
        %v908 = vpop.permute.xlu0 %907
        %909 = vrot.lane.b32.xlu0 %v874, 32
        %v910 = vpop.permute.xlu0 %909
        %911 = vrot.lane.b32.xlu0 %v876, 32
        %v912 = vpop.permute.xlu0 %911
        %vm931 = vcmask 1044480
        %v932 = vrot.slane %v417, 3
        %v933 = vrot.slane %v418, 3
        %v934 = vsel %vm931, %v932, %v933
        %v935 = vrot.slane %v419, 3
        %v936 = vsel %vm931, %v933, %v935
        %v937 = vrot.slane %v420, 3
        %v938 = vsel %vm931, %v935, %v937
        %v939 = vrot.slane %v421, 3
        %v940 = vsel %vm931, %v937, %v939
        %v941 = vrot.slane %v422, 3
        %v942 = vsel %vm931, %v939, %v941
        %v943 = vrot.slane %v423, 3
        %v944 = vsel %vm931, %v941, %v943
        %v945 = vrot.slane %v424, 3
        %v946 = vsel %vm931, %v943, %v945
        %v947 = vrot.slane %v425, 3
        %v948 = vsel %vm931, %v945, %v947
        %v949 = vrot.slane %v426, 3
        %v950 = vsel %vm931, %v947, %v949
        %v951 = vrot.slane %v427, 3
        %v952 = vsel %vm931, %v949, %v951
        %v953 = vrot.slane %v428, 3
        %v954 = vsel %vm931, %v951, %v953
        %v955 = vrot.slane %v429, 3
        %v956 = vsel %vm931, %v953, %v955
        %v957 = vrot.slane %v430, 3
        %v958 = vsel %vm931, %v955, %v957
        %v959 = vrot.slane %v431, 3
        %v960 = vsel %vm931, %v957, %v959
        %v961 = vrot.slane %v432, 3
        %v962 = vsel %vm931, %v959, %v961
        %v963 = vrot.slane %v433, 3
        %v964 = vsel %vm931, %v961, %v963
        %v965 = vrot.slane %v434, 3
        %v966 = vsel %vm931, %v963, %v965
        %v967 = vrot.slane %v726, 3
        %v968 = vsel %vm931, %v965, %v967
        %969 = vrot.lane.b32.xlu0 %v934, 48
        %v970 = vpop.permute.xlu0 %969
        %971 = vrot.lane.b32.xlu0 %v936, 48
        %v972 = vpop.permute.xlu0 %971
        %973 = vrot.lane.b32.xlu0 %v938, 48
        %v974 = vpop.permute.xlu0 %973
        %975 = vrot.lane.b32.xlu0 %v940, 48
        %v976 = vpop.permute.xlu0 %975
        %977 = vrot.lane.b32.xlu0 %v942, 48
        %v978 = vpop.permute.xlu0 %977
        %979 = vrot.lane.b32.xlu0 %v944, 48
        %v980 = vpop.permute.xlu0 %979
        %981 = vrot.lane.b32.xlu0 %v946, 48
        %v982 = vpop.permute.xlu0 %981
        %983 = vrot.lane.b32.xlu0 %v948, 48
        %v984 = vpop.permute.xlu0 %983
        %985 = vrot.lane.b32.xlu0 %v950, 48
        %v986 = vpop.permute.xlu0 %985
        %987 = vrot.lane.b32.xlu0 %v952, 48
        %v988 = vpop.permute.xlu0 %987
        %989 = vrot.lane.b32.xlu0 %v954, 48
        %v990 = vpop.permute.xlu0 %989
        %991 = vrot.lane.b32.xlu0 %v956, 48
        %v992 = vpop.permute.xlu0 %991
        %993 = vrot.lane.b32.xlu0 %v958, 48
        %v994 = vpop.permute.xlu0 %993
        %995 = vrot.lane.b32.xlu0 %v960, 48
        %v996 = vpop.permute.xlu0 %995
        %997 = vrot.lane.b32.xlu0 %v962, 48
        %v998 = vpop.permute.xlu0 %997
        %999 = vrot.lane.b32.xlu0 %v964, 48
        %v1000 = vpop.permute.xlu0 %999
        %1001 = vrot.lane.b32.xlu0 %v966, 48
        %v1002 = vpop.permute.xlu0 %1001
        %1003 = vrot.lane.b32.xlu0 %v968, 48
        %v1004 = vpop.permute.xlu0 %1003
        %v1023 = vrot.slane %v417, 4
        %v1024 = vrot.slane %v418, 4
        %v1025 = vsel %vm592, %v1023, %v1024
        %v1026 = vrot.slane %v419, 4
        %v1027 = vsel %vm592, %v1024, %v1026
        %v1028 = vrot.slane %v420, 4
        %v1029 = vsel %vm592, %v1026, %v1028
        %v1030 = vrot.slane %v421, 4
        %v1031 = vsel %vm592, %v1028, %v1030
        %v1032 = vrot.slane %v422, 4
        %v1033 = vsel %vm592, %v1030, %v1032
        %v1034 = vrot.slane %v423, 4
        %v1035 = vsel %vm592, %v1032, %v1034
        %v1036 = vrot.slane %v424, 4
        %v1037 = vsel %vm592, %v1034, %v1036
        %v1038 = vrot.slane %v425, 4
        %v1039 = vsel %vm592, %v1036, %v1038
        %v1040 = vrot.slane %v426, 4
        %v1041 = vsel %vm592, %v1038, %v1040
        %v1042 = vrot.slane %v427, 4
        %v1043 = vsel %vm592, %v1040, %v1042
        %v1044 = vrot.slane %v428, 4
        %v1045 = vsel %vm592, %v1042, %v1044
        %v1046 = vrot.slane %v429, 4
        %v1047 = vsel %vm592, %v1044, %v1046
        %v1048 = vrot.slane %v430, 4
        %v1049 = vsel %vm592, %v1046, %v1048
        %v1050 = vrot.slane %v431, 4
        %v1051 = vsel %vm592, %v1048, %v1050
        %v1052 = vrot.slane %v432, 4
        %v1053 = vsel %vm592, %v1050, %v1052
        %v1054 = vrot.slane %v433, 4
        %v1055 = vsel %vm592, %v1052, %v1054
        %v1056 = vrot.slane %v434, 4
        %v1057 = vsel %vm592, %v1054, %v1056
        %v1058 = vrot.slane %v726, 4
        %v1059 = vsel %vm592, %v1056, %v1058
        %1060 = vrot.lane.b32.xlu0 %v1025, 64
        %v1061 = vpop.permute.xlu0 %1060
        %1062 = vrot.lane.b32.xlu0 %v1027, 64
        %v1063 = vpop.permute.xlu0 %1062
        %1064 = vrot.lane.b32.xlu0 %v1029, 64
        %v1065 = vpop.permute.xlu0 %1064
        %1066 = vrot.lane.b32.xlu0 %v1031, 64
        %v1067 = vpop.permute.xlu0 %1066
        %1068 = vrot.lane.b32.xlu0 %v1033, 64
        %v1069 = vpop.permute.xlu0 %1068
        %1070 = vrot.lane.b32.xlu0 %v1035, 64
        %v1071 = vpop.permute.xlu0 %1070
        %1072 = vrot.lane.b32.xlu0 %v1037, 64
        %v1073 = vpop.permute.xlu0 %1072
        %1074 = vrot.lane.b32.xlu0 %v1039, 64
        %v1075 = vpop.permute.xlu0 %1074
        %1076 = vrot.lane.b32.xlu0 %v1041, 64
        %v1077 = vpop.permute.xlu0 %1076
        %1078 = vrot.lane.b32.xlu0 %v1043, 64
        %v1079 = vpop.permute.xlu0 %1078
        %1080 = vrot.lane.b32.xlu0 %v1045, 64
        %v1081 = vpop.permute.xlu0 %1080
        %1082 = vrot.lane.b32.xlu0 %v1047, 64
        %v1083 = vpop.permute.xlu0 %1082
        %1084 = vrot.lane.b32.xlu0 %v1049, 64
        %v1085 = vpop.permute.xlu0 %1084
        %1086 = vrot.lane.b32.xlu0 %v1051, 64
        %v1087 = vpop.permute.xlu0 %1086
        %1088 = vrot.lane.b32.xlu0 %v1053, 64
        %v1089 = vpop.permute.xlu0 %1088
        %1090 = vrot.lane.b32.xlu0 %v1055, 64
        %v1091 = vpop.permute.xlu0 %1090
        %1092 = vrot.lane.b32.xlu0 %v1057, 64
        %v1093 = vpop.permute.xlu0 %1092
        %1094 = vrot.lane.b32.xlu0 %v1059, 64
        %v1095 = vpop.permute.xlu0 %1094
        %vm1114 = vcmask 1042432
        %v1115 = vrot.slane %v417, 5
        %v1116 = vrot.slane %v418, 5
        %v1117 = vsel %vm1114, %v1115, %v1116
        %v1118 = vrot.slane %v419, 5
        %v1119 = vsel %vm1114, %v1116, %v1118
        %v1120 = vrot.slane %v420, 5
        %v1121 = vsel %vm1114, %v1118, %v1120
        %v1122 = vrot.slane %v421, 5
        %v1123 = vsel %vm1114, %v1120, %v1122
        %v1124 = vrot.slane %v422, 5
        %v1125 = vsel %vm1114, %v1122, %v1124
        %v1126 = vrot.slane %v423, 5
        %v1127 = vsel %vm1114, %v1124, %v1126
        %v1128 = vrot.slane %v424, 5
        %v1129 = vsel %vm1114, %v1126, %v1128
        %v1130 = vrot.slane %v425, 5
        %v1131 = vsel %vm1114, %v1128, %v1130
        %v1132 = vrot.slane %v426, 5
        %v1133 = vsel %vm1114, %v1130, %v1132
        %v1134 = vrot.slane %v427, 5
        %v1135 = vsel %vm1114, %v1132, %v1134
        %v1136 = vrot.slane %v428, 5
        %v1137 = vsel %vm1114, %v1134, %v1136
        %v1138 = vrot.slane %v429, 5
        %v1139 = vsel %vm1114, %v1136, %v1138
        %v1140 = vrot.slane %v430, 5
        %v1141 = vsel %vm1114, %v1138, %v1140
        %v1142 = vrot.slane %v431, 5
        %v1143 = vsel %vm1114, %v1140, %v1142
        %v1144 = vrot.slane %v432, 5
        %v1145 = vsel %vm1114, %v1142, %v1144
        %v1146 = vrot.slane %v433, 5
        %v1147 = vsel %vm1114, %v1144, %v1146
        %v1148 = vrot.slane %v434, 5
        %v1149 = vsel %vm1114, %v1146, %v1148
        %v1150 = vrot.slane %v726, 5
        %v1151 = vsel %vm1114, %v1148, %v1150
        %1152 = vrot.lane.b32.xlu0 %v1117, 80
        %v1153 = vpop.permute.xlu0 %1152
        %1154 = vrot.lane.b32.xlu0 %v1119, 80
        %v1155 = vpop.permute.xlu0 %1154
        %1156 = vrot.lane.b32.xlu0 %v1121, 80
        %v1157 = vpop.permute.xlu0 %1156
        %1158 = vrot.lane.b32.xlu0 %v1123, 80
        %v1159 = vpop.permute.xlu0 %1158
        %1160 = vrot.lane.b32.xlu0 %v1125, 80
        %v1161 = vpop.permute.xlu0 %1160
        %1162 = vrot.lane.b32.xlu0 %v1127, 80
        %v1163 = vpop.permute.xlu0 %1162
        %1164 = vrot.lane.b32.xlu0 %v1129, 80
        %v1165 = vpop.permute.xlu0 %1164
        %1166 = vrot.lane.b32.xlu0 %v1131, 80
        %v1167 = vpop.permute.xlu0 %1166
        %1168 = vrot.lane.b32.xlu0 %v1133, 80
        %v1169 = vpop.permute.xlu0 %1168
        %1170 = vrot.lane.b32.xlu0 %v1135, 80
        %v1171 = vpop.permute.xlu0 %1170
        %1172 = vrot.lane.b32.xlu0 %v1137, 80
        %v1173 = vpop.permute.xlu0 %1172
        %1174 = vrot.lane.b32.xlu0 %v1139, 80
        %v1175 = vpop.permute.xlu0 %1174
        %1176 = vrot.lane.b32.xlu0 %v1141, 80
        %v1177 = vpop.permute.xlu0 %1176
        %1178 = vrot.lane.b32.xlu0 %v1143, 80
        %v1179 = vpop.permute.xlu0 %1178
        %1180 = vrot.lane.b32.xlu0 %v1145, 80
        %v1181 = vpop.permute.xlu0 %1180
        %1182 = vrot.lane.b32.xlu0 %v1147, 80
        %v1183 = vpop.permute.xlu0 %1182
        %1184 = vrot.lane.b32.xlu0 %v1149, 80
        %v1185 = vpop.permute.xlu0 %1184
        %1186 = vrot.lane.b32.xlu0 %v1151, 80
        %v1187 = vpop.permute.xlu0 %1186
        %v1206 = vrot.slane %v417, 6
        %v1207 = vrot.slane %v418, 6
        %v1208 = vsel %vm669, %v1206, %v1207
        %v1209 = vrot.slane %v419, 6
        %v1210 = vsel %vm669, %v1207, %v1209
        %v1211 = vrot.slane %v420, 6
        %v1212 = vsel %vm669, %v1209, %v1211
        %v1213 = vrot.slane %v421, 6
        %v1214 = vsel %vm669, %v1211, %v1213
        %v1215 = vrot.slane %v422, 6
        %v1216 = vsel %vm669, %v1213, %v1215
        %v1217 = vrot.slane %v423, 6
        %v1218 = vsel %vm669, %v1215, %v1217
        %v1219 = vrot.slane %v424, 6
        %v1220 = vsel %vm669, %v1217, %v1219
        %v1221 = vrot.slane %v425, 6
        %v1222 = vsel %vm669, %v1219, %v1221
        %v1223 = vrot.slane %v426, 6
        %v1224 = vsel %vm669, %v1221, %v1223
        %v1225 = vrot.slane %v427, 6
        %v1226 = vsel %vm669, %v1223, %v1225
        %v1227 = vrot.slane %v428, 6
        %v1228 = vsel %vm669, %v1225, %v1227
        %v1229 = vrot.slane %v429, 6
        %v1230 = vsel %vm669, %v1227, %v1229
        %v1231 = vrot.slane %v430, 6
        %v1232 = vsel %vm669, %v1229, %v1231
        %v1233 = vrot.slane %v431, 6
        %v1234 = vsel %vm669, %v1231, %v1233
        %v1235 = vrot.slane %v432, 6
        %v1236 = vsel %vm669, %v1233, %v1235
        %v1237 = vrot.slane %v433, 6
        %v1238 = vsel %vm669, %v1235, %v1237
        %v1239 = vrot.slane %v434, 6
        %v1240 = vsel %vm669, %v1237, %v1239
        %v1241 = vrot.slane %v726, 6
        %v1242 = vsel %vm669, %v1239, %v1241
        %1243 = vrot.lane.b32.xlu0 %v1208, 96
        %v1244 = vpop.permute.xlu0 %1243
        %1245 = vrot.lane.b32.xlu0 %v1210, 96
        %v1246 = vpop.permute.xlu0 %1245
        %1247 = vrot.lane.b32.xlu0 %v1212, 96
        %v1248 = vpop.permute.xlu0 %1247
        %1249 = vrot.lane.b32.xlu0 %v1214, 96
        %v1250 = vpop.permute.xlu0 %1249
        %1251 = vrot.lane.b32.xlu0 %v1216, 96
        %v1252 = vpop.permute.xlu0 %1251
        %1253 = vrot.lane.b32.xlu0 %v1218, 96
        %v1254 = vpop.permute.xlu0 %1253
        %1255 = vrot.lane.b32.xlu0 %v1220, 96
        %v1256 = vpop.permute.xlu0 %1255
        %1257 = vrot.lane.b32.xlu0 %v1222, 96
        %v1258 = vpop.permute.xlu0 %1257
        %1259 = vrot.lane.b32.xlu0 %v1224, 96
        %v1260 = vpop.permute.xlu0 %1259
        %1261 = vrot.lane.b32.xlu0 %v1226, 96
        %v1262 = vpop.permute.xlu0 %1261
        %1263 = vrot.lane.b32.xlu0 %v1228, 96
        %v1264 = vpop.permute.xlu0 %1263
        %1265 = vrot.lane.b32.xlu0 %v1230, 96
        %v1266 = vpop.permute.xlu0 %1265
        %1267 = vrot.lane.b32.xlu0 %v1232, 96
        %v1268 = vpop.permute.xlu0 %1267
        %1269 = vrot.lane.b32.xlu0 %v1234, 96
        %v1270 = vpop.permute.xlu0 %1269
        %1271 = vrot.lane.b32.xlu0 %v1236, 96
        %v1272 = vpop.permute.xlu0 %1271
        %1273 = vrot.lane.b32.xlu0 %v1238, 96
        %v1274 = vpop.permute.xlu0 %1273
        %1275 = vrot.lane.b32.xlu0 %v1240, 96
        %v1276 = vpop.permute.xlu0 %1275
        %1277 = vrot.lane.b32.xlu0 %v1242, 96
        %v1278 = vpop.permute.xlu0 %1277
        %vm1297 = vcmask 130048
        %v1298 = vsel %vm1297, %v417, %v787
        %v1299 = vsel %vm1297, %v418, %v789
        %v1300 = vsel %vm1297, %v419, %v791
        %v1301 = vsel %vm1297, %v420, %v793
        %v1302 = vsel %vm1297, %v421, %v795
        %v1303 = vsel %vm1297, %v422, %v797
        %v1304 = vsel %vm1297, %v423, %v799
        %v1305 = vsel %vm1297, %v424, %v801
        %v1306 = vsel %vm1297, %v425, %v803
        %v1307 = vsel %vm1297, %v426, %v805
        %v1308 = vsel %vm1297, %v427, %v807
        %v1309 = vsel %vm1297, %v428, %v809
        %v1310 = vsel %vm1297, %v429, %v811
        %v1311 = vsel %vm1297, %v430, %v813
        %v1312 = vsel %vm1297, %v431, %v815
        %v1313 = vsel %vm1297, %v432, %v817
        %v1314 = vsel %vm1297, %v433, %v819
        %v1315 = vsel %vm1297, %v434, %v821
        %vm1316 = vcmask 261120
        %v1317 = vsel %vm1316, %v1298, %v878
        %v1318 = vsel %vm1316, %v1299, %v880
        %v1319 = vsel %vm1316, %v1300, %v882
        %v1320 = vsel %vm1316, %v1301, %v884
        %v1321 = vsel %vm1316, %v1302, %v886
        %v1322 = vsel %vm1316, %v1303, %v888
        %v1323 = vsel %vm1316, %v1304, %v890
        %v1324 = vsel %vm1316, %v1305, %v892
        %v1325 = vsel %vm1316, %v1306, %v894
        %v1326 = vsel %vm1316, %v1307, %v896
        %v1327 = vsel %vm1316, %v1308, %v898
        %v1328 = vsel %vm1316, %v1309, %v900
        %v1329 = vsel %vm1316, %v1310, %v902
        %v1330 = vsel %vm1316, %v1311, %v904
        %v1331 = vsel %vm1316, %v1312, %v906
        %v1332 = vsel %vm1316, %v1313, %v908
        %v1333 = vsel %vm1316, %v1314, %v910
        %v1334 = vsel %vm1316, %v1315, %v912
        %vm1335 = vcmask 392192
        %v1336 = vsel %vm1335, %v1317, %v970
        %v1337 = vsel %vm1335, %v1318, %v972
        %v1338 = vsel %vm1335, %v1319, %v974
        %v1339 = vsel %vm1335, %v1320, %v976
        %v1340 = vsel %vm1335, %v1321, %v978
        %v1341 = vsel %vm1335, %v1322, %v980
        %v1342 = vsel %vm1335, %v1323, %v982
        %v1343 = vsel %vm1335, %v1324, %v984
        %v1344 = vsel %vm1335, %v1325, %v986
        %v1345 = vsel %vm1335, %v1326, %v988
        %v1346 = vsel %vm1335, %v1327, %v990
        %v1347 = vsel %vm1335, %v1328, %v992
        %v1348 = vsel %vm1335, %v1329, %v994
        %v1349 = vsel %vm1335, %v1330, %v996
        %v1350 = vsel %vm1335, %v1331, %v998
        %v1351 = vsel %vm1335, %v1332, %v1000
        %v1352 = vsel %vm1335, %v1333, %v1002
        %v1353 = vsel %vm1335, %v1334, %v1004
        %vm1354 = vcmask 523264
        %v1355 = vsel %vm1354, %v1336, %v1061
        %v1356 = vsel %vm1354, %v1337, %v1063
        %v1357 = vsel %vm1354, %v1338, %v1065
        %v1358 = vsel %vm1354, %v1339, %v1067
        %v1359 = vsel %vm1354, %v1340, %v1069
        %v1360 = vsel %vm1354, %v1341, %v1071
        %v1361 = vsel %vm1354, %v1342, %v1073
        %v1362 = vsel %vm1354, %v1343, %v1075
        %v1363 = vsel %vm1354, %v1344, %v1077
        %v1364 = vsel %vm1354, %v1345, %v1079
        %v1365 = vsel %vm1354, %v1346, %v1081
        %v1366 = vsel %vm1354, %v1347, %v1083
        %v1367 = vsel %vm1354, %v1348, %v1085
        %v1368 = vsel %vm1354, %v1349, %v1087
        %v1369 = vsel %vm1354, %v1350, %v1089
        %v1370 = vsel %vm1354, %v1351, %v1091
        %v1371 = vsel %vm1354, %v1352, %v1093
        %v1372 = vsel %vm1354, %v1353, %v1095
        %vm1373 = vcmask 654336
        %v1374 = vsel %vm1373, %v1355, %v1153
        %v1375 = vsel %vm1373, %v1356, %v1155
        %v1376 = vsel %vm1373, %v1357, %v1157
        %v1377 = vsel %vm1373, %v1358, %v1159
        %v1378 = vsel %vm1373, %v1359, %v1161
        %v1379 = vsel %vm1373, %v1360, %v1163
        %v1380 = vsel %vm1373, %v1361, %v1165
        %v1381 = vsel %vm1373, %v1362, %v1167
        %v1382 = vsel %vm1373, %v1363, %v1169
        %v1383 = vsel %vm1373, %v1364, %v1171
        %v1384 = vsel %vm1373, %v1365, %v1173
        %v1385 = vsel %vm1373, %v1366, %v1175
        %v1386 = vsel %vm1373, %v1367, %v1177
        %v1387 = vsel %vm1373, %v1368, %v1179
        %v1388 = vsel %vm1373, %v1369, %v1181
        %v1389 = vsel %vm1373, %v1370, %v1183
        %v1390 = vsel %vm1373, %v1371, %v1185
        %v1391 = vsel %vm1373, %v1372, %v1187
        %vm1392 = vcmask 785408
        %v1393 = vsel %vm1392, %v1374, %v1244
        %v1394 = vsel %vm1392, %v1375, %v1246
        %v1395 = vsel %vm1392, %v1376, %v1248
        %v1396 = vsel %vm1392, %v1377, %v1250
        %v1397 = vsel %vm1392, %v1378, %v1252
        %v1398 = vsel %vm1392, %v1379, %v1254
        %v1399 = vsel %vm1392, %v1380, %v1256
        %v1400 = vsel %vm1392, %v1381, %v1258
        %v1401 = vsel %vm1392, %v1382, %v1260
        %v1402 = vsel %vm1392, %v1383, %v1262
        %v1403 = vsel %vm1392, %v1384, %v1264
        %v1404 = vsel %vm1392, %v1385, %v1266
        %v1405 = vsel %vm1392, %v1386, %v1268
        %v1406 = vsel %vm1392, %v1387, %v1270
        %v1407 = vsel %vm1392, %v1388, %v1272
        %v1408 = vsel %vm1392, %v1389, %v1274
        %v1409 = vsel %vm1392, %v1390, %v1276
        %v1410 = vsel %vm1392, %v1391, %v1278
        %v1411 = vrot.slane %v518, 1
        %v1412 = vsel %vm748, %v784, %v1411
        %v1413 = vrot.slane %v520, 1
        %v1414 = vsel %vm748, %v1411, %v1413
        %v1415 = vrot.slane %v522, 1
        %v1416 = vsel %vm748, %v1413, %v1415
        %v1417 = vrot.slane %v524, 1
        %v1418 = vsel %vm748, %v1415, %v1417
        %v1419 = vrot.slane %v526, 1
        %v1420 = vsel %vm748, %v1417, %v1419
        %v1421 = vrot.slane %v528, 1
        %v1422 = vsel %vm748, %v1419, %v1421
        %v1423 = vrot.slane %v530, 1
        %v1424 = vsel %vm748, %v1421, %v1423
        %v1425 = vrot.slane %v532, 1
        %v1426 = vsel %vm748, %v1423, %v1425
        %v1427 = vrot.slane %v534, 1
        %v1428 = vsel %vm748, %v1425, %v1427
        %v1429 = vrot.slane %v536, 1
        %v1430 = vsel %vm748, %v1427, %v1429
        %v1431 = vrot.slane %v538, 1
        %v1432 = vsel %vm748, %v1429, %v1431
        %v1433 = vrot.slane %v540, 1
        %v1434 = vsel %vm748, %v1431, %v1433
        %v1435 = vrot.slane %v542, 1
        %v1436 = vsel %vm748, %v1433, %v1435
        %v1437 = vrot.slane %v544, 1
        %v1438 = vsel %vm748, %v1435, %v1437
        %v1439 = vrot.slane %v546, 1
        %v1440 = vsel %vm748, %v1437, %v1439
        %v1441 = vrot.slane %v548, 1
        %v1442 = vsel %vm748, %v1439, %v1441
        %v1443 = vrot.slane %v550, 1
        %v1444 = vsel %vm748, %v1441, %v1443
        %v1445 = vrot.slane %v552, 1
        %v1446 = vsel %vm748, %v1443, %v1445
        %1447 = vrot.lane.b32.xlu0 %v1412, 16
        %v1448 = vpop.permute.xlu0 %1447
        %1449 = vrot.lane.b32.xlu0 %v1414, 16
        %v1450 = vpop.permute.xlu0 %1449
        %1451 = vrot.lane.b32.xlu0 %v1416, 16
        %v1452 = vpop.permute.xlu0 %1451
        %1453 = vrot.lane.b32.xlu0 %v1418, 16
        %v1454 = vpop.permute.xlu0 %1453
        %1455 = vrot.lane.b32.xlu0 %v1420, 16
        %v1456 = vpop.permute.xlu0 %1455
        %1457 = vrot.lane.b32.xlu0 %v1422, 16
        %v1458 = vpop.permute.xlu0 %1457
        %1459 = vrot.lane.b32.xlu0 %v1424, 16
        %v1460 = vpop.permute.xlu0 %1459
        %1461 = vrot.lane.b32.xlu0 %v1426, 16
        %v1462 = vpop.permute.xlu0 %1461
        %1463 = vrot.lane.b32.xlu0 %v1428, 16
        %v1464 = vpop.permute.xlu0 %1463
        %1465 = vrot.lane.b32.xlu0 %v1430, 16
        %v1466 = vpop.permute.xlu0 %1465
        %1467 = vrot.lane.b32.xlu0 %v1432, 16
        %v1468 = vpop.permute.xlu0 %1467
        %1469 = vrot.lane.b32.xlu0 %v1434, 16
        %v1470 = vpop.permute.xlu0 %1469
        %1471 = vrot.lane.b32.xlu0 %v1436, 16
        %v1472 = vpop.permute.xlu0 %1471
        %1473 = vrot.lane.b32.xlu0 %v1438, 16
        %v1474 = vpop.permute.xlu0 %1473
        %1475 = vrot.lane.b32.xlu0 %v1440, 16
        %v1476 = vpop.permute.xlu0 %1475
        %1477 = vrot.lane.b32.xlu0 %v1442, 16
        %v1478 = vpop.permute.xlu0 %1477
        %1479 = vrot.lane.b32.xlu0 %v1444, 16
        %v1480 = vpop.permute.xlu0 %1479
        %1481 = vrot.lane.b32.xlu0 %v1446, 16
        %v1482 = vpop.permute.xlu0 %1481
        %1483 = vrot.lane.b32.xlu0 %v1445, 16
        %v1484 = vpop.permute.xlu0 %1483
        %v1504 = vrot.slane %v518, 2
        %v1505 = vrot.slane %v520, 2
        %v1506 = vsel %vm515, %v1504, %v1505
        %v1507 = vrot.slane %v522, 2
        %v1508 = vsel %vm515, %v1505, %v1507
        %v1509 = vrot.slane %v524, 2
        %v1510 = vsel %vm515, %v1507, %v1509
        %v1511 = vrot.slane %v526, 2
        %v1512 = vsel %vm515, %v1509, %v1511
        %v1513 = vrot.slane %v528, 2
        %v1514 = vsel %vm515, %v1511, %v1513
        %v1515 = vrot.slane %v530, 2
        %v1516 = vsel %vm515, %v1513, %v1515
        %v1517 = vrot.slane %v532, 2
        %v1518 = vsel %vm515, %v1515, %v1517
        %v1519 = vrot.slane %v534, 2
        %v1520 = vsel %vm515, %v1517, %v1519
        %v1521 = vrot.slane %v536, 2
        %v1522 = vsel %vm515, %v1519, %v1521
        %v1523 = vrot.slane %v538, 2
        %v1524 = vsel %vm515, %v1521, %v1523
        %v1525 = vrot.slane %v540, 2
        %v1526 = vsel %vm515, %v1523, %v1525
        %v1527 = vrot.slane %v542, 2
        %v1528 = vsel %vm515, %v1525, %v1527
        %v1529 = vrot.slane %v544, 2
        %v1530 = vsel %vm515, %v1527, %v1529
        %v1531 = vrot.slane %v546, 2
        %v1532 = vsel %vm515, %v1529, %v1531
        %v1533 = vrot.slane %v548, 2
        %v1534 = vsel %vm515, %v1531, %v1533
        %v1535 = vrot.slane %v550, 2
        %v1536 = vsel %vm515, %v1533, %v1535
        %v1537 = vrot.slane %v552, 2
        %v1538 = vsel %vm515, %v1535, %v1537
        %1539 = vrot.lane.b32.xlu0 %v1504, 32
        %v1540 = vpop.permute.xlu0 %1539
        %1541 = vrot.lane.b32.xlu0 %v1506, 32
        %v1542 = vpop.permute.xlu0 %1541
        %1543 = vrot.lane.b32.xlu0 %v1508, 32
        %v1544 = vpop.permute.xlu0 %1543
        %1545 = vrot.lane.b32.xlu0 %v1510, 32
        %v1546 = vpop.permute.xlu0 %1545
        %1547 = vrot.lane.b32.xlu0 %v1512, 32
        %v1548 = vpop.permute.xlu0 %1547
        %1549 = vrot.lane.b32.xlu0 %v1514, 32
        %v1550 = vpop.permute.xlu0 %1549
        %1551 = vrot.lane.b32.xlu0 %v1516, 32
        %v1552 = vpop.permute.xlu0 %1551
        %1553 = vrot.lane.b32.xlu0 %v1518, 32
        %v1554 = vpop.permute.xlu0 %1553
        %1555 = vrot.lane.b32.xlu0 %v1520, 32
        %v1556 = vpop.permute.xlu0 %1555
        %1557 = vrot.lane.b32.xlu0 %v1522, 32
        %v1558 = vpop.permute.xlu0 %1557
        %1559 = vrot.lane.b32.xlu0 %v1524, 32
        %v1560 = vpop.permute.xlu0 %1559
        %1561 = vrot.lane.b32.xlu0 %v1526, 32
        %v1562 = vpop.permute.xlu0 %1561
        %1563 = vrot.lane.b32.xlu0 %v1528, 32
        %v1564 = vpop.permute.xlu0 %1563
        %1565 = vrot.lane.b32.xlu0 %v1530, 32
        %v1566 = vpop.permute.xlu0 %1565
        %1567 = vrot.lane.b32.xlu0 %v1532, 32
        %v1568 = vpop.permute.xlu0 %1567
        %1569 = vrot.lane.b32.xlu0 %v1534, 32
        %v1570 = vpop.permute.xlu0 %1569
        %1571 = vrot.lane.b32.xlu0 %v1536, 32
        %v1572 = vpop.permute.xlu0 %1571
        %1573 = vrot.lane.b32.xlu0 %v1538, 32
        %v1574 = vpop.permute.xlu0 %1573
        %1575 = vrot.lane.b32.xlu0 %v1537, 32
        %v1576 = vpop.permute.xlu0 %1575
        %v1597 = vrot.slane %v518, 3
        %v1598 = vrot.slane %v520, 3
        %v1599 = vsel %vm931, %v1597, %v1598
        %v1600 = vrot.slane %v522, 3
        %v1601 = vsel %vm931, %v1598, %v1600
        %v1602 = vrot.slane %v524, 3
        %v1603 = vsel %vm931, %v1600, %v1602
        %v1604 = vrot.slane %v526, 3
        %v1605 = vsel %vm931, %v1602, %v1604
        %v1606 = vrot.slane %v528, 3
        %v1607 = vsel %vm931, %v1604, %v1606
        %v1608 = vrot.slane %v530, 3
        %v1609 = vsel %vm931, %v1606, %v1608
        %v1610 = vrot.slane %v532, 3
        %v1611 = vsel %vm931, %v1608, %v1610
        %v1612 = vrot.slane %v534, 3
        %v1613 = vsel %vm931, %v1610, %v1612
        %v1614 = vrot.slane %v536, 3
        %v1615 = vsel %vm931, %v1612, %v1614
        %v1616 = vrot.slane %v538, 3
        %v1617 = vsel %vm931, %v1614, %v1616
        %v1618 = vrot.slane %v540, 3
        %v1619 = vsel %vm931, %v1616, %v1618
        %v1620 = vrot.slane %v542, 3
        %v1621 = vsel %vm931, %v1618, %v1620
        %v1622 = vrot.slane %v544, 3
        %v1623 = vsel %vm931, %v1620, %v1622
        %v1624 = vrot.slane %v546, 3
        %v1625 = vsel %vm931, %v1622, %v1624
        %v1626 = vrot.slane %v548, 3
        %v1627 = vsel %vm931, %v1624, %v1626
        %v1628 = vrot.slane %v550, 3
        %v1629 = vsel %vm931, %v1626, %v1628
        %v1630 = vrot.slane %v552, 3
        %v1631 = vsel %vm931, %v1628, %v1630
        %v1632 = vrot.slane %v727, 3
        %v1633 = vsel %vm931, %v1630, %v1632
        %1634 = vrot.lane.b32.xlu0 %v1597, 48
        %v1635 = vpop.permute.xlu0 %1634
        %1636 = vrot.lane.b32.xlu0 %v1599, 48
        %v1637 = vpop.permute.xlu0 %1636
        %1638 = vrot.lane.b32.xlu0 %v1601, 48
        %v1639 = vpop.permute.xlu0 %1638
        %1640 = vrot.lane.b32.xlu0 %v1603, 48
        %v1641 = vpop.permute.xlu0 %1640
        %1642 = vrot.lane.b32.xlu0 %v1605, 48
        %v1643 = vpop.permute.xlu0 %1642
        %1644 = vrot.lane.b32.xlu0 %v1607, 48
        %v1645 = vpop.permute.xlu0 %1644
        %1646 = vrot.lane.b32.xlu0 %v1609, 48
        %v1647 = vpop.permute.xlu0 %1646
        %1648 = vrot.lane.b32.xlu0 %v1611, 48
        %v1649 = vpop.permute.xlu0 %1648
        %1650 = vrot.lane.b32.xlu0 %v1613, 48
        %v1651 = vpop.permute.xlu0 %1650
        %1652 = vrot.lane.b32.xlu0 %v1615, 48
        %v1653 = vpop.permute.xlu0 %1652
        %1654 = vrot.lane.b32.xlu0 %v1617, 48
        %v1655 = vpop.permute.xlu0 %1654
        %1656 = vrot.lane.b32.xlu0 %v1619, 48
        %v1657 = vpop.permute.xlu0 %1656
        %1658 = vrot.lane.b32.xlu0 %v1621, 48
        %v1659 = vpop.permute.xlu0 %1658
        %1660 = vrot.lane.b32.xlu0 %v1623, 48
        %v1661 = vpop.permute.xlu0 %1660
        %1662 = vrot.lane.b32.xlu0 %v1625, 48
        %v1663 = vpop.permute.xlu0 %1662
        %1664 = vrot.lane.b32.xlu0 %v1627, 48
        %v1665 = vpop.permute.xlu0 %1664
        %1666 = vrot.lane.b32.xlu0 %v1629, 48
        %v1667 = vpop.permute.xlu0 %1666
        %1668 = vrot.lane.b32.xlu0 %v1631, 48
        %v1669 = vpop.permute.xlu0 %1668
        %1670 = vrot.lane.b32.xlu0 %v1633, 48
        %v1671 = vpop.permute.xlu0 %1670
        %v1691 = vrot.slane %v518, 4
        %v1692 = vrot.slane %v520, 4
        %v1693 = vsel %vm592, %v1691, %v1692
        %v1694 = vrot.slane %v522, 4
        %v1695 = vsel %vm592, %v1692, %v1694
        %v1696 = vrot.slane %v524, 4
        %v1697 = vsel %vm592, %v1694, %v1696
        %v1698 = vrot.slane %v526, 4
        %v1699 = vsel %vm592, %v1696, %v1698
        %v1700 = vrot.slane %v528, 4
        %v1701 = vsel %vm592, %v1698, %v1700
        %v1702 = vrot.slane %v530, 4
        %v1703 = vsel %vm592, %v1700, %v1702
        %v1704 = vrot.slane %v532, 4
        %v1705 = vsel %vm592, %v1702, %v1704
        %v1706 = vrot.slane %v534, 4
        %v1707 = vsel %vm592, %v1704, %v1706
        %v1708 = vrot.slane %v536, 4
        %v1709 = vsel %vm592, %v1706, %v1708
        %v1710 = vrot.slane %v538, 4
        %v1711 = vsel %vm592, %v1708, %v1710
        %v1712 = vrot.slane %v540, 4
        %v1713 = vsel %vm592, %v1710, %v1712
        %v1714 = vrot.slane %v542, 4
        %v1715 = vsel %vm592, %v1712, %v1714
        %v1716 = vrot.slane %v544, 4
        %v1717 = vsel %vm592, %v1714, %v1716
        %v1718 = vrot.slane %v546, 4
        %v1719 = vsel %vm592, %v1716, %v1718
        %v1720 = vrot.slane %v548, 4
        %v1721 = vsel %vm592, %v1718, %v1720
        %v1722 = vrot.slane %v550, 4
        %v1723 = vsel %vm592, %v1720, %v1722
        %v1724 = vrot.slane %v552, 4
        %v1725 = vsel %vm592, %v1722, %v1724
        %v1726 = vrot.slane %v727, 4
        %v1727 = vsel %vm592, %v1724, %v1726
        %1728 = vrot.lane.b32.xlu0 %v1691, 64
        %v1729 = vpop.permute.xlu0 %1728
        %1730 = vrot.lane.b32.xlu0 %v1693, 64
        %v1731 = vpop.permute.xlu0 %1730
        %1732 = vrot.lane.b32.xlu0 %v1695, 64
        %v1733 = vpop.permute.xlu0 %1732
        %1734 = vrot.lane.b32.xlu0 %v1697, 64
        %v1735 = vpop.permute.xlu0 %1734
        %1736 = vrot.lane.b32.xlu0 %v1699, 64
        %v1737 = vpop.permute.xlu0 %1736
        %1738 = vrot.lane.b32.xlu0 %v1701, 64
        %v1739 = vpop.permute.xlu0 %1738
        %1740 = vrot.lane.b32.xlu0 %v1703, 64
        %v1741 = vpop.permute.xlu0 %1740
        %1742 = vrot.lane.b32.xlu0 %v1705, 64
        %v1743 = vpop.permute.xlu0 %1742
        %1744 = vrot.lane.b32.xlu0 %v1707, 64
        %v1745 = vpop.permute.xlu0 %1744
        %1746 = vrot.lane.b32.xlu0 %v1709, 64
        %v1747 = vpop.permute.xlu0 %1746
        %1748 = vrot.lane.b32.xlu0 %v1711, 64
        %v1749 = vpop.permute.xlu0 %1748
        %1750 = vrot.lane.b32.xlu0 %v1713, 64
        %v1751 = vpop.permute.xlu0 %1750
        %1752 = vrot.lane.b32.xlu0 %v1715, 64
        %v1753 = vpop.permute.xlu0 %1752
        %1754 = vrot.lane.b32.xlu0 %v1717, 64
        %v1755 = vpop.permute.xlu0 %1754
        %1756 = vrot.lane.b32.xlu0 %v1719, 64
        %v1757 = vpop.permute.xlu0 %1756
        %1758 = vrot.lane.b32.xlu0 %v1721, 64
        %v1759 = vpop.permute.xlu0 %1758
        %1760 = vrot.lane.b32.xlu0 %v1723, 64
        %v1761 = vpop.permute.xlu0 %1760
        %1762 = vrot.lane.b32.xlu0 %v1725, 64
        %v1763 = vpop.permute.xlu0 %1762
        %1764 = vrot.lane.b32.xlu0 %v1727, 64
        %v1765 = vpop.permute.xlu0 %1764
        %v1785 = vrot.slane %v518, 5
        %v1786 = vrot.slane %v520, 5
        %v1787 = vsel %vm1114, %v1785, %v1786
        %v1788 = vrot.slane %v522, 5
        %v1789 = vsel %vm1114, %v1786, %v1788
        %v1790 = vrot.slane %v524, 5
        %v1791 = vsel %vm1114, %v1788, %v1790
        %v1792 = vrot.slane %v526, 5
        %v1793 = vsel %vm1114, %v1790, %v1792
        %v1794 = vrot.slane %v528, 5
        %v1795 = vsel %vm1114, %v1792, %v1794
        %v1796 = vrot.slane %v530, 5
        %v1797 = vsel %vm1114, %v1794, %v1796
        %v1798 = vrot.slane %v532, 5
        %v1799 = vsel %vm1114, %v1796, %v1798
        %v1800 = vrot.slane %v534, 5
        %v1801 = vsel %vm1114, %v1798, %v1800
        %v1802 = vrot.slane %v536, 5
        %v1803 = vsel %vm1114, %v1800, %v1802
        %v1804 = vrot.slane %v538, 5
        %v1805 = vsel %vm1114, %v1802, %v1804
        %v1806 = vrot.slane %v540, 5
        %v1807 = vsel %vm1114, %v1804, %v1806
        %v1808 = vrot.slane %v542, 5
        %v1809 = vsel %vm1114, %v1806, %v1808
        %v1810 = vrot.slane %v544, 5
        %v1811 = vsel %vm1114, %v1808, %v1810
        %v1812 = vrot.slane %v546, 5
        %v1813 = vsel %vm1114, %v1810, %v1812
        %v1814 = vrot.slane %v548, 5
        %v1815 = vsel %vm1114, %v1812, %v1814
        %v1816 = vrot.slane %v550, 5
        %v1817 = vsel %vm1114, %v1814, %v1816
        %v1818 = vrot.slane %v552, 5
        %v1819 = vsel %vm1114, %v1816, %v1818
        %v1820 = vrot.slane %v727, 5
        %v1821 = vsel %vm1114, %v1818, %v1820
        %1822 = vrot.lane.b32.xlu0 %v1785, 80
        %v1823 = vpop.permute.xlu0 %1822
        %1824 = vrot.lane.b32.xlu0 %v1787, 80
        %v1825 = vpop.permute.xlu0 %1824
        %1826 = vrot.lane.b32.xlu0 %v1789, 80
        %v1827 = vpop.permute.xlu0 %1826
        %1828 = vrot.lane.b32.xlu0 %v1791, 80
        %v1829 = vpop.permute.xlu0 %1828
        %1830 = vrot.lane.b32.xlu0 %v1793, 80
        %v1831 = vpop.permute.xlu0 %1830
        %1832 = vrot.lane.b32.xlu0 %v1795, 80
        %v1833 = vpop.permute.xlu0 %1832
        %1834 = vrot.lane.b32.xlu0 %v1797, 80
        %v1835 = vpop.permute.xlu0 %1834
        %1836 = vrot.lane.b32.xlu0 %v1799, 80
        %v1837 = vpop.permute.xlu0 %1836
        %1838 = vrot.lane.b32.xlu0 %v1801, 80
        %v1839 = vpop.permute.xlu0 %1838
        %1840 = vrot.lane.b32.xlu0 %v1803, 80
        %v1841 = vpop.permute.xlu0 %1840
        %1842 = vrot.lane.b32.xlu0 %v1805, 80
        %v1843 = vpop.permute.xlu0 %1842
        %1844 = vrot.lane.b32.xlu0 %v1807, 80
        %v1845 = vpop.permute.xlu0 %1844
        %1846 = vrot.lane.b32.xlu0 %v1809, 80
        %v1847 = vpop.permute.xlu0 %1846
        %1848 = vrot.lane.b32.xlu0 %v1811, 80
        %v1849 = vpop.permute.xlu0 %1848
        %1850 = vrot.lane.b32.xlu0 %v1813, 80
        %v1851 = vpop.permute.xlu0 %1850
        %1852 = vrot.lane.b32.xlu0 %v1815, 80
        %v1853 = vpop.permute.xlu0 %1852
        %1854 = vrot.lane.b32.xlu0 %v1817, 80
        %v1855 = vpop.permute.xlu0 %1854
        %1856 = vrot.lane.b32.xlu0 %v1819, 80
        %v1857 = vpop.permute.xlu0 %1856
        %1858 = vrot.lane.b32.xlu0 %v1821, 80
        %v1859 = vpop.permute.xlu0 %1858
        %v1879 = vrot.slane %v518, 6
        %v1880 = vrot.slane %v520, 6
        %v1881 = vsel %vm669, %v1879, %v1880
        %v1882 = vrot.slane %v522, 6
        %v1883 = vsel %vm669, %v1880, %v1882
        %v1884 = vrot.slane %v524, 6
        %v1885 = vsel %vm669, %v1882, %v1884
        %v1886 = vrot.slane %v526, 6
        %v1887 = vsel %vm669, %v1884, %v1886
        %v1888 = vrot.slane %v528, 6
        %v1889 = vsel %vm669, %v1886, %v1888
        %v1890 = vrot.slane %v530, 6
        %v1891 = vsel %vm669, %v1888, %v1890
        %v1892 = vrot.slane %v532, 6
        %v1893 = vsel %vm669, %v1890, %v1892
        %v1894 = vrot.slane %v534, 6
        %v1895 = vsel %vm669, %v1892, %v1894
        %v1896 = vrot.slane %v536, 6
        %v1897 = vsel %vm669, %v1894, %v1896
        %v1898 = vrot.slane %v538, 6
        %v1899 = vsel %vm669, %v1896, %v1898
        %v1900 = vrot.slane %v540, 6
        %v1901 = vsel %vm669, %v1898, %v1900
        %v1902 = vrot.slane %v542, 6
        %v1903 = vsel %vm669, %v1900, %v1902
        %v1904 = vrot.slane %v544, 6
        %v1905 = vsel %vm669, %v1902, %v1904
        %v1906 = vrot.slane %v546, 6
        %v1907 = vsel %vm669, %v1904, %v1906
        %v1908 = vrot.slane %v548, 6
        %v1909 = vsel %vm669, %v1906, %v1908
        %v1910 = vrot.slane %v550, 6
        %v1911 = vsel %vm669, %v1908, %v1910
        %v1912 = vrot.slane %v552, 6
        %v1913 = vsel %vm669, %v1910, %v1912
        %v1914 = vrot.slane %v727, 6
        %v1915 = vsel %vm669, %v1912, %v1914
        %1916 = vrot.lane.b32.xlu0 %v1879, 96
        %v1917 = vpop.permute.xlu0 %1916
        %1918 = vrot.lane.b32.xlu0 %v1881, 96
        %v1919 = vpop.permute.xlu0 %1918
        %1920 = vrot.lane.b32.xlu0 %v1883, 96
        %v1921 = vpop.permute.xlu0 %1920
        %1922 = vrot.lane.b32.xlu0 %v1885, 96
        %v1923 = vpop.permute.xlu0 %1922
        %1924 = vrot.lane.b32.xlu0 %v1887, 96
        %v1925 = vpop.permute.xlu0 %1924
        %1926 = vrot.lane.b32.xlu0 %v1889, 96
        %v1927 = vpop.permute.xlu0 %1926
        %1928 = vrot.lane.b32.xlu0 %v1891, 96
        %v1929 = vpop.permute.xlu0 %1928
        %1930 = vrot.lane.b32.xlu0 %v1893, 96
        %v1931 = vpop.permute.xlu0 %1930
        %1932 = vrot.lane.b32.xlu0 %v1895, 96
        %v1933 = vpop.permute.xlu0 %1932
        %1934 = vrot.lane.b32.xlu0 %v1897, 96
        %v1935 = vpop.permute.xlu0 %1934
        %1936 = vrot.lane.b32.xlu0 %v1899, 96
        %v1937 = vpop.permute.xlu0 %1936
        %1938 = vrot.lane.b32.xlu0 %v1901, 96
        %v1939 = vpop.permute.xlu0 %1938
        %1940 = vrot.lane.b32.xlu0 %v1903, 96
        %v1941 = vpop.permute.xlu0 %1940
        %1942 = vrot.lane.b32.xlu0 %v1905, 96
        %v1943 = vpop.permute.xlu0 %1942
        %1944 = vrot.lane.b32.xlu0 %v1907, 96
        %v1945 = vpop.permute.xlu0 %1944
        %1946 = vrot.lane.b32.xlu0 %v1909, 96
        %v1947 = vpop.permute.xlu0 %1946
        %1948 = vrot.lane.b32.xlu0 %v1911, 96
        %v1949 = vpop.permute.xlu0 %1948
        %1950 = vrot.lane.b32.xlu0 %v1913, 96
        %v1951 = vpop.permute.xlu0 %1950
        %1952 = vrot.lane.b32.xlu0 %v1915, 96
        %v1953 = vpop.permute.xlu0 %1952
        %v1973 = vsel %vm1297, %v726, %v1448
        %v1974 = vsel %vm1297, %v518, %v1450
        %v1975 = vsel %vm1297, %v520, %v1452
        %v1976 = vsel %vm1297, %v522, %v1454
        %v1977 = vsel %vm1297, %v524, %v1456
        %v1978 = vsel %vm1297, %v526, %v1458
        %v1979 = vsel %vm1297, %v528, %v1460
        %v1980 = vsel %vm1297, %v530, %v1462
        %v1981 = vsel %vm1297, %v532, %v1464
        %v1982 = vsel %vm1297, %v534, %v1466
        %v1983 = vsel %vm1297, %v536, %v1468
        %v1984 = vsel %vm1297, %v538, %v1470
        %v1985 = vsel %vm1297, %v540, %v1472
        %v1986 = vsel %vm1297, %v542, %v1474
        %v1987 = vsel %vm1297, %v544, %v1476
        %v1988 = vsel %vm1297, %v546, %v1478
        %v1989 = vsel %vm1297, %v548, %v1480
        %v1990 = vsel %vm1297, %v550, %v1482
        %v1991 = vsel %vm1297, %v552, %v1484
        %v1992 = vsel %vm1316, %v1973, %v1540
        %v1993 = vsel %vm1316, %v1974, %v1542
        %v1994 = vsel %vm1316, %v1975, %v1544
        %v1995 = vsel %vm1316, %v1976, %v1546
        %v1996 = vsel %vm1316, %v1977, %v1548
        %v1997 = vsel %vm1316, %v1978, %v1550
        %v1998 = vsel %vm1316, %v1979, %v1552
        %v1999 = vsel %vm1316, %v1980, %v1554
        %v2000 = vsel %vm1316, %v1981, %v1556
        %v2001 = vsel %vm1316, %v1982, %v1558
        %v2002 = vsel %vm1316, %v1983, %v1560
        %v2003 = vsel %vm1316, %v1984, %v1562
        %v2004 = vsel %vm1316, %v1985, %v1564
        %v2005 = vsel %vm1316, %v1986, %v1566
        %v2006 = vsel %vm1316, %v1987, %v1568
        %v2007 = vsel %vm1316, %v1988, %v1570
        %v2008 = vsel %vm1316, %v1989, %v1572
        %v2009 = vsel %vm1316, %v1990, %v1574
        %v2010 = vsel %vm1316, %v1991, %v1576
        %v2011 = vsel %vm1335, %v1992, %v1635
        %v2012 = vsel %vm1335, %v1993, %v1637
        %v2013 = vsel %vm1335, %v1994, %v1639
        %v2014 = vsel %vm1335, %v1995, %v1641
        %v2015 = vsel %vm1335, %v1996, %v1643
        %v2016 = vsel %vm1335, %v1997, %v1645
        %v2017 = vsel %vm1335, %v1998, %v1647
        %v2018 = vsel %vm1335, %v1999, %v1649
        %v2019 = vsel %vm1335, %v2000, %v1651
        %v2020 = vsel %vm1335, %v2001, %v1653
        %v2021 = vsel %vm1335, %v2002, %v1655
        %v2022 = vsel %vm1335, %v2003, %v1657
        %v2023 = vsel %vm1335, %v2004, %v1659
        %v2024 = vsel %vm1335, %v2005, %v1661
        %v2025 = vsel %vm1335, %v2006, %v1663
        %v2026 = vsel %vm1335, %v2007, %v1665
        %v2027 = vsel %vm1335, %v2008, %v1667
        %v2028 = vsel %vm1335, %v2009, %v1669
        %v2029 = vsel %vm1335, %v2010, %v1671
        %v2030 = vsel %vm1354, %v2011, %v1729
        %v2031 = vsel %vm1354, %v2012, %v1731
        %v2032 = vsel %vm1354, %v2013, %v1733
        %v2033 = vsel %vm1354, %v2014, %v1735
        %v2034 = vsel %vm1354, %v2015, %v1737
        %v2035 = vsel %vm1354, %v2016, %v1739
        %v2036 = vsel %vm1354, %v2017, %v1741
        %v2037 = vsel %vm1354, %v2018, %v1743
        %v2038 = vsel %vm1354, %v2019, %v1745
        %v2039 = vsel %vm1354, %v2020, %v1747
        %v2040 = vsel %vm1354, %v2021, %v1749
        %v2041 = vsel %vm1354, %v2022, %v1751
        %v2042 = vsel %vm1354, %v2023, %v1753
        %v2043 = vsel %vm1354, %v2024, %v1755
        %v2044 = vsel %vm1354, %v2025, %v1757
        %v2045 = vsel %vm1354, %v2026, %v1759
        %v2046 = vsel %vm1354, %v2027, %v1761
        %v2047 = vsel %vm1354, %v2028, %v1763
        %v2048 = vsel %vm1354, %v2029, %v1765
        %v2049 = vsel %vm1373, %v2030, %v1823
        %v2050 = vsel %vm1373, %v2031, %v1825
        %v2051 = vsel %vm1373, %v2032, %v1827
        %v2052 = vsel %vm1373, %v2033, %v1829
        %v2053 = vsel %vm1373, %v2034, %v1831
        %v2054 = vsel %vm1373, %v2035, %v1833
        %v2055 = vsel %vm1373, %v2036, %v1835
        %v2056 = vsel %vm1373, %v2037, %v1837
        %v2057 = vsel %vm1373, %v2038, %v1839
        %v2058 = vsel %vm1373, %v2039, %v1841
        %v2059 = vsel %vm1373, %v2040, %v1843
        %v2060 = vsel %vm1373, %v2041, %v1845
        %v2061 = vsel %vm1373, %v2042, %v1847
        %v2062 = vsel %vm1373, %v2043, %v1849
        %v2063 = vsel %vm1373, %v2044, %v1851
        %v2064 = vsel %vm1373, %v2045, %v1853
        %v2065 = vsel %vm1373, %v2046, %v1855
        %v2066 = vsel %vm1373, %v2047, %v1857
        %v2067 = vsel %vm1373, %v2048, %v1859
        %v2068 = vsel %vm1392, %v2049, %v1917
        %v2069 = vsel %vm1392, %v2050, %v1919
        %v2070 = vsel %vm1392, %v2051, %v1921
        %v2071 = vsel %vm1392, %v2052, %v1923
        %v2072 = vsel %vm1392, %v2053, %v1925
        %v2073 = vsel %vm1392, %v2054, %v1927
        %v2074 = vsel %vm1392, %v2055, %v1929
        %v2075 = vsel %vm1392, %v2056, %v1931
        %v2076 = vsel %vm1392, %v2057, %v1933
        %v2077 = vsel %vm1392, %v2058, %v1935
        %v2078 = vsel %vm1392, %v2059, %v1937
        %v2079 = vsel %vm1392, %v2060, %v1939
        %v2080 = vsel %vm1392, %v2061, %v1941
        %v2081 = vsel %vm1392, %v2062, %v1943
        %v2082 = vsel %vm1392, %v2063, %v1945
        %v2083 = vsel %vm1392, %v2064, %v1947
        %v2084 = vsel %vm1392, %v2065, %v1949
        %v2085 = vsel %vm1392, %v2066, %v1951
        %v2086 = vsel %vm1392, %v2067, %v1953
        %v2087 = vrot.slane %v727, 1
        %v2088 = vrot.slane %v595, 1
        %v2089 = vsel %vm748, %v2087, %v2088
        %v2090 = vrot.slane %v597, 1
        %v2091 = vsel %vm748, %v2088, %v2090
        %v2092 = vrot.slane %v599, 1
        %v2093 = vsel %vm748, %v2090, %v2092
        %v2094 = vrot.slane %v601, 1
        %v2095 = vsel %vm748, %v2092, %v2094
        %v2096 = vrot.slane %v603, 1
        %v2097 = vsel %vm748, %v2094, %v2096
        %v2098 = vrot.slane %v605, 1
        %v2099 = vsel %vm748, %v2096, %v2098
        %v2100 = vrot.slane %v607, 1
        %v2101 = vsel %vm748, %v2098, %v2100
        %v2102 = vrot.slane %v609, 1
        %v2103 = vsel %vm748, %v2100, %v2102
        %v2104 = vrot.slane %v611, 1
        %v2105 = vsel %vm748, %v2102, %v2104
        %v2106 = vrot.slane %v613, 1
        %v2107 = vsel %vm748, %v2104, %v2106
        %v2108 = vrot.slane %v615, 1
        %v2109 = vsel %vm748, %v2106, %v2108
        %v2110 = vrot.slane %v617, 1
        %v2111 = vsel %vm748, %v2108, %v2110
        %v2112 = vrot.slane %v619, 1
        %v2113 = vsel %vm748, %v2110, %v2112
        %v2114 = vrot.slane %v621, 1
        %v2115 = vsel %vm748, %v2112, %v2114
        %v2116 = vrot.slane %v623, 1
        %v2117 = vsel %vm748, %v2114, %v2116
        %v2118 = vrot.slane %v625, 1
        %v2119 = vsel %vm748, %v2116, %v2118
        %v2120 = vrot.slane %v627, 1
        %v2121 = vsel %vm748, %v2118, %v2120
        %v2122 = vrot.slane %v629, 1
        %v2123 = vsel %vm748, %v2120, %v2122
        %2124 = vrot.lane.b32.xlu0 %v2089, 16
        %v2125 = vpop.permute.xlu0 %2124
        %2126 = vrot.lane.b32.xlu0 %v2091, 16
        %v2127 = vpop.permute.xlu0 %2126
        %2128 = vrot.lane.b32.xlu0 %v2093, 16
        %v2129 = vpop.permute.xlu0 %2128
        %2130 = vrot.lane.b32.xlu0 %v2095, 16
        %v2131 = vpop.permute.xlu0 %2130
        %2132 = vrot.lane.b32.xlu0 %v2097, 16
        %v2133 = vpop.permute.xlu0 %2132
        %2134 = vrot.lane.b32.xlu0 %v2099, 16
        %v2135 = vpop.permute.xlu0 %2134
        %2136 = vrot.lane.b32.xlu0 %v2101, 16
        %v2137 = vpop.permute.xlu0 %2136
        %2138 = vrot.lane.b32.xlu0 %v2103, 16
        %v2139 = vpop.permute.xlu0 %2138
        %2140 = vrot.lane.b32.xlu0 %v2105, 16
        %v2141 = vpop.permute.xlu0 %2140
        %2142 = vrot.lane.b32.xlu0 %v2107, 16
        %v2143 = vpop.permute.xlu0 %2142
        %2144 = vrot.lane.b32.xlu0 %v2109, 16
        %v2145 = vpop.permute.xlu0 %2144
        %2146 = vrot.lane.b32.xlu0 %v2111, 16
        %v2147 = vpop.permute.xlu0 %2146
        %2148 = vrot.lane.b32.xlu0 %v2113, 16
        %v2149 = vpop.permute.xlu0 %2148
        %2150 = vrot.lane.b32.xlu0 %v2115, 16
        %v2151 = vpop.permute.xlu0 %2150
        %2152 = vrot.lane.b32.xlu0 %v2117, 16
        %v2153 = vpop.permute.xlu0 %2152
        %2154 = vrot.lane.b32.xlu0 %v2119, 16
        %v2155 = vpop.permute.xlu0 %2154
        %2156 = vrot.lane.b32.xlu0 %v2121, 16
        %v2157 = vpop.permute.xlu0 %2156
        %2158 = vrot.lane.b32.xlu0 %v2123, 16
        %v2159 = vpop.permute.xlu0 %2158
        %2160 = vrot.lane.b32.xlu0 %v2122, 16
        %v2161 = vpop.permute.xlu0 %2160
        %v2181 = vrot.slane %v727, 2
        %v2182 = vrot.slane %v595, 2
        %v2183 = vsel %vm515, %v2181, %v2182
        %v2184 = vrot.slane %v597, 2
        %v2185 = vsel %vm515, %v2182, %v2184
        %v2186 = vrot.slane %v599, 2
        %v2187 = vsel %vm515, %v2184, %v2186
        %v2188 = vrot.slane %v601, 2
        %v2189 = vsel %vm515, %v2186, %v2188
        %v2190 = vrot.slane %v603, 2
        %v2191 = vsel %vm515, %v2188, %v2190
        %v2192 = vrot.slane %v605, 2
        %v2193 = vsel %vm515, %v2190, %v2192
        %v2194 = vrot.slane %v607, 2
        %v2195 = vsel %vm515, %v2192, %v2194
        %v2196 = vrot.slane %v609, 2
        %v2197 = vsel %vm515, %v2194, %v2196
        %v2198 = vrot.slane %v611, 2
        %v2199 = vsel %vm515, %v2196, %v2198
        %v2200 = vrot.slane %v613, 2
        %v2201 = vsel %vm515, %v2198, %v2200
        %v2202 = vrot.slane %v615, 2
        %v2203 = vsel %vm515, %v2200, %v2202
        %v2204 = vrot.slane %v617, 2
        %v2205 = vsel %vm515, %v2202, %v2204
        %v2206 = vrot.slane %v619, 2
        %v2207 = vsel %vm515, %v2204, %v2206
        %v2208 = vrot.slane %v621, 2
        %v2209 = vsel %vm515, %v2206, %v2208
        %v2210 = vrot.slane %v623, 2
        %v2211 = vsel %vm515, %v2208, %v2210
        %v2212 = vrot.slane %v625, 2
        %v2213 = vsel %vm515, %v2210, %v2212
        %v2214 = vrot.slane %v627, 2
        %v2215 = vsel %vm515, %v2212, %v2214
        %v2216 = vrot.slane %v629, 2
        %v2217 = vsel %vm515, %v2214, %v2216
        %2218 = vrot.lane.b32.xlu0 %v2183, 32
        %v2219 = vpop.permute.xlu0 %2218
        %2220 = vrot.lane.b32.xlu0 %v2185, 32
        %v2221 = vpop.permute.xlu0 %2220
        %2222 = vrot.lane.b32.xlu0 %v2187, 32
        %v2223 = vpop.permute.xlu0 %2222
        %2224 = vrot.lane.b32.xlu0 %v2189, 32
        %v2225 = vpop.permute.xlu0 %2224
        %2226 = vrot.lane.b32.xlu0 %v2191, 32
        %v2227 = vpop.permute.xlu0 %2226
        %2228 = vrot.lane.b32.xlu0 %v2193, 32
        %v2229 = vpop.permute.xlu0 %2228
        %2230 = vrot.lane.b32.xlu0 %v2195, 32
        %v2231 = vpop.permute.xlu0 %2230
        %2232 = vrot.lane.b32.xlu0 %v2197, 32
        %v2233 = vpop.permute.xlu0 %2232
        %2234 = vrot.lane.b32.xlu0 %v2199, 32
        %v2235 = vpop.permute.xlu0 %2234
        %2236 = vrot.lane.b32.xlu0 %v2201, 32
        %v2237 = vpop.permute.xlu0 %2236
        %2238 = vrot.lane.b32.xlu0 %v2203, 32
        %v2239 = vpop.permute.xlu0 %2238
        %2240 = vrot.lane.b32.xlu0 %v2205, 32
        %v2241 = vpop.permute.xlu0 %2240
        %2242 = vrot.lane.b32.xlu0 %v2207, 32
        %v2243 = vpop.permute.xlu0 %2242
        %2244 = vrot.lane.b32.xlu0 %v2209, 32
        %v2245 = vpop.permute.xlu0 %2244
        %2246 = vrot.lane.b32.xlu0 %v2211, 32
        %v2247 = vpop.permute.xlu0 %2246
        %2248 = vrot.lane.b32.xlu0 %v2213, 32
        %v2249 = vpop.permute.xlu0 %2248
        %2250 = vrot.lane.b32.xlu0 %v2215, 32
        %v2251 = vpop.permute.xlu0 %2250
        %2252 = vrot.lane.b32.xlu0 %v2217, 32
        %v2253 = vpop.permute.xlu0 %2252
        %2254 = vrot.lane.b32.xlu0 %v2216, 32
        %v2255 = vpop.permute.xlu0 %2254
        %v2275 = vrot.slane %v595, 3
        %v2276 = vsel %vm931, %v1632, %v2275
        %v2277 = vrot.slane %v597, 3
        %v2278 = vsel %vm931, %v2275, %v2277
        %v2279 = vrot.slane %v599, 3
        %v2280 = vsel %vm931, %v2277, %v2279
        %v2281 = vrot.slane %v601, 3
        %v2282 = vsel %vm931, %v2279, %v2281
        %v2283 = vrot.slane %v603, 3
        %v2284 = vsel %vm931, %v2281, %v2283
        %v2285 = vrot.slane %v605, 3
        %v2286 = vsel %vm931, %v2283, %v2285
        %v2287 = vrot.slane %v607, 3
        %v2288 = vsel %vm931, %v2285, %v2287
        %v2289 = vrot.slane %v609, 3
        %v2290 = vsel %vm931, %v2287, %v2289
        %v2291 = vrot.slane %v611, 3
        %v2292 = vsel %vm931, %v2289, %v2291
        %v2293 = vrot.slane %v613, 3
        %v2294 = vsel %vm931, %v2291, %v2293
        %v2295 = vrot.slane %v615, 3
        %v2296 = vsel %vm931, %v2293, %v2295
        %v2297 = vrot.slane %v617, 3
        %v2298 = vsel %vm931, %v2295, %v2297
        %v2299 = vrot.slane %v619, 3
        %v2300 = vsel %vm931, %v2297, %v2299
        %v2301 = vrot.slane %v621, 3
        %v2302 = vsel %vm931, %v2299, %v2301
        %v2303 = vrot.slane %v623, 3
        %v2304 = vsel %vm931, %v2301, %v2303
        %v2305 = vrot.slane %v625, 3
        %v2306 = vsel %vm931, %v2303, %v2305
        %v2307 = vrot.slane %v627, 3
        %v2308 = vsel %vm931, %v2305, %v2307
        %v2309 = vrot.slane %v629, 3
        %v2310 = vsel %vm931, %v2307, %v2309
        %2311 = vrot.lane.b32.xlu0 %v2276, 48
        %v2312 = vpop.permute.xlu0 %2311
        %2313 = vrot.lane.b32.xlu0 %v2278, 48
        %v2314 = vpop.permute.xlu0 %2313
        %2315 = vrot.lane.b32.xlu0 %v2280, 48
        %v2316 = vpop.permute.xlu0 %2315
        %2317 = vrot.lane.b32.xlu0 %v2282, 48
        %v2318 = vpop.permute.xlu0 %2317
        %2319 = vrot.lane.b32.xlu0 %v2284, 48
        %v2320 = vpop.permute.xlu0 %2319
        %2321 = vrot.lane.b32.xlu0 %v2286, 48
        %v2322 = vpop.permute.xlu0 %2321
        %2323 = vrot.lane.b32.xlu0 %v2288, 48
        %v2324 = vpop.permute.xlu0 %2323
        %2325 = vrot.lane.b32.xlu0 %v2290, 48
        %v2326 = vpop.permute.xlu0 %2325
        %2327 = vrot.lane.b32.xlu0 %v2292, 48
        %v2328 = vpop.permute.xlu0 %2327
        %2329 = vrot.lane.b32.xlu0 %v2294, 48
        %v2330 = vpop.permute.xlu0 %2329
        %2331 = vrot.lane.b32.xlu0 %v2296, 48
        %v2332 = vpop.permute.xlu0 %2331
        %2333 = vrot.lane.b32.xlu0 %v2298, 48
        %v2334 = vpop.permute.xlu0 %2333
        %2335 = vrot.lane.b32.xlu0 %v2300, 48
        %v2336 = vpop.permute.xlu0 %2335
        %2337 = vrot.lane.b32.xlu0 %v2302, 48
        %v2338 = vpop.permute.xlu0 %2337
        %2339 = vrot.lane.b32.xlu0 %v2304, 48
        %v2340 = vpop.permute.xlu0 %2339
        %2341 = vrot.lane.b32.xlu0 %v2306, 48
        %v2342 = vpop.permute.xlu0 %2341
        %2343 = vrot.lane.b32.xlu0 %v2308, 48
        %v2344 = vpop.permute.xlu0 %2343
        %2345 = vrot.lane.b32.xlu0 %v2310, 48
        %v2346 = vpop.permute.xlu0 %2345
        %2347 = vrot.lane.b32.xlu0 %v2309, 48
        %v2348 = vpop.permute.xlu0 %2347
        %v2368 = vrot.slane %v595, 4
        %v2369 = vrot.slane %v597, 4
        %v2370 = vsel %vm592, %v2368, %v2369
        %v2371 = vrot.slane %v599, 4
        %v2372 = vsel %vm592, %v2369, %v2371
        %v2373 = vrot.slane %v601, 4
        %v2374 = vsel %vm592, %v2371, %v2373
        %v2375 = vrot.slane %v603, 4
        %v2376 = vsel %vm592, %v2373, %v2375
        %v2377 = vrot.slane %v605, 4
        %v2378 = vsel %vm592, %v2375, %v2377
        %v2379 = vrot.slane %v607, 4
        %v2380 = vsel %vm592, %v2377, %v2379
        %v2381 = vrot.slane %v609, 4
        %v2382 = vsel %vm592, %v2379, %v2381
        %v2383 = vrot.slane %v611, 4
        %v2384 = vsel %vm592, %v2381, %v2383
        %v2385 = vrot.slane %v613, 4
        %v2386 = vsel %vm592, %v2383, %v2385
        %v2387 = vrot.slane %v615, 4
        %v2388 = vsel %vm592, %v2385, %v2387
        %v2389 = vrot.slane %v617, 4
        %v2390 = vsel %vm592, %v2387, %v2389
        %v2391 = vrot.slane %v619, 4
        %v2392 = vsel %vm592, %v2389, %v2391
        %v2393 = vrot.slane %v621, 4
        %v2394 = vsel %vm592, %v2391, %v2393
        %v2395 = vrot.slane %v623, 4
        %v2396 = vsel %vm592, %v2393, %v2395
        %v2397 = vrot.slane %v625, 4
        %v2398 = vsel %vm592, %v2395, %v2397
        %v2399 = vrot.slane %v627, 4
        %v2400 = vsel %vm592, %v2397, %v2399
        %v2401 = vrot.slane %v629, 4
        %v2402 = vsel %vm592, %v2399, %v2401
        %2403 = vrot.lane.b32.xlu0 %v2368, 64
        %v2404 = vpop.permute.xlu0 %2403
        %2405 = vrot.lane.b32.xlu0 %v2370, 64
        %v2406 = vpop.permute.xlu0 %2405
        %2407 = vrot.lane.b32.xlu0 %v2372, 64
        %v2408 = vpop.permute.xlu0 %2407
        %2409 = vrot.lane.b32.xlu0 %v2374, 64
        %v2410 = vpop.permute.xlu0 %2409
        %2411 = vrot.lane.b32.xlu0 %v2376, 64
        %v2412 = vpop.permute.xlu0 %2411
        %2413 = vrot.lane.b32.xlu0 %v2378, 64
        %v2414 = vpop.permute.xlu0 %2413
        %2415 = vrot.lane.b32.xlu0 %v2380, 64
        %v2416 = vpop.permute.xlu0 %2415
        %2417 = vrot.lane.b32.xlu0 %v2382, 64
        %v2418 = vpop.permute.xlu0 %2417
        %2419 = vrot.lane.b32.xlu0 %v2384, 64
        %v2420 = vpop.permute.xlu0 %2419
        %2421 = vrot.lane.b32.xlu0 %v2386, 64
        %v2422 = vpop.permute.xlu0 %2421
        %2423 = vrot.lane.b32.xlu0 %v2388, 64
        %v2424 = vpop.permute.xlu0 %2423
        %2425 = vrot.lane.b32.xlu0 %v2390, 64
        %v2426 = vpop.permute.xlu0 %2425
        %2427 = vrot.lane.b32.xlu0 %v2392, 64
        %v2428 = vpop.permute.xlu0 %2427
        %2429 = vrot.lane.b32.xlu0 %v2394, 64
        %v2430 = vpop.permute.xlu0 %2429
        %2431 = vrot.lane.b32.xlu0 %v2396, 64
        %v2432 = vpop.permute.xlu0 %2431
        %2433 = vrot.lane.b32.xlu0 %v2398, 64
        %v2434 = vpop.permute.xlu0 %2433
        %2435 = vrot.lane.b32.xlu0 %v2400, 64
        %v2436 = vpop.permute.xlu0 %2435
        %2437 = vrot.lane.b32.xlu0 %v2402, 64
        %v2438 = vpop.permute.xlu0 %2437
        %2439 = vrot.lane.b32.xlu0 %v2401, 64
        %v2440 = vpop.permute.xlu0 %2439
        %v2461 = vrot.slane %v595, 5
        %v2462 = vrot.slane %v597, 5
        %v2463 = vsel %vm1114, %v2461, %v2462
        %v2464 = vrot.slane %v599, 5
        %v2465 = vsel %vm1114, %v2462, %v2464
        %v2466 = vrot.slane %v601, 5
        %v2467 = vsel %vm1114, %v2464, %v2466
        %v2468 = vrot.slane %v603, 5
        %v2469 = vsel %vm1114, %v2466, %v2468
        %v2470 = vrot.slane %v605, 5
        %v2471 = vsel %vm1114, %v2468, %v2470
        %v2472 = vrot.slane %v607, 5
        %v2473 = vsel %vm1114, %v2470, %v2472
        %v2474 = vrot.slane %v609, 5
        %v2475 = vsel %vm1114, %v2472, %v2474
        %v2476 = vrot.slane %v611, 5
        %v2477 = vsel %vm1114, %v2474, %v2476
        %v2478 = vrot.slane %v613, 5
        %v2479 = vsel %vm1114, %v2476, %v2478
        %v2480 = vrot.slane %v615, 5
        %v2481 = vsel %vm1114, %v2478, %v2480
        %v2482 = vrot.slane %v617, 5
        %v2483 = vsel %vm1114, %v2480, %v2482
        %v2484 = vrot.slane %v619, 5
        %v2485 = vsel %vm1114, %v2482, %v2484
        %v2486 = vrot.slane %v621, 5
        %v2487 = vsel %vm1114, %v2484, %v2486
        %v2488 = vrot.slane %v623, 5
        %v2489 = vsel %vm1114, %v2486, %v2488
        %v2490 = vrot.slane %v625, 5
        %v2491 = vsel %vm1114, %v2488, %v2490
        %v2492 = vrot.slane %v627, 5
        %v2493 = vsel %vm1114, %v2490, %v2492
        %v2494 = vrot.slane %v629, 5
        %v2495 = vsel %vm1114, %v2492, %v2494
        %v2496 = vrot.slane %v728, 5
        %v2497 = vsel %vm1114, %v2494, %v2496
        %2498 = vrot.lane.b32.xlu0 %v2461, 80
        %v2499 = vpop.permute.xlu0 %2498
        %2500 = vrot.lane.b32.xlu0 %v2463, 80
        %v2501 = vpop.permute.xlu0 %2500
        %2502 = vrot.lane.b32.xlu0 %v2465, 80
        %v2503 = vpop.permute.xlu0 %2502
        %2504 = vrot.lane.b32.xlu0 %v2467, 80
        %v2505 = vpop.permute.xlu0 %2504
        %2506 = vrot.lane.b32.xlu0 %v2469, 80
        %v2507 = vpop.permute.xlu0 %2506
        %2508 = vrot.lane.b32.xlu0 %v2471, 80
        %v2509 = vpop.permute.xlu0 %2508
        %2510 = vrot.lane.b32.xlu0 %v2473, 80
        %v2511 = vpop.permute.xlu0 %2510
        %2512 = vrot.lane.b32.xlu0 %v2475, 80
        %v2513 = vpop.permute.xlu0 %2512
        %2514 = vrot.lane.b32.xlu0 %v2477, 80
        %v2515 = vpop.permute.xlu0 %2514
        %2516 = vrot.lane.b32.xlu0 %v2479, 80
        %v2517 = vpop.permute.xlu0 %2516
        %2518 = vrot.lane.b32.xlu0 %v2481, 80
        %v2519 = vpop.permute.xlu0 %2518
        %2520 = vrot.lane.b32.xlu0 %v2483, 80
        %v2521 = vpop.permute.xlu0 %2520
        %2522 = vrot.lane.b32.xlu0 %v2485, 80
        %v2523 = vpop.permute.xlu0 %2522
        %2524 = vrot.lane.b32.xlu0 %v2487, 80
        %v2525 = vpop.permute.xlu0 %2524
        %2526 = vrot.lane.b32.xlu0 %v2489, 80
        %v2527 = vpop.permute.xlu0 %2526
        %2528 = vrot.lane.b32.xlu0 %v2491, 80
        %v2529 = vpop.permute.xlu0 %2528
        %2530 = vrot.lane.b32.xlu0 %v2493, 80
        %v2531 = vpop.permute.xlu0 %2530
        %2532 = vrot.lane.b32.xlu0 %v2495, 80
        %v2533 = vpop.permute.xlu0 %2532
        %2534 = vrot.lane.b32.xlu0 %v2497, 80
        %v2535 = vpop.permute.xlu0 %2534
        %v2555 = vrot.slane %v595, 6
        %v2556 = vrot.slane %v597, 6
        %v2557 = vsel %vm669, %v2555, %v2556
        %v2558 = vrot.slane %v599, 6
        %v2559 = vsel %vm669, %v2556, %v2558
        %v2560 = vrot.slane %v601, 6
        %v2561 = vsel %vm669, %v2558, %v2560
        %v2562 = vrot.slane %v603, 6
        %v2563 = vsel %vm669, %v2560, %v2562
        %v2564 = vrot.slane %v605, 6
        %v2565 = vsel %vm669, %v2562, %v2564
        %v2566 = vrot.slane %v607, 6
        %v2567 = vsel %vm669, %v2564, %v2566
        %v2568 = vrot.slane %v609, 6
        %v2569 = vsel %vm669, %v2566, %v2568
        %v2570 = vrot.slane %v611, 6
        %v2571 = vsel %vm669, %v2568, %v2570
        %v2572 = vrot.slane %v613, 6
        %v2573 = vsel %vm669, %v2570, %v2572
        %v2574 = vrot.slane %v615, 6
        %v2575 = vsel %vm669, %v2572, %v2574
        %v2576 = vrot.slane %v617, 6
        %v2577 = vsel %vm669, %v2574, %v2576
        %v2578 = vrot.slane %v619, 6
        %v2579 = vsel %vm669, %v2576, %v2578
        %v2580 = vrot.slane %v621, 6
        %v2581 = vsel %vm669, %v2578, %v2580
        %v2582 = vrot.slane %v623, 6
        %v2583 = vsel %vm669, %v2580, %v2582
        %v2584 = vrot.slane %v625, 6
        %v2585 = vsel %vm669, %v2582, %v2584
        %v2586 = vrot.slane %v627, 6
        %v2587 = vsel %vm669, %v2584, %v2586
        %v2588 = vrot.slane %v629, 6
        %v2589 = vsel %vm669, %v2586, %v2588
        %v2590 = vrot.slane %v728, 6
        %v2591 = vsel %vm669, %v2588, %v2590
        %2592 = vrot.lane.b32.xlu0 %v2555, 96
        %v2593 = vpop.permute.xlu0 %2592
        %2594 = vrot.lane.b32.xlu0 %v2557, 96
        %v2595 = vpop.permute.xlu0 %2594
        %2596 = vrot.lane.b32.xlu0 %v2559, 96
        %v2597 = vpop.permute.xlu0 %2596
        %2598 = vrot.lane.b32.xlu0 %v2561, 96
        %v2599 = vpop.permute.xlu0 %2598
        %2600 = vrot.lane.b32.xlu0 %v2563, 96
        %v2601 = vpop.permute.xlu0 %2600
        %2602 = vrot.lane.b32.xlu0 %v2565, 96
        %v2603 = vpop.permute.xlu0 %2602
        %2604 = vrot.lane.b32.xlu0 %v2567, 96
        %v2605 = vpop.permute.xlu0 %2604
        %2606 = vrot.lane.b32.xlu0 %v2569, 96
        %v2607 = vpop.permute.xlu0 %2606
        %2608 = vrot.lane.b32.xlu0 %v2571, 96
        %v2609 = vpop.permute.xlu0 %2608
        %2610 = vrot.lane.b32.xlu0 %v2573, 96
        %v2611 = vpop.permute.xlu0 %2610
        %2612 = vrot.lane.b32.xlu0 %v2575, 96
        %v2613 = vpop.permute.xlu0 %2612
        %2614 = vrot.lane.b32.xlu0 %v2577, 96
        %v2615 = vpop.permute.xlu0 %2614
        %2616 = vrot.lane.b32.xlu0 %v2579, 96
        %v2617 = vpop.permute.xlu0 %2616
        %2618 = vrot.lane.b32.xlu0 %v2581, 96
        %v2619 = vpop.permute.xlu0 %2618
        %2620 = vrot.lane.b32.xlu0 %v2583, 96
        %v2621 = vpop.permute.xlu0 %2620
        %2622 = vrot.lane.b32.xlu0 %v2585, 96
        %v2623 = vpop.permute.xlu0 %2622
        %2624 = vrot.lane.b32.xlu0 %v2587, 96
        %v2625 = vpop.permute.xlu0 %2624
        %2626 = vrot.lane.b32.xlu0 %v2589, 96
        %v2627 = vpop.permute.xlu0 %2626
        %2628 = vrot.lane.b32.xlu0 %v2591, 96
        %v2629 = vpop.permute.xlu0 %2628
        %v2649 = vsel %vm1297, %v727, %v2125
        %v2650 = vsel %vm1297, %v595, %v2127
        %v2651 = vsel %vm1297, %v597, %v2129
        %v2652 = vsel %vm1297, %v599, %v2131
        %v2653 = vsel %vm1297, %v601, %v2133
        %v2654 = vsel %vm1297, %v603, %v2135
        %v2655 = vsel %vm1297, %v605, %v2137
        %v2656 = vsel %vm1297, %v607, %v2139
        %v2657 = vsel %vm1297, %v609, %v2141
        %v2658 = vsel %vm1297, %v611, %v2143
        %v2659 = vsel %vm1297, %v613, %v2145
        %v2660 = vsel %vm1297, %v615, %v2147
        %v2661 = vsel %vm1297, %v617, %v2149
        %v2662 = vsel %vm1297, %v619, %v2151
        %v2663 = vsel %vm1297, %v621, %v2153
        %v2664 = vsel %vm1297, %v623, %v2155
        %v2665 = vsel %vm1297, %v625, %v2157
        %v2666 = vsel %vm1297, %v627, %v2159
        %v2667 = vsel %vm1297, %v629, %v2161
        %v2668 = vsel %vm1316, %v2649, %v2219
        %v2669 = vsel %vm1316, %v2650, %v2221
        %v2670 = vsel %vm1316, %v2651, %v2223
        %v2671 = vsel %vm1316, %v2652, %v2225
        %v2672 = vsel %vm1316, %v2653, %v2227
        %v2673 = vsel %vm1316, %v2654, %v2229
        %v2674 = vsel %vm1316, %v2655, %v2231
        %v2675 = vsel %vm1316, %v2656, %v2233
        %v2676 = vsel %vm1316, %v2657, %v2235
        %v2677 = vsel %vm1316, %v2658, %v2237
        %v2678 = vsel %vm1316, %v2659, %v2239
        %v2679 = vsel %vm1316, %v2660, %v2241
        %v2680 = vsel %vm1316, %v2661, %v2243
        %v2681 = vsel %vm1316, %v2662, %v2245
        %v2682 = vsel %vm1316, %v2663, %v2247
        %v2683 = vsel %vm1316, %v2664, %v2249
        %v2684 = vsel %vm1316, %v2665, %v2251
        %v2685 = vsel %vm1316, %v2666, %v2253
        %v2686 = vsel %vm1316, %v2667, %v2255
        %v2687 = vsel %vm1335, %v2668, %v2312
        %v2688 = vsel %vm1335, %v2669, %v2314
        %v2689 = vsel %vm1335, %v2670, %v2316
        %v2690 = vsel %vm1335, %v2671, %v2318
        %v2691 = vsel %vm1335, %v2672, %v2320
        %v2692 = vsel %vm1335, %v2673, %v2322
        %v2693 = vsel %vm1335, %v2674, %v2324
        %v2694 = vsel %vm1335, %v2675, %v2326
        %v2695 = vsel %vm1335, %v2676, %v2328
        %v2696 = vsel %vm1335, %v2677, %v2330
        %v2697 = vsel %vm1335, %v2678, %v2332
        %v2698 = vsel %vm1335, %v2679, %v2334
        %v2699 = vsel %vm1335, %v2680, %v2336
        %v2700 = vsel %vm1335, %v2681, %v2338
        %v2701 = vsel %vm1335, %v2682, %v2340
        %v2702 = vsel %vm1335, %v2683, %v2342
        %v2703 = vsel %vm1335, %v2684, %v2344
        %v2704 = vsel %vm1335, %v2685, %v2346
        %v2705 = vsel %vm1335, %v2686, %v2348
        %v2706 = vsel %vm1354, %v2687, %v2404
        %v2707 = vsel %vm1354, %v2688, %v2406
        %v2708 = vsel %vm1354, %v2689, %v2408
        %v2709 = vsel %vm1354, %v2690, %v2410
        %v2710 = vsel %vm1354, %v2691, %v2412
        %v2711 = vsel %vm1354, %v2692, %v2414
        %v2712 = vsel %vm1354, %v2693, %v2416
        %v2713 = vsel %vm1354, %v2694, %v2418
        %v2714 = vsel %vm1354, %v2695, %v2420
        %v2715 = vsel %vm1354, %v2696, %v2422
        %v2716 = vsel %vm1354, %v2697, %v2424
        %v2717 = vsel %vm1354, %v2698, %v2426
        %v2718 = vsel %vm1354, %v2699, %v2428
        %v2719 = vsel %vm1354, %v2700, %v2430
        %v2720 = vsel %vm1354, %v2701, %v2432
        %v2721 = vsel %vm1354, %v2702, %v2434
        %v2722 = vsel %vm1354, %v2703, %v2436
        %v2723 = vsel %vm1354, %v2704, %v2438
        %v2724 = vsel %vm1354, %v2705, %v2440
        %v2725 = vsel %vm1373, %v2706, %v2499
        %v2726 = vsel %vm1373, %v2707, %v2501
        %v2727 = vsel %vm1373, %v2708, %v2503
        %v2728 = vsel %vm1373, %v2709, %v2505
        %v2729 = vsel %vm1373, %v2710, %v2507
        %v2730 = vsel %vm1373, %v2711, %v2509
        %v2731 = vsel %vm1373, %v2712, %v2511
        %v2732 = vsel %vm1373, %v2713, %v2513
        %v2733 = vsel %vm1373, %v2714, %v2515
        %v2734 = vsel %vm1373, %v2715, %v2517
        %v2735 = vsel %vm1373, %v2716, %v2519
        %v2736 = vsel %vm1373, %v2717, %v2521
        %v2737 = vsel %vm1373, %v2718, %v2523
        %v2738 = vsel %vm1373, %v2719, %v2525
        %v2739 = vsel %vm1373, %v2720, %v2527
        %v2740 = vsel %vm1373, %v2721, %v2529
        %v2741 = vsel %vm1373, %v2722, %v2531
        %v2742 = vsel %vm1373, %v2723, %v2533
        %v2743 = vsel %vm1373, %v2724, %v2535
        %v2744 = vsel %vm1392, %v2725, %v2593
        %v2745 = vsel %vm1392, %v2726, %v2595
        %v2746 = vsel %vm1392, %v2727, %v2597
        %v2747 = vsel %vm1392, %v2728, %v2599
        %v2748 = vsel %vm1392, %v2729, %v2601
        %v2749 = vsel %vm1392, %v2730, %v2603
        %v2750 = vsel %vm1392, %v2731, %v2605
        %v2751 = vsel %vm1392, %v2732, %v2607
        %v2752 = vsel %vm1392, %v2733, %v2609
        %v2753 = vsel %vm1392, %v2734, %v2611
        %v2754 = vsel %vm1392, %v2735, %v2613
        %v2755 = vsel %vm1392, %v2736, %v2615
        %v2756 = vsel %vm1392, %v2737, %v2617
        %v2757 = vsel %vm1392, %v2738, %v2619
        %v2758 = vsel %vm1392, %v2739, %v2621
        %v2759 = vsel %vm1392, %v2740, %v2623
        %v2760 = vsel %vm1392, %v2741, %v2625
        %v2761 = vsel %vm1392, %v2742, %v2627
        %v2762 = vsel %vm1392, %v2743, %v2629
        %v2763 = vrot.slane %v728, 1
        %v2764 = vrot.slane %v672, 1
        %v2765 = vsel %vm748, %v2763, %v2764
        %v2766 = vrot.slane %v674, 1
        %v2767 = vsel %vm748, %v2764, %v2766
        %v2768 = vrot.slane %v676, 1
        %v2769 = vsel %vm748, %v2766, %v2768
        %v2770 = vrot.slane %v678, 1
        %v2771 = vsel %vm748, %v2768, %v2770
        %v2772 = vrot.slane %v680, 1
        %v2773 = vsel %vm748, %v2770, %v2772
        %v2774 = vrot.slane %v682, 1
        %v2775 = vsel %vm748, %v2772, %v2774
        %v2776 = vrot.slane %v684, 1
        %v2777 = vsel %vm748, %v2774, %v2776
        %v2778 = vrot.slane %v686, 1
        %v2779 = vsel %vm748, %v2776, %v2778
        %v2780 = vrot.slane %v688, 1
        %v2781 = vsel %vm748, %v2778, %v2780
        %v2782 = vrot.slane %v690, 1
        %v2783 = vsel %vm748, %v2780, %v2782
        %v2784 = vrot.slane %v692, 1
        %v2785 = vsel %vm748, %v2782, %v2784
        %v2786 = vrot.slane %v694, 1
        %v2787 = vsel %vm748, %v2784, %v2786
        %v2788 = vrot.slane %v696, 1
        %v2789 = vsel %vm748, %v2786, %v2788
        %v2790 = vrot.slane %v698, 1
        %v2791 = vsel %vm748, %v2788, %v2790
        %v2792 = vrot.slane %v700, 1
        %v2793 = vsel %vm748, %v2790, %v2792
        %v2794 = vrot.slane %v702, 1
        %v2795 = vsel %vm748, %v2792, %v2794
        %v2796 = vrot.slane %v704, 1
        %v2797 = vsel %vm748, %v2794, %v2796
        %v2798 = vrot.slane %v706, 1
        %v2799 = vsel %vm748, %v2796, %v2798
        %2800 = vrot.lane.b32.xlu0 %v2765, 16
        %v2801 = vpop.permute.xlu0 %2800
        %2802 = vrot.lane.b32.xlu0 %v2767, 16
        %v2803 = vpop.permute.xlu0 %2802
        %2804 = vrot.lane.b32.xlu0 %v2769, 16
        %v2805 = vpop.permute.xlu0 %2804
        %2806 = vrot.lane.b32.xlu0 %v2771, 16
        %v2807 = vpop.permute.xlu0 %2806
        %2808 = vrot.lane.b32.xlu0 %v2773, 16
        %v2809 = vpop.permute.xlu0 %2808
        %2810 = vrot.lane.b32.xlu0 %v2775, 16
        %v2811 = vpop.permute.xlu0 %2810
        %2812 = vrot.lane.b32.xlu0 %v2777, 16
        %v2813 = vpop.permute.xlu0 %2812
        %2814 = vrot.lane.b32.xlu0 %v2779, 16
        %v2815 = vpop.permute.xlu0 %2814
        %2816 = vrot.lane.b32.xlu0 %v2781, 16
        %v2817 = vpop.permute.xlu0 %2816
        %2818 = vrot.lane.b32.xlu0 %v2783, 16
        %v2819 = vpop.permute.xlu0 %2818
        %2820 = vrot.lane.b32.xlu0 %v2785, 16
        %v2821 = vpop.permute.xlu0 %2820
        %2822 = vrot.lane.b32.xlu0 %v2787, 16
        %v2823 = vpop.permute.xlu0 %2822
        %2824 = vrot.lane.b32.xlu0 %v2789, 16
        %v2825 = vpop.permute.xlu0 %2824
        %2826 = vrot.lane.b32.xlu0 %v2791, 16
        %v2827 = vpop.permute.xlu0 %2826
        %2828 = vrot.lane.b32.xlu0 %v2793, 16
        %v2829 = vpop.permute.xlu0 %2828
        %2830 = vrot.lane.b32.xlu0 %v2795, 16
        %v2831 = vpop.permute.xlu0 %2830
        %2832 = vrot.lane.b32.xlu0 %v2797, 16
        %v2833 = vpop.permute.xlu0 %2832
        %2834 = vrot.lane.b32.xlu0 %v2799, 16
        %v2835 = vpop.permute.xlu0 %2834
        %2836 = vrot.lane.b32.xlu0 %v2798, 16
        %v2837 = vpop.permute.xlu0 %2836
        %v2857 = vrot.slane %v728, 2
        %v2858 = vrot.slane %v672, 2
        %v2859 = vsel %vm515, %v2857, %v2858
        %v2860 = vrot.slane %v674, 2
        %v2861 = vsel %vm515, %v2858, %v2860
        %v2862 = vrot.slane %v676, 2
        %v2863 = vsel %vm515, %v2860, %v2862
        %v2864 = vrot.slane %v678, 2
        %v2865 = vsel %vm515, %v2862, %v2864
        %v2866 = vrot.slane %v680, 2
        %v2867 = vsel %vm515, %v2864, %v2866
        %v2868 = vrot.slane %v682, 2
        %v2869 = vsel %vm515, %v2866, %v2868
        %v2870 = vrot.slane %v684, 2
        %v2871 = vsel %vm515, %v2868, %v2870
        %v2872 = vrot.slane %v686, 2
        %v2873 = vsel %vm515, %v2870, %v2872
        %v2874 = vrot.slane %v688, 2
        %v2875 = vsel %vm515, %v2872, %v2874
        %v2876 = vrot.slane %v690, 2
        %v2877 = vsel %vm515, %v2874, %v2876
        %v2878 = vrot.slane %v692, 2
        %v2879 = vsel %vm515, %v2876, %v2878
        %v2880 = vrot.slane %v694, 2
        %v2881 = vsel %vm515, %v2878, %v2880
        %v2882 = vrot.slane %v696, 2
        %v2883 = vsel %vm515, %v2880, %v2882
        %v2884 = vrot.slane %v698, 2
        %v2885 = vsel %vm515, %v2882, %v2884
        %v2886 = vrot.slane %v700, 2
        %v2887 = vsel %vm515, %v2884, %v2886
        %v2888 = vrot.slane %v702, 2
        %v2889 = vsel %vm515, %v2886, %v2888
        %v2890 = vrot.slane %v704, 2
        %v2891 = vsel %vm515, %v2888, %v2890
        %v2892 = vrot.slane %v706, 2
        %v2893 = vsel %vm515, %v2890, %v2892
        %2894 = vrot.lane.b32.xlu0 %v2859, 32
        %v2895 = vpop.permute.xlu0 %2894
        %2896 = vrot.lane.b32.xlu0 %v2861, 32
        %v2897 = vpop.permute.xlu0 %2896
        %2898 = vrot.lane.b32.xlu0 %v2863, 32
        %v2899 = vpop.permute.xlu0 %2898
        %2900 = vrot.lane.b32.xlu0 %v2865, 32
        %v2901 = vpop.permute.xlu0 %2900
        %2902 = vrot.lane.b32.xlu0 %v2867, 32
        %v2903 = vpop.permute.xlu0 %2902
        %2904 = vrot.lane.b32.xlu0 %v2869, 32
        %v2905 = vpop.permute.xlu0 %2904
        %2906 = vrot.lane.b32.xlu0 %v2871, 32
        %v2907 = vpop.permute.xlu0 %2906
        %2908 = vrot.lane.b32.xlu0 %v2873, 32
        %v2909 = vpop.permute.xlu0 %2908
        %2910 = vrot.lane.b32.xlu0 %v2875, 32
        %v2911 = vpop.permute.xlu0 %2910
        %2912 = vrot.lane.b32.xlu0 %v2877, 32
        %v2913 = vpop.permute.xlu0 %2912
        %2914 = vrot.lane.b32.xlu0 %v2879, 32
        %v2915 = vpop.permute.xlu0 %2914
        %2916 = vrot.lane.b32.xlu0 %v2881, 32
        %v2917 = vpop.permute.xlu0 %2916
        %2918 = vrot.lane.b32.xlu0 %v2883, 32
        %v2919 = vpop.permute.xlu0 %2918
        %2920 = vrot.lane.b32.xlu0 %v2885, 32
        %v2921 = vpop.permute.xlu0 %2920
        %2922 = vrot.lane.b32.xlu0 %v2887, 32
        %v2923 = vpop.permute.xlu0 %2922
        %2924 = vrot.lane.b32.xlu0 %v2889, 32
        %v2925 = vpop.permute.xlu0 %2924
        %2926 = vrot.lane.b32.xlu0 %v2891, 32
        %v2927 = vpop.permute.xlu0 %2926
        %2928 = vrot.lane.b32.xlu0 %v2893, 32
        %v2929 = vpop.permute.xlu0 %2928
        %2930 = vrot.lane.b32.xlu0 %v2892, 32
        %v2931 = vpop.permute.xlu0 %2930
        %v2951 = vrot.slane %v728, 3
        %v2952 = vrot.slane %v672, 3
        %v2953 = vsel %vm931, %v2951, %v2952
        %v2954 = vrot.slane %v674, 3
        %v2955 = vsel %vm931, %v2952, %v2954
        %v2956 = vrot.slane %v676, 3
        %v2957 = vsel %vm931, %v2954, %v2956
        %v2958 = vrot.slane %v678, 3
        %v2959 = vsel %vm931, %v2956, %v2958
        %v2960 = vrot.slane %v680, 3
        %v2961 = vsel %vm931, %v2958, %v2960
        %v2962 = vrot.slane %v682, 3
        %v2963 = vsel %vm931, %v2960, %v2962
        %v2964 = vrot.slane %v684, 3
        %v2965 = vsel %vm931, %v2962, %v2964
        %v2966 = vrot.slane %v686, 3
        %v2967 = vsel %vm931, %v2964, %v2966
        %v2968 = vrot.slane %v688, 3
        %v2969 = vsel %vm931, %v2966, %v2968
        %v2970 = vrot.slane %v690, 3
        %v2971 = vsel %vm931, %v2968, %v2970
        %v2972 = vrot.slane %v692, 3
        %v2973 = vsel %vm931, %v2970, %v2972
        %v2974 = vrot.slane %v694, 3
        %v2975 = vsel %vm931, %v2972, %v2974
        %v2976 = vrot.slane %v696, 3
        %v2977 = vsel %vm931, %v2974, %v2976
        %v2978 = vrot.slane %v698, 3
        %v2979 = vsel %vm931, %v2976, %v2978
        %v2980 = vrot.slane %v700, 3
        %v2981 = vsel %vm931, %v2978, %v2980
        %v2982 = vrot.slane %v702, 3
        %v2983 = vsel %vm931, %v2980, %v2982
        %v2984 = vrot.slane %v704, 3
        %v2985 = vsel %vm931, %v2982, %v2984
        %v2986 = vrot.slane %v706, 3
        %v2987 = vsel %vm931, %v2984, %v2986
        %2988 = vrot.lane.b32.xlu0 %v2953, 48
        %v2989 = vpop.permute.xlu0 %2988
        %2990 = vrot.lane.b32.xlu0 %v2955, 48
        %v2991 = vpop.permute.xlu0 %2990
        %2992 = vrot.lane.b32.xlu0 %v2957, 48
        %v2993 = vpop.permute.xlu0 %2992
        %2994 = vrot.lane.b32.xlu0 %v2959, 48
        %v2995 = vpop.permute.xlu0 %2994
        %2996 = vrot.lane.b32.xlu0 %v2961, 48
        %v2997 = vpop.permute.xlu0 %2996
        %2998 = vrot.lane.b32.xlu0 %v2963, 48
        %v2999 = vpop.permute.xlu0 %2998
        %3000 = vrot.lane.b32.xlu0 %v2965, 48
        %v3001 = vpop.permute.xlu0 %3000
        %3002 = vrot.lane.b32.xlu0 %v2967, 48
        %v3003 = vpop.permute.xlu0 %3002
        %3004 = vrot.lane.b32.xlu0 %v2969, 48
        %v3005 = vpop.permute.xlu0 %3004
        %3006 = vrot.lane.b32.xlu0 %v2971, 48
        %v3007 = vpop.permute.xlu0 %3006
        %3008 = vrot.lane.b32.xlu0 %v2973, 48
        %v3009 = vpop.permute.xlu0 %3008
        %3010 = vrot.lane.b32.xlu0 %v2975, 48
        %v3011 = vpop.permute.xlu0 %3010
        %3012 = vrot.lane.b32.xlu0 %v2977, 48
        %v3013 = vpop.permute.xlu0 %3012
        %3014 = vrot.lane.b32.xlu0 %v2979, 48
        %v3015 = vpop.permute.xlu0 %3014
        %3016 = vrot.lane.b32.xlu0 %v2981, 48
        %v3017 = vpop.permute.xlu0 %3016
        %3018 = vrot.lane.b32.xlu0 %v2983, 48
        %v3019 = vpop.permute.xlu0 %3018
        %3020 = vrot.lane.b32.xlu0 %v2985, 48
        %v3021 = vpop.permute.xlu0 %3020
        %3022 = vrot.lane.b32.xlu0 %v2987, 48
        %v3023 = vpop.permute.xlu0 %3022
        %3024 = vrot.lane.b32.xlu0 %v2986, 48
        %v3025 = vpop.permute.xlu0 %3024
        %v3045 = vrot.slane %v728, 4
        %v3046 = vrot.slane %v672, 4
        %v3047 = vsel %vm592, %v3045, %v3046
        %v3048 = vrot.slane %v674, 4
        %v3049 = vsel %vm592, %v3046, %v3048
        %v3050 = vrot.slane %v676, 4
        %v3051 = vsel %vm592, %v3048, %v3050
        %v3052 = vrot.slane %v678, 4
        %v3053 = vsel %vm592, %v3050, %v3052
        %v3054 = vrot.slane %v680, 4
        %v3055 = vsel %vm592, %v3052, %v3054
        %v3056 = vrot.slane %v682, 4
        %v3057 = vsel %vm592, %v3054, %v3056
        %v3058 = vrot.slane %v684, 4
        %v3059 = vsel %vm592, %v3056, %v3058
        %v3060 = vrot.slane %v686, 4
        %v3061 = vsel %vm592, %v3058, %v3060
        %v3062 = vrot.slane %v688, 4
        %v3063 = vsel %vm592, %v3060, %v3062
        %v3064 = vrot.slane %v690, 4
        %v3065 = vsel %vm592, %v3062, %v3064
        %v3066 = vrot.slane %v692, 4
        %v3067 = vsel %vm592, %v3064, %v3066
        %v3068 = vrot.slane %v694, 4
        %v3069 = vsel %vm592, %v3066, %v3068
        %v3070 = vrot.slane %v696, 4
        %v3071 = vsel %vm592, %v3068, %v3070
        %v3072 = vrot.slane %v698, 4
        %v3073 = vsel %vm592, %v3070, %v3072
        %v3074 = vrot.slane %v700, 4
        %v3075 = vsel %vm592, %v3072, %v3074
        %v3076 = vrot.slane %v702, 4
        %v3077 = vsel %vm592, %v3074, %v3076
        %v3078 = vrot.slane %v704, 4
        %v3079 = vsel %vm592, %v3076, %v3078
        %v3080 = vrot.slane %v706, 4
        %v3081 = vsel %vm592, %v3078, %v3080
        %3082 = vrot.lane.b32.xlu0 %v3047, 64
        %v3083 = vpop.permute.xlu0 %3082
        %3084 = vrot.lane.b32.xlu0 %v3049, 64
        %v3085 = vpop.permute.xlu0 %3084
        %3086 = vrot.lane.b32.xlu0 %v3051, 64
        %v3087 = vpop.permute.xlu0 %3086
        %3088 = vrot.lane.b32.xlu0 %v3053, 64
        %v3089 = vpop.permute.xlu0 %3088
        %3090 = vrot.lane.b32.xlu0 %v3055, 64
        %v3091 = vpop.permute.xlu0 %3090
        %3092 = vrot.lane.b32.xlu0 %v3057, 64
        %v3093 = vpop.permute.xlu0 %3092
        %3094 = vrot.lane.b32.xlu0 %v3059, 64
        %v3095 = vpop.permute.xlu0 %3094
        %3096 = vrot.lane.b32.xlu0 %v3061, 64
        %v3097 = vpop.permute.xlu0 %3096
        %3098 = vrot.lane.b32.xlu0 %v3063, 64
        %v3099 = vpop.permute.xlu0 %3098
        %3100 = vrot.lane.b32.xlu0 %v3065, 64
        %v3101 = vpop.permute.xlu0 %3100
        %3102 = vrot.lane.b32.xlu0 %v3067, 64
        %v3103 = vpop.permute.xlu0 %3102
        %3104 = vrot.lane.b32.xlu0 %v3069, 64
        %v3105 = vpop.permute.xlu0 %3104
        %3106 = vrot.lane.b32.xlu0 %v3071, 64
        %v3107 = vpop.permute.xlu0 %3106
        %3108 = vrot.lane.b32.xlu0 %v3073, 64
        %v3109 = vpop.permute.xlu0 %3108
        %3110 = vrot.lane.b32.xlu0 %v3075, 64
        %v3111 = vpop.permute.xlu0 %3110
        %3112 = vrot.lane.b32.xlu0 %v3077, 64
        %v3113 = vpop.permute.xlu0 %3112
        %3114 = vrot.lane.b32.xlu0 %v3079, 64
        %v3115 = vpop.permute.xlu0 %3114
        %3116 = vrot.lane.b32.xlu0 %v3081, 64
        %v3117 = vpop.permute.xlu0 %3116
        %3118 = vrot.lane.b32.xlu0 %v3080, 64
        %v3119 = vpop.permute.xlu0 %3118
        %v3139 = vrot.slane %v672, 5
        %v3140 = vsel %vm1114, %v2496, %v3139
        %v3141 = vrot.slane %v674, 5
        %v3142 = vsel %vm1114, %v3139, %v3141
        %v3143 = vrot.slane %v676, 5
        %v3144 = vsel %vm1114, %v3141, %v3143
        %v3145 = vrot.slane %v678, 5
        %v3146 = vsel %vm1114, %v3143, %v3145
        %v3147 = vrot.slane %v680, 5
        %v3148 = vsel %vm1114, %v3145, %v3147
        %v3149 = vrot.slane %v682, 5
        %v3150 = vsel %vm1114, %v3147, %v3149
        %v3151 = vrot.slane %v684, 5
        %v3152 = vsel %vm1114, %v3149, %v3151
        %v3153 = vrot.slane %v686, 5
        %v3154 = vsel %vm1114, %v3151, %v3153
        %v3155 = vrot.slane %v688, 5
        %v3156 = vsel %vm1114, %v3153, %v3155
        %v3157 = vrot.slane %v690, 5
        %v3158 = vsel %vm1114, %v3155, %v3157
        %v3159 = vrot.slane %v692, 5
        %v3160 = vsel %vm1114, %v3157, %v3159
        %v3161 = vrot.slane %v694, 5
        %v3162 = vsel %vm1114, %v3159, %v3161
        %v3163 = vrot.slane %v696, 5
        %v3164 = vsel %vm1114, %v3161, %v3163
        %v3165 = vrot.slane %v698, 5
        %v3166 = vsel %vm1114, %v3163, %v3165
        %v3167 = vrot.slane %v700, 5
        %v3168 = vsel %vm1114, %v3165, %v3167
        %v3169 = vrot.slane %v702, 5
        %v3170 = vsel %vm1114, %v3167, %v3169
        %v3171 = vrot.slane %v704, 5
        %v3172 = vsel %vm1114, %v3169, %v3171
        %v3173 = vrot.slane %v706, 5
        %v3174 = vsel %vm1114, %v3171, %v3173
        %3175 = vrot.lane.b32.xlu0 %v3140, 80
        %v3176 = vpop.permute.xlu0 %3175
        %3177 = vrot.lane.b32.xlu0 %v3142, 80
        %v3178 = vpop.permute.xlu0 %3177
        %3179 = vrot.lane.b32.xlu0 %v3144, 80
        %v3180 = vpop.permute.xlu0 %3179
        %3181 = vrot.lane.b32.xlu0 %v3146, 80
        %v3182 = vpop.permute.xlu0 %3181
        %3183 = vrot.lane.b32.xlu0 %v3148, 80
        %v3184 = vpop.permute.xlu0 %3183
        %3185 = vrot.lane.b32.xlu0 %v3150, 80
        %v3186 = vpop.permute.xlu0 %3185
        %3187 = vrot.lane.b32.xlu0 %v3152, 80
        %v3188 = vpop.permute.xlu0 %3187
        %3189 = vrot.lane.b32.xlu0 %v3154, 80
        %v3190 = vpop.permute.xlu0 %3189
        %3191 = vrot.lane.b32.xlu0 %v3156, 80
        %v3192 = vpop.permute.xlu0 %3191
        %3193 = vrot.lane.b32.xlu0 %v3158, 80
        %v3194 = vpop.permute.xlu0 %3193
        %3195 = vrot.lane.b32.xlu0 %v3160, 80
        %v3196 = vpop.permute.xlu0 %3195
        %3197 = vrot.lane.b32.xlu0 %v3162, 80
        %v3198 = vpop.permute.xlu0 %3197
        %3199 = vrot.lane.b32.xlu0 %v3164, 80
        %v3200 = vpop.permute.xlu0 %3199
        %3201 = vrot.lane.b32.xlu0 %v3166, 80
        %v3202 = vpop.permute.xlu0 %3201
        %3203 = vrot.lane.b32.xlu0 %v3168, 80
        %v3204 = vpop.permute.xlu0 %3203
        %3205 = vrot.lane.b32.xlu0 %v3170, 80
        %v3206 = vpop.permute.xlu0 %3205
        %3207 = vrot.lane.b32.xlu0 %v3172, 80
        %v3208 = vpop.permute.xlu0 %3207
        %3209 = vrot.lane.b32.xlu0 %v3174, 80
        %v3210 = vpop.permute.xlu0 %3209
        %3211 = vrot.lane.b32.xlu0 %v3173, 80
        %v3212 = vpop.permute.xlu0 %3211
        %v3232 = vrot.slane %v672, 6
        %v3233 = vrot.slane %v674, 6
        %v3234 = vsel %vm669, %v3232, %v3233
        %v3235 = vrot.slane %v676, 6
        %v3236 = vsel %vm669, %v3233, %v3235
        %v3237 = vrot.slane %v678, 6
        %v3238 = vsel %vm669, %v3235, %v3237
        %v3239 = vrot.slane %v680, 6
        %v3240 = vsel %vm669, %v3237, %v3239
        %v3241 = vrot.slane %v682, 6
        %v3242 = vsel %vm669, %v3239, %v3241
        %v3243 = vrot.slane %v684, 6
        %v3244 = vsel %vm669, %v3241, %v3243
        %v3245 = vrot.slane %v686, 6
        %v3246 = vsel %vm669, %v3243, %v3245
        %v3247 = vrot.slane %v688, 6
        %v3248 = vsel %vm669, %v3245, %v3247
        %v3249 = vrot.slane %v690, 6
        %v3250 = vsel %vm669, %v3247, %v3249
        %v3251 = vrot.slane %v692, 6
        %v3252 = vsel %vm669, %v3249, %v3251
        %v3253 = vrot.slane %v694, 6
        %v3254 = vsel %vm669, %v3251, %v3253
        %v3255 = vrot.slane %v696, 6
        %v3256 = vsel %vm669, %v3253, %v3255
        %v3257 = vrot.slane %v698, 6
        %v3258 = vsel %vm669, %v3255, %v3257
        %v3259 = vrot.slane %v700, 6
        %v3260 = vsel %vm669, %v3257, %v3259
        %v3261 = vrot.slane %v702, 6
        %v3262 = vsel %vm669, %v3259, %v3261
        %v3263 = vrot.slane %v704, 6
        %v3264 = vsel %vm669, %v3261, %v3263
        %v3265 = vrot.slane %v706, 6
        %v3266 = vsel %vm669, %v3263, %v3265
        %3267 = vrot.lane.b32.xlu0 %v3232, 96
        %v3268 = vpop.permute.xlu0 %3267
        %3269 = vrot.lane.b32.xlu0 %v3234, 96
        %v3270 = vpop.permute.xlu0 %3269
        %3271 = vrot.lane.b32.xlu0 %v3236, 96
        %v3272 = vpop.permute.xlu0 %3271
        %3273 = vrot.lane.b32.xlu0 %v3238, 96
        %v3274 = vpop.permute.xlu0 %3273
        %3275 = vrot.lane.b32.xlu0 %v3240, 96
        %v3276 = vpop.permute.xlu0 %3275
        %3277 = vrot.lane.b32.xlu0 %v3242, 96
        %v3278 = vpop.permute.xlu0 %3277
        %3279 = vrot.lane.b32.xlu0 %v3244, 96
        %v3280 = vpop.permute.xlu0 %3279
        %3281 = vrot.lane.b32.xlu0 %v3246, 96
        %v3282 = vpop.permute.xlu0 %3281
        %3283 = vrot.lane.b32.xlu0 %v3248, 96
        %v3284 = vpop.permute.xlu0 %3283
        %3285 = vrot.lane.b32.xlu0 %v3250, 96
        %v3286 = vpop.permute.xlu0 %3285
        %3287 = vrot.lane.b32.xlu0 %v3252, 96
        %v3288 = vpop.permute.xlu0 %3287
        %3289 = vrot.lane.b32.xlu0 %v3254, 96
        %v3290 = vpop.permute.xlu0 %3289
        %3291 = vrot.lane.b32.xlu0 %v3256, 96
        %v3292 = vpop.permute.xlu0 %3291
        %3293 = vrot.lane.b32.xlu0 %v3258, 96
        %v3294 = vpop.permute.xlu0 %3293
        %3295 = vrot.lane.b32.xlu0 %v3260, 96
        %v3296 = vpop.permute.xlu0 %3295
        %3297 = vrot.lane.b32.xlu0 %v3262, 96
        %v3298 = vpop.permute.xlu0 %3297
        %3299 = vrot.lane.b32.xlu0 %v3264, 96
        %v3300 = vpop.permute.xlu0 %3299
        %3301 = vrot.lane.b32.xlu0 %v3266, 96
        %v3302 = vpop.permute.xlu0 %3301
        %3303 = vrot.lane.b32.xlu0 %v3265, 96
        %v3304 = vpop.permute.xlu0 %3303
        %v3324 = vsel %vm1297, %v728, %v2801
        %v3325 = vsel %vm1297, %v672, %v2803
        %v3326 = vsel %vm1297, %v674, %v2805
        %v3327 = vsel %vm1297, %v676, %v2807
        %v3328 = vsel %vm1297, %v678, %v2809
        %v3329 = vsel %vm1297, %v680, %v2811
        %v3330 = vsel %vm1297, %v682, %v2813
        %v3331 = vsel %vm1297, %v684, %v2815
        %v3332 = vsel %vm1297, %v686, %v2817
        %v3333 = vsel %vm1297, %v688, %v2819
        %v3334 = vsel %vm1297, %v690, %v2821
        %v3335 = vsel %vm1297, %v692, %v2823
        %v3336 = vsel %vm1297, %v694, %v2825
        %v3337 = vsel %vm1297, %v696, %v2827
        %v3338 = vsel %vm1297, %v698, %v2829
        %v3339 = vsel %vm1297, %v700, %v2831
        %v3340 = vsel %vm1297, %v702, %v2833
        %v3341 = vsel %vm1297, %v704, %v2835
        %v3342 = vsel %vm1297, %v706, %v2837
        %v3343 = vsel %vm1316, %v3324, %v2895
        %v3344 = vsel %vm1316, %v3325, %v2897
        %v3345 = vsel %vm1316, %v3326, %v2899
        %v3346 = vsel %vm1316, %v3327, %v2901
        %v3347 = vsel %vm1316, %v3328, %v2903
        %v3348 = vsel %vm1316, %v3329, %v2905
        %v3349 = vsel %vm1316, %v3330, %v2907
        %v3350 = vsel %vm1316, %v3331, %v2909
        %v3351 = vsel %vm1316, %v3332, %v2911
        %v3352 = vsel %vm1316, %v3333, %v2913
        %v3353 = vsel %vm1316, %v3334, %v2915
        %v3354 = vsel %vm1316, %v3335, %v2917
        %v3355 = vsel %vm1316, %v3336, %v2919
        %v3356 = vsel %vm1316, %v3337, %v2921
        %v3357 = vsel %vm1316, %v3338, %v2923
        %v3358 = vsel %vm1316, %v3339, %v2925
        %v3359 = vsel %vm1316, %v3340, %v2927
        %v3360 = vsel %vm1316, %v3341, %v2929
        %v3361 = vsel %vm1316, %v3342, %v2931
        %v3362 = vsel %vm1335, %v3343, %v2989
        %v3363 = vsel %vm1335, %v3344, %v2991
        %v3364 = vsel %vm1335, %v3345, %v2993
        %v3365 = vsel %vm1335, %v3346, %v2995
        %v3366 = vsel %vm1335, %v3347, %v2997
        %v3367 = vsel %vm1335, %v3348, %v2999
        %v3368 = vsel %vm1335, %v3349, %v3001
        %v3369 = vsel %vm1335, %v3350, %v3003
        %v3370 = vsel %vm1335, %v3351, %v3005
        %v3371 = vsel %vm1335, %v3352, %v3007
        %v3372 = vsel %vm1335, %v3353, %v3009
        %v3373 = vsel %vm1335, %v3354, %v3011
        %v3374 = vsel %vm1335, %v3355, %v3013
        %v3375 = vsel %vm1335, %v3356, %v3015
        %v3376 = vsel %vm1335, %v3357, %v3017
        %v3377 = vsel %vm1335, %v3358, %v3019
        %v3378 = vsel %vm1335, %v3359, %v3021
        %v3379 = vsel %vm1335, %v3360, %v3023
        %v3380 = vsel %vm1335, %v3361, %v3025
        %v3381 = vsel %vm1354, %v3362, %v3083
        %v3382 = vsel %vm1354, %v3363, %v3085
        %v3383 = vsel %vm1354, %v3364, %v3087
        %v3384 = vsel %vm1354, %v3365, %v3089
        %v3385 = vsel %vm1354, %v3366, %v3091
        %v3386 = vsel %vm1354, %v3367, %v3093
        %v3387 = vsel %vm1354, %v3368, %v3095
        %v3388 = vsel %vm1354, %v3369, %v3097
        %v3389 = vsel %vm1354, %v3370, %v3099
        %v3390 = vsel %vm1354, %v3371, %v3101
        %v3391 = vsel %vm1354, %v3372, %v3103
        %v3392 = vsel %vm1354, %v3373, %v3105
        %v3393 = vsel %vm1354, %v3374, %v3107
        %v3394 = vsel %vm1354, %v3375, %v3109
        %v3395 = vsel %vm1354, %v3376, %v3111
        %v3396 = vsel %vm1354, %v3377, %v3113
        %v3397 = vsel %vm1354, %v3378, %v3115
        %v3398 = vsel %vm1354, %v3379, %v3117
        %v3399 = vsel %vm1354, %v3380, %v3119
        %v3400 = vsel %vm1373, %v3381, %v3176
        %v3401 = vsel %vm1373, %v3382, %v3178
        %v3402 = vsel %vm1373, %v3383, %v3180
        %v3403 = vsel %vm1373, %v3384, %v3182
        %v3404 = vsel %vm1373, %v3385, %v3184
        %v3405 = vsel %vm1373, %v3386, %v3186
        %v3406 = vsel %vm1373, %v3387, %v3188
        %v3407 = vsel %vm1373, %v3388, %v3190
        %v3408 = vsel %vm1373, %v3389, %v3192
        %v3409 = vsel %vm1373, %v3390, %v3194
        %v3410 = vsel %vm1373, %v3391, %v3196
        %v3411 = vsel %vm1373, %v3392, %v3198
        %v3412 = vsel %vm1373, %v3393, %v3200
        %v3413 = vsel %vm1373, %v3394, %v3202
        %v3414 = vsel %vm1373, %v3395, %v3204
        %v3415 = vsel %vm1373, %v3396, %v3206
        %v3416 = vsel %vm1373, %v3397, %v3208
        %v3417 = vsel %vm1373, %v3398, %v3210
        %v3418 = vsel %vm1373, %v3399, %v3212
        %v3419 = vsel %vm1392, %v3400, %v3268
        %v3420 = vsel %vm1392, %v3401, %v3270
        %v3421 = vsel %vm1392, %v3402, %v3272
        %v3422 = vsel %vm1392, %v3403, %v3274
        %v3423 = vsel %vm1392, %v3404, %v3276
        %v3424 = vsel %vm1392, %v3405, %v3278
        %v3425 = vsel %vm1392, %v3406, %v3280
        %v3426 = vsel %vm1392, %v3407, %v3282
        %v3427 = vsel %vm1392, %v3408, %v3284
        %v3428 = vsel %vm1392, %v3409, %v3286
        %v3429 = vsel %vm1392, %v3410, %v3288
        %v3430 = vsel %vm1392, %v3411, %v3290
        %v3431 = vsel %vm1392, %v3412, %v3292
        %v3432 = vsel %vm1392, %v3413, %v3294
        %v3433 = vsel %vm1392, %v3414, %v3296
        %v3434 = vsel %vm1392, %v3415, %v3298
        %v3435 = vsel %vm1392, %v3416, %v3300
        %v3436 = vsel %vm1392, %v3417, %v3302
        %v3437 = vsel %vm1392, %v3418, %v3304
        %v3457 = vrot.slane %v2068, 6
        %v3458 = vrot.slane %v2069, 6
        %v3459 = vsel %vm669, %v3457, %v3458
        %v3460 = vrot.slane %v2070, 6
        %v3461 = vsel %vm669, %v3458, %v3460
        %v3462 = vrot.slane %v2071, 6
        %v3463 = vsel %vm669, %v3460, %v3462
        %v3464 = vrot.slane %v2072, 6
        %v3465 = vsel %vm669, %v3462, %v3464
        %v3466 = vrot.slane %v2073, 6
        %v3467 = vsel %vm669, %v3464, %v3466
        %v3468 = vrot.slane %v2074, 6
        %v3469 = vsel %vm669, %v3466, %v3468
        %v3470 = vrot.slane %v2075, 6
        %v3471 = vsel %vm669, %v3468, %v3470
        %v3472 = vrot.slane %v2076, 6
        %v3473 = vsel %vm669, %v3470, %v3472
        %v3474 = vrot.slane %v2077, 6
        %v3475 = vsel %vm669, %v3472, %v3474
        %v3476 = vrot.slane %v2078, 6
        %v3477 = vsel %vm669, %v3474, %v3476
        %v3478 = vrot.slane %v2079, 6
        %v3479 = vsel %vm669, %v3476, %v3478
        %v3480 = vrot.slane %v2080, 6
        %v3481 = vsel %vm669, %v3478, %v3480
        %v3482 = vrot.slane %v2081, 6
        %v3483 = vsel %vm669, %v3480, %v3482
        %v3484 = vrot.slane %v2082, 6
        %v3485 = vsel %vm669, %v3482, %v3484
        %v3486 = vrot.slane %v2083, 6
        %v3487 = vsel %vm669, %v3484, %v3486
        %v3488 = vrot.slane %v2084, 6
        %v3489 = vsel %vm669, %v3486, %v3488
        %v3490 = vrot.slane %v2085, 6
        %v3491 = vsel %vm669, %v3488, %v3490
        %v3492 = vrot.slane %v2086, 6
        %v3493 = vsel %vm669, %v3490, %v3492
        %v3513 = vrot.slane %v2744, 4
        %v3514 = vrot.slane %v2745, 4
        %v3515 = vsel %vm592, %v3513, %v3514
        %v3516 = vrot.slane %v2746, 4
        %v3517 = vsel %vm592, %v3514, %v3516
        %v3518 = vrot.slane %v2747, 4
        %v3519 = vsel %vm592, %v3516, %v3518
        %v3520 = vrot.slane %v2748, 4
        %v3521 = vsel %vm592, %v3518, %v3520
        %v3522 = vrot.slane %v2749, 4
        %v3523 = vsel %vm592, %v3520, %v3522
        %v3524 = vrot.slane %v2750, 4
        %v3525 = vsel %vm592, %v3522, %v3524
        %v3526 = vrot.slane %v2751, 4
        %v3527 = vsel %vm592, %v3524, %v3526
        %v3528 = vrot.slane %v2752, 4
        %v3529 = vsel %vm592, %v3526, %v3528
        %v3530 = vrot.slane %v2753, 4
        %v3531 = vsel %vm592, %v3528, %v3530
        %v3532 = vrot.slane %v2754, 4
        %v3533 = vsel %vm592, %v3530, %v3532
        %v3534 = vrot.slane %v2755, 4
        %v3535 = vsel %vm592, %v3532, %v3534
        %v3536 = vrot.slane %v2756, 4
        %v3537 = vsel %vm592, %v3534, %v3536
        %v3538 = vrot.slane %v2757, 4
        %v3539 = vsel %vm592, %v3536, %v3538
        %v3540 = vrot.slane %v2758, 4
        %v3541 = vsel %vm592, %v3538, %v3540
        %v3542 = vrot.slane %v2759, 4
        %v3543 = vsel %vm592, %v3540, %v3542
        %v3544 = vrot.slane %v2760, 4
        %v3545 = vsel %vm592, %v3542, %v3544
        %v3546 = vrot.slane %v2761, 4
        %v3547 = vsel %vm592, %v3544, %v3546
        %v3548 = vrot.slane %v2762, 4
        %v3549 = vsel %vm592, %v3546, %v3548
        %v3569 = vrot.slane %v3419, 2
        %v3570 = vrot.slane %v3420, 2
        %v3571 = vsel %vm515, %v3569, %v3570
        %v3572 = vrot.slane %v3421, 2
        %v3573 = vsel %vm515, %v3570, %v3572
        %v3574 = vrot.slane %v3422, 2
        %v3575 = vsel %vm515, %v3572, %v3574
        %v3576 = vrot.slane %v3423, 2
        %v3577 = vsel %vm515, %v3574, %v3576
        %v3578 = vrot.slane %v3424, 2
        %v3579 = vsel %vm515, %v3576, %v3578
        %v3580 = vrot.slane %v3425, 2
        %v3581 = vsel %vm515, %v3578, %v3580
        %v3582 = vrot.slane %v3426, 2
        %v3583 = vsel %vm515, %v3580, %v3582
        %v3584 = vrot.slane %v3427, 2
        %v3585 = vsel %vm515, %v3582, %v3584
        %v3586 = vrot.slane %v3428, 2
        %v3587 = vsel %vm515, %v3584, %v3586
        %v3588 = vrot.slane %v3429, 2
        %v3589 = vsel %vm515, %v3586, %v3588
        %v3590 = vrot.slane %v3430, 2
        %v3591 = vsel %vm515, %v3588, %v3590
        %v3592 = vrot.slane %v3431, 2
        %v3593 = vsel %vm515, %v3590, %v3592
        %v3594 = vrot.slane %v3432, 2
        %v3595 = vsel %vm515, %v3592, %v3594
        %v3596 = vrot.slane %v3433, 2
        %v3597 = vsel %vm515, %v3594, %v3596
        %v3598 = vrot.slane %v3434, 2
        %v3599 = vsel %vm515, %v3596, %v3598
        %v3600 = vrot.slane %v3435, 2
        %v3601 = vsel %vm515, %v3598, %v3600
        %v3602 = vrot.slane %v3436, 2
        %v3603 = vsel %vm515, %v3600, %v3602
        %v3604 = vrot.slane %v3437, 2
        %v3605 = vsel %vm515, %v3602, %v3604
        %v3606 = vld [vmem:[%s1] sm:$0xff]
        %v3607 = vld [vmem:[%s1 + $0x8] sm:$0xff]
        %v3608 = vld [vmem:[%s1 + $0x10] sm:$0xff]
        %v3609 = vld [vmem:[%s1 + $0x18] sm:$0xff]
        %v3610 = vld [vmem:[%s1 + $0x20] sm:$0xff]
        %v3611 = vld [vmem:[%s1 + $0x28] sm:$0xff]
        %v3612 = vld [vmem:[%s1 + $0x30] sm:$0xff]
        %v3613 = vld [vmem:[%s1 + $0x38] sm:$0xff]
        %v3614 = vld [vmem:[%s1 + $0x40] sm:$0xff]
        %v3615 = vld [vmem:[%s1 + $0x48] sm:$0xff]
        %v3616 = vld [vmem:[%s1 + $0x50] sm:$0xff]
        %v3617 = vld [vmem:[%s1 + $0x58] sm:$0xff]
        %v3618 = vld [vmem:[%s1 + $0x60] sm:$0xff]
        %v3619 = vld [vmem:[%s1 + $0x68] sm:$0xff]
        %v3620 = vld [vmem:[%s7] sm:$0x1]
        %v3621 = vlaneseq
        %v3622 = vshrl.u32 %v3621, 7
        %v3623 = vsub.s32 0, %v3622
        %v3624 = vrot.slane %v3620, %v3623
        %vm3625 = vcmask 916480
        %v3627 = vsel %vm3625, %v1393, 0
        %v3630 = vsel %vm3625, %v1394, 0
        %v3633 = vsel %vm3625, %v1395, 0
        %v3636 = vsel %vm3625, %v1396, 0
        %v3639 = vsel %vm3625, %v1397, 0
        %v3642 = vsel %vm3625, %v1398, 0
        %v3645 = vsel %vm3625, %v1399, 0
        %v3648 = vsel %vm3625, %v1400, 0
        %v3651 = vsel %vm3625, %v1401, 0
        %v3654 = vsel %vm3625, %v1402, 0
        %v3657 = vsel %vm3625, %v1403, 0
        %v3660 = vsel %vm3625, %v1404, 0
        %v3663 = vsel %vm3625, %v1405, 0
        %v3666 = vsel %vm3625, %v1406, 0
        %v3669 = vsel %vm3625, %v1407, 0
        %v3672 = vsel %vm3625, %v1408, 0
        %v3675 = vsel %vm3625, %v1409, 0
        %v3678 = vsel %vm3625, %v1410, 0
        %v3680 = vsel %vm3625, %v3459, 0
        %v3682 = vsel %vm3625, %v3461, 0
        %v3684 = vsel %vm3625, %v3463, 0
        %v3686 = vsel %vm3625, %v3465, 0
        %v3688 = vsel %vm3625, %v3467, 0
        %v3690 = vsel %vm3625, %v3469, 0
        %v3692 = vsel %vm3625, %v3471, 0
        %v3694 = vsel %vm3625, %v3473, 0
        %v3696 = vsel %vm3625, %v3475, 0
        %v3698 = vsel %vm3625, %v3477, 0
        %v3700 = vsel %vm3625, %v3479, 0
        %v3702 = vsel %vm3625, %v3481, 0
        %v3704 = vsel %vm3625, %v3483, 0
        %v3706 = vsel %vm3625, %v3485, 0
        %v3708 = vsel %vm3625, %v3487, 0
        %v3710 = vsel %vm3625, %v3489, 0
        %v3712 = vsel %vm3625, %v3491, 0
        %v3714 = vsel %vm3625, %v3493, 0
        %v3716 = vsel %vm3625, %v3515, 0
        %v3718 = vsel %vm3625, %v3517, 0
        %v3720 = vsel %vm3625, %v3519, 0
        %v3722 = vsel %vm3625, %v3521, 0
        %v3724 = vsel %vm3625, %v3523, 0
        %v3726 = vsel %vm3625, %v3525, 0
        %v3728 = vsel %vm3625, %v3527, 0
        %v3730 = vsel %vm3625, %v3529, 0
        %v3732 = vsel %vm3625, %v3531, 0
        %v3734 = vsel %vm3625, %v3533, 0
        %v3736 = vsel %vm3625, %v3535, 0
        %v3738 = vsel %vm3625, %v3537, 0
        %v3740 = vsel %vm3625, %v3539, 0
        %v3742 = vsel %vm3625, %v3541, 0
        %v3744 = vsel %vm3625, %v3543, 0
        %v3746 = vsel %vm3625, %v3545, 0
        %v3748 = vsel %vm3625, %v3547, 0
        %v3750 = vsel %vm3625, %v3549, 0
        %v3752 = vsel %vm3625, %v3571, 0
        %v3754 = vsel %vm3625, %v3573, 0
        %v3756 = vsel %vm3625, %v3575, 0
        %v3758 = vsel %vm3625, %v3577, 0
        %v3760 = vsel %vm3625, %v3579, 0
        %v3762 = vsel %vm3625, %v3581, 0
        %v3764 = vsel %vm3625, %v3583, 0
        %v3766 = vsel %vm3625, %v3585, 0
        %v3768 = vsel %vm3625, %v3587, 0
        %v3770 = vsel %vm3625, %v3589, 0
        %v3772 = vsel %vm3625, %v3591, 0
        %v3774 = vsel %vm3625, %v3593, 0
        %v3776 = vsel %vm3625, %v3595, 0
        %v3778 = vsel %vm3625, %v3597, 0
        %v3780 = vsel %vm3625, %v3599, 0
        %v3782 = vsel %vm3625, %v3601, 0
        %v3784 = vsel %vm3625, %v3603, 0
        %v3786 = vsel %vm3625, %v3605, 0
        %3788 = vmatprep.subr.mxu0 0.0
        %3789 = vmatpush1.msra.mxu0 %v3606
        %3790 = vmatprep.subr.mxu0 0.0
        %3791 = vmatpush1.msra.mxu0 %v3607
        %3792 = vmatprep.subr.mxu0 0.0
        %3793 = vmatpush1.msra.mxu0 %v3608
        %3794 = vmatprep.subr.mxu0 0.0
        %3795 = vmatpush1.msra.mxu0 %v3609
        %3796 = vmatprep.subr.mxu0 0.0
        %3797 = vmatpush1.msra.mxu0 %v3610
        %3798 = vmatprep.subr.mxu0 0.0
        %3799 = vmatpush1.msra.mxu0 %v3611
        %3800 = vmatprep.subr.mxu0 0.0
        %3801 = vmatpush1.msra.mxu0 %v3612
        %3802 = vmatprep.subr.mxu0 0.0
        %3803 = vmatpush1.msra.mxu0 %v3613
        %3804 = vmatprep.subr.mxu0 0.0
        %3805 = vmatpush1.msra.mxu0 %v3614
        %3806 = vmatprep.subr.mxu0 0.0
        %3807 = vmatpush1.msra.mxu0 %v3615
        %3808 = vmatprep.subr.mxu0 0.0
        %3809 = vmatpush1.msra.mxu0 %v3616
        %3810 = vmatprep.subr.mxu0 0.0
        %3811 = vmatpush1.msra.mxu0 %v3617
        %3812 = vmatprep.subr.mxu0 0.0
        %3813 = vmatpush1.msra.mxu0 %v3618
        %3814 = vmatprep.subr.mxu0 0.0
        %3815 = vmatpush1.msra.mxu0 %v3619
        %3816 = vmatprep.subr.mxu0 0.0
        %3817 = vmatpush1.msra.mxu0 0.0
        %3818 = vmatprep.subr.mxu0 0.0
        %3819 = vmatpush1.msra.mxu0 0.0
        %3820 = vmatprep.subr.mxu0 0.0
        %3821 = vmatpush1.msra.mxu0 0.0
        %3822 = vmatprep.subr.mxu0 0.0
        %3823 = vmatpush1.msra.mxu0 0.0
        %3824 = vmatprep.subr.mxu0 0.0
        %3825 = vmatpush1.msra.mxu0 0.0
        %3826 = vmatprep.subr.mxu0 0.0
        %3827 = vmatpush1.msra.mxu0 0.0
        %3828 = vmatprep.subr.mxu0 0.0
        %3829 = vmatpush1.msra.mxu0 0.0
        %3830 = vmatprep.subr.mxu0 0.0
        %3831 = vmatpush1.msra.mxu0 0.0
        %3832 = vmatprep.subr.mxu0 0.0
        %3833 = vmatpush1.msra.mxu0 0.0
        %3834 = vmatprep.subr.mxu0 0.0
        %3835 = vmatpush1.msra.mxu0 0.0
        %3836 = vmatprep.subr.mxu0 0.0
        %3837 = vmatpush1.msra.mxu0 0.0
        %3838 = vmatprep.subr.mxu0 0.0
        %3839 = vmatpush1.msra.mxu0 0.0
        %3840 = vmatprep.subr.mxu0 0.0
        %3841 = vmatpush1.msra.mxu0 0.0
        %3842 = vmatprep.subr.mxu0 0.0
        %3843 = vmatpush1.msra.mxu0 0.0
        %3844 = vmatprep.subr.mxu0 0.0
        %3845 = vmatpush1.msra.mxu0 0.0
        %3846 = vmatprep.subr.mxu0 0.0
        %3847 = vmatpush1.msra.mxu0 0.0
        %3848 = vmatprep.subr.mxu0 0.0
        %3849 = vmatpush1.msra.mxu0 0.0
        %3850 = vmatprep.subr.mxu0 0.0
        %3851 = vmatpush1.msra.mxu0 0.0
        %3852 = vmatprep.mubr.f32.mxu0 0.0
        %3853 = vmatmul.mubr.f32.gmra.mrb[0].mxu0 %v3627
        %v3854 = vpop.f32.mrb[0].mxu0
        %v3855 = vadd.f32 %v3624, %v3854
        %v3856 = vpop.f32.mrb[0].mxu0
        %3857 = vmatprep.mubr.f32.mxu0 0.0
        %3858 = vmatmul.mubr.f32.gmra.mrb[0].mxu0 %v3630
        %v3859 = vpop.f32.mrb[0].mxu0
        %v3860 = vadd.f32 %v3624, %v3859
        %v3861 = vpop.f32.mrb[0].mxu0
        %3862 = vmatprep.mubr.f32.mxu0 0.0
        %3863 = vmatmul.mubr.f32.gmra.mrb[0].mxu0 %v3633
        %v3864 = vpop.f32.mrb[0].mxu0
        %v3865 = vadd.f32 %v3624, %v3864
        %v3866 = vpop.f32.mrb[0].mxu0
        %3867 = vmatprep.mubr.f32.mxu0 0.0
        %3868 = vmatmul.mubr.f32.gmra.mrb[0].mxu0 %v3636
        %v3869 = vpop.f32.mrb[0].mxu0
        %v3870 = vadd.f32 %v3624, %v3869
        %v3871 = vpop.f32.mrb[0].mxu0
        %3872 = vmatprep.mubr.f32.mxu0 0.0
        %3873 = vmatmul.mubr.f32.gmra.mrb[0].mxu0 %v3639
        %v3874 = vpop.f32.mrb[0].mxu0
        %v3875 = vadd.f32 %v3624, %v3874
        %v3876 = vpop.f32.mrb[0].mxu0
        %3877 = vmatprep.mubr.f32.mxu0 0.0
        %3878 = vmatmul.mubr.f32.gmra.mrb[0].mxu0 %v3642
        %v3879 = vpop.f32.mrb[0].mxu0
        %v3880 = vadd.f32 %v3624, %v3879
        %v3881 = vpop.f32.mrb[0].mxu0
        %3882 = vmatprep.mubr.f32.mxu0 0.0
        %3883 = vmatmul.mubr.f32.gmra.mrb[0].mxu0 %v3645
        %v3884 = vpop.f32.mrb[0].mxu0
        %v3885 = vadd.f32 %v3624, %v3884
        %v3886 = vpop.f32.mrb[0].mxu0
        %3887 = vmatprep.mubr.f32.mxu0 0.0
        %3888 = vmatmul.mubr.f32.gmra.mrb[0].mxu0 %v3648
        %v3889 = vpop.f32.mrb[0].mxu0
        %v3890 = vadd.f32 %v3624, %v3889
        %v3891 = vpop.f32.mrb[0].mxu0
        %3892 = vmatprep.mubr.f32.mxu0 0.0
        %3893 = vmatmul.mubr.f32.gmra.mrb[0].mxu0 %v3651
        %v3894 = vpop.f32.mrb[0].mxu0
        %v3895 = vadd.f32 %v3624, %v3894
        %v3896 = vpop.f32.mrb[0].mxu0
        %3897 = vmatprep.mubr.f32.mxu0 0.0
        %3898 = vmatmul.mubr.f32.gmra.mrb[0].mxu0 %v3654
        %v3899 = vpop.f32.mrb[0].mxu0
        %v3900 = vadd.f32 %v3624, %v3899
        %v3901 = vpop.f32.mrb[0].mxu0
        %3902 = vmatprep.mubr.f32.mxu0 0.0
        %3903 = vmatmul.mubr.f32.gmra.mrb[0].mxu0 %v3657
        %v3904 = vpop.f32.mrb[0].mxu0
        %v3905 = vadd.f32 %v3624, %v3904
        %v3906 = vpop.f32.mrb[0].mxu0
        %3907 = vmatprep.mubr.f32.mxu0 0.0
        %3908 = vmatmul.mubr.f32.gmra.mrb[0].mxu0 %v3660
        %v3909 = vpop.f32.mrb[0].mxu0
        %v3910 = vadd.f32 %v3624, %v3909
        %v3911 = vpop.f32.mrb[0].mxu0
        %3912 = vmatprep.mubr.f32.mxu0 0.0
        %3913 = vmatmul.mubr.f32.gmra.mrb[0].mxu0 %v3663
        %v3914 = vpop.f32.mrb[0].mxu0
        %v3915 = vadd.f32 %v3624, %v3914
        %v3916 = vpop.f32.mrb[0].mxu0
        %3917 = vmatprep.mubr.f32.mxu0 0.0
        %3918 = vmatmul.mubr.f32.gmra.mrb[0].mxu0 %v3666
        %v3919 = vpop.f32.mrb[0].mxu0
        %v3920 = vadd.f32 %v3624, %v3919
        %v3921 = vpop.f32.mrb[0].mxu0
        %3922 = vmatprep.mubr.f32.mxu0 0.0
        %3923 = vmatmul.mubr.f32.gmra.mrb[0].mxu0 %v3669
        %v3924 = vpop.f32.mrb[0].mxu0
        %v3925 = vadd.f32 %v3624, %v3924
        %v3926 = vpop.f32.mrb[0].mxu0
        %3927 = vmatprep.mubr.f32.mxu0 0.0
        %3928 = vmatmul.mubr.f32.gmra.mrb[0].mxu0 %v3672
        %v3929 = vpop.f32.mrb[0].mxu0
        %v3930 = vadd.f32 %v3624, %v3929
        %v3931 = vpop.f32.mrb[0].mxu0
        %3932 = vmatprep.mubr.f32.mxu0 0.0
        %3933 = vmatmul.mubr.f32.gmra.mrb[0].mxu0 %v3675
        %v3934 = vpop.f32.mrb[0].mxu0
        %v3935 = vadd.f32 %v3624, %v3934
        %v3936 = vpop.f32.mrb[0].mxu0
        %3937 = vmatprep.mubr.f32.mxu0 0.0
        %3938 = vmatmul.mubr.f32.gmra.mrb[0].mxu0 %v3678
        %v3939 = vpop.f32.mrb[0].mxu0
        %v3940 = vadd.f32 %v3624, %v3939
        %v3941 = vpop.f32.mrb[0].mxu0
        %3942 = vmatprep.mubr.f32.mxu0 0.0
        %3943 = vmatmul.mubr.f32.gmra.mrb[0].mxu0 %v3680
        %v3944 = vpop.f32.mrb[0].mxu0
        %v3945 = vadd.f32 %v3624, %v3944
        %v3946 = vpop.f32.mrb[0].mxu0
        %3947 = vmatprep.mubr.f32.mxu0 0.0
        %3948 = vmatmul.mubr.f32.gmra.mrb[0].mxu0 %v3682
        %v3949 = vpop.f32.mrb[0].mxu0
        %v3950 = vadd.f32 %v3624, %v3949
        %v3951 = vpop.f32.mrb[0].mxu0
        %3952 = vmatprep.mubr.f32.mxu0 0.0
        %3953 = vmatmul.mubr.f32.gmra.mrb[0].mxu0 %v3684
        %v3954 = vpop.f32.mrb[0].mxu0
        %v3955 = vadd.f32 %v3624, %v3954
        %v3956 = vpop.f32.mrb[0].mxu0
        %3957 = vmatprep.mubr.f32.mxu0 0.0
        %3958 = vmatmul.mubr.f32.gmra.mrb[0].mxu0 %v3686
        %v3959 = vpop.f32.mrb[0].mxu0
        %v3960 = vadd.f32 %v3624, %v3959
        %v3961 = vpop.f32.mrb[0].mxu0
        %3962 = vmatprep.mubr.f32.mxu0 0.0
        %3963 = vmatmul.mubr.f32.gmra.mrb[0].mxu0 %v3688
        %v3964 = vpop.f32.mrb[0].mxu0
        %v3965 = vadd.f32 %v3624, %v3964
        %v3966 = vpop.f32.mrb[0].mxu0
        %3967 = vmatprep.mubr.f32.mxu0 0.0
        %3968 = vmatmul.mubr.f32.gmra.mrb[0].mxu0 %v3690
        %v3969 = vpop.f32.mrb[0].mxu0
        %v3970 = vadd.f32 %v3624, %v3969
        %v3971 = vpop.f32.mrb[0].mxu0
        %3972 = vmatprep.mubr.f32.mxu0 0.0
        %3973 = vmatmul.mubr.f32.gmra.mrb[0].mxu0 %v3692
        %v3974 = vpop.f32.mrb[0].mxu0
        %v3975 = vadd.f32 %v3624, %v3974
        %v3976 = vpop.f32.mrb[0].mxu0
        %3977 = vmatprep.mubr.f32.mxu0 0.0
        %3978 = vmatmul.mubr.f32.gmra.mrb[0].mxu0 %v3694
        %v3979 = vpop.f32.mrb[0].mxu0
        %v3980 = vadd.f32 %v3624, %v3979
        %v3981 = vpop.f32.mrb[0].mxu0
        %3982 = vmatprep.mubr.f32.mxu0 0.0
        %3983 = vmatmul.mubr.f32.gmra.mrb[0].mxu0 %v3696
        %v3984 = vpop.f32.mrb[0].mxu0
        %v3985 = vadd.f32 %v3624, %v3984
        %v3986 = vpop.f32.mrb[0].mxu0
        %3987 = vmatprep.mubr.f32.mxu0 0.0
        %3988 = vmatmul.mubr.f32.gmra.mrb[0].mxu0 %v3698
        %v3989 = vpop.f32.mrb[0].mxu0
        %v3990 = vadd.f32 %v3624, %v3989
        %v3991 = vpop.f32.mrb[0].mxu0
        %3992 = vmatprep.mubr.f32.mxu0 0.0
        %3993 = vmatmul.mubr.f32.gmra.mrb[0].mxu0 %v3700
        %v3994 = vpop.f32.mrb[0].mxu0
        %v3995 = vadd.f32 %v3624, %v3994
        %v3996 = vpop.f32.mrb[0].mxu0
        %3997 = vmatprep.mubr.f32.mxu0 0.0
        %3998 = vmatmul.mubr.f32.gmra.mrb[0].mxu0 %v3702
        %v3999 = vpop.f32.mrb[0].mxu0
        %v4000 = vadd.f32 %v3624, %v3999
        %v4001 = vpop.f32.mrb[0].mxu0
        %4002 = vmatprep.mubr.f32.mxu0 0.0
        %4003 = vmatmul.mubr.f32.gmra.mrb[0].mxu0 %v3704
        %v4004 = vpop.f32.mrb[0].mxu0
        %v4005 = vadd.f32 %v3624, %v4004
        %v4006 = vpop.f32.mrb[0].mxu0
        %4007 = vmatprep.mubr.f32.mxu0 0.0
        %4008 = vmatmul.mubr.f32.gmra.mrb[0].mxu0 %v3706
        %v4009 = vpop.f32.mrb[0].mxu0
        %v4010 = vadd.f32 %v3624, %v4009
        %v4011 = vpop.f32.mrb[0].mxu0
        %4012 = vmatprep.mubr.f32.mxu0 0.0
        %4013 = vmatmul.mubr.f32.gmra.mrb[0].mxu0 %v3708
        %v4014 = vpop.f32.mrb[0].mxu0
        %v4015 = vadd.f32 %v3624, %v4014
        %v4016 = vpop.f32.mrb[0].mxu0
        %4017 = vmatprep.mubr.f32.mxu0 0.0
        %4018 = vmatmul.mubr.f32.gmra.mrb[0].mxu0 %v3710
        %v4019 = vpop.f32.mrb[0].mxu0
        %v4020 = vadd.f32 %v3624, %v4019
        %v4021 = vpop.f32.mrb[0].mxu0
        %4022 = vmatprep.mubr.f32.mxu0 0.0
        %4023 = vmatmul.mubr.f32.gmra.mrb[0].mxu0 %v3712
        %v4024 = vpop.f32.mrb[0].mxu0
        %v4025 = vadd.f32 %v3624, %v4024
        %v4026 = vpop.f32.mrb[0].mxu0
        %4027 = vmatprep.mubr.f32.mxu0 0.0
        %4028 = vmatmul.mubr.f32.gmra.mrb[0].mxu0 %v3714
        %v4029 = vpop.f32.mrb[0].mxu0
        %v4030 = vadd.f32 %v3624, %v4029
        %v4031 = vpop.f32.mrb[0].mxu0
        %4032 = vmatprep.mubr.f32.mxu0 0.0
        %4033 = vmatmul.mubr.f32.gmra.mrb[0].mxu0 %v3716
        %v4034 = vpop.f32.mrb[0].mxu0
        %v4035 = vadd.f32 %v3624, %v4034
        %v4036 = vpop.f32.mrb[0].mxu0
        %4037 = vmatprep.mubr.f32.mxu0 0.0
        %4038 = vmatmul.mubr.f32.gmra.mrb[0].mxu0 %v3718
        %v4039 = vpop.f32.mrb[0].mxu0
        %v4040 = vadd.f32 %v3624, %v4039
        %v4041 = vpop.f32.mrb[0].mxu0
        %4042 = vmatprep.mubr.f32.mxu0 0.0
        %4043 = vmatmul.mubr.f32.gmra.mrb[0].mxu0 %v3720
        %v4044 = vpop.f32.mrb[0].mxu0
        %v4045 = vadd.f32 %v3624, %v4044
        %v4046 = vpop.f32.mrb[0].mxu0
        %4047 = vmatprep.mubr.f32.mxu0 0.0
        %4048 = vmatmul.mubr.f32.gmra.mrb[0].mxu0 %v3722
        %v4049 = vpop.f32.mrb[0].mxu0
        %v4050 = vadd.f32 %v3624, %v4049
        %v4051 = vpop.f32.mrb[0].mxu0
        %4052 = vmatprep.mubr.f32.mxu0 0.0
        %4053 = vmatmul.mubr.f32.gmra.mrb[0].mxu0 %v3724
        %v4054 = vpop.f32.mrb[0].mxu0
        %v4055 = vadd.f32 %v3624, %v4054
        %v4056 = vpop.f32.mrb[0].mxu0
        %4057 = vmatprep.mubr.f32.mxu0 0.0
        %4058 = vmatmul.mubr.f32.gmra.mrb[0].mxu0 %v3726
        %v4059 = vpop.f32.mrb[0].mxu0
        %v4060 = vadd.f32 %v3624, %v4059
        %v4061 = vpop.f32.mrb[0].mxu0
        %4062 = vmatprep.mubr.f32.mxu0 0.0
        %4063 = vmatmul.mubr.f32.gmra.mrb[0].mxu0 %v3728
        %v4064 = vpop.f32.mrb[0].mxu0
        %v4065 = vadd.f32 %v3624, %v4064
        %v4066 = vpop.f32.mrb[0].mxu0
        %4067 = vmatprep.mubr.f32.mxu0 0.0
        %4068 = vmatmul.mubr.f32.gmra.mrb[0].mxu0 %v3730
        %v4069 = vpop.f32.mrb[0].mxu0
        %v4070 = vadd.f32 %v3624, %v4069
        %v4071 = vpop.f32.mrb[0].mxu0
        %4072 = vmatprep.mubr.f32.mxu0 0.0
        %4073 = vmatmul.mubr.f32.gmra.mrb[0].mxu0 %v3732
        %v4074 = vpop.f32.mrb[0].mxu0
        %v4075 = vadd.f32 %v3624, %v4074
        %v4076 = vpop.f32.mrb[0].mxu0
        %4077 = vmatprep.mubr.f32.mxu0 0.0
        %4078 = vmatmul.mubr.f32.gmra.mrb[0].mxu0 %v3734
        %v4079 = vpop.f32.mrb[0].mxu0
        %v4080 = vadd.f32 %v3624, %v4079
        %v4081 = vpop.f32.mrb[0].mxu0
        %4082 = vmatprep.mubr.f32.mxu0 0.0
        %4083 = vmatmul.mubr.f32.gmra.mrb[0].mxu0 %v3736
        %v4084 = vpop.f32.mrb[0].mxu0
        %v4085 = vadd.f32 %v3624, %v4084
        %v4086 = vpop.f32.mrb[0].mxu0
        %4087 = vmatprep.mubr.f32.mxu0 0.0
        %4088 = vmatmul.mubr.f32.gmra.mrb[0].mxu0 %v3738
        %v4089 = vpop.f32.mrb[0].mxu0
        %v4090 = vadd.f32 %v3624, %v4089
        %v4091 = vpop.f32.mrb[0].mxu0
        %4092 = vmatprep.mubr.f32.mxu0 0.0
        %4093 = vmatmul.mubr.f32.gmra.mrb[0].mxu0 %v3740
        %v4094 = vpop.f32.mrb[0].mxu0
        %v4095 = vadd.f32 %v3624, %v4094
        %v4096 = vpop.f32.mrb[0].mxu0
        %4097 = vmatprep.mubr.f32.mxu0 0.0
        %4098 = vmatmul.mubr.f32.gmra.mrb[0].mxu0 %v3742
        %v4099 = vpop.f32.mrb[0].mxu0
        %v4100 = vadd.f32 %v3624, %v4099
        %v4101 = vpop.f32.mrb[0].mxu0
        %4102 = vmatprep.mubr.f32.mxu0 0.0
        %4103 = vmatmul.mubr.f32.gmra.mrb[0].mxu0 %v3744
        %v4104 = vpop.f32.mrb[0].mxu0
        %v4105 = vadd.f32 %v3624, %v4104
        %v4106 = vpop.f32.mrb[0].mxu0
        %4107 = vmatprep.mubr.f32.mxu0 0.0
        %4108 = vmatmul.mubr.f32.gmra.mrb[0].mxu0 %v3746
        %v4109 = vpop.f32.mrb[0].mxu0
        %v4110 = vadd.f32 %v3624, %v4109
        %v4111 = vpop.f32.mrb[0].mxu0
        %4112 = vmatprep.mubr.f32.mxu0 0.0
        %4113 = vmatmul.mubr.f32.gmra.mrb[0].mxu0 %v3748
        %v4114 = vpop.f32.mrb[0].mxu0
        %v4115 = vadd.f32 %v3624, %v4114
        %v4116 = vpop.f32.mrb[0].mxu0
        %4117 = vmatprep.mubr.f32.mxu0 0.0
        %4118 = vmatmul.mubr.f32.gmra.mrb[0].mxu0 %v3750
        %v4119 = vpop.f32.mrb[0].mxu0
        %v4120 = vadd.f32 %v3624, %v4119
        %v4121 = vpop.f32.mrb[0].mxu0
        %4122 = vmatprep.mubr.f32.mxu0 0.0
        %4123 = vmatmul.mubr.f32.gmra.mrb[0].mxu0 %v3752
        %v4124 = vpop.f32.mrb[0].mxu0
        %v4125 = vadd.f32 %v3624, %v4124
        %v4126 = vpop.f32.mrb[0].mxu0
        %4127 = vmatprep.mubr.f32.mxu0 0.0
        %4128 = vmatmul.mubr.f32.gmra.mrb[0].mxu0 %v3754
        %v4129 = vpop.f32.mrb[0].mxu0
        %v4130 = vadd.f32 %v3624, %v4129
        %v4131 = vpop.f32.mrb[0].mxu0
        %4132 = vmatprep.mubr.f32.mxu0 0.0
        %4133 = vmatmul.mubr.f32.gmra.mrb[0].mxu0 %v3756
        %v4134 = vpop.f32.mrb[0].mxu0
        %v4135 = vadd.f32 %v3624, %v4134
        %v4136 = vpop.f32.mrb[0].mxu0
        %4137 = vmatprep.mubr.f32.mxu0 0.0
        %4138 = vmatmul.mubr.f32.gmra.mrb[0].mxu0 %v3758
        %v4139 = vpop.f32.mrb[0].mxu0
        %v4140 = vadd.f32 %v3624, %v4139
        %v4141 = vpop.f32.mrb[0].mxu0
        %4142 = vmatprep.mubr.f32.mxu0 0.0
        %4143 = vmatmul.mubr.f32.gmra.mrb[0].mxu0 %v3760
        %v4144 = vpop.f32.mrb[0].mxu0
        %v4145 = vadd.f32 %v3624, %v4144
        %v4146 = vpop.f32.mrb[0].mxu0
        %4147 = vmatprep.mubr.f32.mxu0 0.0
        %4148 = vmatmul.mubr.f32.gmra.mrb[0].mxu0 %v3762
        %v4149 = vpop.f32.mrb[0].mxu0
        %v4150 = vadd.f32 %v3624, %v4149
        %v4151 = vpop.f32.mrb[0].mxu0
        %4152 = vmatprep.mubr.f32.mxu0 0.0
        %4153 = vmatmul.mubr.f32.gmra.mrb[0].mxu0 %v3764
        %v4154 = vpop.f32.mrb[0].mxu0
        %v4155 = vadd.f32 %v3624, %v4154
        %v4156 = vpop.f32.mrb[0].mxu0
        %4157 = vmatprep.mubr.f32.mxu0 0.0
        %4158 = vmatmul.mubr.f32.gmra.mrb[0].mxu0 %v3766
        %v4159 = vpop.f32.mrb[0].mxu0
        %v4160 = vadd.f32 %v3624, %v4159
        %v4161 = vpop.f32.mrb[0].mxu0
        %4162 = vmatprep.mubr.f32.mxu0 0.0
        %4163 = vmatmul.mubr.f32.gmra.mrb[0].mxu0 %v3768
        %v4164 = vpop.f32.mrb[0].mxu0
        %v4165 = vadd.f32 %v3624, %v4164
        %v4166 = vpop.f32.mrb[0].mxu0
        %4167 = vmatprep.mubr.f32.mxu0 0.0
        %4168 = vmatmul.mubr.f32.gmra.mrb[0].mxu0 %v3770
        %v4169 = vpop.f32.mrb[0].mxu0
        %v4170 = vadd.f32 %v3624, %v4169
        %v4171 = vpop.f32.mrb[0].mxu0
        %4172 = vmatprep.mubr.f32.mxu0 0.0
        %4173 = vmatmul.mubr.f32.gmra.mrb[0].mxu0 %v3772
        %v4174 = vpop.f32.mrb[0].mxu0
        %v4175 = vadd.f32 %v3624, %v4174
        %v4176 = vpop.f32.mrb[0].mxu0
        %4177 = vmatprep.mubr.f32.mxu0 0.0
        %4178 = vmatmul.mubr.f32.gmra.mrb[0].mxu0 %v3774
        %v4179 = vpop.f32.mrb[0].mxu0
        %v4180 = vadd.f32 %v3624, %v4179
        %v4181 = vpop.f32.mrb[0].mxu0
        %4182 = vmatprep.mubr.f32.mxu0 0.0
        %4183 = vmatmul.mubr.f32.gmra.mrb[0].mxu0 %v3776
        %v4184 = vpop.f32.mrb[0].mxu0
        %v4185 = vadd.f32 %v3624, %v4184
        %v4186 = vpop.f32.mrb[0].mxu0
        %4187 = vmatprep.mubr.f32.mxu0 0.0
        %4188 = vmatmul.mubr.f32.gmra.mrb[0].mxu0 %v3778
        %v4189 = vpop.f32.mrb[0].mxu0
        %v4190 = vadd.f32 %v3624, %v4189
        %v4191 = vpop.f32.mrb[0].mxu0
        %4192 = vmatprep.mubr.f32.mxu0 0.0
        %4193 = vmatmul.mubr.f32.gmra.mrb[0].mxu0 %v3780
        %v4194 = vpop.f32.mrb[0].mxu0
        %v4195 = vadd.f32 %v3624, %v4194
        %v4196 = vpop.f32.mrb[0].mxu0
        %4197 = vmatprep.mubr.f32.mxu0 0.0
        %4198 = vmatmul.mubr.f32.gmra.mrb[0].mxu0 %v3782
        %v4199 = vpop.f32.mrb[0].mxu0
        %v4200 = vadd.f32 %v3624, %v4199
        %v4201 = vpop.f32.mrb[0].mxu0
        %4202 = vmatprep.mubr.f32.mxu0 0.0
        %4203 = vmatmul.mubr.f32.gmra.mrb[0].mxu0 %v3784
        %v4204 = vpop.f32.mrb[0].mxu0
        %v4205 = vadd.f32 %v3624, %v4204
        %v4206 = vpop.f32.mrb[0].mxu0
        %4207 = vmatprep.mubr.f32.mxu0 0.0
        %4208 = vmatmul.mubr.f32.gmra.mrb[0].mxu0 %v3786
        %v4209 = vpop.f32.mrb[0].mxu0
        %v4210 = vadd.f32 %v3624, %v4209
        %v4211 = vpop.f32.mrb[0].mxu0
        %4212 = vdwg.mxu0
        %v4213 = vmax.f32 %v3855, 0.0
        %v4214 = vmax.f32 %v3860, 0.0
        %v4215 = vmax.f32 %v3865, 0.0
        %v4216 = vmax.f32 %v3870, 0.0
        %v4217 = vmax.f32 %v3875, 0.0
        %v4218 = vmax.f32 %v3880, 0.0
        %v4219 = vmax.f32 %v3885, 0.0
        %v4220 = vmax.f32 %v3890, 0.0
        %v4221 = vmax.f32 %v3895, 0.0
        %v4222 = vmax.f32 %v3900, 0.0
        %v4223 = vmax.f32 %v3905, 0.0
        %v4224 = vmax.f32 %v3910, 0.0
        %v4225 = vmax.f32 %v3915, 0.0
        %v4226 = vmax.f32 %v3920, 0.0
        %v4227 = vmax.f32 %v3925, 0.0
        %v4228 = vmax.f32 %v3930, 0.0
        %v4229 = vmax.f32 %v3935, 0.0
        %v4230 = vmax.f32 %v3940, 0.0
        %v4231 = vmax.f32 %v3945, 0.0
        %v4232 = vmax.f32 %v3950, 0.0
        %v4233 = vmax.f32 %v3955, 0.0
        %v4234 = vmax.f32 %v3960, 0.0
        %v4235 = vmax.f32 %v3965, 0.0
        %v4236 = vmax.f32 %v3970, 0.0
        %v4237 = vmax.f32 %v3975, 0.0
        %v4238 = vmax.f32 %v3980, 0.0
        %v4239 = vmax.f32 %v3985, 0.0
        %v4240 = vmax.f32 %v3990, 0.0
        %v4241 = vmax.f32 %v3995, 0.0
        %v4242 = vmax.f32 %v4000, 0.0
        %v4243 = vmax.f32 %v4005, 0.0
        %v4244 = vmax.f32 %v4010, 0.0
        %v4245 = vmax.f32 %v4015, 0.0
        %v4246 = vmax.f32 %v4020, 0.0
        %v4247 = vmax.f32 %v4025, 0.0
        %v4248 = vmax.f32 %v4030, 0.0
        %v4249 = vmax.f32 %v4035, 0.0
        %v4250 = vmax.f32 %v4040, 0.0
        %v4251 = vmax.f32 %v4045, 0.0
        %v4252 = vmax.f32 %v4050, 0.0
        %v4253 = vmax.f32 %v4055, 0.0
        %v4254 = vmax.f32 %v4060, 0.0
        %v4255 = vmax.f32 %v4065, 0.0
        %v4256 = vmax.f32 %v4070, 0.0
        %v4257 = vmax.f32 %v4075, 0.0
        %v4258 = vmax.f32 %v4080, 0.0
        %v4259 = vmax.f32 %v4085, 0.0
        %v4260 = vmax.f32 %v4090, 0.0
        %v4261 = vmax.f32 %v4095, 0.0
        %v4262 = vmax.f32 %v4100, 0.0
        %v4263 = vmax.f32 %v4105, 0.0
        %v4264 = vmax.f32 %v4110, 0.0
        %v4265 = vmax.f32 %v4115, 0.0
        %v4266 = vmax.f32 %v4120, 0.0
        %v4267 = vmax.f32 %v4125, 0.0
        %v4268 = vmax.f32 %v4130, 0.0
        %v4269 = vmax.f32 %v4135, 0.0
        %v4270 = vmax.f32 %v4140, 0.0
        %v4271 = vmax.f32 %v4145, 0.0
        %v4272 = vmax.f32 %v4150, 0.0
        %v4273 = vmax.f32 %v4155, 0.0
        %v4274 = vmax.f32 %v4160, 0.0
        %v4275 = vmax.f32 %v4165, 0.0
        %v4276 = vmax.f32 %v4170, 0.0
        %v4277 = vmax.f32 %v4175, 0.0
        %v4278 = vmax.f32 %v4180, 0.0
        %v4279 = vmax.f32 %v4185, 0.0
        %v4280 = vmax.f32 %v4190, 0.0
        %v4281 = vmax.f32 %v4195, 0.0
        %v4282 = vmax.f32 %v4200, 0.0
        %v4283 = vmax.f32 %v4205, 0.0
        %v4284 = vmax.f32 %v4210, 0.0
        %v4357 = vrot.slane %v4213, 1
        %v4358 = vrot.slane %v4214, 1
        %v4359 = vsel %vm748, %v4357, %v4358
        %v4360 = vrot.slane %v4215, 1
        %v4361 = vsel %vm748, %v4358, %v4360
        %v4362 = vrot.slane %v4216, 1
        %v4363 = vsel %vm748, %v4360, %v4362
        %v4364 = vrot.slane %v4217, 1
        %v4365 = vsel %vm748, %v4362, %v4364
        %v4366 = vrot.slane %v4218, 1
        %v4367 = vsel %vm748, %v4364, %v4366
        %v4368 = vrot.slane %v4219, 1
        %v4369 = vsel %vm748, %v4366, %v4368
        %v4370 = vrot.slane %v4220, 1
        %v4371 = vsel %vm748, %v4368, %v4370
        %v4372 = vrot.slane %v4221, 1
        %v4373 = vsel %vm748, %v4370, %v4372
        %v4374 = vrot.slane %v4222, 1
        %v4375 = vsel %vm748, %v4372, %v4374
        %v4376 = vrot.slane %v4223, 1
        %v4377 = vsel %vm748, %v4374, %v4376
        %v4378 = vrot.slane %v4224, 1
        %v4379 = vsel %vm748, %v4376, %v4378
        %v4380 = vrot.slane %v4225, 1
        %v4381 = vsel %vm748, %v4378, %v4380
        %v4382 = vrot.slane %v4226, 1
        %v4383 = vsel %vm748, %v4380, %v4382
        %v4384 = vrot.slane %v4227, 1
        %v4385 = vsel %vm748, %v4382, %v4384
        %v4386 = vrot.slane %v4228, 1
        %v4387 = vsel %vm748, %v4384, %v4386
        %v4388 = vrot.slane %v4229, 1
        %v4389 = vsel %vm748, %v4386, %v4388
        %v4390 = vrot.slane %v4230, 1
        %v4391 = vsel %vm748, %v4388, %v4390
        %v4392 = vrot.slane %v4231, 1
        %v4393 = vsel %vm748, %v4390, %v4392
        %v4394 = vrot.slane %v4232, 1
        %v4395 = vsel %vm748, %v4392, %v4394
        %v4396 = vrot.slane %v4233, 1
        %v4397 = vsel %vm748, %v4394, %v4396
        %v4398 = vrot.slane %v4234, 1
        %v4399 = vsel %vm748, %v4396, %v4398
        %v4400 = vrot.slane %v4235, 1
        %v4401 = vsel %vm748, %v4398, %v4400
        %v4402 = vrot.slane %v4236, 1
        %v4403 = vsel %vm748, %v4400, %v4402
        %v4404 = vrot.slane %v4237, 1
        %v4405 = vsel %vm748, %v4402, %v4404
        %v4406 = vrot.slane %v4238, 1
        %v4407 = vsel %vm748, %v4404, %v4406
        %v4408 = vrot.slane %v4239, 1
        %v4409 = vsel %vm748, %v4406, %v4408
        %v4410 = vrot.slane %v4240, 1
        %v4411 = vsel %vm748, %v4408, %v4410
        %v4412 = vrot.slane %v4241, 1
        %v4413 = vsel %vm748, %v4410, %v4412
        %v4414 = vrot.slane %v4242, 1
        %v4415 = vsel %vm748, %v4412, %v4414
        %v4416 = vrot.slane %v4243, 1
        %v4417 = vsel %vm748, %v4414, %v4416
        %v4418 = vrot.slane %v4244, 1
        %v4419 = vsel %vm748, %v4416, %v4418
        %v4420 = vrot.slane %v4245, 1
        %v4421 = vsel %vm748, %v4418, %v4420
        %v4422 = vrot.slane %v4246, 1
        %v4423 = vsel %vm748, %v4420, %v4422
        %v4424 = vrot.slane %v4247, 1
        %v4425 = vsel %vm748, %v4422, %v4424
        %v4426 = vrot.slane %v4248, 1
        %v4427 = vsel %vm748, %v4424, %v4426
        %v4428 = vrot.slane %v4249, 1
        %v4429 = vsel %vm748, %v4426, %v4428
        %v4430 = vrot.slane %v4250, 1
        %v4431 = vsel %vm748, %v4428, %v4430
        %v4432 = vrot.slane %v4251, 1
        %v4433 = vsel %vm748, %v4430, %v4432
        %v4434 = vrot.slane %v4252, 1
        %v4435 = vsel %vm748, %v4432, %v4434
        %v4436 = vrot.slane %v4253, 1
        %v4437 = vsel %vm748, %v4434, %v4436
        %v4438 = vrot.slane %v4254, 1
        %v4439 = vsel %vm748, %v4436, %v4438
        %v4440 = vrot.slane %v4255, 1
        %v4441 = vsel %vm748, %v4438, %v4440
        %v4442 = vrot.slane %v4256, 1
        %v4443 = vsel %vm748, %v4440, %v4442
        %v4444 = vrot.slane %v4257, 1
        %v4445 = vsel %vm748, %v4442, %v4444
        %v4446 = vrot.slane %v4258, 1
        %v4447 = vsel %vm748, %v4444, %v4446
        %v4448 = vrot.slane %v4259, 1
        %v4449 = vsel %vm748, %v4446, %v4448
        %v4450 = vrot.slane %v4260, 1
        %v4451 = vsel %vm748, %v4448, %v4450
        %v4452 = vrot.slane %v4261, 1
        %v4453 = vsel %vm748, %v4450, %v4452
        %v4454 = vrot.slane %v4262, 1
        %v4455 = vsel %vm748, %v4452, %v4454
        %v4456 = vrot.slane %v4263, 1
        %v4457 = vsel %vm748, %v4454, %v4456
        %v4458 = vrot.slane %v4264, 1
        %v4459 = vsel %vm748, %v4456, %v4458
        %v4460 = vrot.slane %v4265, 1
        %v4461 = vsel %vm748, %v4458, %v4460
        %v4462 = vrot.slane %v4266, 1
        %v4463 = vsel %vm748, %v4460, %v4462
        %v4464 = vrot.slane %v4267, 1
        %v4465 = vsel %vm748, %v4462, %v4464
        %v4466 = vrot.slane %v4268, 1
        %v4467 = vsel %vm748, %v4464, %v4466
        %v4468 = vrot.slane %v4269, 1
        %v4469 = vsel %vm748, %v4466, %v4468
        %v4470 = vrot.slane %v4270, 1
        %v4471 = vsel %vm748, %v4468, %v4470
        %v4472 = vrot.slane %v4271, 1
        %v4473 = vsel %vm748, %v4470, %v4472
        %v4474 = vrot.slane %v4272, 1
        %v4475 = vsel %vm748, %v4472, %v4474
        %v4476 = vrot.slane %v4273, 1
        %v4477 = vsel %vm748, %v4474, %v4476
        %v4478 = vrot.slane %v4274, 1
        %v4479 = vsel %vm748, %v4476, %v4478
        %v4480 = vrot.slane %v4275, 1
        %v4481 = vsel %vm748, %v4478, %v4480
        %v4482 = vrot.slane %v4276, 1
        %v4483 = vsel %vm748, %v4480, %v4482
        %v4484 = vrot.slane %v4277, 1
        %v4485 = vsel %vm748, %v4482, %v4484
        %v4486 = vrot.slane %v4278, 1
        %v4487 = vsel %vm748, %v4484, %v4486
        %v4488 = vrot.slane %v4279, 1
        %v4489 = vsel %vm748, %v4486, %v4488
        %v4490 = vrot.slane %v4280, 1
        %v4491 = vsel %vm748, %v4488, %v4490
        %v4492 = vrot.slane %v4281, 1
        %v4493 = vsel %vm748, %v4490, %v4492
        %v4494 = vrot.slane %v4282, 1
        %v4495 = vsel %vm748, %v4492, %v4494
        %v4496 = vrot.slane %v4283, 1
        %v4497 = vsel %vm748, %v4494, %v4496
        %v4498 = vrot.slane %v4284, 1
        %v4499 = vsel %vm748, %v4496, %v4498
        %v4572 = vmax.f32 %v4213, %v4359
        %v4573 = vmax.f32 %v4214, %v4361
        %v4574 = vmax.f32 %v4215, %v4363
        %v4575 = vmax.f32 %v4216, %v4365
        %v4576 = vmax.f32 %v4217, %v4367
        %v4577 = vmax.f32 %v4218, %v4369
        %v4578 = vmax.f32 %v4219, %v4371
        %v4579 = vmax.f32 %v4220, %v4373
        %v4580 = vmax.f32 %v4221, %v4375
        %v4581 = vmax.f32 %v4222, %v4377
        %v4582 = vmax.f32 %v4223, %v4379
        %v4583 = vmax.f32 %v4224, %v4381
        %v4584 = vmax.f32 %v4225, %v4383
        %v4585 = vmax.f32 %v4226, %v4385
        %v4586 = vmax.f32 %v4227, %v4387
        %v4587 = vmax.f32 %v4228, %v4389
        %v4588 = vmax.f32 %v4229, %v4391
        %v4589 = vmax.f32 %v4230, %v4393
        %v4590 = vmax.f32 %v4231, %v4395
        %v4591 = vmax.f32 %v4232, %v4397
        %v4592 = vmax.f32 %v4233, %v4399
        %v4593 = vmax.f32 %v4234, %v4401
        %v4594 = vmax.f32 %v4235, %v4403
        %v4595 = vmax.f32 %v4236, %v4405
        %v4596 = vmax.f32 %v4237, %v4407
        %v4597 = vmax.f32 %v4238, %v4409
        %v4598 = vmax.f32 %v4239, %v4411
        %v4599 = vmax.f32 %v4240, %v4413
        %v4600 = vmax.f32 %v4241, %v4415
        %v4601 = vmax.f32 %v4242, %v4417
        %v4602 = vmax.f32 %v4243, %v4419
        %v4603 = vmax.f32 %v4244, %v4421
        %v4604 = vmax.f32 %v4245, %v4423
        %v4605 = vmax.f32 %v4246, %v4425
        %v4606 = vmax.f32 %v4247, %v4427
        %v4607 = vmax.f32 %v4248, %v4429
        %v4608 = vmax.f32 %v4249, %v4431
        %v4609 = vmax.f32 %v4250, %v4433
        %v4610 = vmax.f32 %v4251, %v4435
        %v4611 = vmax.f32 %v4252, %v4437
        %v4612 = vmax.f32 %v4253, %v4439
        %v4613 = vmax.f32 %v4254, %v4441
        %v4614 = vmax.f32 %v4255, %v4443
        %v4615 = vmax.f32 %v4256, %v4445
        %v4616 = vmax.f32 %v4257, %v4447
        %v4617 = vmax.f32 %v4258, %v4449
        %v4618 = vmax.f32 %v4259, %v4451
        %v4619 = vmax.f32 %v4260, %v4453
        %v4620 = vmax.f32 %v4261, %v4455
        %v4621 = vmax.f32 %v4262, %v4457
        %v4622 = vmax.f32 %v4263, %v4459
        %v4623 = vmax.f32 %v4264, %v4461
        %v4624 = vmax.f32 %v4265, %v4463
        %v4625 = vmax.f32 %v4266, %v4465
        %v4626 = vmax.f32 %v4267, %v4467
        %v4627 = vmax.f32 %v4268, %v4469
        %v4628 = vmax.f32 %v4269, %v4471
        %v4629 = vmax.f32 %v4270, %v4473
        %v4630 = vmax.f32 %v4271, %v4475
        %v4631 = vmax.f32 %v4272, %v4477
        %v4632 = vmax.f32 %v4273, %v4479
        %v4633 = vmax.f32 %v4274, %v4481
        %v4634 = vmax.f32 %v4275, %v4483
        %v4635 = vmax.f32 %v4276, %v4485
        %v4636 = vmax.f32 %v4277, %v4487
        %v4637 = vmax.f32 %v4278, %v4489
        %v4638 = vmax.f32 %v4279, %v4491
        %v4639 = vmax.f32 %v4280, %v4493
        %v4640 = vmax.f32 %v4281, %v4495
        %v4641 = vmax.f32 %v4282, %v4497
        %v4642 = vmax.f32 %v4283, %v4499
        %v4643 = vmax.f32 %v4284, %v4498
        %v4644 = vrot.slane %v4213, 2
        %v4645 = vrot.slane %v4214, 2
        %v4646 = vsel %vm515, %v4644, %v4645
        %v4647 = vrot.slane %v4215, 2
        %v4648 = vsel %vm515, %v4645, %v4647
        %v4649 = vrot.slane %v4216, 2
        %v4650 = vsel %vm515, %v4647, %v4649
        %v4651 = vrot.slane %v4217, 2
        %v4652 = vsel %vm515, %v4649, %v4651
        %v4653 = vrot.slane %v4218, 2
        %v4654 = vsel %vm515, %v4651, %v4653
        %v4655 = vrot.slane %v4219, 2
        %v4656 = vsel %vm515, %v4653, %v4655
        %v4657 = vrot.slane %v4220, 2
        %v4658 = vsel %vm515, %v4655, %v4657
        %v4659 = vrot.slane %v4221, 2
        %v4660 = vsel %vm515, %v4657, %v4659
        %v4661 = vrot.slane %v4222, 2
        %v4662 = vsel %vm515, %v4659, %v4661
        %v4663 = vrot.slane %v4223, 2
        %v4664 = vsel %vm515, %v4661, %v4663
        %v4665 = vrot.slane %v4224, 2
        %v4666 = vsel %vm515, %v4663, %v4665
        %v4667 = vrot.slane %v4225, 2
        %v4668 = vsel %vm515, %v4665, %v4667
        %v4669 = vrot.slane %v4226, 2
        %v4670 = vsel %vm515, %v4667, %v4669
        %v4671 = vrot.slane %v4227, 2
        %v4672 = vsel %vm515, %v4669, %v4671
        %v4673 = vrot.slane %v4228, 2
        %v4674 = vsel %vm515, %v4671, %v4673
        %v4675 = vrot.slane %v4229, 2
        %v4676 = vsel %vm515, %v4673, %v4675
        %v4677 = vrot.slane %v4230, 2
        %v4678 = vsel %vm515, %v4675, %v4677
        %v4679 = vrot.slane %v4231, 2
        %v4680 = vsel %vm515, %v4677, %v4679
        %v4681 = vrot.slane %v4232, 2
        %v4682 = vsel %vm515, %v4679, %v4681
        %v4683 = vrot.slane %v4233, 2
        %v4684 = vsel %vm515, %v4681, %v4683
        %v4685 = vrot.slane %v4234, 2
        %v4686 = vsel %vm515, %v4683, %v4685
        %v4687 = vrot.slane %v4235, 2
        %v4688 = vsel %vm515, %v4685, %v4687
        %v4689 = vrot.slane %v4236, 2
        %v4690 = vsel %vm515, %v4687, %v4689
        %v4691 = vrot.slane %v4237, 2
        %v4692 = vsel %vm515, %v4689, %v4691
        %v4693 = vrot.slane %v4238, 2
        %v4694 = vsel %vm515, %v4691, %v4693
        %v4695 = vrot.slane %v4239, 2
        %v4696 = vsel %vm515, %v4693, %v4695
        %v4697 = vrot.slane %v4240, 2
        %v4698 = vsel %vm515, %v4695, %v4697
        %v4699 = vrot.slane %v4241, 2
        %v4700 = vsel %vm515, %v4697, %v4699
        %v4701 = vrot.slane %v4242, 2
        %v4702 = vsel %vm515, %v4699, %v4701
        %v4703 = vrot.slane %v4243, 2
        %v4704 = vsel %vm515, %v4701, %v4703
        %v4705 = vrot.slane %v4244, 2
        %v4706 = vsel %vm515, %v4703, %v4705
        %v4707 = vrot.slane %v4245, 2
        %v4708 = vsel %vm515, %v4705, %v4707
        %v4709 = vrot.slane %v4246, 2
        %v4710 = vsel %vm515, %v4707, %v4709
        %v4711 = vrot.slane %v4247, 2
        %v4712 = vsel %vm515, %v4709, %v4711
        %v4713 = vrot.slane %v4248, 2
        %v4714 = vsel %vm515, %v4711, %v4713
        %v4715 = vrot.slane %v4249, 2
        %v4716 = vsel %vm515, %v4713, %v4715
        %v4717 = vrot.slane %v4250, 2
        %v4718 = vsel %vm515, %v4715, %v4717
        %v4719 = vrot.slane %v4251, 2
        %v4720 = vsel %vm515, %v4717, %v4719
        %v4721 = vrot.slane %v4252, 2
        %v4722 = vsel %vm515, %v4719, %v4721
        %v4723 = vrot.slane %v4253, 2
        %v4724 = vsel %vm515, %v4721, %v4723
        %v4725 = vrot.slane %v4254, 2
        %v4726 = vsel %vm515, %v4723, %v4725
        %v4727 = vrot.slane %v4255, 2
        %v4728 = vsel %vm515, %v4725, %v4727
        %v4729 = vrot.slane %v4256, 2
        %v4730 = vsel %vm515, %v4727, %v4729
        %v4731 = vrot.slane %v4257, 2
        %v4732 = vsel %vm515, %v4729, %v4731
        %v4733 = vrot.slane %v4258, 2
        %v4734 = vsel %vm515, %v4731, %v4733
        %v4735 = vrot.slane %v4259, 2
        %v4736 = vsel %vm515, %v4733, %v4735
        %v4737 = vrot.slane %v4260, 2
        %v4738 = vsel %vm515, %v4735, %v4737
        %v4739 = vrot.slane %v4261, 2
        %v4740 = vsel %vm515, %v4737, %v4739
        %v4741 = vrot.slane %v4262, 2
        %v4742 = vsel %vm515, %v4739, %v4741
        %v4743 = vrot.slane %v4263, 2
        %v4744 = vsel %vm515, %v4741, %v4743
        %v4745 = vrot.slane %v4264, 2
        %v4746 = vsel %vm515, %v4743, %v4745
        %v4747 = vrot.slane %v4265, 2
        %v4748 = vsel %vm515, %v4745, %v4747
        %v4749 = vrot.slane %v4266, 2
        %v4750 = vsel %vm515, %v4747, %v4749
        %v4751 = vrot.slane %v4267, 2
        %v4752 = vsel %vm515, %v4749, %v4751
        %v4753 = vrot.slane %v4268, 2
        %v4754 = vsel %vm515, %v4751, %v4753
        %v4755 = vrot.slane %v4269, 2
        %v4756 = vsel %vm515, %v4753, %v4755
        %v4757 = vrot.slane %v4270, 2
        %v4758 = vsel %vm515, %v4755, %v4757
        %v4759 = vrot.slane %v4271, 2
        %v4760 = vsel %vm515, %v4757, %v4759
        %v4761 = vrot.slane %v4272, 2
        %v4762 = vsel %vm515, %v4759, %v4761
        %v4763 = vrot.slane %v4273, 2
        %v4764 = vsel %vm515, %v4761, %v4763
        %v4765 = vrot.slane %v4274, 2
        %v4766 = vsel %vm515, %v4763, %v4765
        %v4767 = vrot.slane %v4275, 2
        %v4768 = vsel %vm515, %v4765, %v4767
        %v4769 = vrot.slane %v4276, 2
        %v4770 = vsel %vm515, %v4767, %v4769
        %v4771 = vrot.slane %v4277, 2
        %v4772 = vsel %vm515, %v4769, %v4771
        %v4773 = vrot.slane %v4278, 2
        %v4774 = vsel %vm515, %v4771, %v4773
        %v4775 = vrot.slane %v4279, 2
        %v4776 = vsel %vm515, %v4773, %v4775
        %v4777 = vrot.slane %v4280, 2
        %v4778 = vsel %vm515, %v4775, %v4777
        %v4779 = vrot.slane %v4281, 2
        %v4780 = vsel %vm515, %v4777, %v4779
        %v4781 = vrot.slane %v4282, 2
        %v4782 = vsel %vm515, %v4779, %v4781
        %v4783 = vrot.slane %v4283, 2
        %v4784 = vsel %vm515, %v4781, %v4783
        %v4785 = vrot.slane %v4284, 2
        %v4786 = vsel %vm515, %v4783, %v4785
        %v4859 = vmax.f32 %v4572, %v4646
        %v4860 = vmax.f32 %v4573, %v4648
        %v4861 = vmax.f32 %v4574, %v4650
        %v4862 = vmax.f32 %v4575, %v4652
        %v4863 = vmax.f32 %v4576, %v4654
        %v4864 = vmax.f32 %v4577, %v4656
        %v4865 = vmax.f32 %v4578, %v4658
        %v4866 = vmax.f32 %v4579, %v4660
        %v4867 = vmax.f32 %v4580, %v4662
        %v4868 = vmax.f32 %v4581, %v4664
        %v4869 = vmax.f32 %v4582, %v4666
        %v4870 = vmax.f32 %v4583, %v4668
        %v4871 = vmax.f32 %v4584, %v4670
        %v4872 = vmax.f32 %v4585, %v4672
        %v4873 = vmax.f32 %v4586, %v4674
        %v4874 = vmax.f32 %v4587, %v4676
        %v4875 = vmax.f32 %v4588, %v4678
        %v4876 = vmax.f32 %v4589, %v4680
        %v4877 = vmax.f32 %v4590, %v4682
        %v4878 = vmax.f32 %v4591, %v4684
        %v4879 = vmax.f32 %v4592, %v4686
        %v4880 = vmax.f32 %v4593, %v4688
        %v4881 = vmax.f32 %v4594, %v4690
        %v4882 = vmax.f32 %v4595, %v4692
        %v4883 = vmax.f32 %v4596, %v4694
        %v4884 = vmax.f32 %v4597, %v4696
        %v4885 = vmax.f32 %v4598, %v4698
        %v4886 = vmax.f32 %v4599, %v4700
        %v4887 = vmax.f32 %v4600, %v4702
        %v4888 = vmax.f32 %v4601, %v4704
        %v4889 = vmax.f32 %v4602, %v4706
        %v4890 = vmax.f32 %v4603, %v4708
        %v4891 = vmax.f32 %v4604, %v4710
        %v4892 = vmax.f32 %v4605, %v4712
        %v4893 = vmax.f32 %v4606, %v4714
        %v4894 = vmax.f32 %v4607, %v4716
        %v4895 = vmax.f32 %v4608, %v4718
        %v4896 = vmax.f32 %v4609, %v4720
        %v4897 = vmax.f32 %v4610, %v4722
        %v4898 = vmax.f32 %v4611, %v4724
        %v4899 = vmax.f32 %v4612, %v4726
        %v4900 = vmax.f32 %v4613, %v4728
        %v4901 = vmax.f32 %v4614, %v4730
        %v4902 = vmax.f32 %v4615, %v4732
        %v4903 = vmax.f32 %v4616, %v4734
        %v4904 = vmax.f32 %v4617, %v4736
        %v4905 = vmax.f32 %v4618, %v4738
        %v4906 = vmax.f32 %v4619, %v4740
        %v4907 = vmax.f32 %v4620, %v4742
        %v4908 = vmax.f32 %v4621, %v4744
        %v4909 = vmax.f32 %v4622, %v4746
        %v4910 = vmax.f32 %v4623, %v4748
        %v4911 = vmax.f32 %v4624, %v4750
        %v4912 = vmax.f32 %v4625, %v4752
        %v4913 = vmax.f32 %v4626, %v4754
        %v4914 = vmax.f32 %v4627, %v4756
        %v4915 = vmax.f32 %v4628, %v4758
        %v4916 = vmax.f32 %v4629, %v4760
        %v4917 = vmax.f32 %v4630, %v4762
        %v4918 = vmax.f32 %v4631, %v4764
        %v4919 = vmax.f32 %v4632, %v4766
        %v4920 = vmax.f32 %v4633, %v4768
        %v4921 = vmax.f32 %v4634, %v4770
        %v4922 = vmax.f32 %v4635, %v4772
        %v4923 = vmax.f32 %v4636, %v4774
        %v4924 = vmax.f32 %v4637, %v4776
        %v4925 = vmax.f32 %v4638, %v4778
        %v4926 = vmax.f32 %v4639, %v4780
        %v4927 = vmax.f32 %v4640, %v4782
        %v4928 = vmax.f32 %v4641, %v4784
        %v4929 = vmax.f32 %v4642, %v4786
        %v4930 = vmax.f32 %v4643, %v4785
        %4931 = vst.msk [vmem:[#allocation2] sm:$0xff] %vm1316, %v4859
        %4932 = vst.msk [vmem:[#allocation2 + $0x8] sm:$0xff] %vm1316, %v4860
        %4933 = vst.msk [vmem:[#allocation2 + $0x10] sm:$0xff] %vm1316, %v4861
        %4934 = vst.msk [vmem:[#allocation2 + $0x18] sm:$0xff] %vm1316, %v4862
        %4935 = vst.msk [vmem:[#allocation2 + $0x20] sm:$0xff] %vm1316, %v4863
        %4936 = vst.msk [vmem:[#allocation2 + $0x28] sm:$0xff] %vm1316, %v4864
        %4937 = vst.msk [vmem:[#allocation2 + $0x30] sm:$0xff] %vm1316, %v4865
        %4938 = vst.msk [vmem:[#allocation2 + $0x38] sm:$0xff] %vm1316, %v4866
        %4939 = vst.msk [vmem:[#allocation2 + $0x40] sm:$0xff] %vm1316, %v4867
        %4940 = vst.msk [vmem:[#allocation2 + $0x48] sm:$0xff] %vm1316, %v4868
        %4941 = vst.msk [vmem:[#allocation2 + $0x50] sm:$0xff] %vm1316, %v4869
        %4942 = vst.msk [vmem:[#allocation2 + $0x58] sm:$0xff] %vm1316, %v4870
        %4943 = vst.msk [vmem:[#allocation2 + $0x60] sm:$0xff] %vm1316, %v4871
        %4944 = vst.msk [vmem:[#allocation2 + $0x68] sm:$0xff] %vm1316, %v4872
        %4945 = vst.msk [vmem:[#allocation2 + $0x70] sm:$0xff] %vm1316, %v4873
        %4946 = vst.msk [vmem:[#allocation2 + $0x78] sm:$0xff] %vm1316, %v4874
        %4947 = vst.msk [vmem:[#allocation2 + $0x80] sm:$0xff] %vm1316, %v4875
        %4948 = vst.msk [vmem:[#allocation2 + $0x88] sm:$0xff] %vm1316, %v4876
        %4949 = vst.msk [vmem:[#allocation2 + $0x90] sm:$0xff] %vm1316, %v4877
        %4950 = vst.msk [vmem:[#allocation2 + $0x98] sm:$0xff] %vm1316, %v4878
        %4951 = vst.msk [vmem:[#allocation2 + $0xa0] sm:$0xff] %vm1316, %v4879
        %4952 = vst.msk [vmem:[#allocation2 + $0xa8] sm:$0xff] %vm1316, %v4880
        %4953 = vst.msk [vmem:[#allocation2 + $0xb0] sm:$0xff] %vm1316, %v4881
        %4954 = vst.msk [vmem:[#allocation2 + $0xb8] sm:$0xff] %vm1316, %v4882
        %4955 = vst.msk [vmem:[#allocation2 + $0xc0] sm:$0xff] %vm1316, %v4883
        %4956 = vst.msk [vmem:[#allocation2 + $0xc8] sm:$0xff] %vm1316, %v4884
        %4957 = vst.msk [vmem:[#allocation2 + $0xd0] sm:$0xff] %vm1316, %v4885
        %4958 = vst.msk [vmem:[#allocation2 + $0xd8] sm:$0xff] %vm1316, %v4886
        %4959 = vst.msk [vmem:[#allocation2 + $0xe0] sm:$0xff] %vm1316, %v4887
        %4960 = vst.msk [vmem:[#allocation2 + $0xe8] sm:$0xff] %vm1316, %v4888
        %4961 = vst.msk [vmem:[#allocation2 + $0xf0] sm:$0xff] %vm1316, %v4889
        %4962 = vst.msk [vmem:[#allocation2 + $0xf8] sm:$0xff] %vm1316, %v4890
        %4963 = vst.msk [vmem:[#allocation2 + $0x100] sm:$0xff] %vm1316, %v4891
        %4964 = vst.msk [vmem:[#allocation2 + $0x108] sm:$0xff] %vm1316, %v4892
        %4965 = vst.msk [vmem:[#allocation2 + $0x110] sm:$0xff] %vm1316, %v4893
        %4966 = vst.msk [vmem:[#allocation2 + $0x118] sm:$0xff] %vm1316, %v4894
        %4967 = vst.msk [vmem:[#allocation2 + $0x120] sm:$0xff] %vm1316, %v4895
        %4968 = vst.msk [vmem:[#allocation2 + $0x128] sm:$0xff] %vm1316, %v4896
        %4969 = vst.msk [vmem:[#allocation2 + $0x130] sm:$0xff] %vm1316, %v4897
        %4970 = vst.msk [vmem:[#allocation2 + $0x138] sm:$0xff] %vm1316, %v4898
        %4971 = vst.msk [vmem:[#allocation2 + $0x140] sm:$0xff] %vm1316, %v4899
        %4972 = vst.msk [vmem:[#allocation2 + $0x148] sm:$0xff] %vm1316, %v4900
        %4973 = vst.msk [vmem:[#allocation2 + $0x150] sm:$0xff] %vm1316, %v4901
        %4974 = vst.msk [vmem:[#allocation2 + $0x158] sm:$0xff] %vm1316, %v4902
        %4975 = vst.msk [vmem:[#allocation2 + $0x160] sm:$0xff] %vm1316, %v4903
        %4976 = vst.msk [vmem:[#allocation2 + $0x168] sm:$0xff] %vm1316, %v4904
        %4977 = vst.msk [vmem:[#allocation2 + $0x170] sm:$0xff] %vm1316, %v4905
        %4978 = vst.msk [vmem:[#allocation2 + $0x178] sm:$0xff] %vm1316, %v4906
        %4979 = vst.msk [vmem:[#allocation2 + $0x180] sm:$0xff] %vm1316, %v4907
        %4980 = vst.msk [vmem:[#allocation2 + $0x188] sm:$0xff] %vm1316, %v4908
        %4981 = vst.msk [vmem:[#allocation2 + $0x190] sm:$0xff] %vm1316, %v4909
        %4982 = vst.msk [vmem:[#allocation2 + $0x198] sm:$0xff] %vm1316, %v4910
        %4983 = vst.msk [vmem:[#allocation2 + $0x1a0] sm:$0xff] %vm1316, %v4911
        %4984 = vst.msk [vmem:[#allocation2 + $0x1a8] sm:$0xff] %vm1316, %v4912
        %4985 = vst.msk [vmem:[#allocation2 + $0x1b0] sm:$0xff] %vm1316, %v4913
        %4986 = vst.msk [vmem:[#allocation2 + $0x1b8] sm:$0xff] %vm1316, %v4914
        %4987 = vst.msk [vmem:[#allocation2 + $0x1c0] sm:$0xff] %vm1316, %v4915
        %4988 = vst.msk [vmem:[#allocation2 + $0x1c8] sm:$0xff] %vm1316, %v4916
        %4989 = vst.msk [vmem:[#allocation2 + $0x1d0] sm:$0xff] %vm1316, %v4917
        %4990 = vst.msk [vmem:[#allocation2 + $0x1d8] sm:$0xff] %vm1316, %v4918
        %4991 = vst.msk [vmem:[#allocation2 + $0x1e0] sm:$0xff] %vm1316, %v4919
        %4992 = vst.msk [vmem:[#allocation2 + $0x1e8] sm:$0xff] %vm1316, %v4920
        %4993 = vst.msk [vmem:[#allocation2 + $0x1f0] sm:$0xff] %vm1316, %v4921
        %4994 = vst.msk [vmem:[#allocation2 + $0x1f8] sm:$0xff] %vm1316, %v4922
        %4995 = vst.msk [vmem:[#allocation2 + $0x200] sm:$0xff] %vm1316, %v4923
        %4996 = vst.msk [vmem:[#allocation2 + $0x208] sm:$0xff] %vm1316, %v4924
        %4997 = vst.msk [vmem:[#allocation2 + $0x210] sm:$0xff] %vm1316, %v4925
        %4998 = vst.msk [vmem:[#allocation2 + $0x218] sm:$0xff] %vm1316, %v4926
        %4999 = vst.msk [vmem:[#allocation2 + $0x220] sm:$0xff] %vm1316, %v4927
        %5000 = vst.msk [vmem:[#allocation2 + $0x228] sm:$0xff] %vm1316, %v4928
        %5001 = vst.msk [vmem:[#allocation2 + $0x230] sm:$0xff] %vm1316, %v4929
        %vm5002 = vcmask 259072
        %5003 = vst.msk [vmem:[#allocation2 + $0x238] sm:$0x3f] %vm5002, %v4930
        %v5004 = vld [vmem:[#allocation2] ss:$3 sm:$0xff]
        %s5005 = scalar_lea.vmem [#allocation2], 24
        %v5006 = vld [vmem:[%s5005] ss:$3 sm:$0xff]
        %s5007 = scalar_lea.vmem [#allocation2], 48
        %v5008 = vld [vmem:[%s5007] ss:$3 sm:$0xff]
        %s5009 = scalar_lea.vmem [#allocation2], 72
        %v5010 = vld [vmem:[%s5009] ss:$3 sm:$0xff]
        %s5011 = scalar_lea.vmem [#allocation2], 96
        %v5012 = vld [vmem:[%s5011] ss:$3 sm:$0xff]
        %s5013 = scalar_lea.vmem [#allocation2], 120
        %v5014 = vld [vmem:[%s5013] ss:$3 sm:$0xff]
        %s5015 = scalar_lea.vmem [#allocation2], 144
        %v5016 = vld [vmem:[%s5015] ss:$3 sm:$0xff]
        %s5017 = scalar_lea.vmem [#allocation2], 168
        %v5018 = vld [vmem:[%s5017] ss:$3 sm:$0xff]
        %s5019 = scalar_lea.vmem [#allocation2], 192
        %v5020 = vld [vmem:[%s5019] ss:$3 sm:$0xff]
        %s5021 = scalar_lea.vmem [#allocation2], 216
        %v5022 = vld [vmem:[%s5021] ss:$3 sm:$0xff]
        %s5023 = scalar_lea.vmem [#allocation2], 240
        %v5024 = vld [vmem:[%s5023] ss:$3 sm:$0xff]
        %s5025 = scalar_lea.vmem [#allocation2], 264
        %v5026 = vld [vmem:[%s5025] ss:$3 sm:$0xff]
        %s5027 = scalar_lea.vmem [#allocation2], 288
        %v5028 = vld [vmem:[%s5027] ss:$3 sm:$0xff]
        %s5029 = scalar_lea.vmem [#allocation2], 312
        %v5030 = vld [vmem:[%s5029] ss:$3 sm:$0xff]
        %s5031 = scalar_lea.vmem [#allocation2], 336
        %v5032 = vld [vmem:[%s5031] ss:$3 sm:$0xff]
        %s5033 = scalar_lea.vmem [#allocation2], 360
        %v5034 = vld [vmem:[%s5033] ss:$3 sm:$0xff]
        %s5035 = scalar_lea.vmem [#allocation2], 384
        %v5036 = vld [vmem:[%s5035] ss:$3 sm:$0xff]
        %s5037 = scalar_lea.vmem [#allocation2], 408
        %v5038 = vld [vmem:[%s5037] ss:$3 sm:$0xff]
        %s5039 = scalar_lea.vmem [#allocation2], 432
        %v5040 = vld [vmem:[%s5039] ss:$3 sm:$0xff]
        %s5041 = scalar_lea.vmem [#allocation2], 456
        %v5042 = vld [vmem:[%s5041] ss:$3 sm:$0xff]
        %s5043 = scalar_lea.vmem [#allocation2], 480
        %v5044 = vld [vmem:[%s5043] ss:$3 sm:$0xff]
        %s5045 = scalar_lea.vmem [#allocation2], 504
        %v5046 = vld [vmem:[%s5045] ss:$3 sm:$0xff]
        %s5047 = scalar_lea.vmem [#allocation2], 528
        %v5048 = vld [vmem:[%s5047] ss:$3 sm:$0xff]
        %s5049 = scalar_lea.vmem [#allocation2], 552
        %v5050 = vld [vmem:[%s5049] ss:$3 sm:$0xff]
        %v5057 = vrot.slane %v5004, 1
        %v5058 = vrot.slane %v5006, 1
        %v5059 = vsel %vm748, %v5057, %v5058
        %v5060 = vrot.slane %v5008, 1
        %v5061 = vsel %vm748, %v5058, %v5060
        %v5062 = vrot.slane %v5010, 1
        %v5063 = vsel %vm748, %v5060, %v5062
        %v5064 = vrot.slane %v5012, 1
        %v5065 = vsel %vm748, %v5062, %v5064
        %v5066 = vrot.slane %v5014, 1
        %v5067 = vsel %vm748, %v5064, %v5066
        %5068 = vrot.lane.b32.xlu0 %v5059, 32
        %v5069 = vpop.permute.xlu0 %5068
        %5070 = vrot.lane.b32.xlu0 %v5061, 32
        %v5071 = vpop.permute.xlu0 %5070
        %5072 = vrot.lane.b32.xlu0 %v5063, 32
        %v5073 = vpop.permute.xlu0 %5072
        %5074 = vrot.lane.b32.xlu0 %v5065, 32
        %v5075 = vpop.permute.xlu0 %5074
        %5076 = vrot.lane.b32.xlu0 %v5067, 32
        %v5077 = vpop.permute.xlu0 %5076
        %5078 = vrot.lane.b32.xlu0 %v5066, 32
        %v5079 = vpop.permute.xlu0 %5078
        %v5086 = vrot.slane %v5004, 2
        %v5087 = vrot.slane %v5006, 2
        %v5088 = vsel %vm515, %v5086, %v5087
        %v5089 = vrot.slane %v5008, 2
        %v5090 = vsel %vm515, %v5087, %v5089
        %v5091 = vrot.slane %v5010, 2
        %v5092 = vsel %vm515, %v5089, %v5091
        %v5093 = vrot.slane %v5012, 2
        %v5094 = vsel %vm515, %v5091, %v5093
        %v5095 = vrot.slane %v5014, 2
        %v5096 = vsel %vm515, %v5093, %v5095
        %5097 = vrot.lane.b32.xlu0 %v5088, 64
        %v5098 = vpop.permute.xlu0 %5097
        %5099 = vrot.lane.b32.xlu0 %v5090, 64
        %v5100 = vpop.permute.xlu0 %5099
        %5101 = vrot.lane.b32.xlu0 %v5092, 64
        %v5102 = vpop.permute.xlu0 %5101
        %5103 = vrot.lane.b32.xlu0 %v5094, 64
        %v5104 = vpop.permute.xlu0 %5103
        %5105 = vrot.lane.b32.xlu0 %v5096, 64
        %v5106 = vpop.permute.xlu0 %5105
        %5107 = vrot.lane.b32.xlu0 %v5095, 64
        %v5108 = vpop.permute.xlu0 %5107
        %v5115 = vrot.slane %v5004, 3
        %v5116 = vrot.slane %v5006, 3
        %v5117 = vsel %vm931, %v5115, %v5116
        %v5118 = vrot.slane %v5008, 3
        %v5119 = vsel %vm931, %v5116, %v5118
        %v5120 = vrot.slane %v5010, 3
        %v5121 = vsel %vm931, %v5118, %v5120
        %v5122 = vrot.slane %v5012, 3
        %v5123 = vsel %vm931, %v5120, %v5122
        %v5124 = vrot.slane %v5014, 3
        %v5125 = vsel %vm931, %v5122, %v5124
        %5126 = vrot.lane.b32.xlu0 %v5117, 96
        %v5127 = vpop.permute.xlu0 %5126
        %5128 = vrot.lane.b32.xlu0 %v5119, 96
        %v5129 = vpop.permute.xlu0 %5128
        %5130 = vrot.lane.b32.xlu0 %v5121, 96
        %v5131 = vpop.permute.xlu0 %5130
        %5132 = vrot.lane.b32.xlu0 %v5123, 96
        %v5133 = vpop.permute.xlu0 %5132
        %5134 = vrot.lane.b32.xlu0 %v5125, 96
        %v5135 = vpop.permute.xlu0 %5134
        %5136 = vrot.lane.b32.xlu0 %v5124, 96
        %v5137 = vpop.permute.xlu0 %5136
        %v5144 = vrot.slane %v5004, 4
        %v5145 = vrot.slane %v5006, 4
        %v5146 = vsel %vm592, %v5144, %v5145
        %v5147 = vrot.slane %v5008, 4
        %v5148 = vsel %vm592, %v5145, %v5147
        %v5149 = vrot.slane %v5010, 4
        %v5150 = vsel %vm592, %v5147, %v5149
        %v5151 = vrot.slane %v5012, 4
        %v5152 = vsel %vm592, %v5149, %v5151
        %v5153 = vrot.slane %v5014, 4
        %v5154 = vsel %vm592, %v5151, %v5153
        %v5161 = vrot.slane %v5004, 5
        %v5162 = vrot.slane %v5006, 5
        %v5163 = vsel %vm1114, %v5161, %v5162
        %v5164 = vrot.slane %v5008, 5
        %v5165 = vsel %vm1114, %v5162, %v5164
        %v5166 = vrot.slane %v5010, 5
        %v5167 = vsel %vm1114, %v5164, %v5166
        %v5168 = vrot.slane %v5012, 5
        %v5169 = vsel %vm1114, %v5166, %v5168
        %v5170 = vrot.slane %v5014, 5
        %v5171 = vsel %vm1114, %v5168, %v5170
        %5172 = vrot.lane.b32.xlu0 %v5163, 32
        %v5173 = vpop.permute.xlu0 %5172
        %5174 = vrot.lane.b32.xlu0 %v5165, 32
        %v5175 = vpop.permute.xlu0 %5174
        %5176 = vrot.lane.b32.xlu0 %v5167, 32
        %v5177 = vpop.permute.xlu0 %5176
        %5178 = vrot.lane.b32.xlu0 %v5169, 32
        %v5179 = vpop.permute.xlu0 %5178
        %5180 = vrot.lane.b32.xlu0 %v5171, 32
        %v5181 = vpop.permute.xlu0 %5180
        %5182 = vrot.lane.b32.xlu0 %v5170, 32
        %v5183 = vpop.permute.xlu0 %5182
        %v5190 = vrot.slane %v5004, 6
        %v5191 = vrot.slane %v5006, 6
        %v5192 = vsel %vm669, %v5190, %v5191
        %v5193 = vrot.slane %v5008, 6
        %v5194 = vsel %vm669, %v5191, %v5193
        %v5195 = vrot.slane %v5010, 6
        %v5196 = vsel %vm669, %v5193, %v5195
        %v5197 = vrot.slane %v5012, 6
        %v5198 = vsel %vm669, %v5195, %v5197
        %v5199 = vrot.slane %v5014, 6
        %v5200 = vsel %vm669, %v5197, %v5199
        %5201 = vrot.lane.b32.xlu0 %v5192, 64
        %v5202 = vpop.permute.xlu0 %5201
        %5203 = vrot.lane.b32.xlu0 %v5194, 64
        %v5204 = vpop.permute.xlu0 %5203
        %5205 = vrot.lane.b32.xlu0 %v5196, 64
        %v5206 = vpop.permute.xlu0 %5205
        %5207 = vrot.lane.b32.xlu0 %v5198, 64
        %v5208 = vpop.permute.xlu0 %5207
        %5209 = vrot.lane.b32.xlu0 %v5200, 64
        %v5210 = vpop.permute.xlu0 %5209
        %5211 = vrot.lane.b32.xlu0 %v5199, 64
        %v5212 = vpop.permute.xlu0 %5211
        %v5219 = vsel %vm1316, %v5004, %v5069
        %v5220 = vsel %vm1316, %v5006, %v5071
        %v5221 = vsel %vm1316, %v5008, %v5073
        %v5222 = vsel %vm1316, %v5010, %v5075
        %v5223 = vsel %vm1316, %v5012, %v5077
        %v5224 = vsel %vm1316, %v5014, %v5079
        %v5225 = vsel %vm1354, %v5219, %v5098
        %v5226 = vsel %vm1354, %v5220, %v5100
        %v5227 = vsel %vm1354, %v5221, %v5102
        %v5228 = vsel %vm1354, %v5222, %v5104
        %v5229 = vsel %vm1354, %v5223, %v5106
        %v5230 = vsel %vm1354, %v5224, %v5108
        %v5231 = vsel %vm1392, %v5225, %v5127
        %v5232 = vsel %vm1392, %v5226, %v5129
        %v5233 = vsel %vm1392, %v5227, %v5131
        %v5234 = vsel %vm1392, %v5228, %v5133
        %v5235 = vsel %vm1392, %v5229, %v5135
        %v5236 = vsel %vm1392, %v5230, %v5137
        %v5237 = vsel %vm1316, %v5146, %v5173
        %v5238 = vsel %vm1316, %v5148, %v5175
        %v5239 = vsel %vm1316, %v5150, %v5177
        %v5240 = vsel %vm1316, %v5152, %v5179
        %v5241 = vsel %vm1316, %v5154, %v5181
        %v5242 = vsel %vm1316, %v5153, %v5183
        %v5243 = vsel %vm1354, %v5237, %v5202
        %v5244 = vsel %vm1354, %v5238, %v5204
        %v5245 = vsel %vm1354, %v5239, %v5206
        %v5246 = vsel %vm1354, %v5240, %v5208
        %v5247 = vsel %vm1354, %v5241, %v5210
        %v5248 = vsel %vm1354, %v5242, %v5212
        %v5255 = vrot.slane %v5016, 1
        %v5256 = vrot.slane %v5018, 1
        %v5257 = vsel %vm748, %v5255, %v5256
        %v5258 = vrot.slane %v5020, 1
        %v5259 = vsel %vm748, %v5256, %v5258
        %v5260 = vrot.slane %v5022, 1
        %v5261 = vsel %vm748, %v5258, %v5260
        %v5262 = vrot.slane %v5024, 1
        %v5263 = vsel %vm748, %v5260, %v5262
        %v5264 = vrot.slane %v5026, 1
        %v5265 = vsel %vm748, %v5262, %v5264
        %5266 = vrot.lane.b32.xlu0 %v5257, 32
        %v5267 = vpop.permute.xlu0 %5266
        %5268 = vrot.lane.b32.xlu0 %v5259, 32
        %v5269 = vpop.permute.xlu0 %5268
        %5270 = vrot.lane.b32.xlu0 %v5261, 32
        %v5271 = vpop.permute.xlu0 %5270
        %5272 = vrot.lane.b32.xlu0 %v5263, 32
        %v5273 = vpop.permute.xlu0 %5272
        %5274 = vrot.lane.b32.xlu0 %v5265, 32
        %v5275 = vpop.permute.xlu0 %5274
        %5276 = vrot.lane.b32.xlu0 %v5264, 32
        %v5277 = vpop.permute.xlu0 %5276
        %v5284 = vrot.slane %v5016, 2
        %v5285 = vrot.slane %v5018, 2
        %v5286 = vsel %vm515, %v5284, %v5285
        %v5287 = vrot.slane %v5020, 2
        %v5288 = vsel %vm515, %v5285, %v5287
        %v5289 = vrot.slane %v5022, 2
        %v5290 = vsel %vm515, %v5287, %v5289
        %v5291 = vrot.slane %v5024, 2
        %v5292 = vsel %vm515, %v5289, %v5291
        %v5293 = vrot.slane %v5026, 2
        %v5294 = vsel %vm515, %v5291, %v5293
        %5295 = vrot.lane.b32.xlu0 %v5286, 64
        %v5296 = vpop.permute.xlu0 %5295
        %5297 = vrot.lane.b32.xlu0 %v5288, 64
        %v5298 = vpop.permute.xlu0 %5297
        %5299 = vrot.lane.b32.xlu0 %v5290, 64
        %v5300 = vpop.permute.xlu0 %5299
        %5301 = vrot.lane.b32.xlu0 %v5292, 64
        %v5302 = vpop.permute.xlu0 %5301
        %5303 = vrot.lane.b32.xlu0 %v5294, 64
        %v5304 = vpop.permute.xlu0 %5303
        %5305 = vrot.lane.b32.xlu0 %v5293, 64
        %v5306 = vpop.permute.xlu0 %5305
        %v5313 = vrot.slane %v5016, 3
        %v5314 = vrot.slane %v5018, 3
        %v5315 = vsel %vm931, %v5313, %v5314
        %v5316 = vrot.slane %v5020, 3
        %v5317 = vsel %vm931, %v5314, %v5316
        %v5318 = vrot.slane %v5022, 3
        %v5319 = vsel %vm931, %v5316, %v5318
        %v5320 = vrot.slane %v5024, 3
        %v5321 = vsel %vm931, %v5318, %v5320
        %v5322 = vrot.slane %v5026, 3
        %v5323 = vsel %vm931, %v5320, %v5322
        %5324 = vrot.lane.b32.xlu0 %v5315, 96
        %v5325 = vpop.permute.xlu0 %5324
        %5326 = vrot.lane.b32.xlu0 %v5317, 96
        %v5327 = vpop.permute.xlu0 %5326
        %5328 = vrot.lane.b32.xlu0 %v5319, 96
        %v5329 = vpop.permute.xlu0 %5328
        %5330 = vrot.lane.b32.xlu0 %v5321, 96
        %v5331 = vpop.permute.xlu0 %5330
        %5332 = vrot.lane.b32.xlu0 %v5323, 96
        %v5333 = vpop.permute.xlu0 %5332
        %5334 = vrot.lane.b32.xlu0 %v5322, 96
        %v5335 = vpop.permute.xlu0 %5334
        %v5342 = vrot.slane %v5016, 4
        %v5343 = vrot.slane %v5018, 4
        %v5344 = vsel %vm592, %v5342, %v5343
        %v5345 = vrot.slane %v5020, 4
        %v5346 = vsel %vm592, %v5343, %v5345
        %v5347 = vrot.slane %v5022, 4
        %v5348 = vsel %vm592, %v5345, %v5347
        %v5349 = vrot.slane %v5024, 4
        %v5350 = vsel %vm592, %v5347, %v5349
        %v5351 = vrot.slane %v5026, 4
        %v5352 = vsel %vm592, %v5349, %v5351
        %v5359 = vrot.slane %v5016, 5
        %v5360 = vrot.slane %v5018, 5
        %v5361 = vsel %vm1114, %v5359, %v5360
        %v5362 = vrot.slane %v5020, 5
        %v5363 = vsel %vm1114, %v5360, %v5362
        %v5364 = vrot.slane %v5022, 5
        %v5365 = vsel %vm1114, %v5362, %v5364
        %v5366 = vrot.slane %v5024, 5
        %v5367 = vsel %vm1114, %v5364, %v5366
        %v5368 = vrot.slane %v5026, 5
        %v5369 = vsel %vm1114, %v5366, %v5368
        %5370 = vrot.lane.b32.xlu0 %v5361, 32
        %v5371 = vpop.permute.xlu0 %5370
        %5372 = vrot.lane.b32.xlu0 %v5363, 32
        %v5373 = vpop.permute.xlu0 %5372
        %5374 = vrot.lane.b32.xlu0 %v5365, 32
        %v5375 = vpop.permute.xlu0 %5374
        %5376 = vrot.lane.b32.xlu0 %v5367, 32
        %v5377 = vpop.permute.xlu0 %5376
        %5378 = vrot.lane.b32.xlu0 %v5369, 32
        %v5379 = vpop.permute.xlu0 %5378
        %5380 = vrot.lane.b32.xlu0 %v5368, 32
        %v5381 = vpop.permute.xlu0 %5380
        %v5388 = vrot.slane %v5016, 6
        %v5389 = vrot.slane %v5018, 6
        %v5390 = vsel %vm669, %v5388, %v5389
        %v5391 = vrot.slane %v5020, 6
        %v5392 = vsel %vm669, %v5389, %v5391
        %v5393 = vrot.slane %v5022, 6
        %v5394 = vsel %vm669, %v5391, %v5393
        %v5395 = vrot.slane %v5024, 6
        %v5396 = vsel %vm669, %v5393, %v5395
        %v5397 = vrot.slane %v5026, 6
        %v5398 = vsel %vm669, %v5395, %v5397
        %5399 = vrot.lane.b32.xlu0 %v5390, 64
        %v5400 = vpop.permute.xlu0 %5399
        %5401 = vrot.lane.b32.xlu0 %v5392, 64
        %v5402 = vpop.permute.xlu0 %5401
        %5403 = vrot.lane.b32.xlu0 %v5394, 64
        %v5404 = vpop.permute.xlu0 %5403
        %5405 = vrot.lane.b32.xlu0 %v5396, 64
        %v5406 = vpop.permute.xlu0 %5405
        %5407 = vrot.lane.b32.xlu0 %v5398, 64
        %v5408 = vpop.permute.xlu0 %5407
        %5409 = vrot.lane.b32.xlu0 %v5397, 64
        %v5410 = vpop.permute.xlu0 %5409
        %v5417 = vsel %vm1316, %v5016, %v5267
        %v5418 = vsel %vm1316, %v5018, %v5269
        %v5419 = vsel %vm1316, %v5020, %v5271
        %v5420 = vsel %vm1316, %v5022, %v5273
        %v5421 = vsel %vm1316, %v5024, %v5275
        %v5422 = vsel %vm1316, %v5026, %v5277
        %v5423 = vsel %vm1354, %v5417, %v5296
        %v5424 = vsel %vm1354, %v5418, %v5298
        %v5425 = vsel %vm1354, %v5419, %v5300
        %v5426 = vsel %vm1354, %v5420, %v5302
        %v5427 = vsel %vm1354, %v5421, %v5304
        %v5428 = vsel %vm1354, %v5422, %v5306
        %v5429 = vsel %vm1392, %v5423, %v5325
        %v5430 = vsel %vm1392, %v5424, %v5327
        %v5431 = vsel %vm1392, %v5425, %v5329
        %v5432 = vsel %vm1392, %v5426, %v5331
        %v5433 = vsel %vm1392, %v5427, %v5333
        %v5434 = vsel %vm1392, %v5428, %v5335
        %v5435 = vsel %vm1316, %v5344, %v5371
        %v5436 = vsel %vm1316, %v5346, %v5373
        %v5437 = vsel %vm1316, %v5348, %v5375
        %v5438 = vsel %vm1316, %v5350, %v5377
        %v5439 = vsel %vm1316, %v5352, %v5379
        %v5440 = vsel %vm1316, %v5351, %v5381
        %v5441 = vsel %vm1354, %v5435, %v5400
        %v5442 = vsel %vm1354, %v5436, %v5402
        %v5443 = vsel %vm1354, %v5437, %v5404
        %v5444 = vsel %vm1354, %v5438, %v5406
        %v5445 = vsel %vm1354, %v5439, %v5408
        %v5446 = vsel %vm1354, %v5440, %v5410
        %v5453 = vrot.slane %v5028, 1
        %v5454 = vrot.slane %v5030, 1
        %v5455 = vsel %vm748, %v5453, %v5454
        %v5456 = vrot.slane %v5032, 1
        %v5457 = vsel %vm748, %v5454, %v5456
        %v5458 = vrot.slane %v5034, 1
        %v5459 = vsel %vm748, %v5456, %v5458
        %v5460 = vrot.slane %v5036, 1
        %v5461 = vsel %vm748, %v5458, %v5460
        %v5462 = vrot.slane %v5038, 1
        %v5463 = vsel %vm748, %v5460, %v5462
        %5464 = vrot.lane.b32.xlu0 %v5455, 32
        %v5465 = vpop.permute.xlu0 %5464
        %5466 = vrot.lane.b32.xlu0 %v5457, 32
        %v5467 = vpop.permute.xlu0 %5466
        %5468 = vrot.lane.b32.xlu0 %v5459, 32
        %v5469 = vpop.permute.xlu0 %5468
        %5470 = vrot.lane.b32.xlu0 %v5461, 32
        %v5471 = vpop.permute.xlu0 %5470
        %5472 = vrot.lane.b32.xlu0 %v5463, 32
        %v5473 = vpop.permute.xlu0 %5472
        %5474 = vrot.lane.b32.xlu0 %v5462, 32
        %v5475 = vpop.permute.xlu0 %5474
        %v5482 = vrot.slane %v5028, 2
        %v5483 = vrot.slane %v5030, 2
        %v5484 = vsel %vm515, %v5482, %v5483
        %v5485 = vrot.slane %v5032, 2
        %v5486 = vsel %vm515, %v5483, %v5485
        %v5487 = vrot.slane %v5034, 2
        %v5488 = vsel %vm515, %v5485, %v5487
        %v5489 = vrot.slane %v5036, 2
        %v5490 = vsel %vm515, %v5487, %v5489
        %v5491 = vrot.slane %v5038, 2
        %v5492 = vsel %vm515, %v5489, %v5491
        %5493 = vrot.lane.b32.xlu0 %v5484, 64
        %v5494 = vpop.permute.xlu0 %5493
        %5495 = vrot.lane.b32.xlu0 %v5486, 64
        %v5496 = vpop.permute.xlu0 %5495
        %5497 = vrot.lane.b32.xlu0 %v5488, 64
        %v5498 = vpop.permute.xlu0 %5497
        %5499 = vrot.lane.b32.xlu0 %v5490, 64
        %v5500 = vpop.permute.xlu0 %5499
        %5501 = vrot.lane.b32.xlu0 %v5492, 64
        %v5502 = vpop.permute.xlu0 %5501
        %5503 = vrot.lane.b32.xlu0 %v5491, 64
        %v5504 = vpop.permute.xlu0 %5503
        %v5511 = vrot.slane %v5028, 3
        %v5512 = vrot.slane %v5030, 3
        %v5513 = vsel %vm931, %v5511, %v5512
        %v5514 = vrot.slane %v5032, 3
        %v5515 = vsel %vm931, %v5512, %v5514
        %v5516 = vrot.slane %v5034, 3
        %v5517 = vsel %vm931, %v5514, %v5516
        %v5518 = vrot.slane %v5036, 3
        %v5519 = vsel %vm931, %v5516, %v5518
        %v5520 = vrot.slane %v5038, 3
        %v5521 = vsel %vm931, %v5518, %v5520
        %5522 = vrot.lane.b32.xlu0 %v5513, 96
        %v5523 = vpop.permute.xlu0 %5522
        %5524 = vrot.lane.b32.xlu0 %v5515, 96
        %v5525 = vpop.permute.xlu0 %5524
        %5526 = vrot.lane.b32.xlu0 %v5517, 96
        %v5527 = vpop.permute.xlu0 %5526
        %5528 = vrot.lane.b32.xlu0 %v5519, 96
        %v5529 = vpop.permute.xlu0 %5528
        %5530 = vrot.lane.b32.xlu0 %v5521, 96
        %v5531 = vpop.permute.xlu0 %5530
        %5532 = vrot.lane.b32.xlu0 %v5520, 96
        %v5533 = vpop.permute.xlu0 %5532
        %v5540 = vrot.slane %v5028, 4
        %v5541 = vrot.slane %v5030, 4
        %v5542 = vsel %vm592, %v5540, %v5541
        %v5543 = vrot.slane %v5032, 4
        %v5544 = vsel %vm592, %v5541, %v5543
        %v5545 = vrot.slane %v5034, 4
        %v5546 = vsel %vm592, %v5543, %v5545
        %v5547 = vrot.slane %v5036, 4
        %v5548 = vsel %vm592, %v5545, %v5547
        %v5549 = vrot.slane %v5038, 4
        %v5550 = vsel %vm592, %v5547, %v5549
        %v5557 = vrot.slane %v5028, 5
        %v5558 = vrot.slane %v5030, 5
        %v5559 = vsel %vm1114, %v5557, %v5558
        %v5560 = vrot.slane %v5032, 5
        %v5561 = vsel %vm1114, %v5558, %v5560
        %v5562 = vrot.slane %v5034, 5
        %v5563 = vsel %vm1114, %v5560, %v5562
        %v5564 = vrot.slane %v5036, 5
        %v5565 = vsel %vm1114, %v5562, %v5564
        %v5566 = vrot.slane %v5038, 5
        %v5567 = vsel %vm1114, %v5564, %v5566
        %5568 = vrot.lane.b32.xlu0 %v5559, 32
        %v5569 = vpop.permute.xlu0 %5568
        %5570 = vrot.lane.b32.xlu0 %v5561, 32
        %v5571 = vpop.permute.xlu0 %5570
        %5572 = vrot.lane.b32.xlu0 %v5563, 32
        %v5573 = vpop.permute.xlu0 %5572
        %5574 = vrot.lane.b32.xlu0 %v5565, 32
        %v5575 = vpop.permute.xlu0 %5574
        %5576 = vrot.lane.b32.xlu0 %v5567, 32
        %v5577 = vpop.permute.xlu0 %5576
        %5578 = vrot.lane.b32.xlu0 %v5566, 32
        %v5579 = vpop.permute.xlu0 %5578
        %v5586 = vrot.slane %v5028, 6
        %v5587 = vrot.slane %v5030, 6
        %v5588 = vsel %vm669, %v5586, %v5587
        %v5589 = vrot.slane %v5032, 6
        %v5590 = vsel %vm669, %v5587, %v5589
        %v5591 = vrot.slane %v5034, 6
        %v5592 = vsel %vm669, %v5589, %v5591
        %v5593 = vrot.slane %v5036, 6
        %v5594 = vsel %vm669, %v5591, %v5593
        %v5595 = vrot.slane %v5038, 6
        %v5596 = vsel %vm669, %v5593, %v5595
        %5597 = vrot.lane.b32.xlu0 %v5588, 64
        %v5598 = vpop.permute.xlu0 %5597
        %5599 = vrot.lane.b32.xlu0 %v5590, 64
        %v5600 = vpop.permute.xlu0 %5599
        %5601 = vrot.lane.b32.xlu0 %v5592, 64
        %v5602 = vpop.permute.xlu0 %5601
        %5603 = vrot.lane.b32.xlu0 %v5594, 64
        %v5604 = vpop.permute.xlu0 %5603
        %5605 = vrot.lane.b32.xlu0 %v5596, 64
        %v5606 = vpop.permute.xlu0 %5605
        %5607 = vrot.lane.b32.xlu0 %v5595, 64
        %v5608 = vpop.permute.xlu0 %5607
        %v5615 = vsel %vm1316, %v5028, %v5465
        %v5616 = vsel %vm1316, %v5030, %v5467
        %v5617 = vsel %vm1316, %v5032, %v5469
        %v5618 = vsel %vm1316, %v5034, %v5471
        %v5619 = vsel %vm1316, %v5036, %v5473
        %v5620 = vsel %vm1316, %v5038, %v5475
        %v5621 = vsel %vm1354, %v5615, %v5494
        %v5622 = vsel %vm1354, %v5616, %v5496
        %v5623 = vsel %vm1354, %v5617, %v5498
        %v5624 = vsel %vm1354, %v5618, %v5500
        %v5625 = vsel %vm1354, %v5619, %v5502
        %v5626 = vsel %vm1354, %v5620, %v5504
        %v5627 = vsel %vm1392, %v5621, %v5523
        %v5628 = vsel %vm1392, %v5622, %v5525
        %v5629 = vsel %vm1392, %v5623, %v5527
        %v5630 = vsel %vm1392, %v5624, %v5529
        %v5631 = vsel %vm1392, %v5625, %v5531
        %v5632 = vsel %vm1392, %v5626, %v5533
        %v5633 = vsel %vm1316, %v5542, %v5569
        %v5634 = vsel %vm1316, %v5544, %v5571
        %v5635 = vsel %vm1316, %v5546, %v5573
        %v5636 = vsel %vm1316, %v5548, %v5575
        %v5637 = vsel %vm1316, %v5550, %v5577
        %v5638 = vsel %vm1316, %v5549, %v5579
        %v5639 = vsel %vm1354, %v5633, %v5598
        %v5640 = vsel %vm1354, %v5634, %v5600
        %v5641 = vsel %vm1354, %v5635, %v5602
        %v5642 = vsel %vm1354, %v5636, %v5604
        %v5643 = vsel %vm1354, %v5637, %v5606
        %v5644 = vsel %vm1354, %v5638, %v5608
        %v5651 = vrot.slane %v5040, 1
        %v5652 = vrot.slane %v5042, 1
        %v5653 = vsel %vm748, %v5651, %v5652
        %v5654 = vrot.slane %v5044, 1
        %v5655 = vsel %vm748, %v5652, %v5654
        %v5656 = vrot.slane %v5046, 1
        %v5657 = vsel %vm748, %v5654, %v5656
        %v5658 = vrot.slane %v5048, 1
        %v5659 = vsel %vm748, %v5656, %v5658
        %v5660 = vrot.slane %v5050, 1
        %v5661 = vsel %vm748, %v5658, %v5660
        %5662 = vrot.lane.b32.xlu0 %v5653, 32
        %v5663 = vpop.permute.xlu0 %5662
        %5664 = vrot.lane.b32.xlu0 %v5655, 32
        %v5665 = vpop.permute.xlu0 %5664
        %5666 = vrot.lane.b32.xlu0 %v5657, 32
        %v5667 = vpop.permute.xlu0 %5666
        %5668 = vrot.lane.b32.xlu0 %v5659, 32
        %v5669 = vpop.permute.xlu0 %5668
        %5670 = vrot.lane.b32.xlu0 %v5661, 32
        %v5671 = vpop.permute.xlu0 %5670
        %5672 = vrot.lane.b32.xlu0 %v5660, 32
        %v5673 = vpop.permute.xlu0 %5672
        %v5680 = vrot.slane %v5040, 2
        %v5681 = vrot.slane %v5042, 2
        %v5682 = vsel %vm515, %v5680, %v5681
        %v5683 = vrot.slane %v5044, 2
        %v5684 = vsel %vm515, %v5681, %v5683
        %v5685 = vrot.slane %v5046, 2
        %v5686 = vsel %vm515, %v5683, %v5685
        %v5687 = vrot.slane %v5048, 2
        %v5688 = vsel %vm515, %v5685, %v5687
        %v5689 = vrot.slane %v5050, 2
        %v5690 = vsel %vm515, %v5687, %v5689
        %5691 = vrot.lane.b32.xlu0 %v5682, 64
        %v5692 = vpop.permute.xlu0 %5691
        %5693 = vrot.lane.b32.xlu0 %v5684, 64
        %v5694 = vpop.permute.xlu0 %5693
        %5695 = vrot.lane.b32.xlu0 %v5686, 64
        %v5696 = vpop.permute.xlu0 %5695
        %5697 = vrot.lane.b32.xlu0 %v5688, 64
        %v5698 = vpop.permute.xlu0 %5697
        %5699 = vrot.lane.b32.xlu0 %v5690, 64
        %v5700 = vpop.permute.xlu0 %5699
        %5701 = vrot.lane.b32.xlu0 %v5689, 64
        %v5702 = vpop.permute.xlu0 %5701
        %v5709 = vrot.slane %v5040, 3
        %v5710 = vrot.slane %v5042, 3
        %v5711 = vsel %vm931, %v5709, %v5710
        %v5712 = vrot.slane %v5044, 3
        %v5713 = vsel %vm931, %v5710, %v5712
        %v5714 = vrot.slane %v5046, 3
        %v5715 = vsel %vm931, %v5712, %v5714
        %v5716 = vrot.slane %v5048, 3
        %v5717 = vsel %vm931, %v5714, %v5716
        %v5718 = vrot.slane %v5050, 3
        %v5719 = vsel %vm931, %v5716, %v5718
        %5720 = vrot.lane.b32.xlu0 %v5711, 96
        %v5721 = vpop.permute.xlu0 %5720
        %5722 = vrot.lane.b32.xlu0 %v5713, 96
        %v5723 = vpop.permute.xlu0 %5722
        %5724 = vrot.lane.b32.xlu0 %v5715, 96
        %v5725 = vpop.permute.xlu0 %5724
        %5726 = vrot.lane.b32.xlu0 %v5717, 96
        %v5727 = vpop.permute.xlu0 %5726
        %5728 = vrot.lane.b32.xlu0 %v5719, 96
        %v5729 = vpop.permute.xlu0 %5728
        %5730 = vrot.lane.b32.xlu0 %v5718, 96
        %v5731 = vpop.permute.xlu0 %5730
        %v5738 = vrot.slane %v5040, 4
        %v5739 = vrot.slane %v5042, 4
        %v5740 = vsel %vm592, %v5738, %v5739
        %v5741 = vrot.slane %v5044, 4
        %v5742 = vsel %vm592, %v5739, %v5741
        %v5743 = vrot.slane %v5046, 4
        %v5744 = vsel %vm592, %v5741, %v5743
        %v5745 = vrot.slane %v5048, 4
        %v5746 = vsel %vm592, %v5743, %v5745
        %v5747 = vrot.slane %v5050, 4
        %v5748 = vsel %vm592, %v5745, %v5747
        %v5755 = vrot.slane %v5040, 5
        %v5756 = vrot.slane %v5042, 5
        %v5757 = vsel %vm1114, %v5755, %v5756
        %v5758 = vrot.slane %v5044, 5
        %v5759 = vsel %vm1114, %v5756, %v5758
        %v5760 = vrot.slane %v5046, 5
        %v5761 = vsel %vm1114, %v5758, %v5760
        %v5762 = vrot.slane %v5048, 5
        %v5763 = vsel %vm1114, %v5760, %v5762
        %v5764 = vrot.slane %v5050, 5
        %v5765 = vsel %vm1114, %v5762, %v5764
        %5766 = vrot.lane.b32.xlu0 %v5757, 32
        %v5767 = vpop.permute.xlu0 %5766
        %5768 = vrot.lane.b32.xlu0 %v5759, 32
        %v5769 = vpop.permute.xlu0 %5768
        %5770 = vrot.lane.b32.xlu0 %v5761, 32
        %v5771 = vpop.permute.xlu0 %5770
        %5772 = vrot.lane.b32.xlu0 %v5763, 32
        %v5773 = vpop.permute.xlu0 %5772
        %5774 = vrot.lane.b32.xlu0 %v5765, 32
        %v5775 = vpop.permute.xlu0 %5774
        %5776 = vrot.lane.b32.xlu0 %v5764, 32
        %v5777 = vpop.permute.xlu0 %5776
        %v5784 = vrot.slane %v5040, 6
        %v5785 = vrot.slane %v5042, 6
        %v5786 = vsel %vm669, %v5784, %v5785
        %v5787 = vrot.slane %v5044, 6
        %v5788 = vsel %vm669, %v5785, %v5787
        %v5789 = vrot.slane %v5046, 6
        %v5790 = vsel %vm669, %v5787, %v5789
        %v5791 = vrot.slane %v5048, 6
        %v5792 = vsel %vm669, %v5789, %v5791
        %v5793 = vrot.slane %v5050, 6
        %v5794 = vsel %vm669, %v5791, %v5793
        %5795 = vrot.lane.b32.xlu0 %v5786, 64
        %v5796 = vpop.permute.xlu0 %5795
        %5797 = vrot.lane.b32.xlu0 %v5788, 64
        %v5798 = vpop.permute.xlu0 %5797
        %5799 = vrot.lane.b32.xlu0 %v5790, 64
        %v5800 = vpop.permute.xlu0 %5799
        %5801 = vrot.lane.b32.xlu0 %v5792, 64
        %v5802 = vpop.permute.xlu0 %5801
        %5803 = vrot.lane.b32.xlu0 %v5794, 64
        %v5804 = vpop.permute.xlu0 %5803
        %5805 = vrot.lane.b32.xlu0 %v5793, 64
        %v5806 = vpop.permute.xlu0 %5805
        %v5813 = vsel %vm1316, %v5040, %v5663
        %v5814 = vsel %vm1316, %v5042, %v5665
        %v5815 = vsel %vm1316, %v5044, %v5667
        %v5816 = vsel %vm1316, %v5046, %v5669
        %v5817 = vsel %vm1316, %v5048, %v5671
        %v5818 = vsel %vm1316, %v5050, %v5673
        %v5819 = vsel %vm1354, %v5813, %v5692
        %v5820 = vsel %vm1354, %v5814, %v5694
        %v5821 = vsel %vm1354, %v5815, %v5696
        %v5822 = vsel %vm1354, %v5816, %v5698
        %v5823 = vsel %vm1354, %v5817, %v5700
        %v5824 = vsel %vm1354, %v5818, %v5702
        %v5825 = vsel %vm1392, %v5819, %v5721
        %v5826 = vsel %vm1392, %v5820, %v5723
        %v5827 = vsel %vm1392, %v5821, %v5725
        %v5828 = vsel %vm1392, %v5822, %v5727
        %v5829 = vsel %vm1392, %v5823, %v5729
        %v5830 = vsel %vm1392, %v5824, %v5731
        %v5831 = vsel %vm1316, %v5740, %v5767
        %v5832 = vsel %vm1316, %v5742, %v5769
        %v5833 = vsel %vm1316, %v5744, %v5771
        %v5834 = vsel %vm1316, %v5746, %v5773
        %v5835 = vsel %vm1316, %v5748, %v5775
        %v5836 = vsel %vm1316, %v5747, %v5777
        %v5837 = vsel %vm1354, %v5831, %v5796
        %v5838 = vsel %vm1354, %v5832, %v5798
        %v5839 = vsel %vm1354, %v5833, %v5800
        %v5840 = vsel %vm1354, %v5834, %v5802
        %v5841 = vsel %vm1354, %v5835, %v5804
        %v5842 = vsel %vm1354, %v5836, %v5806
        %v5855 = vrot.slane %v5429, 6
        %v5856 = vrot.slane %v5441, 6
        %v5857 = vrot.slane %v5430, 6
        %v5858 = vsel %vm669, %v5855, %v5857
        %v5859 = vrot.slane %v5442, 6
        %v5860 = vsel %vm669, %v5856, %v5859
        %v5861 = vrot.slane %v5431, 6
        %v5862 = vsel %vm669, %v5857, %v5861
        %v5863 = vrot.slane %v5443, 6
        %v5864 = vsel %vm669, %v5859, %v5863
        %v5865 = vrot.slane %v5432, 6
        %v5866 = vsel %vm669, %v5861, %v5865
        %v5867 = vrot.slane %v5444, 6
        %v5868 = vsel %vm669, %v5863, %v5867
        %v5869 = vrot.slane %v5433, 6
        %v5870 = vsel %vm669, %v5865, %v5869
        %v5871 = vrot.slane %v5445, 6
        %v5872 = vsel %vm669, %v5867, %v5871
        %v5873 = vrot.slane %v5434, 6
        %v5874 = vsel %vm669, %v5869, %v5873
        %v5875 = vrot.slane %v5446, 6
        %v5876 = vsel %vm669, %v5871, %v5875
        %v5897 = vrot.slane %v5627, 4
        %v5898 = vrot.slane %v5639, 4
        %v5899 = vrot.slane %v5628, 4
        %v5900 = vsel %vm592, %v5897, %v5899
        %v5901 = vrot.slane %v5640, 4
        %v5902 = vsel %vm592, %v5898, %v5901
        %v5903 = vrot.slane %v5629, 4
        %v5904 = vsel %vm592, %v5899, %v5903
        %v5905 = vrot.slane %v5641, 4
        %v5906 = vsel %vm592, %v5901, %v5905
        %v5907 = vrot.slane %v5630, 4
        %v5908 = vsel %vm592, %v5903, %v5907
        %v5909 = vrot.slane %v5642, 4
        %v5910 = vsel %vm592, %v5905, %v5909
        %v5911 = vrot.slane %v5631, 4
        %v5912 = vsel %vm592, %v5907, %v5911
        %v5913 = vrot.slane %v5643, 4
        %v5914 = vsel %vm592, %v5909, %v5913
        %v5915 = vrot.slane %v5632, 4
        %v5916 = vsel %vm592, %v5911, %v5915
        %v5917 = vrot.slane %v5644, 4
        %v5918 = vsel %vm592, %v5913, %v5917
        %v5939 = vrot.slane %v5825, 2
        %v5940 = vrot.slane %v5837, 2
        %v5941 = vrot.slane %v5826, 2
        %v5942 = vsel %vm515, %v5939, %v5941
        %v5943 = vrot.slane %v5838, 2
        %v5944 = vsel %vm515, %v5940, %v5943
        %v5945 = vrot.slane %v5827, 2
        %v5946 = vsel %vm515, %v5941, %v5945
        %v5947 = vrot.slane %v5839, 2
        %v5948 = vsel %vm515, %v5943, %v5947
        %v5949 = vrot.slane %v5828, 2
        %v5950 = vsel %vm515, %v5945, %v5949
        %v5951 = vrot.slane %v5840, 2
        %v5952 = vsel %vm515, %v5947, %v5951
        %v5953 = vrot.slane %v5829, 2
        %v5954 = vsel %vm515, %v5949, %v5953
        %v5955 = vrot.slane %v5841, 2
        %v5956 = vsel %vm515, %v5951, %v5955
        %v5957 = vrot.slane %v5830, 2
        %v5958 = vsel %vm515, %v5953, %v5957
        %v5959 = vrot.slane %v5842, 2
        %v5960 = vsel %vm515, %v5955, %v5959
        %v5968 = vsel %vm669, %v5236, %v5855
        %v5969 = vsel %vm669, %v5248, %v5856
        %v5970 = vsel %vm592, %v5874, %v5897
        %v5971 = vsel %vm592, %v5876, %v5898
        %v5972 = vsel %vm515, %v5916, %v5939
        %v5973 = vsel %vm515, %v5918, %v5940
        %v5974 = vld [vmem:[%s2] sm:$0xff]
        %v5975 = vld [vmem:[%s2 + $0x8] sm:$0xff]
        %v5976 = vld [vmem:[%s2 + $0x10] sm:$0xff]
        %v5977 = vld [vmem:[%s2 + $0x18] sm:$0xff]
        %v5978 = vld [vmem:[%s2 + $0x20] sm:$0xff]
        %v5979 = vld [vmem:[%s2 + $0x28] sm:$0xff]
        %v5980 = vld [vmem:[%s2 + $0x30] sm:$0xff]
        %v5981 = vld [vmem:[%s2 + $0x38] sm:$0xff]
        %v5982 = vld [vmem:[%s2 + $0x40] sm:$0xff]
        %v5983 = vld [vmem:[%s2 + $0x48] sm:$0xff]
        %v5984 = vld [vmem:[%s2 + $0x50] sm:$0xff]
        %v5985 = vld [vmem:[%s2 + $0x58] sm:$0xff]
        %v5986 = vld [vmem:[%s2 + $0x60] sm:$0xff]
        %v5987 = vld [vmem:[%s2 + $0x68] sm:$0xff]
        %v5988 = vld [vmem:[%s2 + $0x70] sm:$0xff]
        %v5989 = vld [vmem:[%s2 + $0x78] sm:$0xff]
        %v5990 = vld [vmem:[%s2 + $0x80] sm:$0xff]
        %v5991 = vld [vmem:[%s2 + $0x88] sm:$0xff]
        %v5992 = vld [vmem:[%s2 + $0x90] sm:$0xff]
        %v5993 = vld [vmem:[%s2 + $0x98] sm:$0xff]
        %v5994 = vld [vmem:[%s2 + $0xa0] sm:$0xff]
        %v5995 = vld [vmem:[%s2 + $0xa8] sm:$0xff]
        %v5996 = vld [vmem:[%s2 + $0xb0] sm:$0xff]
        %v5997 = vld [vmem:[%s2 + $0xb8] sm:$0xff]
        %v5998 = vld [vmem:[%s2 + $0xc0] sm:$0xff]
        %v5999 = vld [vmem:[%s2 + $0xc8] sm:$0xff]
        %v6000 = vld [vmem:[%s2 + $0xd0] sm:$0xff]
        %v6001 = vld [vmem:[%s2 + $0xd8] sm:$0xff]
        %v6002 = vld [vmem:[%s7 + $0x1] sm:$0x1]
        %v6003 = vlaneseq
        %v6004 = vshrl.u32 %v6003, 7
        %v6005 = vsub.s32 0, %v6004
        %v6006 = vrot.slane %v6002, %v6005
        %v6008 = vsel %vm1392, %v5243, 0
        %v6011 = vsel %vm1392, %v5244, 0
        %v6014 = vsel %vm1392, %v5245, 0
        %v6017 = vsel %vm1392, %v5246, 0
        %v6020 = vsel %vm1392, %v5247, 0
        %v6023 = vsel %vm1392, %v5969, 0
        %v6025 = vsel %vm1392, %v5860, 0
        %v6027 = vsel %vm1392, %v5864, 0
        %v6029 = vsel %vm1392, %v5868, 0
        %v6031 = vsel %vm1392, %v5872, 0
        %v6034 = vsel %vm1392, %v5971, 0
        %v6036 = vsel %vm1392, %v5902, 0
        %v6038 = vsel %vm1392, %v5906, 0
        %v6040 = vsel %vm1392, %v5910, 0
        %v6042 = vsel %vm1392, %v5914, 0
        %v6045 = vsel %vm1392, %v5973, 0
        %v6047 = vsel %vm1392, %v5944, 0
        %v6049 = vsel %vm1392, %v5948, 0
        %v6051 = vsel %vm1392, %v5952, 0
        %v6053 = vsel %vm1392, %v5956, 0
        %v6055 = vsel %vm1392, %v5960, 0
        %6057 = vmatprep.subr.mxu0 0.0
        %6058 = vmatpush1.msra.mxu0 %v5974
        %6059 = vmatprep.subr.mxu0 0.0
        %6060 = vmatpush1.msra.mxu0 %v5975
        %6061 = vmatprep.subr.mxu0 0.0
        %6062 = vmatpush1.msra.mxu0 %v5976
        %6063 = vmatprep.subr.mxu0 0.0
        %6064 = vmatpush1.msra.mxu0 %v5977
        %6065 = vmatprep.subr.mxu0 0.0
        %6066 = vmatpush1.msra.mxu0 %v5978
        %6067 = vmatprep.subr.mxu0 0.0
        %6068 = vmatpush1.msra.mxu0 %v5979
        %6069 = vmatprep.subr.mxu0 0.0
        %6070 = vmatpush1.msra.mxu0 %v5980
        %6071 = vmatprep.subr.mxu0 0.0
        %6072 = vmatpush1.msra.mxu0 %v5981
        %6073 = vmatprep.subr.mxu0 0.0
        %6074 = vmatpush1.msra.mxu0 %v5982
        %6075 = vmatprep.subr.mxu0 0.0
        %6076 = vmatpush1.msra.mxu0 %v5983
        %6077 = vmatprep.subr.mxu0 0.0
        %6078 = vmatpush1.msra.mxu0 %v5984
        %6079 = vmatprep.subr.mxu0 0.0
        %6080 = vmatpush1.msra.mxu0 %v5985
        %6081 = vmatprep.subr.mxu0 0.0
        %6082 = vmatpush1.msra.mxu0 %v5986
        %6083 = vmatprep.subr.mxu0 0.0
        %6084 = vmatpush1.msra.mxu0 %v5987
        %6085 = vmatprep.subr.mxu0 0.0
        %6086 = vmatpush1.msra.mxu0 %v5988
        %6087 = vmatprep.subr.mxu0 0.0
        %6088 = vmatpush1.msra.mxu0 %v5989
        %6089 = vmatprep.subr.mxu0 0.0
        %6090 = vmatpush1.msra.mxu0 %v5990
        %6091 = vmatprep.subr.mxu0 0.0
        %6092 = vmatpush1.msra.mxu0 %v5991
        %6093 = vmatprep.subr.mxu0 0.0
        %6094 = vmatpush1.msra.mxu0 %v5992
        %6095 = vmatprep.subr.mxu0 0.0
        %6096 = vmatpush1.msra.mxu0 %v5993
        %6097 = vmatprep.subr.mxu0 0.0
        %6098 = vmatpush1.msra.mxu0 %v5994
        %6099 = vmatprep.subr.mxu0 0.0
        %6100 = vmatpush1.msra.mxu0 %v5995
        %6101 = vmatprep.subr.mxu0 0.0
        %6102 = vmatpush1.msra.mxu0 %v5996
        %6103 = vmatprep.subr.mxu0 0.0
        %6104 = vmatpush1.msra.mxu0 %v5997
        %6105 = vmatprep.subr.mxu0 0.0
        %6106 = vmatpush1.msra.mxu0 %v5998
        %6107 = vmatprep.subr.mxu0 0.0
        %6108 = vmatpush1.msra.mxu0 %v5999
        %6109 = vmatprep.subr.mxu0 0.0
        %6110 = vmatpush1.msra.mxu0 %v6000
        %6111 = vmatprep.subr.mxu0 0.0
        %6112 = vmatpush1.msra.mxu0 %v6001
        %6113 = vmatprep.subr.mxu0 0.0
        %6114 = vmatpush1.msra.mxu0 0.0
        %6115 = vmatprep.subr.mxu0 0.0
        %6116 = vmatpush1.msra.mxu0 0.0
        %6117 = vmatprep.subr.mxu0 0.0
        %6118 = vmatpush1.msra.mxu0 0.0
        %6119 = vmatprep.subr.mxu0 0.0
        %6120 = vmatpush1.msra.mxu0 0.0
        %6121 = vmatprep.mubr.f32.mxu0 %v6008
        %6122 = vmatmul.mubr.f32.gmra.mrb[0].mxu0 %v5231
        %v6123 = vpop.f32.mrb[0].mxu0
        %v6124 = vadd.f32 %v6006, %v6123
        %v6125 = vpop.f32.mrb[0].mxu0
        %6126 = vmatprep.mubr.f32.mxu0 %v6011
        %6127 = vmatmul.mubr.f32.gmra.mrb[0].mxu0 %v5232
        %v6128 = vpop.f32.mrb[0].mxu0
        %v6129 = vadd.f32 %v6006, %v6128
        %v6130 = vpop.f32.mrb[0].mxu0
        %6131 = vmatprep.mubr.f32.mxu0 %v6014
        %6132 = vmatmul.mubr.f32.gmra.mrb[0].mxu0 %v5233
        %v6133 = vpop.f32.mrb[0].mxu0
        %v6134 = vadd.f32 %v6006, %v6133
        %v6135 = vpop.f32.mrb[0].mxu0
        %6136 = vmatprep.mubr.f32.mxu0 %v6017
        %6137 = vmatmul.mubr.f32.gmra.mrb[0].mxu0 %v5234
        %v6138 = vpop.f32.mrb[0].mxu0
        %v6139 = vadd.f32 %v6006, %v6138
        %v6140 = vpop.f32.mrb[0].mxu0
        %6141 = vmatprep.mubr.f32.mxu0 %v6020
        %6142 = vmatmul.mubr.f32.gmra.mrb[0].mxu0 %v5235
        %v6143 = vpop.f32.mrb[0].mxu0
        %v6144 = vadd.f32 %v6006, %v6143
        %v6145 = vpop.f32.mrb[0].mxu0
        %6146 = vmatprep.mubr.f32.mxu0 %v6023
        %6147 = vmatmul.mubr.f32.gmra.mrb[0].mxu0 %v5968
        %v6148 = vpop.f32.mrb[0].mxu0
        %v6149 = vadd.f32 %v6006, %v6148
        %v6150 = vpop.f32.mrb[0].mxu0
        %6151 = vmatprep.mubr.f32.mxu0 %v6025
        %6152 = vmatmul.mubr.f32.gmra.mrb[0].mxu0 %v5858
        %v6153 = vpop.f32.mrb[0].mxu0
        %v6154 = vadd.f32 %v6006, %v6153
        %v6155 = vpop.f32.mrb[0].mxu0
        %6156 = vmatprep.mubr.f32.mxu0 %v6027
        %6157 = vmatmul.mubr.f32.gmra.mrb[0].mxu0 %v5862
        %v6158 = vpop.f32.mrb[0].mxu0
        %v6159 = vadd.f32 %v6006, %v6158
        %v6160 = vpop.f32.mrb[0].mxu0
        %6161 = vmatprep.mubr.f32.mxu0 %v6029
        %6162 = vmatmul.mubr.f32.gmra.mrb[0].mxu0 %v5866
        %v6163 = vpop.f32.mrb[0].mxu0
        %v6164 = vadd.f32 %v6006, %v6163
        %v6165 = vpop.f32.mrb[0].mxu0
        %6166 = vmatprep.mubr.f32.mxu0 %v6031
        %6167 = vmatmul.mubr.f32.gmra.mrb[0].mxu0 %v5870
        %v6168 = vpop.f32.mrb[0].mxu0
        %v6169 = vadd.f32 %v6006, %v6168
        %v6170 = vpop.f32.mrb[0].mxu0
        %6171 = vmatprep.mubr.f32.mxu0 %v6034
        %6172 = vmatmul.mubr.f32.gmra.mrb[0].mxu0 %v5970
        %v6173 = vpop.f32.mrb[0].mxu0
        %v6174 = vadd.f32 %v6006, %v6173
        %v6175 = vpop.f32.mrb[0].mxu0
        %6176 = vmatprep.mubr.f32.mxu0 %v6036
        %6177 = vmatmul.mubr.f32.gmra.mrb[0].mxu0 %v5900
        %v6178 = vpop.f32.mrb[0].mxu0
        %v6179 = vadd.f32 %v6006, %v6178
        %v6180 = vpop.f32.mrb[0].mxu0
        %6181 = vmatprep.mubr.f32.mxu0 %v6038
        %6182 = vmatmul.mubr.f32.gmra.mrb[0].mxu0 %v5904
        %v6183 = vpop.f32.mrb[0].mxu0
        %v6184 = vadd.f32 %v6006, %v6183
        %v6185 = vpop.f32.mrb[0].mxu0
        %6186 = vmatprep.mubr.f32.mxu0 %v6040
        %6187 = vmatmul.mubr.f32.gmra.mrb[0].mxu0 %v5908
        %v6188 = vpop.f32.mrb[0].mxu0
        %v6189 = vadd.f32 %v6006, %v6188
        %v6190 = vpop.f32.mrb[0].mxu0
        %6191 = vmatprep.mubr.f32.mxu0 %v6042
        %6192 = vmatmul.mubr.f32.gmra.mrb[0].mxu0 %v5912
        %v6193 = vpop.f32.mrb[0].mxu0
        %v6194 = vadd.f32 %v6006, %v6193
        %v6195 = vpop.f32.mrb[0].mxu0
        %6196 = vmatprep.mubr.f32.mxu0 %v6045
        %6197 = vmatmul.mubr.f32.gmra.mrb[0].mxu0 %v5972
        %v6198 = vpop.f32.mrb[0].mxu0
        %v6199 = vadd.f32 %v6006, %v6198
        %v6200 = vpop.f32.mrb[0].mxu0
        %6201 = vmatprep.mubr.f32.mxu0 %v6047
        %6202 = vmatmul.mubr.f32.gmra.mrb[0].mxu0 %v5942
        %v6203 = vpop.f32.mrb[0].mxu0
        %v6204 = vadd.f32 %v6006, %v6203
        %v6205 = vpop.f32.mrb[0].mxu0
        %6206 = vmatprep.mubr.f32.mxu0 %v6049
        %6207 = vmatmul.mubr.f32.gmra.mrb[0].mxu0 %v5946
        %v6208 = vpop.f32.mrb[0].mxu0
        %v6209 = vadd.f32 %v6006, %v6208
        %v6210 = vpop.f32.mrb[0].mxu0
        %6211 = vmatprep.mubr.f32.mxu0 %v6051
        %6212 = vmatmul.mubr.f32.gmra.mrb[0].mxu0 %v5950
        %v6213 = vpop.f32.mrb[0].mxu0
        %v6214 = vadd.f32 %v6006, %v6213
        %v6215 = vpop.f32.mrb[0].mxu0
        %6216 = vmatprep.mubr.f32.mxu0 %v6053
        %6217 = vmatmul.mubr.f32.gmra.mrb[0].mxu0 %v5954
        %v6218 = vpop.f32.mrb[0].mxu0
        %v6219 = vadd.f32 %v6006, %v6218
        %v6220 = vpop.f32.mrb[0].mxu0
        %6221 = vmatprep.mubr.f32.mxu0 %v6055
        %6222 = vmatmul.mubr.f32.gmra.mrb[0].mxu0 %v5958
        %v6223 = vpop.f32.mrb[0].mxu0
        %v6224 = vadd.f32 %v6006, %v6223
        %v6225 = vpop.f32.mrb[0].mxu0
        %6226 = vdwg.mxu0
        %v6227 = vmax.f32 %v6124, 0.0
        %v6228 = vmax.f32 %v6129, 0.0
        %v6229 = vmax.f32 %v6134, 0.0
        %v6230 = vmax.f32 %v6139, 0.0
        %v6231 = vmax.f32 %v6144, 0.0
        %v6232 = vmax.f32 %v6149, 0.0
        %v6233 = vmax.f32 %v6154, 0.0
        %v6234 = vmax.f32 %v6159, 0.0
        %v6235 = vmax.f32 %v6164, 0.0
        %v6236 = vmax.f32 %v6169, 0.0
        %v6237 = vmax.f32 %v6174, 0.0
        %v6238 = vmax.f32 %v6179, 0.0
        %v6239 = vmax.f32 %v6184, 0.0
        %v6240 = vmax.f32 %v6189, 0.0
        %v6241 = vmax.f32 %v6194, 0.0
        %v6242 = vmax.f32 %v6199, 0.0
        %v6243 = vmax.f32 %v6204, 0.0
        %v6244 = vmax.f32 %v6209, 0.0
        %v6245 = vmax.f32 %v6214, 0.0
        %v6246 = vmax.f32 %v6219, 0.0
        %v6247 = vmax.f32 %v6224, 0.0
        %v6269 = vrot.slane %v6227, 1
        %v6270 = vrot.slane %v6228, 1
        %v6271 = vsel %vm748, %v6269, %v6270
        %v6272 = vrot.slane %v6229, 1
        %v6273 = vsel %vm748, %v6270, %v6272
        %v6274 = vrot.slane %v6230, 1
        %v6275 = vsel %vm748, %v6272, %v6274
        %v6276 = vrot.slane %v6231, 1
        %v6277 = vsel %vm748, %v6274, %v6276
        %v6278 = vrot.slane %v6232, 1
        %v6279 = vsel %vm748, %v6276, %v6278
        %v6280 = vrot.slane %v6233, 1
        %v6281 = vsel %vm748, %v6278, %v6280
        %v6282 = vrot.slane %v6234, 1
        %v6283 = vsel %vm748, %v6280, %v6282
        %v6284 = vrot.slane %v6235, 1
        %v6285 = vsel %vm748, %v6282, %v6284
        %v6286 = vrot.slane %v6236, 1
        %v6287 = vsel %vm748, %v6284, %v6286
        %v6288 = vrot.slane %v6237, 1
        %v6289 = vsel %vm748, %v6286, %v6288
        %v6290 = vrot.slane %v6238, 1
        %v6291 = vsel %vm748, %v6288, %v6290
        %v6292 = vrot.slane %v6239, 1
        %v6293 = vsel %vm748, %v6290, %v6292
        %v6294 = vrot.slane %v6240, 1
        %v6295 = vsel %vm748, %v6292, %v6294
        %v6296 = vrot.slane %v6241, 1
        %v6297 = vsel %vm748, %v6294, %v6296
        %v6298 = vrot.slane %v6242, 1
        %v6299 = vsel %vm748, %v6296, %v6298
        %v6300 = vrot.slane %v6243, 1
        %v6301 = vsel %vm748, %v6298, %v6300
        %v6302 = vrot.slane %v6244, 1
        %v6303 = vsel %vm748, %v6300, %v6302
        %v6304 = vrot.slane %v6245, 1
        %v6305 = vsel %vm748, %v6302, %v6304
        %v6306 = vrot.slane %v6246, 1
        %v6307 = vsel %vm748, %v6304, %v6306
        %v6308 = vrot.slane %v6247, 1
        %v6309 = vsel %vm748, %v6306, %v6308
        %v6331 = vmax.f32 %v6227, %v6271
        %v6332 = vmax.f32 %v6228, %v6273
        %v6333 = vmax.f32 %v6229, %v6275
        %v6334 = vmax.f32 %v6230, %v6277
        %v6335 = vmax.f32 %v6231, %v6279
        %v6336 = vmax.f32 %v6232, %v6281
        %v6337 = vmax.f32 %v6233, %v6283
        %v6338 = vmax.f32 %v6234, %v6285
        %v6339 = vmax.f32 %v6235, %v6287
        %v6340 = vmax.f32 %v6236, %v6289
        %v6341 = vmax.f32 %v6237, %v6291
        %v6342 = vmax.f32 %v6238, %v6293
        %v6343 = vmax.f32 %v6239, %v6295
        %v6344 = vmax.f32 %v6240, %v6297
        %v6345 = vmax.f32 %v6241, %v6299
        %v6346 = vmax.f32 %v6242, %v6301
        %v6347 = vmax.f32 %v6243, %v6303
        %v6348 = vmax.f32 %v6244, %v6305
        %v6349 = vmax.f32 %v6245, %v6307
        %v6350 = vmax.f32 %v6246, %v6309
        %v6351 = vmax.f32 %v6247, %v6308
        %v6352 = vrot.slane %v6227, 2
        %v6353 = vrot.slane %v6228, 2
        %v6354 = vsel %vm515, %v6352, %v6353
        %v6355 = vrot.slane %v6229, 2
        %v6356 = vsel %vm515, %v6353, %v6355
        %v6357 = vrot.slane %v6230, 2
        %v6358 = vsel %vm515, %v6355, %v6357
        %v6359 = vrot.slane %v6231, 2
        %v6360 = vsel %vm515, %v6357, %v6359
        %v6361 = vrot.slane %v6232, 2
        %v6362 = vsel %vm515, %v6359, %v6361
        %v6363 = vrot.slane %v6233, 2
        %v6364 = vsel %vm515, %v6361, %v6363
        %v6365 = vrot.slane %v6234, 2
        %v6366 = vsel %vm515, %v6363, %v6365
        %v6367 = vrot.slane %v6235, 2
        %v6368 = vsel %vm515, %v6365, %v6367
        %v6369 = vrot.slane %v6236, 2
        %v6370 = vsel %vm515, %v6367, %v6369
        %v6371 = vrot.slane %v6237, 2
        %v6372 = vsel %vm515, %v6369, %v6371
        %v6373 = vrot.slane %v6238, 2
        %v6374 = vsel %vm515, %v6371, %v6373
        %v6375 = vrot.slane %v6239, 2
        %v6376 = vsel %vm515, %v6373, %v6375
        %v6377 = vrot.slane %v6240, 2
        %v6378 = vsel %vm515, %v6375, %v6377
        %v6379 = vrot.slane %v6241, 2
        %v6380 = vsel %vm515, %v6377, %v6379
        %v6381 = vrot.slane %v6242, 2
        %v6382 = vsel %vm515, %v6379, %v6381
        %v6383 = vrot.slane %v6243, 2
        %v6384 = vsel %vm515, %v6381, %v6383
        %v6385 = vrot.slane %v6244, 2
        %v6386 = vsel %vm515, %v6383, %v6385
        %v6387 = vrot.slane %v6245, 2
        %v6388 = vsel %vm515, %v6385, %v6387
        %v6389 = vrot.slane %v6246, 2
        %v6390 = vsel %vm515, %v6387, %v6389
        %v6391 = vrot.slane %v6247, 2
        %v6392 = vsel %vm515, %v6389, %v6391
        %v6414 = vmax.f32 %v6331, %v6354
        %v6415 = vmax.f32 %v6332, %v6356
        %v6416 = vmax.f32 %v6333, %v6358
        %v6417 = vmax.f32 %v6334, %v6360
        %v6418 = vmax.f32 %v6335, %v6362
        %v6419 = vmax.f32 %v6336, %v6364
        %v6420 = vmax.f32 %v6337, %v6366
        %v6421 = vmax.f32 %v6338, %v6368
        %v6422 = vmax.f32 %v6339, %v6370
        %v6423 = vmax.f32 %v6340, %v6372
        %v6424 = vmax.f32 %v6341, %v6374
        %v6425 = vmax.f32 %v6342, %v6376
        %v6426 = vmax.f32 %v6343, %v6378
        %v6427 = vmax.f32 %v6344, %v6380
        %v6428 = vmax.f32 %v6345, %v6382
        %v6429 = vmax.f32 %v6346, %v6384
        %v6430 = vmax.f32 %v6347, %v6386
        %v6431 = vmax.f32 %v6348, %v6388
        %v6432 = vmax.f32 %v6349, %v6390
        %v6433 = vmax.f32 %v6350, %v6392
        %v6434 = vmax.f32 %v6351, %v6391
        %6435 = vst.msk [vmem:[#allocation2] sm:$0xff] %vm1316, %v6414
        %6436 = vst.msk [vmem:[#allocation2 + $0x8] sm:$0xff] %vm1316, %v6415
        %6437 = vst.msk [vmem:[#allocation2 + $0x10] sm:$0xff] %vm1316, %v6416
        %6438 = vst.msk [vmem:[#allocation2 + $0x18] sm:$0xff] %vm1316, %v6417
        %6439 = vst.msk [vmem:[#allocation2 + $0x20] sm:$0xff] %vm1316, %v6418
        %6440 = vst.msk [vmem:[#allocation2 + $0x28] sm:$0xff] %vm1316, %v6419
        %6441 = vst.msk [vmem:[#allocation2 + $0x30] sm:$0xff] %vm1316, %v6420
        %6442 = vst.msk [vmem:[#allocation2 + $0x38] sm:$0xff] %vm1316, %v6421
        %6443 = vst.msk [vmem:[#allocation2 + $0x40] sm:$0xff] %vm1316, %v6422
        %6444 = vst.msk [vmem:[#allocation2 + $0x48] sm:$0xff] %vm1316, %v6423
        %6445 = vst.msk [vmem:[#allocation2 + $0x50] sm:$0xff] %vm1316, %v6424
        %6446 = vst.msk [vmem:[#allocation2 + $0x58] sm:$0xff] %vm1316, %v6425
        %6447 = vst.msk [vmem:[#allocation2 + $0x60] sm:$0xff] %vm1316, %v6426
        %6448 = vst.msk [vmem:[#allocation2 + $0x68] sm:$0xff] %vm1316, %v6427
        %6449 = vst.msk [vmem:[#allocation2 + $0x70] sm:$0xff] %vm1316, %v6428
        %6450 = vst.msk [vmem:[#allocation2 + $0x78] sm:$0xff] %vm1316, %v6429
        %6451 = vst.msk [vmem:[#allocation2 + $0x80] sm:$0xff] %vm1316, %v6430
        %6452 = vst.msk [vmem:[#allocation2 + $0x88] sm:$0xff] %vm1316, %v6431
        %6453 = vst.msk [vmem:[#allocation2 + $0x90] sm:$0xff] %vm1316, %v6432
        %6454 = vst.msk [vmem:[#allocation2 + $0x98] sm:$0xff] %vm1316, %v6433
        %6455 = vst.msk [vmem:[#allocation2 + $0xa0] sm:$0x3f] %vm5002, %v6434
        %v6456 = vld [vmem:[#allocation2] ss:$3 sm:$0xff]
        %v6457 = vld [vmem:[%s5005] ss:$3 sm:$0xff]
        %v6458 = vld [vmem:[%s5007] ss:$3 sm:$0xff]
        %v6459 = vld [vmem:[%s5009] ss:$3 sm:$0xff]
        %v6460 = vld [vmem:[%s5011] ss:$3 sm:$0xff]
        %v6461 = vld [vmem:[%s5013] ss:$3 sm:$0xff]
        %v6462 = vld [vmem:[%s5015] ss:$3 sm:$0xff]
        %v6465 = vrot.slane %v6456, 1
        %v6466 = vrot.slane %v6457, 1
        %v6467 = vsel %vm748, %v6465, %v6466
        %6468 = vrot.lane.b32.xlu0 %v6467, 32
        %v6469 = vpop.permute.xlu0 %6468
        %6470 = vrot.lane.b32.xlu0 %v6466, 32
        %v6471 = vpop.permute.xlu0 %6470
        %v6474 = vrot.slane %v6456, 2
        %v6475 = vrot.slane %v6457, 2
        %v6476 = vsel %vm515, %v6474, %v6475
        %6477 = vrot.lane.b32.xlu0 %v6476, 64
        %v6478 = vpop.permute.xlu0 %6477
        %6479 = vrot.lane.b32.xlu0 %v6475, 64
        %v6480 = vpop.permute.xlu0 %6479
        %v6483 = vsel %vm1316, %v6456, %v6469
        %v6484 = vsel %vm1316, %v6457, %v6471
        %v6485 = vsel %vm1354, %v6483, %v6478
        %v6486 = vsel %vm1354, %v6484, %v6480
        %v6489 = vrot.slane %v6458, 1
        %v6490 = vsel %vm748, %v6466, %v6489
        %v6491 = vrot.slane %v6459, 1
        %v6492 = vsel %vm748, %v6489, %v6491
        %6493 = vrot.lane.b32.xlu0 %v6490, 32
        %v6494 = vpop.permute.xlu0 %6493
        %6495 = vrot.lane.b32.xlu0 %v6492, 32
        %v6496 = vpop.permute.xlu0 %6495
        %6497 = vrot.lane.b32.xlu0 %v6491, 32
        %v6498 = vpop.permute.xlu0 %6497
        %v6502 = vrot.slane %v6458, 2
        %v6503 = vrot.slane %v6459, 2
        %v6504 = vsel %vm515, %v6502, %v6503
        %6505 = vrot.lane.b32.xlu0 %v6502, 64
        %v6506 = vpop.permute.xlu0 %6505
        %6507 = vrot.lane.b32.xlu0 %v6504, 64
        %v6508 = vpop.permute.xlu0 %6507
        %6509 = vrot.lane.b32.xlu0 %v6503, 64
        %v6510 = vpop.permute.xlu0 %6509
        %v6514 = vsel %vm1316, %v6457, %v6494
        %v6515 = vsel %vm1316, %v6458, %v6496
        %v6516 = vsel %vm1316, %v6459, %v6498
        %v6517 = vsel %vm1354, %v6514, %v6506
        %v6518 = vsel %vm1354, %v6515, %v6508
        %v6519 = vsel %vm1354, %v6516, %v6510
        %v6522 = vrot.slane %v6460, 1
        %v6523 = vsel %vm748, %v6491, %v6522
        %v6524 = vrot.slane %v6461, 1
        %v6525 = vsel %vm748, %v6522, %v6524
        %6526 = vrot.lane.b32.xlu0 %v6523, 32
        %v6527 = vpop.permute.xlu0 %6526
        %6528 = vrot.lane.b32.xlu0 %v6525, 32
        %v6529 = vpop.permute.xlu0 %6528
        %v6532 = vrot.slane %v6460, 2
        %v6533 = vsel %vm515, %v6503, %v6532
        %v6534 = vrot.slane %v6461, 2
        %v6535 = vsel %vm515, %v6532, %v6534
        %6536 = vrot.lane.b32.xlu0 %v6533, 64
        %v6537 = vpop.permute.xlu0 %6536
        %6538 = vrot.lane.b32.xlu0 %v6535, 64
        %v6539 = vpop.permute.xlu0 %6538
        %v6542 = vsel %vm1316, %v6459, %v6527
        %v6543 = vsel %vm1316, %v6460, %v6529
        %v6544 = vsel %vm1354, %v6542, %v6537
        %v6545 = vsel %vm1354, %v6543, %v6539
        %v6547 = vrot.slane %v6462, 1
        %v6548 = vsel %vm748, %v6524, %v6547
        %6549 = vrot.lane.b32.xlu0 %v6548, 32
        %v6550 = vpop.permute.xlu0 %6549
        %6551 = vrot.lane.b32.xlu0 %v6547, 32
        %v6552 = vpop.permute.xlu0 %6551
        %v6555 = vrot.slane %v6462, 2
        %v6556 = vsel %vm515, %v6534, %v6555
        %6557 = vrot.lane.b32.xlu0 %v6556, 64
        %v6558 = vpop.permute.xlu0 %6557
        %6559 = vrot.lane.b32.xlu0 %v6555, 64
        %v6560 = vpop.permute.xlu0 %6559
        %v6563 = vsel %vm1316, %v6461, %v6550
        %v6564 = vsel %vm1316, %v6462, %v6552
        %v6565 = vsel %vm1354, %v6563, %v6558
        %v6566 = vsel %vm1354, %v6564, %v6560
        %v6570 = vrot.slane %v6517, 2
        %v6571 = vrot.slane %v6518, 2
        %v6572 = vsel %vm515, %v6570, %v6571
        %v6573 = vrot.slane %v6519, 2
        %v6574 = vsel %vm515, %v6571, %v6573
        %v6578 = vrot.slane %v6544, 4
        %v6579 = vrot.slane %v6545, 4
        %v6580 = vsel %vm592, %v6578, %v6579
        %v6584 = vrot.slane %v6565, 6
        %v6585 = vrot.slane %v6566, 6
        %v6586 = vsel %vm669, %v6584, %v6585
        %v6588 = vsel %vm592, %v6486, %v6572
        %v6589 = vsel %vm592, %v6579, %v6584
        %v6590 = vld [vmem:[%s3] sm:$0xff]
        %v6591 = vld [vmem:[%s3 + $0x8] sm:$0xff]
        %v6592 = vld [vmem:[%s3 + $0x10] sm:$0xff]
        %v6593 = vld [vmem:[%s3 + $0x18] sm:$0xff]
        %v6594 = vld [vmem:[%s3 + $0x20] sm:$0xff]
        %v6595 = vld [vmem:[%s3 + $0x28] sm:$0xff]
        %v6596 = vld [vmem:[%s3 + $0x30] sm:$0xff]
        %v6597 = vld [vmem:[%s3 + $0x38] sm:$0xff]
        %v6598 = vld [vmem:[%s3 + $0x40] sm:$0xff]
        %v6599 = vld [vmem:[%s3 + $0x48] sm:$0xff]
        %v6600 = vld [vmem:[%s3 + $0x50] sm:$0xff]
        %v6601 = vld [vmem:[%s3 + $0x58] sm:$0xff]
        %v6602 = vld [vmem:[%s7 + $0x2] sm:$0x1]
        %v6603 = vlaneseq
        %v6604 = vshrl.u32 %v6603, 7
        %v6605 = vsub.s32 0, %v6604
        %v6606 = vrot.slane %v6602, %v6605
        %v6608 = vsel %vm1392, %v6485, 0
        %v6611 = vsel %vm1392, %v6588, 0
        %v6613 = vsel %vm1392, %v6574, 0
        %v6615 = vsel %vm1392, %v6580, 0
        %v6618 = vsel %vm1392, %v6589, 0
        %v6620 = vsel %vm1392, %v6586, 0
        %6622 = vmatprep.subr.mxu0 0.0
        %6623 = vmatpush1.msra.mxu0 %v6590
        %6624 = vmatprep.subr.mxu0 0.0
        %6625 = vmatpush1.msra.mxu0 %v6591
        %6626 = vmatprep.subr.mxu0 0.0
        %6627 = vmatpush1.msra.mxu0 %v6592
        %6628 = vmatprep.subr.mxu0 0.0
        %6629 = vmatpush1.msra.mxu0 %v6593
        %6630 = vmatprep.subr.mxu0 0.0
        %6631 = vmatpush1.msra.mxu0 %v6594
        %6632 = vmatprep.subr.mxu0 0.0
        %6633 = vmatpush1.msra.mxu0 %v6595
        %6634 = vmatprep.subr.mxu0 0.0
        %6635 = vmatpush1.msra.mxu0 %v6596
        %6636 = vmatprep.subr.mxu0 0.0
        %6637 = vmatpush1.msra.mxu0 %v6597
        %6638 = vmatprep.subr.mxu0 0.0
        %6639 = vmatpush1.msra.mxu0 %v6598
        %6640 = vmatprep.subr.mxu0 0.0
        %6641 = vmatpush1.msra.mxu0 %v6599
        %6642 = vmatprep.subr.mxu0 0.0
        %6643 = vmatpush1.msra.mxu0 %v6600
        %6644 = vmatprep.subr.mxu0 0.0
        %6645 = vmatpush1.msra.mxu0 %v6601
        %6646 = vmatprep.subr.mxu0 0.0
        %6647 = vmatpush1.msra.mxu0 0.0
        %6648 = vmatprep.subr.mxu0 0.0
        %6649 = vmatpush1.msra.mxu0 0.0
        %6650 = vmatprep.subr.mxu0 0.0
        %6651 = vmatpush1.msra.mxu0 0.0
        %6652 = vmatprep.subr.mxu0 0.0
        %6653 = vmatpush1.msra.mxu0 0.0
        %6654 = vmatprep.subr.mxu0 0.0
        %6655 = vmatpush1.msra.mxu0 0.0
        %6656 = vmatprep.subr.mxu0 0.0
        %6657 = vmatpush1.msra.mxu0 0.0
        %6658 = vmatprep.subr.mxu0 0.0
        %6659 = vmatpush1.msra.mxu0 0.0
        %6660 = vmatprep.subr.mxu0 0.0
        %6661 = vmatpush1.msra.mxu0 0.0
        %6662 = vmatprep.subr.mxu0 0.0
        %6663 = vmatpush1.msra.mxu0 0.0
        %6664 = vmatprep.subr.mxu0 0.0
        %6665 = vmatpush1.msra.mxu0 0.0
        %6666 = vmatprep.subr.mxu0 0.0
        %6667 = vmatpush1.msra.mxu0 0.0
        %6668 = vmatprep.subr.mxu0 0.0
        %6669 = vmatpush1.msra.mxu0 0.0
        %6670 = vmatprep.subr.mxu0 0.0
        %6671 = vmatpush1.msra.mxu0 0.0
        %6672 = vmatprep.subr.mxu0 0.0
        %6673 = vmatpush1.msra.mxu0 0.0
        %6674 = vmatprep.subr.mxu0 0.0
        %6675 = vmatpush1.msra.mxu0 0.0
        %6676 = vmatprep.subr.mxu0 0.0
        %6677 = vmatpush1.msra.mxu0 0.0
        %6678 = vmatprep.subr.mxu0 0.0
        %6679 = vmatpush1.msra.mxu0 0.0
        %6680 = vmatprep.subr.mxu0 0.0
        %6681 = vmatpush1.msra.mxu0 0.0
        %6682 = vmatprep.subr.mxu0 0.0
        %6683 = vmatpush1.msra.mxu0 0.0
        %6684 = vmatprep.subr.mxu0 0.0
        %6685 = vmatpush1.msra.mxu0 0.0
        %6686 = vmatprep.mubr.f32.mxu0 0.0
        %6687 = vmatmul.mubr.f32.gmra.mrb[0].mxu0 %v6608
        %v6688 = vpop.f32.mrb[0].mxu0
        %v6689 = vadd.f32 %v6606, %v6688
        %v6690 = vpop.f32.mrb[0].mxu0
        %6691 = vmatprep.mubr.f32.mxu0 0.0
        %6692 = vmatmul.mubr.f32.gmra.mrb[0].mxu0 %v6611
        %v6693 = vpop.f32.mrb[0].mxu0
        %v6694 = vadd.f32 %v6606, %v6693
        %v6695 = vpop.f32.mrb[0].mxu0
        %6696 = vmatprep.mubr.f32.mxu0 0.0
        %6697 = vmatmul.mubr.f32.gmra.mrb[0].mxu0 %v6613
        %v6698 = vpop.f32.mrb[0].mxu0
        %v6699 = vadd.f32 %v6606, %v6698
        %v6700 = vpop.f32.mrb[0].mxu0
        %6701 = vmatprep.mubr.f32.mxu0 0.0
        %6702 = vmatmul.mubr.f32.gmra.mrb[0].mxu0 %v6615
        %v6703 = vpop.f32.mrb[0].mxu0
        %v6704 = vadd.f32 %v6606, %v6703
        %v6705 = vpop.f32.mrb[0].mxu0
        %6706 = vmatprep.mubr.f32.mxu0 0.0
        %6707 = vmatmul.mubr.f32.gmra.mrb[0].mxu0 %v6618
        %v6708 = vpop.f32.mrb[0].mxu0
        %v6709 = vadd.f32 %v6606, %v6708
        %v6710 = vpop.f32.mrb[0].mxu0
        %6711 = vmatprep.mubr.f32.mxu0 0.0
        %6712 = vmatmul.mubr.f32.gmra.mrb[0].mxu0 %v6620
        %v6713 = vpop.f32.mrb[0].mxu0
        %v6714 = vadd.f32 %v6606, %v6713
        %v6715 = vpop.f32.mrb[0].mxu0
        %6716 = vdwg.mxu0
        %v6717 = vmax.f32 %v6689, 0.0
        %v6718 = vmax.f32 %v6694, 0.0
        %v6719 = vmax.f32 %v6699, 0.0
        %v6720 = vmax.f32 %v6704, 0.0
        %v6721 = vmax.f32 %v6709, 0.0
        %v6722 = vmax.f32 %v6714, 0.0
        %v6725 = vrot.slane %v6717, 1
        %v6726 = vrot.slane %v6718, 1
        %v6727 = vsel %vm748, %v6725, %v6726
        %6728 = vrot.lane.b32.xlu0 %v6727, 32
        %v6729 = vpop.permute.xlu0 %6728
        %6730 = vrot.lane.b32.xlu0 %v6726, 32
        %v6731 = vpop.permute.xlu0 %6730
        %v6734 = vrot.slane %v6717, 2
        %v6735 = vrot.slane %v6718, 2
        %v6736 = vsel %vm515, %v6734, %v6735
        %6737 = vrot.lane.b32.xlu0 %v6736, 64
        %v6738 = vpop.permute.xlu0 %6737
        %6739 = vrot.lane.b32.xlu0 %v6735, 64
        %v6740 = vpop.permute.xlu0 %6739
        %v6743 = vsel %vm1316, %v6717, %v6729
        %v6744 = vsel %vm1316, %v6718, %v6731
        %v6745 = vsel %vm1354, %v6743, %v6738
        %v6746 = vsel %vm1354, %v6744, %v6740
        %v6748 = vrot.slane %v6719, 1
        %v6749 = vsel %vm748, %v6726, %v6748
        %6750 = vrot.lane.b32.xlu0 %v6749, 32
        %v6751 = vpop.permute.xlu0 %6750
        %6752 = vrot.lane.b32.xlu0 %v6748, 32
        %v6753 = vpop.permute.xlu0 %6752
        %v6756 = vrot.slane %v6719, 2
        %v6757 = vsel %vm515, %v6735, %v6756
        %6758 = vrot.lane.b32.xlu0 %v6757, 64
        %v6759 = vpop.permute.xlu0 %6758
        %6760 = vrot.lane.b32.xlu0 %v6756, 64
        %v6761 = vpop.permute.xlu0 %6760
        %v6764 = vsel %vm1316, %v6718, %v6751
        %v6765 = vsel %vm1316, %v6719, %v6753
        %v6766 = vsel %vm1354, %v6764, %v6759
        %v6767 = vsel %vm1354, %v6765, %v6761
        %v6770 = vrot.slane %v6720, 1
        %v6771 = vrot.slane %v6721, 1
        %v6772 = vsel %vm748, %v6770, %v6771
        %6773 = vrot.lane.b32.xlu0 %v6772, 32
        %v6774 = vpop.permute.xlu0 %6773
        %6775 = vrot.lane.b32.xlu0 %v6771, 32
        %v6776 = vpop.permute.xlu0 %6775
        %v6779 = vrot.slane %v6720, 2
        %v6780 = vrot.slane %v6721, 2
        %v6781 = vsel %vm515, %v6779, %v6780
        %6782 = vrot.lane.b32.xlu0 %v6781, 64
        %v6783 = vpop.permute.xlu0 %6782
        %6784 = vrot.lane.b32.xlu0 %v6780, 64
        %v6785 = vpop.permute.xlu0 %6784
        %v6788 = vsel %vm1316, %v6720, %v6774
        %v6789 = vsel %vm1316, %v6721, %v6776
        %v6790 = vsel %vm1354, %v6788, %v6783
        %v6791 = vsel %vm1354, %v6789, %v6785
        %v6793 = vrot.slane %v6722, 1
        %v6794 = vsel %vm748, %v6771, %v6793
        %6795 = vrot.lane.b32.xlu0 %v6794, 32
        %v6796 = vpop.permute.xlu0 %6795
        %6797 = vrot.lane.b32.xlu0 %v6793, 32
        %v6798 = vpop.permute.xlu0 %6797
        %v6801 = vrot.slane %v6722, 2
        %v6802 = vsel %vm515, %v6780, %v6801
        %6803 = vrot.lane.b32.xlu0 %v6802, 64
        %v6804 = vpop.permute.xlu0 %6803
        %6805 = vrot.lane.b32.xlu0 %v6801, 64
        %v6806 = vpop.permute.xlu0 %6805
        %v6809 = vsel %vm1316, %v6721, %v6796
        %v6810 = vsel %vm1316, %v6722, %v6798
        %v6811 = vsel %vm1354, %v6809, %v6804
        %v6812 = vsel %vm1354, %v6810, %v6806
        %v6815 = vrot.slane %v6766, 2
        %v6816 = vrot.slane %v6767, 2
        %v6817 = vsel %vm515, %v6815, %v6816
        %v6822 = vrot.slane %v6790, 4
        %v6823 = vrot.slane %v6791, 4
        %v6824 = vsel %vm592, %v6822, %v6823
        %v6829 = vrot.slane %v6811, 6
        %v6830 = vrot.slane %v6812, 6
        %v6831 = vsel %vm669, %v6829, %v6830
        %v6833 = vsel %vm669, %v6746, %v6817
        %v6834 = vsel %vm592, %v6816, %v6822
        %v6835 = vsel %vm515, %v6824, %v6829
        %v6836 = vld [vmem:[%s4] sm:$0xff]
        %v6837 = vld [vmem:[%s4 + $0x8] sm:$0xff]
        %v6838 = vld [vmem:[%s4 + $0x10] sm:$0xff]
        %v6839 = vld [vmem:[%s4 + $0x18] sm:$0xff]
        %v6840 = vld [vmem:[%s4 + $0x20] sm:$0xff]
        %v6841 = vld [vmem:[%s4 + $0x28] sm:$0xff]
        %v6842 = vld [vmem:[%s4 + $0x30] sm:$0xff]
        %v6843 = vld [vmem:[%s4 + $0x38] sm:$0xff]
        %v6844 = vld [vmem:[%s4 + $0x40] sm:$0xff]
        %v6845 = vld [vmem:[%s4 + $0x48] sm:$0xff]
        %v6846 = vld [vmem:[%s4 + $0x50] sm:$0xff]
        %v6847 = vld [vmem:[%s4 + $0x58] sm:$0xff]
        %v6848 = vld [vmem:[%s7 + $0x3] sm:$0x1]
        %v6849 = vlaneseq
        %v6850 = vshrl.u32 %v6849, 7
        %v6851 = vsub.s32 0, %v6850
        %v6852 = vrot.slane %v6848, %v6851
        %v6854 = vsel %vm1392, %v6745, 0
        %v6857 = vsel %vm1392, %v6833, 0
        %v6860 = vsel %vm1392, %v6834, 0
        %v6863 = vsel %vm1392, %v6835, 0
        %v6865 = vsel %vm1392, %v6831, 0
        %6867 = vmatprep.subr.mxu0 0.0
        %6868 = vmatpush1.msra.mxu0 %v6836
        %6869 = vmatprep.subr.mxu0 0.0
        %6870 = vmatpush1.msra.mxu0 %v6837
        %6871 = vmatprep.subr.mxu0 0.0
        %6872 = vmatpush1.msra.mxu0 %v6838
        %6873 = vmatprep.subr.mxu0 0.0
        %6874 = vmatpush1.msra.mxu0 %v6839
        %6875 = vmatprep.subr.mxu0 0.0
        %6876 = vmatpush1.msra.mxu0 %v6840
        %6877 = vmatprep.subr.mxu0 0.0
        %6878 = vmatpush1.msra.mxu0 %v6841
        %6879 = vmatprep.subr.mxu0 0.0
        %6880 = vmatpush1.msra.mxu0 %v6842
        %6881 = vmatprep.subr.mxu0 0.0
        %6882 = vmatpush1.msra.mxu0 %v6843
        %6883 = vmatprep.subr.mxu0 0.0
        %6884 = vmatpush1.msra.mxu0 %v6844
        %6885 = vmatprep.subr.mxu0 0.0
        %6886 = vmatpush1.msra.mxu0 %v6845
        %6887 = vmatprep.subr.mxu0 0.0
        %6888 = vmatpush1.msra.mxu0 %v6846
        %6889 = vmatprep.subr.mxu0 0.0
        %6890 = vmatpush1.msra.mxu0 %v6847
        %6891 = vmatprep.subr.mxu0 0.0
        %6892 = vmatpush1.msra.mxu0 0.0
        %6893 = vmatprep.subr.mxu0 0.0
        %6894 = vmatpush1.msra.mxu0 0.0
        %6895 = vmatprep.subr.mxu0 0.0
        %6896 = vmatpush1.msra.mxu0 0.0
        %6897 = vmatprep.subr.mxu0 0.0
        %6898 = vmatpush1.msra.mxu0 0.0
        %6899 = vmatprep.subr.mxu0 0.0
        %6900 = vmatpush1.msra.mxu0 0.0
        %6901 = vmatprep.subr.mxu0 0.0
        %6902 = vmatpush1.msra.mxu0 0.0
        %6903 = vmatprep.subr.mxu0 0.0
        %6904 = vmatpush1.msra.mxu0 0.0
        %6905 = vmatprep.subr.mxu0 0.0
        %6906 = vmatpush1.msra.mxu0 0.0
        %6907 = vmatprep.subr.mxu0 0.0
        %6908 = vmatpush1.msra.mxu0 0.0
        %6909 = vmatprep.subr.mxu0 0.0
        %6910 = vmatpush1.msra.mxu0 0.0
        %6911 = vmatprep.subr.mxu0 0.0
        %6912 = vmatpush1.msra.mxu0 0.0
        %6913 = vmatprep.subr.mxu0 0.0
        %6914 = vmatpush1.msra.mxu0 0.0
        %6915 = vmatprep.subr.mxu0 0.0
        %6916 = vmatpush1.msra.mxu0 0.0
        %6917 = vmatprep.subr.mxu0 0.0
        %6918 = vmatpush1.msra.mxu0 0.0
        %6919 = vmatprep.subr.mxu0 0.0
        %6920 = vmatpush1.msra.mxu0 0.0
        %6921 = vmatprep.subr.mxu0 0.0
        %6922 = vmatpush1.msra.mxu0 0.0
        %6923 = vmatprep.subr.mxu0 0.0
        %6924 = vmatpush1.msra.mxu0 0.0
        %6925 = vmatprep.subr.mxu0 0.0
        %6926 = vmatpush1.msra.mxu0 0.0
        %6927 = vmatprep.subr.mxu0 0.0
        %6928 = vmatpush1.msra.mxu0 0.0
        %6929 = vmatprep.subr.mxu0 0.0
        %6930 = vmatpush1.msra.mxu0 0.0
        %6931 = vmatprep.mubr.f32.mxu0 0.0
        %6932 = vmatmul.mubr.f32.gmra.mrb[0].mxu0 %v6854
        %v6933 = vpop.f32.mrb[0].mxu0
        %v6934 = vadd.f32 %v6852, %v6933
        %v6935 = vpop.f32.mrb[0].mxu0
        %6936 = vmatprep.mubr.f32.mxu0 0.0
        %6937 = vmatmul.mubr.f32.gmra.mrb[0].mxu0 %v6857
        %v6938 = vpop.f32.mrb[0].mxu0
        %v6939 = vadd.f32 %v6852, %v6938
        %v6940 = vpop.f32.mrb[0].mxu0
        %6941 = vmatprep.mubr.f32.mxu0 0.0
        %6942 = vmatmul.mubr.f32.gmra.mrb[0].mxu0 %v6860
        %v6943 = vpop.f32.mrb[0].mxu0
        %v6944 = vadd.f32 %v6852, %v6943
        %v6945 = vpop.f32.mrb[0].mxu0
        %6946 = vmatprep.mubr.f32.mxu0 0.0
        %6947 = vmatmul.mubr.f32.gmra.mrb[0].mxu0 %v6863
        %v6948 = vpop.f32.mrb[0].mxu0
        %v6949 = vadd.f32 %v6852, %v6948
        %v6950 = vpop.f32.mrb[0].mxu0
        %6951 = vmatprep.mubr.f32.mxu0 0.0
        %6952 = vmatmul.mubr.f32.gmra.mrb[0].mxu0 %v6865
        %v6953 = vpop.f32.mrb[0].mxu0
        %v6954 = vadd.f32 %v6852, %v6953
        %v6955 = vpop.f32.mrb[0].mxu0
        %6956 = vdwg.mxu0
        %v6957 = vmax.f32 %v6934, 0.0
        %v6958 = vmax.f32 %v6939, 0.0
        %v6959 = vmax.f32 %v6944, 0.0
        %v6960 = vmax.f32 %v6949, 0.0
        %v6961 = vmax.f32 %v6954, 0.0
        %v6964 = vrot.slane %v6957, 1
        %v6965 = vrot.slane %v6958, 1
        %v6966 = vsel %vm748, %v6964, %v6965
        %6967 = vrot.lane.b32.xlu0 %v6966, 32
        %v6968 = vpop.permute.xlu0 %6967
        %v6970 = vrot.slane %v6957, 2
        %v6971 = vrot.slane %v6958, 2
        %v6972 = vsel %vm515, %v6970, %v6971
        %6973 = vrot.lane.b32.xlu0 %v6972, 64
        %v6974 = vpop.permute.xlu0 %6973
        %v6976 = vsel %vm1316, %v6957, %v6968
        %v6977 = vsel %vm1354, %v6976, %v6974
        %v6979 = vrot.slane %v6959, 1
        %v6980 = vsel %vm748, %v6965, %v6979
        %6981 = vrot.lane.b32.xlu0 %v6980, 32
        %v6982 = vpop.permute.xlu0 %6981
        %6983 = vrot.lane.b32.xlu0 %v6979, 32
        %v6984 = vpop.permute.xlu0 %6983
        %v6987 = vrot.slane %v6959, 2
        %v6988 = vsel %vm515, %v6971, %v6987
        %6989 = vrot.lane.b32.xlu0 %v6988, 64
        %v6990 = vpop.permute.xlu0 %6989
        %6991 = vrot.lane.b32.xlu0 %v6987, 64
        %v6992 = vpop.permute.xlu0 %6991
        %v6995 = vsel %vm1316, %v6958, %v6982
        %v6996 = vsel %vm1316, %v6959, %v6984
        %v6997 = vsel %vm1354, %v6995, %v6990
        %v6998 = vsel %vm1354, %v6996, %v6992
        %v7000 = vrot.slane %v6960, 1
        %v7001 = vsel %vm748, %v6979, %v7000
        %7002 = vrot.lane.b32.xlu0 %v7001, 32
        %v7003 = vpop.permute.xlu0 %7002
        %7004 = vrot.lane.b32.xlu0 %v7000, 32
        %v7005 = vpop.permute.xlu0 %7004
        %v7008 = vrot.slane %v6960, 2
        %v7009 = vsel %vm515, %v6987, %v7008
        %7010 = vrot.lane.b32.xlu0 %v7009, 64
        %v7011 = vpop.permute.xlu0 %7010
        %7012 = vrot.lane.b32.xlu0 %v7008, 64
        %v7013 = vpop.permute.xlu0 %7012
        %v7016 = vsel %vm1316, %v6959, %v7003
        %v7017 = vsel %vm1316, %v6960, %v7005
        %v7018 = vsel %vm1354, %v7016, %v7011
        %v7019 = vsel %vm1354, %v7017, %v7013
        %v7021 = vrot.slane %v6961, 1
        %v7022 = vsel %vm748, %v7000, %v7021
        %7023 = vrot.lane.b32.xlu0 %v7022, 32
        %v7024 = vpop.permute.xlu0 %7023
        %7025 = vrot.lane.b32.xlu0 %v7021, 32
        %v7026 = vpop.permute.xlu0 %7025
        %v7029 = vrot.slane %v6961, 2
        %7030 = vrot.lane.b32.xlu0 %v7029, 64
        %v7031 = vpop.permute.xlu0 %7030
        %v7033 = vsel %vm1316, %v6960, %v7024
        %v7034 = vsel %vm1316, %v6961, %v7026
        %v7035 = vsel %vm1354, %v7033, %v7031
        %v7036 = vsel %vm1354, %v7034, %v7031
        %v7039 = vrot.slane %v6997, 2
        %v7040 = vrot.slane %v6998, 2
        %v7041 = vsel %vm515, %v7039, %v7040
        %v7044 = vrot.slane %v7018, 4
        %v7045 = vrot.slane %v7019, 4
        %v7046 = vsel %vm592, %v7044, %v7045
        %v7049 = vrot.slane %v7035, 6
        %v7050 = vrot.slane %v7036, 6
        %v7051 = vsel %vm669, %v7049, %v7050
        %v7052 = vld [vmem:[%s5] sm:$0xff]
        %v7053 = vld [vmem:[%s5 + $0x8] sm:$0xff]
        %v7054 = vld [vmem:[%s5 + $0x10] sm:$0xff]
        %v7055 = vld [vmem:[%s5 + $0x18] sm:$0xff]
        %v7056 = vld [vmem:[%s5 + $0x20] sm:$0xff]
        %v7057 = vld [vmem:[%s5 + $0x28] sm:$0xff]
        %v7058 = vld [vmem:[%s5 + $0x30] sm:$0xff]
        %v7059 = vld [vmem:[%s5 + $0x38] sm:$0xff]
        %v7060 = vld [vmem:[%s5 + $0x40] sm:$0xff]
        %v7061 = vld [vmem:[%s5 + $0x48] sm:$0xff]
        %v7062 = vld [vmem:[%s5 + $0x50] sm:$0xff]
        %v7063 = vld [vmem:[%s5 + $0x58] sm:$0xff]
        %v7064 = vld [vmem:[%s7 + $0x4] sm:$0x1]
        %v7065 = vlaneseq
        %v7066 = vshrl.u32 %v7065, 7
        %v7067 = vsub.s32 0, %v7066
        %v7068 = vrot.slane %v7064, %v7067
        %v7070 = vsel %vm1392, %v6977, 0
        %v7072 = vsel %vm1392, %v7041, 0
        %v7074 = vsel %vm1392, %v7046, 0
        %v7076 = vsel %vm1392, %v7051, 0
        %7078 = vmatprep.subr.mxu0 0.0
        %7079 = vmatpush1.msra.mxu0 %v7052
        %7080 = vmatprep.subr.mxu0 0.0
        %7081 = vmatpush1.msra.mxu0 %v7053
        %7082 = vmatprep.subr.mxu0 0.0
        %7083 = vmatpush1.msra.mxu0 %v7054
        %7084 = vmatprep.subr.mxu0 0.0
        %7085 = vmatpush1.msra.mxu0 %v7055
        %7086 = vmatprep.subr.mxu0 0.0
        %7087 = vmatpush1.msra.mxu0 %v7056
        %7088 = vmatprep.subr.mxu0 0.0
        %7089 = vmatpush1.msra.mxu0 %v7057
        %7090 = vmatprep.subr.mxu0 0.0
        %7091 = vmatpush1.msra.mxu0 %v7058
        %7092 = vmatprep.subr.mxu0 0.0
        %7093 = vmatpush1.msra.mxu0 %v7059
        %7094 = vmatprep.subr.mxu0 0.0
        %7095 = vmatpush1.msra.mxu0 %v7060
        %7096 = vmatprep.subr.mxu0 0.0
        %7097 = vmatpush1.msra.mxu0 %v7061
        %7098 = vmatprep.subr.mxu0 0.0
        %7099 = vmatpush1.msra.mxu0 %v7062
        %7100 = vmatprep.subr.mxu0 0.0
        %7101 = vmatpush1.msra.mxu0 %v7063
        %7102 = vmatprep.subr.mxu0 0.0
        %7103 = vmatpush1.msra.mxu0 0.0
        %7104 = vmatprep.subr.mxu0 0.0
        %7105 = vmatpush1.msra.mxu0 0.0
        %7106 = vmatprep.subr.mxu0 0.0
        %7107 = vmatpush1.msra.mxu0 0.0
        %7108 = vmatprep.subr.mxu0 0.0
        %7109 = vmatpush1.msra.mxu0 0.0
        %7110 = vmatprep.subr.mxu0 0.0
        %7111 = vmatpush1.msra.mxu0 0.0
        %7112 = vmatprep.subr.mxu0 0.0
        %7113 = vmatpush1.msra.mxu0 0.0
        %7114 = vmatprep.subr.mxu0 0.0
        %7115 = vmatpush1.msra.mxu0 0.0
        %7116 = vmatprep.subr.mxu0 0.0
        %7117 = vmatpush1.msra.mxu0 0.0
        %7118 = vmatprep.subr.mxu0 0.0
        %7119 = vmatpush1.msra.mxu0 0.0
        %7120 = vmatprep.subr.mxu0 0.0
        %7121 = vmatpush1.msra.mxu0 0.0
        %7122 = vmatprep.subr.mxu0 0.0
        %7123 = vmatpush1.msra.mxu0 0.0
        %7124 = vmatprep.subr.mxu0 0.0
        %7125 = vmatpush1.msra.mxu0 0.0
        %7126 = vmatprep.subr.mxu0 0.0
        %7127 = vmatpush1.msra.mxu0 0.0
        %7128 = vmatprep.subr.mxu0 0.0
        %7129 = vmatpush1.msra.mxu0 0.0
        %7130 = vmatprep.subr.mxu0 0.0
        %7131 = vmatpush1.msra.mxu0 0.0
        %7132 = vmatprep.subr.mxu0 0.0
        %7133 = vmatpush1.msra.mxu0 0.0
        %7134 = vmatprep.subr.mxu0 0.0
        %7135 = vmatpush1.msra.mxu0 0.0
        %7136 = vmatprep.subr.mxu0 0.0
        %7137 = vmatpush1.msra.mxu0 0.0
        %7138 = vmatprep.subr.mxu0 0.0
        %7139 = vmatpush1.msra.mxu0 0.0
        %7140 = vmatprep.subr.mxu0 0.0
        %7141 = vmatpush1.msra.mxu0 0.0
        %7142 = vmatprep.mubr.f32.mxu0 0.0
        %7143 = vmatmul.mubr.f32.gmra.mrb[0].mxu0 %v7070
        %v7144 = vpop.f32.mrb[0].mxu0
        %v7145 = vadd.f32 %v7068, %v7144
        %v7146 = vpop.f32.mrb[0].mxu0
        %7147 = vmatprep.mubr.f32.mxu0 0.0
        %7148 = vmatmul.mubr.f32.gmra.mrb[0].mxu0 %v7072
        %v7149 = vpop.f32.mrb[0].mxu0
        %v7150 = vadd.f32 %v7068, %v7149
        %v7151 = vpop.f32.mrb[0].mxu0
        %7152 = vmatprep.mubr.f32.mxu0 0.0
        %7153 = vmatmul.mubr.f32.gmra.mrb[0].mxu0 %v7074
        %v7154 = vpop.f32.mrb[0].mxu0
        %v7155 = vadd.f32 %v7068, %v7154
        %v7156 = vpop.f32.mrb[0].mxu0
        %7157 = vmatprep.mubr.f32.mxu0 0.0
        %7158 = vmatmul.mubr.f32.gmra.mrb[0].mxu0 %v7076
        %v7159 = vpop.f32.mrb[0].mxu0
        %v7160 = vadd.f32 %v7068, %v7159
        %v7161 = vpop.f32.mrb[0].mxu0
        %7162 = vdwg.mxu0
        %v7163 = vmax.f32 %v7145, 0.0
        %v7164 = vmax.f32 %v7150, 0.0
        %v7165 = vmax.f32 %v7155, 0.0
        %v7166 = vmax.f32 %v7160, 0.0
        %v7168 = vrot.slane %v7163, 1
        %7169 = vrot.lane.b32.xlu0 %v7168, 32
        %v7170 = vpop.permute.xlu0 %7169
        %v7172 = vrot.slane %v7163, 2
        %7173 = vrot.lane.b32.xlu0 %v7172, 64
        %v7174 = vpop.permute.xlu0 %7173
        %v7176 = vsel %vm1316, %v7163, %v7170
        %v7177 = vsel %vm1354, %v7176, %v7174
        %v7179 = vrot.slane %v7164, 1
        %7180 = vrot.lane.b32.xlu0 %v7179, 32
        %v7181 = vpop.permute.xlu0 %7180
        %v7183 = vrot.slane %v7164, 2
        %7184 = vrot.lane.b32.xlu0 %v7183, 64
        %v7185 = vpop.permute.xlu0 %7184
        %v7187 = vsel %vm1316, %v7164, %v7181
        %v7188 = vsel %vm1354, %v7187, %v7185
        %v7190 = vrot.slane %v7165, 1
        %7191 = vrot.lane.b32.xlu0 %v7190, 32
        %v7192 = vpop.permute.xlu0 %7191
        %v7194 = vrot.slane %v7165, 2
        %7195 = vrot.lane.b32.xlu0 %v7194, 64
        %v7196 = vpop.permute.xlu0 %7195
        %v7198 = vsel %vm1316, %v7165, %v7192
        %v7199 = vsel %vm1354, %v7198, %v7196
        %v7201 = vrot.slane %v7166, 1
        %7202 = vrot.lane.b32.xlu0 %v7201, 32
        %v7203 = vpop.permute.xlu0 %7202
        %v7205 = vrot.slane %v7166, 2
        %7206 = vrot.lane.b32.xlu0 %v7205, 64
        %v7207 = vpop.permute.xlu0 %7206
        %v7209 = vsel %vm1316, %v7166, %v7203
        %v7210 = vsel %vm1354, %v7209, %v7207
        %v7212 = vrot.slane %v7188, 2
        %v7215 = vrot.slane %v7199, 4
        %v7218 = vrot.slane %v7210, 6
        %v7220 = vsel %vm515, %v7177, %v7212
        %v7221 = vsel %vm592, %v7212, %v7215
        %v7222 = vsel %vm669, %v7215, %v7218
        %v7223 = vld [vmem:[%s6] sm:$0xff]
        %v7224 = vld [vmem:[%s6 + $0x8] sm:$0xff]
        %v7225 = vld [vmem:[%s6 + $0x10] sm:$0xff]
        %v7226 = vld [vmem:[%s6 + $0x18] sm:$0xff]
        %v7227 = vld [vmem:[%s6 + $0x20] sm:$0xff]
        %v7228 = vld [vmem:[%s6 + $0x28] sm:$0xff]
        %v7229 = vld [vmem:[%s6 + $0x30] sm:$0xff]
        %v7230 = vld [vmem:[%s6 + $0x38] sm:$0xff]
        %v7231 = vld [vmem:[%s6 + $0x40] sm:$0xff]
        %v7232 = vld [vmem:[%s6 + $0x48] sm:$0xff]
        %v7233 = vld [vmem:[%s6 + $0x50] sm:$0xff]
        %v7234 = vld [vmem:[%s6 + $0x58] sm:$0xff]
        %v7235 = vld [vmem:[%s7 + $0x5] sm:$0x1]
        %v7236 = vlaneseq
        %v7237 = vshrl.u32 %v7236, 7
        %v7238 = vsub.s32 0, %v7237
        %v7239 = vrot.slane %v7235, %v7238
        %v7241 = vsel %vm1392, %v7220, 0
        %v7244 = vsel %vm1392, %v7221, 0
        %v7247 = vsel %vm1392, %v7222, 0
        %7249 = vmatprep.subr.mxu0 0.0
        %7250 = vmatpush1.msra.mxu0 %v7223
        %7251 = vmatprep.subr.mxu0 0.0
        %7252 = vmatpush1.msra.mxu0 %v7224
        %7253 = vmatprep.subr.mxu0 0.0
        %7254 = vmatpush1.msra.mxu0 %v7225
        %7255 = vmatprep.subr.mxu0 0.0
        %7256 = vmatpush1.msra.mxu0 %v7226
        %7257 = vmatprep.subr.mxu0 0.0
        %7258 = vmatpush1.msra.mxu0 %v7227
        %7259 = vmatprep.subr.mxu0 0.0
        %7260 = vmatpush1.msra.mxu0 %v7228
        %7261 = vmatprep.subr.mxu0 0.0
        %7262 = vmatpush1.msra.mxu0 %v7229
        %7263 = vmatprep.subr.mxu0 0.0
        %7264 = vmatpush1.msra.mxu0 %v7230
        %7265 = vmatprep.subr.mxu0 0.0
        %7266 = vmatpush1.msra.mxu0 %v7231
        %7267 = vmatprep.subr.mxu0 0.0
        %7268 = vmatpush1.msra.mxu0 %v7232
        %7269 = vmatprep.subr.mxu0 0.0
        %7270 = vmatpush1.msra.mxu0 %v7233
        %7271 = vmatprep.subr.mxu0 0.0
        %7272 = vmatpush1.msra.mxu0 %v7234
        %7273 = vmatprep.subr.mxu0 0.0
        %7274 = vmatpush1.msra.mxu0 0.0
        %7275 = vmatprep.subr.mxu0 0.0
        %7276 = vmatpush1.msra.mxu0 0.0
        %7277 = vmatprep.subr.mxu0 0.0
        %7278 = vmatpush1.msra.mxu0 0.0
        %7279 = vmatprep.subr.mxu0 0.0
        %7280 = vmatpush1.msra.mxu0 0.0
        %7281 = vmatprep.subr.mxu0 0.0
        %7282 = vmatpush1.msra.mxu0 0.0
        %7283 = vmatprep.subr.mxu0 0.0
        %7284 = vmatpush1.msra.mxu0 0.0
        %7285 = vmatprep.subr.mxu0 0.0
        %7286 = vmatpush1.msra.mxu0 0.0
        %7287 = vmatprep.subr.mxu0 0.0
        %7288 = vmatpush1.msra.mxu0 0.0
        %7289 = vmatprep.subr.mxu0 0.0
        %7290 = vmatpush1.msra.mxu0 0.0
        %7291 = vmatprep.subr.mxu0 0.0
        %7292 = vmatpush1.msra.mxu0 0.0
        %7293 = vmatprep.subr.mxu0 0.0
        %7294 = vmatpush1.msra.mxu0 0.0
        %7295 = vmatprep.subr.mxu0 0.0
        %7296 = vmatpush1.msra.mxu0 0.0
        %7297 = vmatprep.subr.mxu0 0.0
        %7298 = vmatpush1.msra.mxu0 0.0
        %7299 = vmatprep.subr.mxu0 0.0
        %7300 = vmatpush1.msra.mxu0 0.0
        %7301 = vmatprep.subr.mxu0 0.0
        %7302 = vmatpush1.msra.mxu0 0.0
        %7303 = vmatprep.subr.mxu0 0.0
        %7304 = vmatpush1.msra.mxu0 0.0
        %7305 = vmatprep.subr.mxu0 0.0
        %7306 = vmatpush1.msra.mxu0 0.0
        %7307 = vmatprep.subr.mxu0 0.0
        %7308 = vmatpush1.msra.mxu0 0.0
        %7309 = vmatprep.subr.mxu0 0.0
        %7310 = vmatpush1.msra.mxu0 0.0
        %7311 = vmatprep.subr.mxu0 0.0
        %7312 = vmatpush1.msra.mxu0 0.0
        %7313 = vmatprep.mubr.f32.mxu0 0.0
        %7314 = vmatmul.mubr.f32.gmra.mrb[0].mxu0 %v7241
        %v7315 = vpop.f32.mrb[0].mxu0
        %v7316 = vadd.f32 %v7239, %v7315
        %v7317 = vpop.f32.mrb[0].mxu0
        %7318 = vmatprep.mubr.f32.mxu0 0.0
        %7319 = vmatmul.mubr.f32.gmra.mrb[0].mxu0 %v7244
        %v7320 = vpop.f32.mrb[0].mxu0
        %v7321 = vadd.f32 %v7239, %v7320
        %v7322 = vpop.f32.mrb[0].mxu0
        %7323 = vmatprep.mubr.f32.mxu0 0.0
        %7324 = vmatmul.mubr.f32.gmra.mrb[0].mxu0 %v7247
        %v7325 = vpop.f32.mrb[0].mxu0
        %v7326 = vadd.f32 %v7239, %v7325
        %v7327 = vpop.f32.mrb[0].mxu0
        %7328 = vdwg.mxu0
        %v7329 = vmax.f32 %v7316, 0.0
        %v7330 = vmax.f32 %v7321, 0.0
        %v7331 = vmax.f32 %v7326, 0.0
        %v7335 = vrot.slane %v7329, 1
        %v7336 = vrot.slane %v7330, 1
        %v7337 = vsel %vm748, %v7335, %v7336
        %v7338 = vrot.slane %v7331, 1
        %v7339 = vsel %vm748, %v7336, %v7338
        %v7343 = vmax.f32 %v7329, %v7337
        %v7344 = vmax.f32 %v7330, %v7339
        %v7345 = vmax.f32 %v7331, %v7338
        %v7346 = vrot.slane %v7329, 2
        %v7347 = vrot.slane %v7330, 2
        %v7348 = vsel %vm515, %v7346, %v7347
        %v7349 = vrot.slane %v7331, 2
        %v7350 = vsel %vm515, %v7347, %v7349
        %v7354 = vmax.f32 %v7343, %v7348
        %v7355 = vmax.f32 %v7344, %v7350
        %v7356 = vmax.f32 %v7345, %v7349
        %7357 = vst.msk [vmem:[#allocation2] sm:$0xff] %vm1316, %v7354
        %7358 = vst.msk [vmem:[#allocation2 + $0x8] sm:$0xff] %vm1316, %v7355
        %7359 = vst.msk [vmem:[#allocation2 + $0x10] sm:$0x3f] %vm5002, %v7356
        %v7360 = vld [vmem:[#allocation2] ss:$3 sm:$0xff]
        %v7362 = vrot.slane %v7360, 1
        %7363 = vrot.lane.b32.xlu0 %v7362, 32
        %v7364 = vpop.permute.xlu0 %7363
        %v7366 = vsel %vm1316, %v7360, %v7364
        %v7368 = vrot.slane %v7366, 1
        %v7370 = vrot.slane %v7366, 2
        %v7372 = vrot.slane %v7366, 3
        %vm7374 = vcmask 1040384
        %v7375 = vsel %vm7374, %v7366, %v7368
        %v7376 = vsel %vm669, %v7375, %v7370
        %v7377 = vsel %vm1114, %v7376, %v7372
        %v7378 = vld [vmem:[%s8] sm:$0xff]
        %v7379 = vld [vmem:[%s8 + $0x8] sm:$0xff]
        %v7380 = vld [vmem:[%s8 + $0x10] sm:$0xff]
        %v7381 = vld [vmem:[%s8 + $0x18] sm:$0xff]
        %v7382 = vld [vmem:[%s8 + $0x20] sm:$0xff]
        %v7383 = vld [vmem:[%s8 + $0x28] sm:$0xff]
        %v7384 = vld [vmem:[%s8 + $0x30] sm:$0xff]
        %v7385 = vld [vmem:[%s8 + $0x38] sm:$0xff]
        %v7386 = vld [vmem:[%s11] sm:$0x1]
        %v7387 = vlaneseq
        %v7388 = vshrl.u32 %v7387, 7
        %v7389 = vsub.s32 0, %v7388
        %v7390 = vrot.slane %v7386, %v7389
        %v7392 = vsel %vm1354, %v7377, 0
        %7394 = vmatprep.subr.mxu0 0.0
        %7395 = vmatpush1.msra.mxu0 %v7378
        %7396 = vmatprep.subr.mxu0 0.0
        %7397 = vmatpush1.msra.mxu0 %v7379
        %7398 = vmatprep.subr.mxu0 0.0
        %7399 = vmatpush1.msra.mxu0 %v7380
        %7400 = vmatprep.subr.mxu0 0.0
        %7401 = vmatpush1.msra.mxu0 %v7381
        %7402 = vmatprep.subr.mxu0 0.0
        %7403 = vmatpush1.msra.mxu0 %v7382
        %7404 = vmatprep.subr.mxu0 0.0
        %7405 = vmatpush1.msra.mxu0 %v7383
        %7406 = vmatprep.subr.mxu0 0.0
        %7407 = vmatpush1.msra.mxu0 %v7384
        %7408 = vmatprep.subr.mxu0 0.0
        %7409 = vmatpush1.msra.mxu0 %v7385
        %7410 = vmatprep.subr.mxu0 0.0
        %7411 = vmatpush1.msra.mxu0 0.0
        %7412 = vmatprep.subr.mxu0 0.0
        %7413 = vmatpush1.msra.mxu0 0.0
        %7414 = vmatprep.subr.mxu0 0.0
        %7415 = vmatpush1.msra.mxu0 0.0
        %7416 = vmatprep.subr.mxu0 0.0
        %7417 = vmatpush1.msra.mxu0 0.0
        %7418 = vmatprep.subr.mxu0 0.0
        %7419 = vmatpush1.msra.mxu0 0.0
        %7420 = vmatprep.subr.mxu0 0.0
        %7421 = vmatpush1.msra.mxu0 0.0
        %7422 = vmatprep.subr.mxu0 0.0
        %7423 = vmatpush1.msra.mxu0 0.0
        %7424 = vmatprep.subr.mxu0 0.0
        %7425 = vmatpush1.msra.mxu0 0.0
        %7426 = vmatprep.subr.mxu0 0.0
        %7427 = vmatpush1.msra.mxu0 0.0
        %7428 = vmatprep.subr.mxu0 0.0
        %7429 = vmatpush1.msra.mxu0 0.0
        %7430 = vmatprep.subr.mxu0 0.0
        %7431 = vmatpush1.msra.mxu0 0.0
        %7432 = vmatprep.subr.mxu0 0.0
        %7433 = vmatpush1.msra.mxu0 0.0
        %7434 = vmatprep.subr.mxu0 0.0
        %7435 = vmatpush1.msra.mxu0 0.0
        %7436 = vmatprep.subr.mxu0 0.0
        %7437 = vmatpush1.msra.mxu0 0.0
        %7438 = vmatprep.subr.mxu0 0.0
        %7439 = vmatpush1.msra.mxu0 0.0
        %7440 = vmatprep.subr.mxu0 0.0
        %7441 = vmatpush1.msra.mxu0 0.0
        %7442 = vmatprep.subr.mxu0 0.0
        %7443 = vmatpush1.msra.mxu0 0.0
        %7444 = vmatprep.subr.mxu0 0.0
        %7445 = vmatpush1.msra.mxu0 0.0
        %7446 = vmatprep.subr.mxu0 0.0
        %7447 = vmatpush1.msra.mxu0 0.0
        %7448 = vmatprep.subr.mxu0 0.0
        %7449 = vmatpush1.msra.mxu0 0.0
        %7450 = vmatprep.subr.mxu0 0.0
        %7451 = vmatpush1.msra.mxu0 0.0
        %7452 = vmatprep.subr.mxu0 0.0
        %7453 = vmatpush1.msra.mxu0 0.0
        %7454 = vmatprep.subr.mxu0 0.0
        %7455 = vmatpush1.msra.mxu0 0.0
        %7456 = vmatprep.subr.mxu0 0.0
        %7457 = vmatpush1.msra.mxu0 0.0
        %7458 = vmatprep.mubr.f32.mxu0 0.0
        %7459 = vmatmul.mubr.f32.gmra.mrb[0].mxu0 %v7392
        %v7460 = vpop.f32.mrb[0].mxu0
        %v7461 = vadd.f32 %v7390, %v7460
        %v7462 = vpop.f32.mrb[0].mxu0
        %7463 = vdwg.mxu0
        %v7464 = vmax.f32 %v7461, 0.0
        %v7465 = vld [vmem:[%s9] sm:$0xff]
        %v7466 = vld [vmem:[%s9 + $0x8] sm:$0xff]
        %v7467 = vld [vmem:[%s9 + $0x10] sm:$0xff]
        %v7468 = vld [vmem:[%s9 + $0x18] sm:$0xff]
        %v7469 = vld [vmem:[%s9 + $0x20] sm:$0xff]
        %v7470 = vld [vmem:[%s9 + $0x28] sm:$0xff]
        %v7471 = vld [vmem:[%s9 + $0x30] sm:$0xff]
        %v7472 = vld [vmem:[%s9 + $0x38] sm:$0xff]
        %v7473 = vld [vmem:[%s11 + $0x1] sm:$0x1]
        %v7474 = vlaneseq
        %v7475 = vshrl.u32 %v7474, 7
        %v7476 = vsub.s32 0, %v7475
        %v7477 = vrot.slane %v7473, %v7476
        %v7479 = vsel %vm1354, %v7464, 0
        %7481 = vmatprep.subr.mxu0 0.0
        %7482 = vmatpush1.msra.mxu0 %v7465
        %7483 = vmatprep.subr.mxu0 0.0
        %7484 = vmatpush1.msra.mxu0 %v7466
        %7485 = vmatprep.subr.mxu0 0.0
        %7486 = vmatpush1.msra.mxu0 %v7467
        %7487 = vmatprep.subr.mxu0 0.0
        %7488 = vmatpush1.msra.mxu0 %v7468
        %7489 = vmatprep.subr.mxu0 0.0
        %7490 = vmatpush1.msra.mxu0 %v7469
        %7491 = vmatprep.subr.mxu0 0.0
        %7492 = vmatpush1.msra.mxu0 %v7470
        %7493 = vmatprep.subr.mxu0 0.0
        %7494 = vmatpush1.msra.mxu0 %v7471
        %7495 = vmatprep.subr.mxu0 0.0
        %7496 = vmatpush1.msra.mxu0 %v7472
        %7497 = vmatprep.subr.mxu0 0.0
        %7498 = vmatpush1.msra.mxu0 0.0
        %7499 = vmatprep.subr.mxu0 0.0
        %7500 = vmatpush1.msra.mxu0 0.0
        %7501 = vmatprep.subr.mxu0 0.0
        %7502 = vmatpush1.msra.mxu0 0.0
        %7503 = vmatprep.subr.mxu0 0.0
        %7504 = vmatpush1.msra.mxu0 0.0
        %7505 = vmatprep.subr.mxu0 0.0
        %7506 = vmatpush1.msra.mxu0 0.0
        %7507 = vmatprep.subr.mxu0 0.0
        %7508 = vmatpush1.msra.mxu0 0.0
        %7509 = vmatprep.subr.mxu0 0.0
        %7510 = vmatpush1.msra.mxu0 0.0
        %7511 = vmatprep.subr.mxu0 0.0
        %7512 = vmatpush1.msra.mxu0 0.0
        %7513 = vmatprep.subr.mxu0 0.0
        %7514 = vmatpush1.msra.mxu0 0.0
        %7515 = vmatprep.subr.mxu0 0.0
        %7516 = vmatpush1.msra.mxu0 0.0
        %7517 = vmatprep.subr.mxu0 0.0
        %7518 = vmatpush1.msra.mxu0 0.0
        %7519 = vmatprep.subr.mxu0 0.0
        %7520 = vmatpush1.msra.mxu0 0.0
        %7521 = vmatprep.subr.mxu0 0.0
        %7522 = vmatpush1.msra.mxu0 0.0
        %7523 = vmatprep.subr.mxu0 0.0
        %7524 = vmatpush1.msra.mxu0 0.0
        %7525 = vmatprep.subr.mxu0 0.0
        %7526 = vmatpush1.msra.mxu0 0.0
        %7527 = vmatprep.subr.mxu0 0.0
        %7528 = vmatpush1.msra.mxu0 0.0
        %7529 = vmatprep.subr.mxu0 0.0
        %7530 = vmatpush1.msra.mxu0 0.0
        %7531 = vmatprep.subr.mxu0 0.0
        %7532 = vmatpush1.msra.mxu0 0.0
        %7533 = vmatprep.subr.mxu0 0.0
        %7534 = vmatpush1.msra.mxu0 0.0
        %7535 = vmatprep.subr.mxu0 0.0
        %7536 = vmatpush1.msra.mxu0 0.0
        %7537 = vmatprep.subr.mxu0 0.0
        %7538 = vmatpush1.msra.mxu0 0.0
        %7539 = vmatprep.subr.mxu0 0.0
        %7540 = vmatpush1.msra.mxu0 0.0
        %7541 = vmatprep.subr.mxu0 0.0
        %7542 = vmatpush1.msra.mxu0 0.0
        %7543 = vmatprep.subr.mxu0 0.0
        %7544 = vmatpush1.msra.mxu0 0.0
        %7545 = vmatprep.mubr.f32.mxu0 0.0
        %7546 = vmatmul.mubr.f32.gmra.mrb[0].mxu0 %v7479
        %v7547 = vpop.f32.mrb[0].mxu0
        %v7548 = vadd.f32 %v7477, %v7547
        %v7549 = vpop.f32.mrb[0].mxu0
        %7550 = vdwg.mxu0
        %v7551 = vmax.f32 %v7548, 0.0
        %v7552 = vld [vmem:[%s10] sm:$0xff]
        %v7553 = vld [vmem:[%s10 + $0x8] sm:$0xff]
        %v7554 = vld [vmem:[%s10 + $0x10] sm:$0xff]
        %v7555 = vld [vmem:[%s10 + $0x18] sm:$0xff]
        %v7556 = vld [vmem:[%s10 + $0x20] sm:$0xff]
        %v7557 = vld [vmem:[%s10 + $0x28] sm:$0xff]
        %v7558 = vld [vmem:[%s10 + $0x30] sm:$0xff]
        %v7559 = vld [vmem:[%s10 + $0x38] sm:$0xff]
        %v7560 = vld [vmem:[%s11 + $0x2] sm:$0x1]
        %v7561 = vlaneseq
        %v7562 = vshrl.u32 %v7561, 7
        %v7563 = vsub.s32 0, %v7562
        %v7564 = vrot.slane %v7560, %v7563
        %v7566 = vsel %vm1354, %v7551, 0
        %7568 = vmatprep.subr.mxu0 0.0
        %7569 = vmatpush1.msra.mxu0 %v7552
        %7570 = vmatprep.subr.mxu0 0.0
        %7571 = vmatpush1.msra.mxu0 %v7553
        %7572 = vmatprep.subr.mxu0 0.0
        %7573 = vmatpush1.msra.mxu0 %v7554
        %7574 = vmatprep.subr.mxu0 0.0
        %7575 = vmatpush1.msra.mxu0 %v7555
        %7576 = vmatprep.subr.mxu0 0.0
        %7577 = vmatpush1.msra.mxu0 %v7556
        %7578 = vmatprep.subr.mxu0 0.0
        %7579 = vmatpush1.msra.mxu0 %v7557
        %7580 = vmatprep.subr.mxu0 0.0
        %7581 = vmatpush1.msra.mxu0 %v7558
        %7582 = vmatprep.subr.mxu0 0.0
        %7583 = vmatpush1.msra.mxu0 %v7559
        %7584 = vmatprep.subr.mxu0 0.0
        %7585 = vmatpush1.msra.mxu0 0.0
        %7586 = vmatprep.subr.mxu0 0.0
        %7587 = vmatpush1.msra.mxu0 0.0
        %7588 = vmatprep.subr.mxu0 0.0
        %7589 = vmatpush1.msra.mxu0 0.0
        %7590 = vmatprep.subr.mxu0 0.0
        %7591 = vmatpush1.msra.mxu0 0.0
        %7592 = vmatprep.subr.mxu0 0.0
        %7593 = vmatpush1.msra.mxu0 0.0
        %7594 = vmatprep.subr.mxu0 0.0
        %7595 = vmatpush1.msra.mxu0 0.0
        %7596 = vmatprep.subr.mxu0 0.0
        %7597 = vmatpush1.msra.mxu0 0.0
        %7598 = vmatprep.subr.mxu0 0.0
        %7599 = vmatpush1.msra.mxu0 0.0
        %7600 = vmatprep.subr.mxu0 0.0
        %7601 = vmatpush1.msra.mxu0 0.0
        %7602 = vmatprep.subr.mxu0 0.0
        %7603 = vmatpush1.msra.mxu0 0.0
        %7604 = vmatprep.subr.mxu0 0.0
        %7605 = vmatpush1.msra.mxu0 0.0
        %7606 = vmatprep.subr.mxu0 0.0
        %7607 = vmatpush1.msra.mxu0 0.0
        %7608 = vmatprep.subr.mxu0 0.0
        %7609 = vmatpush1.msra.mxu0 0.0
        %7610 = vmatprep.subr.mxu0 0.0
        %7611 = vmatpush1.msra.mxu0 0.0
        %7612 = vmatprep.subr.mxu0 0.0
        %7613 = vmatpush1.msra.mxu0 0.0
        %7614 = vmatprep.subr.mxu0 0.0
        %7615 = vmatpush1.msra.mxu0 0.0
        %7616 = vmatprep.subr.mxu0 0.0
        %7617 = vmatpush1.msra.mxu0 0.0
        %7618 = vmatprep.subr.mxu0 0.0
        %7619 = vmatpush1.msra.mxu0 0.0
        %7620 = vmatprep.subr.mxu0 0.0
        %7621 = vmatpush1.msra.mxu0 0.0
        %7622 = vmatprep.subr.mxu0 0.0
        %7623 = vmatpush1.msra.mxu0 0.0
        %7624 = vmatprep.subr.mxu0 0.0
        %7625 = vmatpush1.msra.mxu0 0.0
        %7626 = vmatprep.subr.mxu0 0.0
        %7627 = vmatpush1.msra.mxu0 0.0
        %7628 = vmatprep.subr.mxu0 0.0
        %7629 = vmatpush1.msra.mxu0 0.0
        %7630 = vmatprep.subr.mxu0 0.0
        %7631 = vmatpush1.msra.mxu0 0.0
        %7632 = vmatprep.mubr.f32.mxu0 0.0
        %7633 = vmatmul.mubr.f32.gmra.mrb[0].mxu0 %v7566
        %v7634 = vpop.f32.mrb[0].mxu0
        %v7635 = vadd.f32 %v7564, %v7634
        %v7636 = vpop.f32.mrb[0].mxu0
        %7637 = vdwg.mxu0
        %v7638 = vsub.f32 0.0, %v7635
        %v7639 = vmul.f32 %v7638, 1.442695
        %v7640 = vpow.pop %v7639
        %v7641 = vadd.f32 %v7640, 1.0
        %v7642 = vrcp.pop %v7641
        %v7643 = vmul.f32 1.0, %v7642
        %vm7644 = vcmask 27648
        %7645 = vst.msk [vmem:[%s409] sm:$0xf] %vm7644, %v7643
        %s7646 = sand.u32 %s291, 1
        %s7647 = scalar_lea.sflag [#allocation4], %s7646
        %s7648 = sand.u32 %s291, 1
        %s7649 = smul.addr %s7648, 4
        %s7650 = scalar_lea.vmem [#allocation3], %s7649
        // Predicated region
        $region69: #{tpu_custom_call.1} parent=67 // pred_check
          %p7651 = pneg %p301
        $region70: #{tpu_custom_call.1} parent=67 // pred_check_branch
          %7653 = sbr.rel (%p7651) target = $region72
        $region71: #{tpu_custom_call.1} parent=67 // pred_region
          %s7655 = ssub.s32 64, 64
          %7656 = vsyncadd %s7647, %s7655
          %s7657 = smul.addr %s26, 64
          %s7658 = scalar_lea.hbm %s12, %s7657
          %s7660 = sshll.u32 %s7650, 4
          %s7661 = int_to_ptr.vmem [resolvable:$true] %s7660
          %7663 = dma.vmem_to_hbm [thread:$0]  %s7661, 64, %s7658, %s7647
        $region72: #{tpu_custom_call.1} parent=67 // pred_fallthru
          _
      $region68: #{tpu_custom_call.1} parent=5 // pred_fallthru
        _
      %p7664 = scmp.le.s32.totalorder 2, %s21
      // Predicated region
      $region73: #{tpu_custom_call.1} parent=5 // pred_check
        %p7665 = pneg %p7664
      $region74: #{tpu_custom_call.1} parent=5 // pred_check_branch
        %7667 = sbr.rel (%p7665) target = $region76
      $region75: #{tpu_custom_call.1} parent=5 // pred_region
        %s7668 = ssub.s32 %s21, 2
        // Predicated region
        $region77: #{tpu_custom_call.1} parent=75 // pred_check
          %p7669 = pneg %p307
        $region78: #{tpu_custom_call.1} parent=75 // pred_check_branch
          %7671 = sbr.rel (%p7669) target = $region80
        $region79: #{tpu_custom_call.1} parent=75 // pred_region
          %s7672 = sand.u32 %s292, 1
          %s7673 = scalar_lea.sflag [#allocation4], %s7672
          %s7674 = sand.u32 %s292, 1
          %s7675 = smul.addr %s7674, 4
          %s7676 = scalar_lea.vmem [#allocation3], %s7675
          %7677 = dma.done %s7673, 64
        $region80: #{tpu_custom_call.1} parent=75 // pred_fallthru
          _
      $region76: #{tpu_custom_call.1} parent=5 // pred_fallthru
        _
    $region6: #{tpu_custom_call.1} parent=1 // loop_footer
      %s25 = sadd.s32 1, %s21
    $region7: #{tpu_custom_call.1} parent=1 // loop_footer_branch
      %20 = sbr.rel target = $region3
    $region8: #{tpu_custom_call.1} parent=1 // loop_exit
      _
    %7678 = vsyncpa [#allocation4], 1
    %s7679 = scalar_lea.sflag [#allocation4], 1
    %7680 = vsyncpa %s7679, 1

</llo_original>
